<compile_context>
chip_gen: v7x
topology: tpu7x:2x2x1
jax: 0.10.0
libtpu: 0.0.40
codegen_flags: <defaults>
</compile_context>

<pallas_src>
import functools
import numpy as np
import jax
import jax.numpy as jnp
from jax.experimental import pallas as pl
from jax.experimental.pallas import tpu as pltpu


# ----------------------------- configuration -------------------------------
class Config:
    num_nodes = 4          # power of two (in-kernel float index math relies on exact 1/n)
    seq_len = 16           # == "dimension" of x_enc
    pred_len = 8
    top_k = 2
    d_model = 16
    c_out = 4
    conv_out = 4
    lstmhidden_dim = 8
    lstmout_dim = 8
    conv_kernel = 3
    hidden_dim = 16
    moving_windows = [1, 2]
    strides = [1, 1]
    decay = 0.7
    pooling_choice = "mean"


# ----------------------------- static helpers -------------------------------
def _np_adaptive_pool_matrix(L, out=32):
    """Exact F.adaptive_avg_pool1d(L -> out) as an (L, out) averaging matrix."""
    P = np.zeros((L, out), np.float32)
    for i in range(out):
        s = (i * L) // out
        e = -(-((i + 1) * L) // out)                  # ceil
        P[s:e, i] = 1.0 / (e - s)
    return P


def _scale_table(cfg):
    """Static set of possible scales (period = seq_len // freq_idx) and idx->branch map."""
    n_freq = cfg.seq_len // 2
    idx_to_scale = [cfg.seq_len] + [max(cfg.seq_len // i, 1) for i in range(1, n_freq + 1)]
    scales = sorted(set(idx_to_scale), reverse=True)
    sel = [scales.index(s) for s in idx_to_scale]
    return scales, sel


def _slab_layout(cfg, scale):
    """Row offsets / shapes of the packed weight slab (16-sublane aligned for bf16)."""
    LH, LO, H, T = cfg.lstmhidden_dim, cfg.lstmout_dim, cfg.hidden_dim, cfg.seq_len
    sizes = [
        ("w1", scale, LH * scale),
        ("w2", LH * scale, LO * scale),
        ("pm2", LO * scale, 2 * H),
        ("g1", 2 * H, H),
        ("g2", 2 * H, H),
        ("f1", 2 * H, 2 * H),
        ("f2", 2 * H, LH),
        ("f3", LH, T),
    ]
    offs, row = {}, 0
    for name, r, _ in sizes:
        offs[name] = row
        row += ((r + 15) // 16) * 16
    wrows = row
    wcols = max(c for _, _, c in sizes)
    bcols = max(LH * scale, LO * scale, 2 * H, T)
    return offs, wrows, wcols, bcols


# ----------------------------- parameter preparation ------------------------
def _prepare_block_scale(blk, cfg, scale):
    """Fold conv1/conv2 into banded-Toeplitz matmuls, fuse pool+map2, pack into slabs."""
    K, LH, LO, H = cfg.conv_kernel, cfg.lstmhidden_dim, cfg.lstmout_dim, cfg.hidden_dim
    offs, wrows, wcols, bcols = _slab_layout(cfg, scale)

    w1 = np.asarray(blk["conv1_w"], np.float32)                      # (K, LH)
    w2 = np.asarray(blk["conv2_w"], np.float32).reshape(LH, K, LO)   # (LH, K, LO)
    shifts = [np.eye(scale, k=1 - j, dtype=np.float32) for j in range(K)]
    w1full = sum(np.kron(w1[j][None, :], shifts[j]) for j in range(K))   # (scale, LH*scale)
    w2full = sum(np.kron(w2[:, j, :], shifts[j]) for j in range(K))      # (LH*scale, LO*scale)
    b1w = np.kron(np.asarray(blk["conv1_b"], np.float32), np.ones(scale, np.float32))
    b2w = np.kron(np.asarray(blk["conv2_b"], np.float32), np.ones(scale, np.float32))

    # adaptive_avg_pool1d(LO*scale -> 32) over torch's channel-major flatten, fused with
    # the nonlin_map2 Linear (eval-mode BatchNorm already folded into the weights at init).
    P = _np_adaptive_pool_matrix(LO * scale, 32)                     # (LO*scale, 32)
    pm2 = P @ np.asarray(blk["map2_w"], np.float32)                  # (LO*scale, 2H)

    W = np.zeros((wrows, wcols), np.float32)

    def put(name, a):
        r, c = a.shape
        W[offs[name]:offs[name] + r, :c] = a

    put("w1", w1full)
    put("w2", w2full)
    put("pm2", pm2)
    put("g1", np.asarray(blk["mpnn1_w"], np.float32))
    put("g2", np.asarray(blk["mpnn2_w"], np.float32))
    put("f1", np.asarray(blk["fc1_w"], np.float32))
    put("f2", np.asarray(blk["fc2_w"], np.float32))
    put("f3", np.asarray(blk["fc3_w"], np.float32))

    B = np.zeros((8, bcols), np.float32)
    for i, v in enumerate([b1w, b2w,
                           np.asarray(blk["map2_b"], np.float32),
                           np.asarray(blk["mpnn1_b"], np.float32),
                           np.asarray(blk["mpnn2_b"], np.float32),
                           np.asarray(blk["fc1_b"], np.float32),
                           np.asarray(blk["fc2_b"], np.float32),
                           np.asarray(blk["fc3_b"], np.float32)]):
        B[i, :v.shape[0]] = v

    return {"w": jnp.asarray(W, dtype=jnp.bfloat16),   # bf16 MXU operands (f32 accumulation)
            "b": jnp.asarray(B, dtype=jnp.float32)}


def prepare_params(params, cfg):
    """Build per-(block, scale) packed slabs once, outside the jitted forward."""
    scales, _ = _scale_table(cfg)
    return [[_prepare_block_scale(blk, cfg, s) for s in scales] for blk in params["blocks"]]


def _num_batch_splits(bs, rb, n):
    """2-way batch split only on v7x (2 TensorCores) and only when per-step blocks keep
    >=8 sublanes; v5e/v6e (single TC) always run the whole batch in one grid step."""
    try:
        kind = jax.devices()[0].device_kind.lower()
    except Exception:
        kind = ""
    if "v7" in kind and bs % 2 == 0:
        bpg = bs // 2
        if (bpg * rb) % 8 == 0 and (bpg * n) % 8 == 0:
            return 2
    return 1


# ----------------------------- fused Pallas kernel ---------------------------
def _graph_block_kernel(x_ref, w_ref, b_ref, o_ref, *, scale, n, bpg, scale_num,
                        LH, LO, H, seq_len, offs):
    """Whole GraphBlock for `bpg` batch elements in one grid step; every intermediate
    stays VMEM/vreg resident. Weights are static bf16 slab slices; accumulation is f32."""
    f32, bf16 = jnp.float32, jnp.bfloat16
    rb = scale_num * n
    M = bpg * rb                       # total graph rows (batch folded into M)
    inv_n = 1.0 / n                    # exact for power-of-two num_nodes

    def w(name, r, c):
        o = offs[name]
        return w_ref[o:o + r, 0:c]

    def b(i, c):
        return b_ref[i:i + 1, 0:c]

    # Feature_extractor_1DCNN: two same-padded Conv1d(+ReLU) as banded-Toeplitz matmuls.
    x = x_ref[...].astype(bf16)                                                  # (M, scale)
    h = jnp.dot(x, w("w1", scale, LH * scale), preferred_element_type=f32) + b(0, LH * scale)
    h = jnp.maximum(h, 0.0)
    h = jnp.dot(h.astype(bf16), w("w2", LH * scale, LO * scale),
                preferred_element_type=f32) + b(1, LO * scale)
    h = jnp.maximum(h, 0.0)                                                      # (M, LO*scale)

    # adaptive_avg_pool1d + nonlin_map2 Linear, pre-fused into a single matrix pm2.
    a2 = jnp.dot(h.astype(bf16), w("pm2", LO * scale, 2 * H),
                 preferred_element_type=f32) + b(2, 2 * H)                       # (M, 2H)

    # Block-diagonal within-(batch, window) mask, generated in-kernel (float index math,
    # exact for these small integer indices; no integer vector div/mod needed).
    ri = jax.lax.broadcasted_iota(jnp.int32, (M, M), 0).astype(f32)
    ci = jax.lax.broadcasted_iota(jnp.int32, (M, M), 1).astype(f32)
    mask = (jnp.floor(ri * inv_n) == jnp.floor(ci * inv_n)).astype(f32)

    # Dot-product adjacency + masked row-softmax (multiply-by-mask; denominator >= 1).
    a2b = a2.astype(bf16)
    gram = jax.lax.dot_general(a2b, a2b, (((1,), (1,)), ((), ())),
                               preferred_element_type=f32)                       # (M, M)
    gram = jnp.maximum(gram, 0.0) * mask
    mrow = jnp.max(gram, axis=-1, keepdims=True)
    e = jnp.exp(gram - mrow) * mask
    denom = jnp.sum(e, axis=-1, keepdims=True)
    adj = e * pl.reciprocal(denom, approx=True)
    agg = jnp.dot(adj.astype(bf16), a2b, preferred_element_type=f32)             # (M, 2H)

    aggb = agg.astype(bf16)
    hA = jnp.maximum(jnp.dot(aggb, w("g1", 2 * H, H), preferred_element_type=f32) + b(3, H), 0.0)
    hB = jnp.maximum(jnp.dot(aggb, w("g2", 2 * H, H), preferred_element_type=f32) + b(4, H), 0.0)

    # Window mean-pool matrix (rows = (batch, node); cols = (batch, window, node)),
    # also generated in-kernel from iota.
    R = bpg * n
    rp = jax.lax.broadcasted_iota(jnp.int32, (R, M), 0).astype(f32)
    cq = jax.lax.broadcasted_iota(jnp.int32, (R, M), 1).astype(f32)
    node_r = rp - n * jnp.floor(rp * inv_n)
    node_c = cq - n * jnp.floor(cq * inv_n)
    t = cq - jnp.floor(rp * inv_n) * rb                 # column offset within row's batch
    sel = (node_r == node_c) & (t >= 0.0) & (t < rb)
    wp = jnp.where(sel, 1.0 / scale_num, 0.0)           # (R, M)

    m1 = jnp.dot(wp, hA, preferred_element_type=f32)    # (R, H)
    m2 = jnp.dot(wp, hB, preferred_element_type=f32)    # (R, H)

    # fc head; concat([m1, m2], -1) @ fc1 done as a split matmul (no concat).
    of1 = offs["f1"]
    y = (jnp.dot(m1.astype(bf16), w_ref[of1:of1 + H, 0:2 * H], preferred_element_type=f32)
         + jnp.dot(m2.astype(bf16), w_ref[of1 + H:of1 + 2 * H, 0:2 * H],
                   preferred_element_type=f32)
         + b(5, 2 * H))
    y = jnp.maximum(y, 0.0)
    y = jnp.maximum(jnp.dot(y.astype(bf16), w("f2", 2 * H, LH),
                            preferred_element_type=f32) + b(6, LH), 0.0)
    y = jnp.dot(y.astype(bf16), w("f3", LH, seq_len),
                preferred_element_type=f32) + b(7, seq_len)                      # (R, seq_len)
    o_ref[...] = y.astype(o_ref.dtype)


# ----------------------------- per-scale branch ------------------------------
def _graph_block_branch(x_enc, *, prep, cfg, scale):
    """One GraphBlock forward for a static scale, as a single fused pallas_call."""
    bs, _, n = x_enc.shape
    seq_len, LH, LO, H = cfg.seq_len, cfg.lstmhidden_dim, cfg.lstmout_dim, cfg.hidden_dim

    if seq_len % scale != 0:
        length = (seq_len // scale + 1) * scale
        pad = jnp.zeros((bs, length - seq_len, n), x_enc.dtype)
        xp = jnp.concatenate([x_enc, pad], axis=1)
    else:
        length = seq_len
        xp = x_enc
    scale_num = length // scale
    rb = scale_num * n

    # Same flat row-major regrouping as the PyTorch reshape chain, with the batch folded
    # into the matmul row dimension: (bs, length, n) -> (bs*scale_num*n, scale).
    x3 = xp.reshape(bs * rb, scale).astype(jnp.float32)

    n_splits = _num_batch_splits(bs, rb, n)
    bpg = bs // n_splits
    offs, wrows, wcols, bcols = _slab_layout(cfg, scale)

    kernel = functools.partial(_graph_block_kernel, scale=scale, n=n, bpg=bpg,
                               scale_num=scale_num, LH=LH, LO=LO, H=H,
                               seq_len=seq_len, offs=offs)

    out = pl.pallas_call(
        kernel,
        out_shape=jax.ShapeDtypeStruct((bs * n, seq_len), jnp.float32),
        grid=(n_splits,),
        in_specs=[
            pl.BlockSpec((bpg * rb, scale), lambda i: (i, 0)),   # activations
            pl.BlockSpec((wrows, wcols), lambda i: (0, 0)),      # packed bf16 weight slab
            pl.BlockSpec((8, bcols), lambda i: (0, 0)),          # packed f32 bias slab
        ],
        out_specs=pl.BlockSpec((bpg * n, seq_len), lambda i: (i, 0)),
        compiler_params=pltpu.CompilerParams(dimension_semantics=("parallel",)),
    )(x3, prep["w"], prep["b"])
    return out.reshape(bs, n, seq_len)


# ----------------------------- full module forward ---------------------------
def multi_scale_graph_block(x_enc, prepared, cfg):
    k = cfg.top_k

    # FFT period detection fully on device (no host round-trip).
    xf = jnp.fft.rfft(x_enc, axis=1)
    amp = jnp.abs(xf)                                   # (bs, F, N)
    freq = amp.mean(axis=0).mean(axis=-1)               # (F,)
    freq = freq.at[0].set(0.0)
    _, top_idx = jax.lax.top_k(freq, k)                 # (k,) int32
    scale_weight = amp.mean(axis=-1)[:, top_idx]        # (bs, k)

    scales, sel = _scale_table(cfg)
    sel_table = jnp.asarray(sel, jnp.int32)

    outs = []
    for i in range(k):
        branches = [functools.partial(_graph_block_branch, prep=prepared[i][j], cfg=cfg, scale=s)
                    for j, s in enumerate(scales)]
        outs.append(jax.lax.switch(sel_table[top_idx[i]], branches, x_enc))
    outs = jnp.stack(outs, axis=0)                      # (k, bs, N, T)

    # Softmax-weighted scale fusion + residual: tiny, left to XLA as an epilogue.
    w = jax.nn.softmax(scale_weight, axis=1)            # (bs, k)
    fused = jnp.einsum('kbnt,bk->bnt', outs, w)         # (bs, N, T)
    return jnp.transpose(fused, (0, 2, 1)) + x_enc      # (bs, T, N)


# ----------------------------- parameter init --------------------------------
def init_params(cfg, key):
    H, LH, LO, K = cfg.hidden_dim, cfg.lstmhidden_dim, cfg.lstmout_dim, cfg.conv_kernel
    bn_scale = 1.0 / np.sqrt(1.0 + 1e-5)                # eval-mode BatchNorm1d, default stats

    def lin(k_, fi, fo):
        return jax.random.normal(k_, (fi, fo), jnp.float32) * (1.0 / np.sqrt(fi))

    keys = jax.random.split(key, cfg.top_k)
    blocks = []
    for i in range(cfg.top_k):
        kk = jax.random.split(keys[i], 8)
        blocks.append({
            "conv1_w": lin(kk[0], 1 * K, LH),  "conv1_b": jnp.zeros((LH,), jnp.float32),
            "conv2_w": lin(kk[1], LH * K, LO), "conv2_b": jnp.zeros((LO,), jnp.float32),
            "map2_w": lin(kk[2], 32, 2 * H) * bn_scale,
            "map2_b": jnp.zeros((2 * H,), jnp.float32),
            "mpnn1_w": lin(kk[3], 2 * H, H), "mpnn1_b": jnp.zeros((H,), jnp.float32),
            "mpnn2_w": lin(kk[4], 2 * H, H), "mpnn2_b": jnp.zeros((H,), jnp.float32),
            "fc1_w": lin(kk[5], 2 * H, 2 * H), "fc1_b": jnp.zeros((2 * H,), jnp.float32),
            "fc2_w": lin(kk[6], 2 * H, LH),    "fc2_b": jnp.zeros((LH,), jnp.float32),
            "fc3_w": lin(kk[7], LH, cfg.seq_len), "fc3_b": jnp.zeros((cfg.seq_len,), jnp.float32),
        })
    return {"blocks": blocks}


# ----------------------------------- main ------------------------------------
if __name__ == "__main__":
    cfg = Config()
    key = jax.random.PRNGKey(0)
    kx, kp = jax.random.split(key)
    x_enc = jax.random.normal(kx, (2, cfg.seq_len, cfg.num_nodes), jnp.float32)
    params = init_params(cfg, kp)
    prepared = prepare_params(params, cfg)               # once, outside the jitted forward

    fwd = jax.jit(functools.partial(multi_scale_graph_block, cfg=cfg))
    out = jax.block_until_ready(fwd(x_enc, prepared))
    assert out.shape == (2, cfg.seq_len, cfg.num_nodes), out.shape
    assert bool(jnp.all(jnp.isfinite(out)))
    print("KERNEL_OK")
</pallas_src>

<mosaic_0001>
module attributes {stable_mosaic.version = 11 : i64} {
  func.func @_graph_block_kernel(%arg0: i32, %arg1: memref<8x16xf32, #tpu.memory_space<vmem>>, %arg2: memref<416x128xbf16, #tpu.memory_space<vmem>>, %arg3: memref<8x128xf32, #tpu.memory_space<vmem>>, %arg4: memref<8x16xf32, #tpu.memory_space<vmem>>) attributes {dimension_semantics = [#tpu.dimension_semantics<parallel>], iteration_bounds = array<i64: 1>, scalar_prefetch = 0 : i64, scratch_operands = 0 : i64, tpu.core_type = #tpu.core_type<tc>, window_params = [{transform_indices = @transform_0, window_bounds = array<i64: 8, 16>}, {pipeline_mode = #tpu.pipeline_mode<synchronous>, transform_indices = @transform_1, window_bounds = array<i64: 416, 128>}, {pipeline_mode = #tpu.pipeline_mode<synchronous>, transform_indices = @transform_2, window_bounds = array<i64: 8, 128>}, {transform_indices = @transform_3, window_bounds = array<i64: 8, 16>}]} {
    %c0 = arith.constant 0 : index
    %c0_0 = arith.constant 0 : index
    %0 = vector.load %arg1[%c0, %c0_0] : memref<8x16xf32, #tpu.memory_space<vmem>>, vector<8x16xf32>
    %1 = arith.truncf %0 : vector<8x16xf32> to vector<8x16xbf16>
    %c0_1 = arith.constant 0 : index
    %c0_2 = arith.constant 0 : index
    %2 = vector.load %arg2[%c0_1, %c0_2] : memref<416x128xbf16, #tpu.memory_space<vmem>>, vector<16x128xbf16>
    %cst = arith.constant dense<0.000000e+00> : vector<8x128xf32>
    %3 = tpu.matmul %1, %2, %cst {dimension_numbers = #tpu.dot_dimension_numbers<[1], [0], [0], [1], [0, 0, 1, 1], [], []>} : vector<8x16xbf16>, vector<16x128xbf16>, vector<8x128xf32> -> vector<8x128xf32>
    %c0_3 = arith.constant 0 : index
    %c0_4 = arith.constant 0 : index
    %4 = vector.load %arg3[%c0_3, %c0_4] : memref<8x128xf32, #tpu.memory_space<vmem>>, vector<1x128xf32>
    %5 = vector.broadcast %4 : vector<1x128xf32> to vector<8x128xf32>
    %6 = arith.addf %3, %5 : vector<8x128xf32>
    %cst_5 = arith.constant 0.000000e+00 : f32
    %7 = vector.broadcast %cst_5 : f32 to vector<8x128xf32>
    %8 = arith.maximumf %6, %7 : vector<8x128xf32>
    %9 = arith.truncf %8 : vector<8x128xf32> to vector<8x128xbf16>
    %c16 = arith.constant 16 : index
    %c0_6 = arith.constant 0 : index
    %10 = vector.load %arg2[%c16, %c0_6] : memref<416x128xbf16, #tpu.memory_space<vmem>>, vector<128x128xbf16>
    %cst_7 = arith.constant dense<0.000000e+00> : vector<8x128xf32>
    %11 = tpu.matmul %9, %10, %cst_7 {dimension_numbers = #tpu.dot_dimension_numbers<[1], [0], [0], [1], [0, 0, 1, 1], [], []>} : vector<8x128xbf16>, vector<128x128xbf16>, vector<8x128xf32> -> vector<8x128xf32>
    %c1 = arith.constant 1 : index
    %c0_8 = arith.constant 0 : index
    %12 = vector.load %arg3[%c1, %c0_8] : memref<8x128xf32, #tpu.memory_space<vmem>>, vector<1x128xf32>
    %13 = vector.broadcast %12 : vector<1x128xf32> to vector<8x128xf32>
    %14 = arith.addf %11, %13 : vector<8x128xf32>
    %cst_9 = arith.constant 0.000000e+00 : f32
    %15 = vector.broadcast %cst_9 : f32 to vector<8x128xf32>
    %16 = arith.maximumf %14, %15 : vector<8x128xf32>
    %17 = arith.truncf %16 : vector<8x128xf32> to vector<8x128xbf16>
    %c144 = arith.constant 144 : index
    %c0_10 = arith.constant 0 : index
    %18 = vector.load %arg2[%c144, %c0_10] : memref<416x128xbf16, #tpu.memory_space<vmem>>, vector<128x32xbf16>
    %cst_11 = arith.constant dense<0.000000e+00> : vector<8x32xf32>
    %19 = tpu.matmul %17, %18, %cst_11 {dimension_numbers = #tpu.dot_dimension_numbers<[1], [0], [0], [1], [0, 0, 1, 1], [], []>} : vector<8x128xbf16>, vector<128x32xbf16>, vector<8x32xf32> -> vector<8x32xf32>
    %c2 = arith.constant 2 : index
    %c0_12 = arith.constant 0 : index
    %20 = vector.load %arg3[%c2, %c0_12] : memref<8x128xf32, #tpu.memory_space<vmem>>, vector<1x32xf32>
    %21 = vector.broadcast %20 : vector<1x32xf32> to vector<8x32xf32>
    %22 = arith.addf %19, %21 : vector<8x32xf32>
    %23 = tpu.iota {dimensions = array<i32: 0>} : vector<8x8xi32>
    %24 = arith.sitofp %23 : vector<8x8xi32> to vector<8x8xf32>
    %25 = tpu.iota {dimensions = array<i32: 1>} : vector<8x8xi32>
    %26 = arith.sitofp %25 : vector<8x8xi32> to vector<8x8xf32>
    %cst_13 = arith.constant 2.500000e-01 : f32
    %27 = vector.broadcast %cst_13 : f32 to vector<8x8xf32>
    %28 = arith.mulf %24, %27 : vector<8x8xf32>
    %29 = math.floor %28 : vector<8x8xf32>
    %cst_14 = arith.constant 2.500000e-01 : f32
    %30 = vector.broadcast %cst_14 : f32 to vector<8x8xf32>
    %31 = arith.mulf %26, %30 : vector<8x8xf32>
    %32 = math.floor %31 : vector<8x8xf32>
    %33 = arith.cmpf oeq, %29, %32 : vector<8x8xf32>
    %34 = arith.extui %33 : vector<8x8xi1> to vector<8x8xi32>
    %35 = arith.sitofp %34 : vector<8x8xi32> to vector<8x8xf32>
    %36 = arith.truncf %22 : vector<8x32xf32> to vector<8x32xbf16>
    %cst_15 = arith.constant dense<0.000000e+00> : vector<8x8xf32>
    %37 = tpu.matmul %36, %36, %cst_15 {dimension_numbers = #tpu.dot_dimension_numbers<[1], [1], [0], [0], [0, 0, 1, 0], [], []>} : vector<8x32xbf16>, vector<8x32xbf16>, vector<8x8xf32> -> vector<8x8xf32>
    %cst_16 = arith.constant 0.000000e+00 : f32
    %38 = vector.broadcast %cst_16 : f32 to vector<8x8xf32>
    %39 = arith.maximumf %37, %38 : vector<8x8xf32>
    %40 = arith.mulf %39, %35 : vector<8x8xf32>
    %cst_17 = arith.constant dense<0xFF800000> : vector<8xf32>
    %41 = vector.multi_reduction <maximumf>, %40, %cst_17 [1] : vector<8x8xf32> to vector<8xf32>
    %42 = vector.shape_cast %41 : vector<8xf32> to vector<8x1xf32>
    %43 = vector.broadcast %42 : vector<8x1xf32> to vector<8x8xf32>
    %44 = arith.subf %40, %43 : vector<8x8xf32>
    %45 = math.exp %44 : vector<8x8xf32>
    %46 = arith.mulf %45, %35 : vector<8x8xf32>
    %cst_18 = arith.constant dense<0.000000e+00> : vector<8xf32>
    %47 = vector.multi_reduction <add>, %46, %cst_18 [1] : vector<8x8xf32> to vector<8xf32>
    %48 = vector.shape_cast %47 : vector<8xf32> to vector<8x1xf32>
    %49 = tpu.reciprocal %48 {approx = true} : vector<8x1xf32> -> vector<8x1xf32>
    %50 = vector.broadcast %49 : vector<8x1xf32> to vector<8x8xf32>
    %51 = arith.mulf %46, %50 : vector<8x8xf32>
    %52 = arith.truncf %51 : vector<8x8xf32> to vector<8x8xbf16>
    %cst_19 = arith.constant dense<0.000000e+00> : vector<8x32xf32>
    %53 = tpu.matmul %52, %36, %cst_19 {dimension_numbers = #tpu.dot_dimension_numbers<[1], [0], [0], [1], [0, 0, 1, 1], [], []>} : vector<8x8xbf16>, vector<8x32xbf16>, vector<8x32xf32> -> vector<8x32xf32>
    %54 = arith.truncf %53 : vector<8x32xf32> to vector<8x32xbf16>
    %c272 = arith.constant 272 : index
    %c0_20 = arith.constant 0 : index
    %55 = vector.load %arg2[%c272, %c0_20] : memref<416x128xbf16, #tpu.memory_space<vmem>>, vector<32x16xbf16>
    %cst_21 = arith.constant dense<0.000000e+00> : vector<8x16xf32>
    %56 = tpu.matmul %54, %55, %cst_21 {dimension_numbers = #tpu.dot_dimension_numbers<[1], [0], [0], [1], [0, 0, 1, 1], [], []>} : vector<8x32xbf16>, vector<32x16xbf16>, vector<8x16xf32> -> vector<8x16xf32>
    %c3 = arith.constant 3 : index
    %c0_22 = arith.constant 0 : index
    %57 = vector.load %arg3[%c3, %c0_22] : memref<8x128xf32, #tpu.memory_space<vmem>>, vector<1x16xf32>
    %58 = vector.broadcast %57 : vector<1x16xf32> to vector<8x16xf32>
    %59 = arith.addf %56, %58 : vector<8x16xf32>
    %cst_23 = arith.constant 0.000000e+00 : f32
    %60 = vector.broadcast %cst_23 : f32 to vector<8x16xf32>
    %61 = arith.maximumf %59, %60 : vector<8x16xf32>
    %c304 = arith.constant 304 : index
    %c0_24 = arith.constant 0 : index
    %62 = vector.load %arg2[%c304, %c0_24] : memref<416x128xbf16, #tpu.memory_space<vmem>>, vector<32x16xbf16>
    %cst_25 = arith.constant dense<0.000000e+00> : vector<8x16xf32>
    %63 = tpu.matmul %54, %62, %cst_25 {dimension_numbers = #tpu.dot_dimension_numbers<[1], [0], [0], [1], [0, 0, 1, 1], [], []>} : vector<8x32xbf16>, vector<32x16xbf16>, vector<8x16xf32> -> vector<8x16xf32>
    %c4 = arith.constant 4 : index
    %c0_26 = arith.constant 0 : index
    %64 = vector.load %arg3[%c4, %c0_26] : memref<8x128xf32, #tpu.memory_space<vmem>>, vector<1x16xf32>
    %65 = vector.broadcast %64 : vector<1x16xf32> to vector<8x16xf32>
    %66 = arith.addf %63, %65 : vector<8x16xf32>
    %cst_27 = arith.constant 0.000000e+00 : f32
    %67 = vector.broadcast %cst_27 : f32 to vector<8x16xf32>
    %68 = arith.maximumf %66, %67 : vector<8x16xf32>
    %69 = tpu.iota {dimensions = array<i32: 0>} : vector<8x8xi32>
    %70 = arith.sitofp %69 : vector<8x8xi32> to vector<8x8xf32>
    %71 = tpu.iota {dimensions = array<i32: 1>} : vector<8x8xi32>
    %72 = arith.sitofp %71 : vector<8x8xi32> to vector<8x8xf32>
    %cst_28 = arith.constant 2.500000e-01 : f32
    %73 = vector.broadcast %cst_28 : f32 to vector<8x8xf32>
    %74 = arith.mulf %70, %73 : vector<8x8xf32>
    %75 = math.floor %74 : vector<8x8xf32>
    %cst_29 = arith.constant 4.000000e+00 : f32
    %76 = vector.broadcast %cst_29 : f32 to vector<8x8xf32>
    %77 = arith.mulf %76, %75 : vector<8x8xf32>
    %78 = arith.subf %70, %77 : vector<8x8xf32>
    %cst_30 = arith.constant 2.500000e-01 : f32
    %79 = vector.broadcast %cst_30 : f32 to vector<8x8xf32>
    %80 = arith.mulf %72, %79 : vector<8x8xf32>
    %81 = math.floor %80 : vector<8x8xf32>
    %cst_31 = arith.constant 4.000000e+00 : f32
    %82 = vector.broadcast %cst_31 : f32 to vector<8x8xf32>
    %83 = arith.mulf %82, %81 : vector<8x8xf32>
    %84 = arith.subf %72, %83 : vector<8x8xf32>
    %cst_32 = arith.constant 2.500000e-01 : f32
    %85 = vector.broadcast %cst_32 : f32 to vector<8x8xf32>
    %86 = arith.mulf %70, %85 : vector<8x8xf32>
    %87 = math.floor %86 : vector<8x8xf32>
    %cst_33 = arith.constant 4.000000e+00 : f32
    %88 = vector.broadcast %cst_33 : f32 to vector<8x8xf32>
    %89 = arith.mulf %87, %88 : vector<8x8xf32>
    %90 = arith.subf %72, %89 : vector<8x8xf32>
    %91 = arith.cmpf oeq, %78, %84 : vector<8x8xf32>
    %cst_34 = arith.constant 0.000000e+00 : f32
    %92 = vector.broadcast %cst_34 : f32 to vector<8x8xf32>
    %93 = arith.cmpf oge, %90, %92 : vector<8x8xf32>
    %94 = arith.andi %91, %93 : vector<8x8xi1>
    %cst_35 = arith.constant 4.000000e+00 : f32
    %95 = vector.broadcast %cst_35 : f32 to vector<8x8xf32>
    %96 = arith.cmpf olt, %90, %95 : vector<8x8xf32>
    %97 = arith.andi %94, %96 : vector<8x8xi1>
    %cst_36 = arith.constant 1.000000e+00 : f32
    %cst_37 = arith.constant 0.000000e+00 : f32
    %98 = vector.broadcast %cst_36 : f32 to vector<8x8xf32>
    %99 = vector.broadcast %cst_37 : f32 to vector<8x8xf32>
    %100 = arith.select %97, %98, %99 : vector<8x8xi1>, vector<8x8xf32>
    %cst_38 = arith.constant dense<0.000000e+00> : vector<8x16xf32>
    %101 = tpu.matmul %100, %61, %cst_38 {dimension_numbers = #tpu.dot_dimension_numbers<[1], [0], [0], [1], [0, 0, 1, 1], [], []>} : vector<8x8xf32>, vector<8x16xf32>, vector<8x16xf32> -> vector<8x16xf32>
    %cst_39 = arith.constant dense<0.000000e+00> : vector<8x16xf32>
    %102 = tpu.matmul %100, %68, %cst_39 {dimension_numbers = #tpu.dot_dimension_numbers<[1], [0], [0], [1], [0, 0, 1, 1], [], []>} : vector<8x8xf32>, vector<8x16xf32>, vector<8x16xf32> -> vector<8x16xf32>
    %103 = arith.truncf %101 : vector<8x16xf32> to vector<8x16xbf16>
    %c336 = arith.constant 336 : index
    %c0_40 = arith.constant 0 : index
    %104 = vector.load %arg2[%c336, %c0_40] : memref<416x128xbf16, #tpu.memory_space<vmem>>, vector<16x32xbf16>
    %cst_41 = arith.constant dense<0.000000e+00> : vector<8x32xf32>
    %105 = tpu.matmul %103, %104, %cst_41 {dimension_numbers = #tpu.dot_dimension_numbers<[1], [0], [0], [1], [0, 0, 1, 1], [], []>} : vector<8x16xbf16>, vector<16x32xbf16>, vector<8x32xf32> -> vector<8x32xf32>
    %106 = arith.truncf %102 : vector<8x16xf32> to vector<8x16xbf16>
    %c352 = arith.constant 352 : index
    %c0_42 = arith.constant 0 : index
    %107 = vector.load %arg2[%c352, %c0_42] : memref<416x128xbf16, #tpu.memory_space<vmem>>, vector<16x32xbf16>
    %cst_43 = arith.constant dense<0.000000e+00> : vector<8x32xf32>
    %108 = tpu.matmul %106, %107, %cst_43 {dimension_numbers = #tpu.dot_dimension_numbers<[1], [0], [0], [1], [0, 0, 1, 1], [], []>} : vector<8x16xbf16>, vector<16x32xbf16>, vector<8x32xf32> -> vector<8x32xf32>
    %109 = arith.addf %105, %108 : vector<8x32xf32>
    %c5 = arith.constant 5 : index
    %c0_44 = arith.constant 0 : index
    %110 = vector.load %arg3[%c5, %c0_44] : memref<8x128xf32, #tpu.memory_space<vmem>>, vector<1x32xf32>
    %111 = vector.broadcast %110 : vector<1x32xf32> to vector<8x32xf32>
    %112 = arith.addf %109, %111 : vector<8x32xf32>
    %cst_45 = arith.constant 0.000000e+00 : f32
    %113 = vector.broadcast %cst_45 : f32 to vector<8x32xf32>
    %114 = arith.maximumf %112, %113 : vector<8x32xf32>
    %115 = arith.truncf %114 : vector<8x32xf32> to vector<8x32xbf16>
    %c368 = arith.constant 368 : index
    %c0_46 = arith.constant 0 : index
    %116 = vector.load %arg2[%c368, %c0_46] : memref<416x128xbf16, #tpu.memory_space<vmem>>, vector<32x8xbf16>
    %cst_47 = arith.constant dense<0.000000e+00> : vector<8x8xf32>
    %117 = tpu.matmul %115, %116, %cst_47 {dimension_numbers = #tpu.dot_dimension_numbers<[1], [0], [0], [1], [0, 0, 1, 1], [], []>} : vector<8x32xbf16>, vector<32x8xbf16>, vector<8x8xf32> -> vector<8x8xf32>
    %c6 = arith.constant 6 : index
    %c0_48 = arith.constant 0 : index
    %118 = vector.load %arg3[%c6, %c0_48] : memref<8x128xf32, #tpu.memory_space<vmem>>, vector<1x8xf32>
    %119 = vector.broadcast %118 : vector<1x8xf32> to vector<8x8xf32>
    %120 = arith.addf %117, %119 : vector<8x8xf32>
    %cst_49 = arith.constant 0.000000e+00 : f32
    %121 = vector.broadcast %cst_49 : f32 to vector<8x8xf32>
    %122 = arith.maximumf %120, %121 : vector<8x8xf32>
    %123 = arith.truncf %122 : vector<8x8xf32> to vector<8x8xbf16>
    %c400 = arith.constant 400 : index
    %c0_50 = arith.constant 0 : index
    %124 = vector.load %arg2[%c400, %c0_50] : memref<416x128xbf16, #tpu.memory_space<vmem>>, vector<8x16xbf16>
    %cst_51 = arith.constant dense<0.000000e+00> : vector<8x16xf32>
    %125 = tpu.matmul %123, %124, %cst_51 {dimension_numbers = #tpu.dot_dimension_numbers<[1], [0], [0], [1], [0, 0, 1, 1], [], []>} : vector<8x8xbf16>, vector<8x16xbf16>, vector<8x16xf32> -> vector<8x16xf32>
    %c7 = arith.constant 7 : index
    %c0_52 = arith.constant 0 : index
    %126 = vector.load %arg3[%c7, %c0_52] : memref<8x128xf32, #tpu.memory_space<vmem>>, vector<1x16xf32>
    %127 = vector.broadcast %126 : vector<1x16xf32> to vector<8x16xf32>
    %128 = arith.addf %125, %127 : vector<8x16xf32>
    %c0_53 = arith.constant 0 : index
    %c0_54 = arith.constant 0 : index
    %129 = vector.load %arg4[%c0_53, %c0_54] : memref<8x16xf32, #tpu.memory_space<vmem>>, vector<8x16xf32>
    tpu.vector_store %arg4[%c0_53, %c0_54], %128 {strides = array<i32>} : memref<8x16xf32, #tpu.memory_space<vmem>>, vector<8x16xf32>,
    return
  }
  func.func @transform_0(%arg0: i32) -> (i32, i32) {
    %c0_i32 = arith.constant 0 : i32
    %c0_i32_0 = arith.constant 0 : i32
    return %arg0, %c0_i32 : i32, i32
  }
  func.func @transform_1(%arg0: i32) -> (i32, i32) {
    %c0_i32 = arith.constant 0 : i32
    %c0_i32_0 = arith.constant 0 : i32
    %c0_i32_1 = arith.constant 0 : i32
    return %c0_i32, %c0_i32_0 : i32, i32
  }
  func.func @transform_2(%arg0: i32) -> (i32, i32) {
    %c0_i32 = arith.constant 0 : i32
    %c0_i32_0 = arith.constant 0 : i32
    %c0_i32_1 = arith.constant 0 : i32
    return %c0_i32, %c0_i32_0 : i32, i32
  }
  func.func @transform_3(%arg0: i32) -> (i32, i32) {
    %c0_i32 = arith.constant 0 : i32
    %c0_i32_0 = arith.constant 0 : i32
    return %arg0, %c0_i32 : i32, i32
  }
}

module attributes {stable_mosaic.version = 11 : i64} {
  func.func @_graph_block_kernel(%arg0: i32, %arg1: memref<32x5xf32, #tpu.memory_space<vmem>>, %arg2: memref<256x40xbf16, #tpu.memory_space<vmem>>, %arg3: memref<8x40xf32, #tpu.memory_space<vmem>>, %arg4: memref<8x16xf32, #tpu.memory_space<vmem>>) attributes {dimension_semantics = [#tpu.dimension_semantics<parallel>], iteration_bounds = array<i64: 1>, scalar_prefetch = 0 : i64, scratch_operands = 0 : i64, tpu.core_type = #tpu.core_type<tc>, window_params = [{transform_indices = @transform_0, window_bounds = array<i64: 32, 5>}, {pipeline_mode = #tpu.pipeline_mode<synchronous>, transform_indices = @transform_1, window_bounds = array<i64: 256, 40>}, {pipeline_mode = #tpu.pipeline_mode<synchronous>, transform_indices = @transform_2, window_bounds = array<i64: 8, 40>}, {transform_indices = @transform_3, window_bounds = array<i64: 8, 16>}]} {
    %c0 = arith.constant 0 : index
    %c0_0 = arith.constant 0 : index
    %0 = vector.load %arg1[%c0, %c0_0] : memref<32x5xf32, #tpu.memory_space<vmem>>, vector<32x5xf32>
    %1 = arith.truncf %0 : vector<32x5xf32> to vector<32x5xbf16>
    %c0_1 = arith.constant 0 : index
    %c0_2 = arith.constant 0 : index
    %2 = vector.load %arg2[%c0_1, %c0_2] : memref<256x40xbf16, #tpu.memory_space<vmem>>, vector<5x40xbf16>
    %cst = arith.constant dense<0.000000e+00> : vector<32x40xf32>
    %3 = tpu.matmul %1, %2, %cst {dimension_numbers = #tpu.dot_dimension_numbers<[1], [0], [0], [1], [0, 0, 1, 1], [], []>} : vector<32x5xbf16>, vector<5x40xbf16>, vector<32x40xf32> -> vector<32x40xf32>
    %c0_3 = arith.constant 0 : index
    %c0_4 = arith.constant 0 : index
    %4 = vector.load %arg3[%c0_3, %c0_4] : memref<8x40xf32, #tpu.memory_space<vmem>>, vector<1x40xf32>
    %5 = vector.broadcast %4 : vector<1x40xf32> to vector<32x40xf32>
    %6 = arith.addf %3, %5 : vector<32x40xf32>
    %cst_5 = arith.constant 0.000000e+00 : f32
    %7 = vector.broadcast %cst_5 : f32 to vector<32x40xf32>
    %8 = arith.maximumf %6, %7 : vector<32x40xf32>
    %9 = arith.truncf %8 : vector<32x40xf32> to vector<32x40xbf16>
    %c16 = arith.constant 16 : index
    %c0_6 = arith.constant 0 : index
    %10 = vector.load %arg2[%c16, %c0_6] : memref<256x40xbf16, #tpu.memory_space<vmem>>, vector<40x40xbf16>
    %cst_7 = arith.constant dense<0.000000e+00> : vector<32x40xf32>
    %11 = tpu.matmul %9, %10, %cst_7 {dimension_numbers = #tpu.dot_dimension_numbers<[1], [0], [0], [1], [0, 0, 1, 1], [], []>} : vector<32x40xbf16>, vector<40x40xbf16>, vector<32x40xf32> -> vector<32x40xf32>
    %c1 = arith.constant 1 : index
    %c0_8 = arith.constant 0 : index
    %12 = vector.load %arg3[%c1, %c0_8] : memref<8x40xf32, #tpu.memory_space<vmem>>, vector<1x40xf32>
    %13 = vector.broadcast %12 : vector<1x40xf32> to vector<32x40xf32>
    %14 = arith.addf %11, %13 : vector<32x40xf32>
    %cst_9 = arith.constant 0.000000e+00 : f32
    %15 = vector.broadcast %cst_9 : f32 to vector<32x40xf32>
    %16 = arith.maximumf %14, %15 : vector<32x40xf32>
    %17 = arith.truncf %16 : vector<32x40xf32> to vector<32x40xbf16>
    %c64 = arith.constant 64 : index
    %c0_10 = arith.constant 0 : index
    %18 = vector.load %arg2[%c64, %c0_10] : memref<256x40xbf16, #tpu.memory_space<vmem>>, vector<40x32xbf16>
    %cst_11 = arith.constant dense<0.000000e+00> : vector<32x32xf32>
    %19 = tpu.matmul %17, %18, %cst_11 {dimension_numbers = #tpu.dot_dimension_numbers<[1], [0], [0], [1], [0, 0, 1, 1], [], []>} : vector<32x40xbf16>, vector<40x32xbf16>, vector<32x32xf32> -> vector<32x32xf32>
    %c2 = arith.constant 2 : index
    %c0_12 = arith.constant 0 : index
    %20 = vector.load %arg3[%c2, %c0_12] : memref<8x40xf32, #tpu.memory_space<vmem>>, vector<1x32xf32>
    %21 = vector.broadcast %20 : vector<1x32xf32> to vector<32x32xf32>
    %22 = arith.addf %19, %21 : vector<32x32xf32>
    %23 = tpu.iota {dimensions = array<i32: 0>} : vector<32x32xi32>
    %24 = arith.sitofp %23 : vector<32x32xi32> to vector<32x32xf32>
    %25 = tpu.iota {dimensions = array<i32: 1>} : vector<32x32xi32>
    %26 = arith.sitofp %25 : vector<32x32xi32> to vector<32x32xf32>
    %cst_13 = arith.constant 2.500000e-01 : f32
    %27 = vector.broadcast %cst_13 : f32 to vector<32x32xf32>
    %28 = arith.mulf %24, %27 : vector<32x32xf32>
    %29 = math.floor %28 : vector<32x32xf32>
    %cst_14 = arith.constant 2.500000e-01 : f32
    %30 = vector.broadcast %cst_14 : f32 to vector<32x32xf32>
    %31 = arith.mulf %26, %30 : vector<32x32xf32>
    %32 = math.floor %31 : vector<32x32xf32>
    %33 = arith.cmpf oeq, %29, %32 : vector<32x32xf32>
    %34 = arith.extui %33 : vector<32x32xi1> to vector<32x32xi32>
    %35 = arith.sitofp %34 : vector<32x32xi32> to vector<32x32xf32>
    %36 = arith.truncf %22 : vector<32x32xf32> to vector<32x32xbf16>
    %cst_15 = arith.constant dense<0.000000e+00> : vector<32x32xf32>
    %37 = tpu.matmul %36, %36, %cst_15 {dimension_numbers = #tpu.dot_dimension_numbers<[1], [1], [0], [0], [0, 0, 1, 0], [], []>} : vector<32x32xbf16>, vector<32x32xbf16>, vector<32x32xf32> -> vector<32x32xf32>
    %cst_16 = arith.constant 0.000000e+00 : f32
    %38 = vector.broadcast %cst_16 : f32 to vector<32x32xf32>
    %39 = arith.maximumf %37, %38 : vector<32x32xf32>
    %40 = arith.mulf %39, %35 : vector<32x32xf32>
    %cst_17 = arith.constant dense<0xFF800000> : vector<32xf32>
    %41 = vector.multi_reduction <maximumf>, %40, %cst_17 [1] : vector<32x32xf32> to vector<32xf32>
    %42 = vector.shape_cast %41 : vector<32xf32> to vector<32x1xf32>
    %43 = vector.broadcast %42 : vector<32x1xf32> to vector<32x32xf32>
    %44 = arith.subf %40, %43 : vector<32x32xf32>
    %45 = math.exp %44 : vector<32x32xf32>
    %46 = arith.mulf %45, %35 : vector<32x32xf32>
    %cst_18 = arith.constant dense<0.000000e+00> : vector<32xf32>
    %47 = vector.multi_reduction <add>, %46, %cst_18 [1] : vector<32x32xf32> to vector<32xf32>
    %48 = vector.shape_cast %47 : vector<32xf32> to vector<32x1xf32>
    %49 = tpu.reciprocal %48 {approx = true} : vector<32x1xf32> -> vector<32x1xf32>
    %50 = vector.broadcast %49 : vector<32x1xf32> to vector<32x32xf32>
    %51 = arith.mulf %46, %50 : vector<32x32xf32>
    %52 = arith.truncf %51 : vector<32x32xf32> to vector<32x32xbf16>
    %cst_19 = arith.constant dense<0.000000e+00> : vector<32x32xf32>
    %53 = tpu.matmul %52, %36, %cst_19 {dimension_numbers = #tpu.dot_dimension_numbers<[1], [0], [0], [1], [0, 0, 1, 1], [], []>} : vector<32x32xbf16>, vector<32x32xbf16>, vector<32x32xf32> -> vector<32x32xf32>
    %54 = arith.truncf %53 : vector<32x32xf32> to vector<32x32xbf16>
    %c112 = arith.constant 112 : index
    %c0_20 = arith.constant 0 : index
    %55 = vector.load %arg2[%c112, %c0_20] : memref<256x40xbf16, #tpu.memory_space<vmem>>, vector<32x16xbf16>
    %cst_21 = arith.constant dense<0.000000e+00> : vector<32x16xf32>
    %56 = tpu.matmul %54, %55, %cst_21 {dimension_numbers = #tpu.dot_dimension_numbers<[1], [0], [0], [1], [0, 0, 1, 1], [], []>} : vector<32x32xbf16>, vector<32x16xbf16>, vector<32x16xf32> -> vector<32x16xf32>
    %c3 = arith.constant 3 : index
    %c0_22 = arith.constant 0 : index
    %57 = vector.load %arg3[%c3, %c0_22] : memref<8x40xf32, #tpu.memory_space<vmem>>, vector<1x16xf32>
    %58 = vector.broadcast %57 : vector<1x16xf32> to vector<32x16xf32>
    %59 = arith.addf %56, %58 : vector<32x16xf32>
    %cst_23 = arith.constant 0.000000e+00 : f32
    %60 = vector.broadcast %cst_23 : f32 to vector<32x16xf32>
    %61 = arith.maximumf %59, %60 : vector<32x16xf32>
    %c144 = arith.constant 144 : index
    %c0_24 = arith.constant 0 : index
    %62 = vector.load %arg2[%c144, %c0_24] : memref<256x40xbf16, #tpu.memory_space<vmem>>, vector<32x16xbf16>
    %cst_25 = arith.constant dense<0.000000e+00> : vector<32x16xf32>
    %63 = tpu.matmul %54, %62, %cst_25 {dimension_numbers = #tpu.dot_dimension_numbers<[1], [0], [0], [1], [0, 0, 1, 1], [], []>} : vector<32x32xbf16>, vector<32x16xbf16>, vector<32x16xf32> -> vector<32x16xf32>
    %c4 = arith.constant 4 : index
    %c0_26 = arith.constant 0 : index
    %64 = vector.load %arg3[%c4, %c0_26] : memref<8x40xf32, #tpu.memory_space<vmem>>, vector<1x16xf32>
    %65 = vector.broadcast %64 : vector<1x16xf32> to vector<32x16xf32>
    %66 = arith.addf %63, %65 : vector<32x16xf32>
    %cst_27 = arith.constant 0.000000e+00 : f32
    %67 = vector.broadcast %cst_27 : f32 to vector<32x16xf32>
    %68 = arith.maximumf %66, %67 : vector<32x16xf32>
    %69 = tpu.iota {dimensions = array<i32: 0>} : vector<8x32xi32>
    %70 = arith.sitofp %69 : vector<8x32xi32> to vector<8x32xf32>
    %71 = tpu.iota {dimensions = array<i32: 1>} : vector<8x32xi32>
    %72 = arith.sitofp %71 : vector<8x32xi32> to vector<8x32xf32>
    %cst_28 = arith.constant 2.500000e-01 : f32
    %73 = vector.broadcast %cst_28 : f32 to vector<8x32xf32>
    %74 = arith.mulf %70, %73 : vector<8x32xf32>
    %75 = math.floor %74 : vector<8x32xf32>
    %cst_29 = arith.constant 4.000000e+00 : f32
    %76 = vector.broadcast %cst_29 : f32 to vector<8x32xf32>
    %77 = arith.mulf %76, %75 : vector<8x32xf32>
    %78 = arith.subf %70, %77 : vector<8x32xf32>
    %cst_30 = arith.constant 2.500000e-01 : f32
    %79 = vector.broadcast %cst_30 : f32 to vector<8x32xf32>
    %80 = arith.mulf %72, %79 : vector<8x32xf32>
    %81 = math.floor %80 : vector<8x32xf32>
    %cst_31 = arith.constant 4.000000e+00 : f32
    %82 = vector.broadcast %cst_31 : f32 to vector<8x32xf32>
    %83 = arith.mulf %82, %81 : vector<8x32xf32>
    %84 = arith.subf %72, %83 : vector<8x32xf32>
    %cst_32 = arith.constant 2.500000e-01 : f32
    %85 = vector.broadcast %cst_32 : f32 to vector<8x32xf32>
    %86 = arith.mulf %70, %85 : vector<8x32xf32>
    %87 = math.floor %86 : vector<8x32xf32>
    %cst_33 = arith.constant 1.600000e+01 : f32
    %88 = vector.broadcast %cst_33 : f32 to vector<8x32xf32>
    %89 = arith.mulf %87, %88 : vector<8x32xf32>
    %90 = arith.subf %72, %89 : vector<8x32xf32>
    %91 = arith.cmpf oeq, %78, %84 : vector<8x32xf32>
    %cst_34 = arith.constant 0.000000e+00 : f32
    %92 = vector.broadcast %cst_34 : f32 to vector<8x32xf32>
    %93 = arith.cmpf oge, %90, %92 : vector<8x32xf32>
    %94 = arith.andi %91, %93 : vector<8x32xi1>
    %cst_35 = arith.constant 1.600000e+01 : f32
    %95 = vector.broadcast %cst_35 : f32 to vector<8x32xf32>
    %96 = arith.cmpf olt, %90, %95 : vector<8x32xf32>
    %97 = arith.andi %94, %96 : vector<8x32xi1>
    %cst_36 = arith.constant 2.500000e-01 : f32
    %cst_37 = arith.constant 0.000000e+00 : f32
    %98 = vector.broadcast %cst_36 : f32 to vector<8x32xf32>
    %99 = vector.broadcast %cst_37 : f32 to vector<8x32xf32>
    %100 = arith.select %97, %98, %99 : vector<8x32xi1>, vector<8x32xf32>
    %cst_38 = arith.constant dense<0.000000e+00> : vector<8x16xf32>
    %101 = tpu.matmul %100, %61, %cst_38 {dimension_numbers = #tpu.dot_dimension_numbers<[1], [0], [0], [1], [0, 0, 1, 1], [], []>} : vector<8x32xf32>, vector<32x16xf32>, vector<8x16xf32> -> vector<8x16xf32>
    %cst_39 = arith.constant dense<0.000000e+00> : vector<8x16xf32>
    %102 = tpu.matmul %100, %68, %cst_39 {dimension_numbers = #tpu.dot_dimension_numbers<[1], [0], [0], [1], [0, 0, 1, 1], [], []>} : vector<8x32xf32>, vector<32x16xf32>, vector<8x16xf32> -> vector<8x16xf32>
    %103 = arith.truncf %101 : vector<8x16xf32> to vector<8x16xbf16>
    %c176 = arith.constant 176 : index
    %c0_40 = arith.constant 0 : index
    %104 = vector.load %arg2[%c176, %c0_40] : memref<256x40xbf16, #tpu.memory_space<vmem>>, vector<16x32xbf16>
    %cst_41 = arith.constant dense<0.000000e+00> : vector<8x32xf32>
    %105 = tpu.matmul %103, %104, %cst_41 {dimension_numbers = #tpu.dot_dimension_numbers<[1], [0], [0], [1], [0, 0, 1, 1], [], []>} : vector<8x16xbf16>, vector<16x32xbf16>, vector<8x32xf32> -> vector<8x32xf32>
    %106 = arith.truncf %102 : vector<8x16xf32> to vector<8x16xbf16>
    %c192 = arith.constant 192 : index
    %c0_42 = arith.constant 0 : index
    %107 = vector.load %arg2[%c192, %c0_42] : memref<256x40xbf16, #tpu.memory_space<vmem>>, vector<16x32xbf16>
    %cst_43 = arith.constant dense<0.000000e+00> : vector<8x32xf32>
    %108 = tpu.matmul %106, %107, %cst_43 {dimension_numbers = #tpu.dot_dimension_numbers<[1], [0], [0], [1], [0, 0, 1, 1], [], []>} : vector<8x16xbf16>, vector<16x32xbf16>, vector<8x32xf32> -> vector<8x32xf32>
    %109 = arith.addf %105, %108 : vector<8x32xf32>
    %c5 = arith.constant 5 : index
    %c0_44 = arith.constant 0 : index
    %110 = vector.load %arg3[%c5, %c0_44] : memref<8x40xf32, #tpu.memory_space<vmem>>, vector<1x32xf32>
    %111 = vector.broadcast %110 : vector<1x32xf32> to vector<8x32xf32>
    %112 = arith.addf %109, %111 : vector<8x32xf32>
    %cst_45 = arith.constant 0.000000e+00 : f32
    %113 = vector.broadcast %cst_45 : f32 to vector<8x32xf32>
    %114 = arith.maximumf %112, %113 : vector<8x32xf32>
    %115 = arith.truncf %114 : vector<8x32xf32> to vector<8x32xbf16>
    %c208 = arith.constant 208 : index
    %c0_46 = arith.constant 0 : index
    %116 = vector.load %arg2[%c208, %c0_46] : memref<256x40xbf16, #tpu.memory_space<vmem>>, vector<32x8xbf16>
    %cst_47 = arith.constant dense<0.000000e+00> : vector<8x8xf32>
    %117 = tpu.matmul %115, %116, %cst_47 {dimension_numbers = #tpu.dot_dimension_numbers<[1], [0], [0], [1], [0, 0, 1, 1], [], []>} : vector<8x32xbf16>, vector<32x8xbf16>, vector<8x8xf32> -> vector<8x8xf32>
    %c6 = arith.constant 6 : index
    %c0_48 = arith.constant 0 : index
    %118 = vector.load %arg3[%c6, %c0_48] : memref<8x40xf32, #tpu.memory_space<vmem>>, vector<1x8xf32>
    %119 = vector.broadcast %118 : vector<1x8xf32> to vector<8x8xf32>
    %120 = arith.addf %117, %119 : vector<8x8xf32>
    %cst_49 = arith.constant 0.000000e+00 : f32
    %121 = vector.broadcast %cst_49 : f32 to vector<8x8xf32>
    %122 = arith.maximumf %120, %121 : vector<8x8xf32>
    %123 = arith.truncf %122 : vector<8x8xf32> to vector<8x8xbf16>
    %c240 = arith.constant 240 : index
    %c0_50 = arith.constant 0 : index
    %124 = vector.load %arg2[%c240, %c0_50] : memref<256x40xbf16, #tpu.memory_space<vmem>>, vector<8x16xbf16>
    %cst_51 = arith.constant dense<0.000000e+00> : vector<8x16xf32>
    %125 = tpu.matmul %123, %124, %cst_51 {dimension_numbers = #tpu.dot_dimension_numbers<[1], [0], [0], [1], [0, 0, 1, 1], [], []>} : vector<8x8xbf16>, vector<8x16xbf16>, vector<8x16xf32> -> vector<8x16xf32>
    %c7 = arith.constant 7 : index
    %c0_52 = arith.constant 0 : index
    %126 = vector.load %arg3[%c7, %c0_52] : memref<8x40xf32, #tpu.memory_space<vmem>>, vector<1x16xf32>
    %127 = vector.broadcast %126 : vector<1x16xf32> to vector<8x16xf32>
    %128 = arith.addf %125, %127 : vector<8x16xf32>
    %c0_53 = arith.constant 0 : index
    %c0_54 = arith.constant 0 : index
    %129 = vector.load %arg4[%c0_53, %c0_54] : memref<8x16xf32, #tpu.memory_space<vmem>>, vector<8x16xf32>
    tpu.vector_store %arg4[%c0_53, %c0_54], %128 {strides = array<i32>} : memref<8x16xf32, #tpu.memory_space<vmem>>, vector<8x16xf32>,
    return
  }
  func.func @transform_0(%arg0: i32) -> (i32, i32) {
    %c0_i32 = arith.constant 0 : i32
    %c0_i32_0 = arith.constant 0 : i32
    return %arg0, %c0_i32 : i32, i32
  }
  func.func @transform_1(%arg0: i32) -> (i32, i32) {
    %c0_i32 = arith.constant 0 : i32
    %c0_i32_0 = arith.constant 0 : i32
    %c0_i32_1 = arith.constant 0 : i32
    return %c0_i32, %c0_i32_0 : i32, i32
  }
  func.func @transform_2(%arg0: i32) -> (i32, i32) {
    %c0_i32 = arith.constant 0 : i32
    %c0_i32_0 = arith.constant 0 : i32
    %c0_i32_1 = arith.constant 0 : i32
    return %c0_i32, %c0_i32_0 : i32, i32
  }
  func.func @transform_3(%arg0: i32) -> (i32, i32) {
    %c0_i32 = arith.constant 0 : i32
    %c0_i32_0 = arith.constant 0 : i32
    return %arg0, %c0_i32 : i32, i32
  }
}

module attributes {stable_mosaic.version = 11 : i64} {
  func.func @_graph_block_kernel(%arg0: i32, %arg1: memref<16x8xf32, #tpu.memory_space<vmem>>, %arg2: memref<288x64xbf16, #tpu.memory_space<vmem>>, %arg3: memref<8x64xf32, #tpu.memory_space<vmem>>, %arg4: memref<8x16xf32, #tpu.memory_space<vmem>>) attributes {dimension_semantics = [#tpu.dimension_semantics<parallel>], iteration_bounds = array<i64: 1>, scalar_prefetch = 0 : i64, scratch_operands = 0 : i64, tpu.core_type = #tpu.core_type<tc>, window_params = [{transform_indices = @transform_0, window_bounds = array<i64: 16, 8>}, {pipeline_mode = #tpu.pipeline_mode<synchronous>, transform_indices = @transform_1, window_bounds = array<i64: 288, 64>}, {pipeline_mode = #tpu.pipeline_mode<synchronous>, transform_indices = @transform_2, window_bounds = array<i64: 8, 64>}, {transform_indices = @transform_3, window_bounds = array<i64: 8, 16>}]} {
    %c0 = arith.constant 0 : index
    %c0_0 = arith.constant 0 : index
    %0 = vector.load %arg1[%c0, %c0_0] : memref<16x8xf32, #tpu.memory_space<vmem>>, vector<16x8xf32>
    %1 = arith.truncf %0 : vector<16x8xf32> to vector<16x8xbf16>
    %c0_1 = arith.constant 0 : index
    %c0_2 = arith.constant 0 : index
    %2 = vector.load %arg2[%c0_1, %c0_2] : memref<288x64xbf16, #tpu.memory_space<vmem>>, vector<8x64xbf16>
    %cst = arith.constant dense<0.000000e+00> : vector<16x64xf32>
    %3 = tpu.matmul %1, %2, %cst {dimension_numbers = #tpu.dot_dimension_numbers<[1], [0], [0], [1], [0, 0, 1, 1], [], []>} : vector<16x8xbf16>, vector<8x64xbf16>, vector<16x64xf32> -> vector<16x64xf32>
    %c0_3 = arith.constant 0 : index
    %c0_4 = arith.constant 0 : index
    %4 = vector.load %arg3[%c0_3, %c0_4] : memref<8x64xf32, #tpu.memory_space<vmem>>, vector<1x64xf32>
    %5 = vector.broadcast %4 : vector<1x64xf32> to vector<16x64xf32>
    %6 = arith.addf %3, %5 : vector<16x64xf32>
    %cst_5 = arith.constant 0.000000e+00 : f32
    %7 = vector.broadcast %cst_5 : f32 to vector<16x64xf32>
    %8 = arith.maximumf %6, %7 : vector<16x64xf32>
    %9 = arith.truncf %8 : vector<16x64xf32> to vector<16x64xbf16>
    %c16 = arith.constant 16 : index
    %c0_6 = arith.constant 0 : index
    %10 = vector.load %arg2[%c16, %c0_6] : memref<288x64xbf16, #tpu.memory_space<vmem>>, vector<64x64xbf16>
    %cst_7 = arith.constant dense<0.000000e+00> : vector<16x64xf32>
    %11 = tpu.matmul %9, %10, %cst_7 {dimension_numbers = #tpu.dot_dimension_numbers<[1], [0], [0], [1], [0, 0, 1, 1], [], []>} : vector<16x64xbf16>, vector<64x64xbf16>, vector<16x64xf32> -> vector<16x64xf32>
    %c1 = arith.constant 1 : index
    %c0_8 = arith.constant 0 : index
    %12 = vector.load %arg3[%c1, %c0_8] : memref<8x64xf32, #tpu.memory_space<vmem>>, vector<1x64xf32>
    %13 = vector.broadcast %12 : vector<1x64xf32> to vector<16x64xf32>
    %14 = arith.addf %11, %13 : vector<16x64xf32>
    %cst_9 = arith.constant 0.000000e+00 : f32
    %15 = vector.broadcast %cst_9 : f32 to vector<16x64xf32>
    %16 = arith.maximumf %14, %15 : vector<16x64xf32>
    %17 = arith.truncf %16 : vector<16x64xf32> to vector<16x64xbf16>
    %c80 = arith.constant 80 : index
    %c0_10 = arith.constant 0 : index
    %18 = vector.load %arg2[%c80, %c0_10] : memref<288x64xbf16, #tpu.memory_space<vmem>>, vector<64x32xbf16>
    %cst_11 = arith.constant dense<0.000000e+00> : vector<16x32xf32>
    %19 = tpu.matmul %17, %18, %cst_11 {dimension_numbers = #tpu.dot_dimension_numbers<[1], [0], [0], [1], [0, 0, 1, 1], [], []>} : vector<16x64xbf16>, vector<64x32xbf16>, vector<16x32xf32> -> vector<16x32xf32>
    %c2 = arith.constant 2 : index
    %c0_12 = arith.constant 0 : index
    %20 = vector.load %arg3[%c2, %c0_12] : memref<8x64xf32, #tpu.memory_space<vmem>>, vector<1x32xf32>
    %21 = vector.broadcast %20 : vector<1x32xf32> to vector<16x32xf32>
    %22 = arith.addf %19, %21 : vector<16x32xf32>
    %23 = tpu.iota {dimensions = array<i32: 0>} : vector<16x16xi32>
    %24 = arith.sitofp %23 : vector<16x16xi32> to vector<16x16xf32>
    %25 = tpu.iota {dimensions = array<i32: 1>} : vector<16x16xi32>
    %26 = arith.sitofp %25 : vector<16x16xi32> to vector<16x16xf32>
    %cst_13 = arith.constant 2.500000e-01 : f32
    %27 = vector.broadcast %cst_13 : f32 to vector<16x16xf32>
    %28 = arith.mulf %24, %27 : vector<16x16xf32>
    %29 = math.floor %28 : vector<16x16xf32>
    %cst_14 = arith.constant 2.500000e-01 : f32
    %30 = vector.broadcast %cst_14 : f32 to vector<16x16xf32>
    %31 = arith.mulf %26, %30 : vector<16x16xf32>
    %32 = math.floor %31 : vector<16x16xf32>
    %33 = arith.cmpf oeq, %29, %32 : vector<16x16xf32>
    %34 = arith.extui %33 : vector<16x16xi1> to vector<16x16xi32>
    %35 = arith.sitofp %34 : vector<16x16xi32> to vector<16x16xf32>
    %36 = arith.truncf %22 : vector<16x32xf32> to vector<16x32xbf16>
    %cst_15 = arith.constant dense<0.000000e+00> : vector<16x16xf32>
    %37 = tpu.matmul %36, %36, %cst_15 {dimension_numbers = #tpu.dot_dimension_numbers<[1], [1], [0], [0], [0, 0, 1, 0], [], []>} : vector<16x32xbf16>, vector<16x32xbf16>, vector<16x16xf32> -> vector<16x16xf32>
    %cst_16 = arith.constant 0.000000e+00 : f32
    %38 = vector.broadcast %cst_16 : f32 to vector<16x16xf32>
    %39 = arith.maximumf %37, %38 : vector<16x16xf32>
    %40 = arith.mulf %39, %35 : vector<16x16xf32>
    %cst_17 = arith.constant dense<0xFF800000> : vector<16xf32>
    %41 = vector.multi_reduction <maximumf>, %40, %cst_17 [1] : vector<16x16xf32> to vector<16xf32>
    %42 = vector.shape_cast %41 : vector<16xf32> to vector<16x1xf32>
    %43 = vector.broadcast %42 : vector<16x1xf32> to vector<16x16xf32>
    %44 = arith.subf %40, %43 : vector<16x16xf32>
    %45 = math.exp %44 : vector<16x16xf32>
    %46 = arith.mulf %45, %35 : vector<16x16xf32>
    %cst_18 = arith.constant dense<0.000000e+00> : vector<16xf32>
    %47 = vector.multi_reduction <add>, %46, %cst_18 [1] : vector<16x16xf32> to vector<16xf32>
    %48 = vector.shape_cast %47 : vector<16xf32> to vector<16x1xf32>
    %49 = tpu.reciprocal %48 {approx = true} : vector<16x1xf32> -> vector<16x1xf32>
    %50 = vector.broadcast %49 : vector<16x1xf32> to vector<16x16xf32>
    %51 = arith.mulf %46, %50 : vector<16x16xf32>
    %52 = arith.truncf %51 : vector<16x16xf32> to vector<16x16xbf16>
    %cst_19 = arith.constant dense<0.000000e+00> : vector<16x32xf32>
    %53 = tpu.matmul %52, %36, %cst_19 {dimension_numbers = #tpu.dot_dimension_numbers<[1], [0], [0], [1], [0, 0, 1, 1], [], []>} : vector<16x16xbf16>, vector<16x32xbf16>, vector<16x32xf32> -> vector<16x32xf32>
    %54 = arith.truncf %53 : vector<16x32xf32> to vector<16x32xbf16>
    %c144 = arith.constant 144 : index
    %c0_20 = arith.constant 0 : index
    %55 = vector.load %arg2[%c144, %c0_20] : memref<288x64xbf16, #tpu.memory_space<vmem>>, vector<32x16xbf16>
    %cst_21 = arith.constant dense<0.000000e+00> : vector<16x16xf32>
    %56 = tpu.matmul %54, %55, %cst_21 {dimension_numbers = #tpu.dot_dimension_numbers<[1], [0], [0], [1], [0, 0, 1, 1], [], []>} : vector<16x32xbf16>, vector<32x16xbf16>, vector<16x16xf32> -> vector<16x16xf32>
    %c3 = arith.constant 3 : index
    %c0_22 = arith.constant 0 : index
    %57 = vector.load %arg3[%c3, %c0_22] : memref<8x64xf32, #tpu.memory_space<vmem>>, vector<1x16xf32>
    %58 = vector.broadcast %57 : vector<1x16xf32> to vector<16x16xf32>
    %59 = arith.addf %56, %58 : vector<16x16xf32>
    %cst_23 = arith.constant 0.000000e+00 : f32
    %60 = vector.broadcast %cst_23 : f32 to vector<16x16xf32>
    %61 = arith.maximumf %59, %60 : vector<16x16xf32>
    %c176 = arith.constant 176 : index
    %c0_24 = arith.constant 0 : index
    %62 = vector.load %arg2[%c176, %c0_24] : memref<288x64xbf16, #tpu.memory_space<vmem>>, vector<32x16xbf16>
    %cst_25 = arith.constant dense<0.000000e+00> : vector<16x16xf32>
    %63 = tpu.matmul %54, %62, %cst_25 {dimension_numbers = #tpu.dot_dimension_numbers<[1], [0], [0], [1], [0, 0, 1, 1], [], []>} : vector<16x32xbf16>, vector<32x16xbf16>, vector<16x16xf32> -> vector<16x16xf32>
    %c4 = arith.constant 4 : index
    %c0_26 = arith.constant 0 : index
    %64 = vector.load %arg3[%c4, %c0_26] : memref<8x64xf32, #tpu.memory_space<vmem>>, vector<1x16xf32>
    %65 = vector.broadcast %64 : vector<1x16xf32> to vector<16x16xf32>
    %66 = arith.addf %63, %65 : vector<16x16xf32>
    %cst_27 = arith.constant 0.000000e+00 : f32
    %67 = vector.broadcast %cst_27 : f32 to vector<16x16xf32>
    %68 = arith.maximumf %66, %67 : vector<16x16xf32>
    %69 = tpu.iota {dimensions = array<i32: 0>} : vector<8x16xi32>
    %70 = arith.sitofp %69 : vector<8x16xi32> to vector<8x16xf32>
    %71 = tpu.iota {dimensions = array<i32: 1>} : vector<8x16xi32>
    %72 = arith.sitofp %71 : vector<8x16xi32> to vector<8x16xf32>
    %cst_28 = arith.constant 2.500000e-01 : f32
    %73 = vector.broadcast %cst_28 : f32 to vector<8x16xf32>
    %74 = arith.mulf %70, %73 : vector<8x16xf32>
    %75 = math.floor %74 : vector<8x16xf32>
    %cst_29 = arith.constant 4.000000e+00 : f32
    %76 = vector.broadcast %cst_29 : f32 to vector<8x16xf32>
    %77 = arith.mulf %76, %75 : vector<8x16xf32>
    %78 = arith.subf %70, %77 : vector<8x16xf32>
    %cst_30 = arith.constant 2.500000e-01 : f32
    %79 = vector.broadcast %cst_30 : f32 to vector<8x16xf32>
    %80 = arith.mulf %72, %79 : vector<8x16xf32>
    %81 = math.floor %80 : vector<8x16xf32>
    %cst_31 = arith.constant 4.000000e+00 : f32
    %82 = vector.broadcast %cst_31 : f32 to vector<8x16xf32>
    %83 = arith.mulf %82, %81 : vector<8x16xf32>
    %84 = arith.subf %72, %83 : vector<8x16xf32>
    %cst_32 = arith.constant 2.500000e-01 : f32
    %85 = vector.broadcast %cst_32 : f32 to vector<8x16xf32>
    %86 = arith.mulf %70, %85 : vector<8x16xf32>
    %87 = math.floor %86 : vector<8x16xf32>
    %cst_33 = arith.constant 8.000000e+00 : f32
    %88 = vector.broadcast %cst_33 : f32 to vector<8x16xf32>
    %89 = arith.mulf %87, %88 : vector<8x16xf32>
    %90 = arith.subf %72, %89 : vector<8x16xf32>
    %91 = arith.cmpf oeq, %78, %84 : vector<8x16xf32>
    %cst_34 = arith.constant 0.000000e+00 : f32
    %92 = vector.broadcast %cst_34 : f32 to vector<8x16xf32>
    %93 = arith.cmpf oge, %90, %92 : vector<8x16xf32>
    %94 = arith.andi %91, %93 : vector<8x16xi1>
    %cst_35 = arith.constant 8.000000e+00 : f32
    %95 = vector.broadcast %cst_35 : f32 to vector<8x16xf32>
    %96 = arith.cmpf olt, %90, %95 : vector<8x16xf32>
    %97 = arith.andi %94, %96 : vector<8x16xi1>
    %cst_36 = arith.constant 5.000000e-01 : f32
    %cst_37 = arith.constant 0.000000e+00 : f32
    %98 = vector.broadcast %cst_36 : f32 to vector<8x16xf32>
    %99 = vector.broadcast %cst_37 : f32 to vector<8x16xf32>
    %100 = arith.select %97, %98, %99 : vector<8x16xi1>, vector<8x16xf32>
    %cst_38 = arith.constant dense<0.000000e+00> : vector<8x16xf32>
    %101 = tpu.matmul %100, %61, %cst_38 {dimension_numbers = #tpu.dot_dimension_numbers<[1], [0], [0], [1], [0, 0, 1, 1], [], []>} : vector<8x16xf32>, vector<16x16xf32>, vector<8x16xf32> -> vector<8x16xf32>
    %cst_39 = arith.constant dense<0.000000e+00> : vector<8x16xf32>
    %102 = tpu.matmul %100, %68, %cst_39 {dimension_numbers = #tpu.dot_dimension_numbers<[1], [0], [0], [1], [0, 0, 1, 1], [], []>} : vector<8x16xf32>, vector<16x16xf32>, vector<8x16xf32> -> vector<8x16xf32>
    %103 = arith.truncf %101 : vector<8x16xf32> to vector<8x16xbf16>
    %c208 = arith.constant 208 : index
    %c0_40 = arith.constant 0 : index
    %104 = vector.load %arg2[%c208, %c0_40] : memref<288x64xbf16, #tpu.memory_space<vmem>>, vector<16x32xbf16>
    %cst_41 = arith.constant dense<0.000000e+00> : vector<8x32xf32>
    %105 = tpu.matmul %103, %104, %cst_41 {dimension_numbers = #tpu.dot_dimension_numbers<[1], [0], [0], [1], [0, 0, 1, 1], [], []>} : vector<8x16xbf16>, vector<16x32xbf16>, vector<8x32xf32> -> vector<8x32xf32>
    %106 = arith.truncf %102 : vector<8x16xf32> to vector<8x16xbf16>
    %c224 = arith.constant 224 : index
    %c0_42 = arith.constant 0 : index
    %107 = vector.load %arg2[%c224, %c0_42] : memref<288x64xbf16, #tpu.memory_space<vmem>>, vector<16x32xbf16>
    %cst_43 = arith.constant dense<0.000000e+00> : vector<8x32xf32>
    %108 = tpu.matmul %106, %107, %cst_43 {dimension_numbers = #tpu.dot_dimension_numbers<[1], [0], [0], [1], [0, 0, 1, 1], [], []>} : vector<8x16xbf16>, vector<16x32xbf16>, vector<8x32xf32> -> vector<8x32xf32>
    %109 = arith.addf %105, %108 : vector<8x32xf32>
    %c5 = arith.constant 5 : index
    %c0_44 = arith.constant 0 : index
    %110 = vector.load %arg3[%c5, %c0_44] : memref<8x64xf32, #tpu.memory_space<vmem>>, vector<1x32xf32>
    %111 = vector.broadcast %110 : vector<1x32xf32> to vector<8x32xf32>
    %112 = arith.addf %109, %111 : vector<8x32xf32>
    %cst_45 = arith.constant 0.000000e+00 : f32
    %113 = vector.broadcast %cst_45 : f32 to vector<8x32xf32>
    %114 = arith.maximumf %112, %113 : vector<8x32xf32>
    %115 = arith.truncf %114 : vector<8x32xf32> to vector<8x32xbf16>
    %c240 = arith.constant 240 : index
    %c0_46 = arith.constant 0 : index
    %116 = vector.load %arg2[%c240, %c0_46] : memref<288x64xbf16, #tpu.memory_space<vmem>>, vector<32x8xbf16>
    %cst_47 = arith.constant dense<0.000000e+00> : vector<8x8xf32>
    %117 = tpu.matmul %115, %116, %cst_47 {dimension_numbers = #tpu.dot_dimension_numbers<[1], [0], [0], [1], [0, 0, 1, 1], [], []>} : vector<8x32xbf16>, vector<32x8xbf16>, vector<8x8xf32> -> vector<8x8xf32>
    %c6 = arith.constant 6 : index
    %c0_48 = arith.constant 0 : index
    %118 = vector.load %arg3[%c6, %c0_48] : memref<8x64xf32, #tpu.memory_space<vmem>>, vector<1x8xf32>
    %119 = vector.broadcast %118 : vector<1x8xf32> to vector<8x8xf32>
    %120 = arith.addf %117, %119 : vector<8x8xf32>
    %cst_49 = arith.constant 0.000000e+00 : f32
    %121 = vector.broadcast %cst_49 : f32 to vector<8x8xf32>
    %122 = arith.maximumf %120, %121 : vector<8x8xf32>
    %123 = arith.truncf %122 : vector<8x8xf32> to vector<8x8xbf16>
    %c272 = arith.constant 272 : index
    %c0_50 = arith.constant 0 : index
    %124 = vector.load %arg2[%c272, %c0_50] : memref<288x64xbf16, #tpu.memory_space<vmem>>, vector<8x16xbf16>
    %cst_51 = arith.constant dense<0.000000e+00> : vector<8x16xf32>
    %125 = tpu.matmul %123, %124, %cst_51 {dimension_numbers = #tpu.dot_dimension_numbers<[1], [0], [0], [1], [0, 0, 1, 1], [], []>} : vector<8x8xbf16>, vector<8x16xbf16>, vector<8x16xf32> -> vector<8x16xf32>
    %c7 = arith.constant 7 : index
    %c0_52 = arith.constant 0 : index
    %126 = vector.load %arg3[%c7, %c0_52] : memref<8x64xf32, #tpu.memory_space<vmem>>, vector<1x16xf32>
    %127 = vector.broadcast %126 : vector<1x16xf32> to vector<8x16xf32>
    %128 = arith.addf %125, %127 : vector<8x16xf32>
    %c0_53 = arith.constant 0 : index
    %c0_54 = arith.constant 0 : index
    %129 = vector.load %arg4[%c0_53, %c0_54] : memref<8x16xf32, #tpu.memory_space<vmem>>, vector<8x16xf32>
    tpu.vector_store %arg4[%c0_53, %c0_54], %128 {strides = array<i32>} : memref<8x16xf32, #tpu.memory_space<vmem>>, vector<8x16xf32>,
    return
  }
  func.func @transform_0(%arg0: i32) -> (i32, i32) {
    %c0_i32 = arith.constant 0 : i32
    %c0_i32_0 = arith.constant 0 : i32
    return %arg0, %c0_i32 : i32, i32
  }
  func.func @transform_1(%arg0: i32) -> (i32, i32) {
    %c0_i32 = arith.constant 0 : i32
    %c0_i32_0 = arith.constant 0 : i32
    %c0_i32_1 = arith.constant 0 : i32
    return %c0_i32, %c0_i32_0 : i32, i32
  }
  func.func @transform_2(%arg0: i32) -> (i32, i32) {
    %c0_i32 = arith.constant 0 : i32
    %c0_i32_0 = arith.constant 0 : i32
    %c0_i32_1 = arith.constant 0 : i32
    return %c0_i32, %c0_i32_0 : i32, i32
  }
  func.func @transform_3(%arg0: i32) -> (i32, i32) {
    %c0_i32 = arith.constant 0 : i32
    %c0_i32_0 = arith.constant 0 : i32
    return %arg0, %c0_i32 : i32, i32
  }
}

module attributes {stable_mosaic.version = 11 : i64} {
  func.func @_graph_block_kernel(%arg0: i32, %arg1: memref<32x4xf32, #tpu.memory_space<vmem>>, %arg2: memref<224x32xbf16, #tpu.memory_space<vmem>>, %arg3: memref<8x32xf32, #tpu.memory_space<vmem>>, %arg4: memref<8x16xf32, #tpu.memory_space<vmem>>) attributes {dimension_semantics = [#tpu.dimension_semantics<parallel>], iteration_bounds = array<i64: 1>, scalar_prefetch = 0 : i64, scratch_operands = 0 : i64, tpu.core_type = #tpu.core_type<tc>, window_params = [{transform_indices = @transform_0, window_bounds = array<i64: 32, 4>}, {pipeline_mode = #tpu.pipeline_mode<synchronous>, transform_indices = @transform_1, window_bounds = array<i64: 224, 32>}, {pipeline_mode = #tpu.pipeline_mode<synchronous>, transform_indices = @transform_2, window_bounds = array<i64: 8, 32>}, {transform_indices = @transform_3, window_bounds = array<i64: 8, 16>}]} {
    %c0 = arith.constant 0 : index
    %c0_0 = arith.constant 0 : index
    %0 = vector.load %arg1[%c0, %c0_0] : memref<32x4xf32, #tpu.memory_space<vmem>>, vector<32x4xf32>
    %1 = arith.truncf %0 : vector<32x4xf32> to vector<32x4xbf16>
    %c0_1 = arith.constant 0 : index
    %c0_2 = arith.constant 0 : index
    %2 = vector.load %arg2[%c0_1, %c0_2] : memref<224x32xbf16, #tpu.memory_space<vmem>>, vector<4x32xbf16>
    %cst = arith.constant dense<0.000000e+00> : vector<32x32xf32>
    %3 = tpu.matmul %1, %2, %cst {dimension_numbers = #tpu.dot_dimension_numbers<[1], [0], [0], [1], [0, 0, 1, 1], [], []>} : vector<32x4xbf16>, vector<4x32xbf16>, vector<32x32xf32> -> vector<32x32xf32>
    %c0_3 = arith.constant 0 : index
    %c0_4 = arith.constant 0 : index
    %4 = vector.load %arg3[%c0_3, %c0_4] : memref<8x32xf32, #tpu.memory_space<vmem>>, vector<1x32xf32>
    %5 = vector.broadcast %4 : vector<1x32xf32> to vector<32x32xf32>
    %6 = arith.addf %3, %5 : vector<32x32xf32>
    %cst_5 = arith.constant 0.000000e+00 : f32
    %7 = vector.broadcast %cst_5 : f32 to vector<32x32xf32>
    %8 = arith.maximumf %6, %7 : vector<32x32xf32>
    %9 = arith.truncf %8 : vector<32x32xf32> to vector<32x32xbf16>
    %c16 = arith.constant 16 : index
    %c0_6 = arith.constant 0 : index
    %10 = vector.load %arg2[%c16, %c0_6] : memref<224x32xbf16, #tpu.memory_space<vmem>>, vector<32x32xbf16>
    %cst_7 = arith.constant dense<0.000000e+00> : vector<32x32xf32>
    %11 = tpu.matmul %9, %10, %cst_7 {dimension_numbers = #tpu.dot_dimension_numbers<[1], [0], [0], [1], [0, 0, 1, 1], [], []>} : vector<32x32xbf16>, vector<32x32xbf16>, vector<32x32xf32> -> vector<32x32xf32>
    %c1 = arith.constant 1 : index
    %c0_8 = arith.constant 0 : index
    %12 = vector.load %arg3[%c1, %c0_8] : memref<8x32xf32, #tpu.memory_space<vmem>>, vector<1x32xf32>
    %13 = vector.broadcast %12 : vector<1x32xf32> to vector<32x32xf32>
    %14 = arith.addf %11, %13 : vector<32x32xf32>
    %cst_9 = arith.constant 0.000000e+00 : f32
    %15 = vector.broadcast %cst_9 : f32 to vector<32x32xf32>
    %16 = arith.maximumf %14, %15 : vector<32x32xf32>
    %17 = arith.truncf %16 : vector<32x32xf32> to vector<32x32xbf16>
    %c48 = arith.constant 48 : index
    %c0_10 = arith.constant 0 : index
    %18 = vector.load %arg2[%c48, %c0_10] : memref<224x32xbf16, #tpu.memory_space<vmem>>, vector<32x32xbf16>
    %cst_11 = arith.constant dense<0.000000e+00> : vector<32x32xf32>
    %19 = tpu.matmul %17, %18, %cst_11 {dimension_numbers = #tpu.dot_dimension_numbers<[1], [0], [0], [1], [0, 0, 1, 1], [], []>} : vector<32x32xbf16>, vector<32x32xbf16>, vector<32x32xf32> -> vector<32x32xf32>
    %c2 = arith.constant 2 : index
    %c0_12 = arith.constant 0 : index
    %20 = vector.load %arg3[%c2, %c0_12] : memref<8x32xf32, #tpu.memory_space<vmem>>, vector<1x32xf32>
    %21 = vector.broadcast %20 : vector<1x32xf32> to vector<32x32xf32>
    %22 = arith.addf %19, %21 : vector<32x32xf32>
    %23 = tpu.iota {dimensions = array<i32: 0>} : vector<32x32xi32>
    %24 = arith.sitofp %23 : vector<32x32xi32> to vector<32x32xf32>
    %25 = tpu.iota {dimensions = array<i32: 1>} : vector<32x32xi32>
    %26 = arith.sitofp %25 : vector<32x32xi32> to vector<32x32xf32>
    %cst_13 = arith.constant 2.500000e-01 : f32
    %27 = vector.broadcast %cst_13 : f32 to vector<32x32xf32>
    %28 = arith.mulf %24, %27 : vector<32x32xf32>
    %29 = math.floor %28 : vector<32x32xf32>
    %cst_14 = arith.constant 2.500000e-01 : f32
    %30 = vector.broadcast %cst_14 : f32 to vector<32x32xf32>
    %31 = arith.mulf %26, %30 : vector<32x32xf32>
    %32 = math.floor %31 : vector<32x32xf32>
    %33 = arith.cmpf oeq, %29, %32 : vector<32x32xf32>
    %34 = arith.extui %33 : vector<32x32xi1> to vector<32x32xi32>
    %35 = arith.sitofp %34 : vector<32x32xi32> to vector<32x32xf32>
    %36 = arith.truncf %22 : vector<32x32xf32> to vector<32x32xbf16>
    %cst_15 = arith.constant dense<0.000000e+00> : vector<32x32xf32>
    %37 = tpu.matmul %36, %36, %cst_15 {dimension_numbers = #tpu.dot_dimension_numbers<[1], [1], [0], [0], [0, 0, 1, 0], [], []>} : vector<32x32xbf16>, vector<32x32xbf16>, vector<32x32xf32> -> vector<32x32xf32>
    %cst_16 = arith.constant 0.000000e+00 : f32
    %38 = vector.broadcast %cst_16 : f32 to vector<32x32xf32>
    %39 = arith.maximumf %37, %38 : vector<32x32xf32>
    %40 = arith.mulf %39, %35 : vector<32x32xf32>
    %cst_17 = arith.constant dense<0xFF800000> : vector<32xf32>
    %41 = vector.multi_reduction <maximumf>, %40, %cst_17 [1] : vector<32x32xf32> to vector<32xf32>
    %42 = vector.shape_cast %41 : vector<32xf32> to vector<32x1xf32>
    %43 = vector.broadcast %42 : vector<32x1xf32> to vector<32x32xf32>
    %44 = arith.subf %40, %43 : vector<32x32xf32>
    %45 = math.exp %44 : vector<32x32xf32>
    %46 = arith.mulf %45, %35 : vector<32x32xf32>
    %cst_18 = arith.constant dense<0.000000e+00> : vector<32xf32>
    %47 = vector.multi_reduction <add>, %46, %cst_18 [1] : vector<32x32xf32> to vector<32xf32>
    %48 = vector.shape_cast %47 : vector<32xf32> to vector<32x1xf32>
    %49 = tpu.reciprocal %48 {approx = true} : vector<32x1xf32> -> vector<32x1xf32>
    %50 = vector.broadcast %49 : vector<32x1xf32> to vector<32x32xf32>
    %51 = arith.mulf %46, %50 : vector<32x32xf32>
    %52 = arith.truncf %51 : vector<32x32xf32> to vector<32x32xbf16>
    %cst_19 = arith.constant dense<0.000000e+00> : vector<32x32xf32>
    %53 = tpu.matmul %52, %36, %cst_19 {dimension_numbers = #tpu.dot_dimension_numbers<[1], [0], [0], [1], [0, 0, 1, 1], [], []>} : vector<32x32xbf16>, vector<32x32xbf16>, vector<32x32xf32> -> vector<32x32xf32>
    %54 = arith.truncf %53 : vector<32x32xf32> to vector<32x32xbf16>
    %c80 = arith.constant 80 : index
    %c0_20 = arith.constant 0 : index
    %55 = vector.load %arg2[%c80, %c0_20] : memref<224x32xbf16, #tpu.memory_space<vmem>>, vector<32x16xbf16>
    %cst_21 = arith.constant dense<0.000000e+00> : vector<32x16xf32>
    %56 = tpu.matmul %54, %55, %cst_21 {dimension_numbers = #tpu.dot_dimension_numbers<[1], [0], [0], [1], [0, 0, 1, 1], [], []>} : vector<32x32xbf16>, vector<32x16xbf16>, vector<32x16xf32> -> vector<32x16xf32>
    %c3 = arith.constant 3 : index
    %c0_22 = arith.constant 0 : index
    %57 = vector.load %arg3[%c3, %c0_22] : memref<8x32xf32, #tpu.memory_space<vmem>>, vector<1x16xf32>
    %58 = vector.broadcast %57 : vector<1x16xf32> to vector<32x16xf32>
    %59 = arith.addf %56, %58 : vector<32x16xf32>
    %cst_23 = arith.constant 0.000000e+00 : f32
    %60 = vector.broadcast %cst_23 : f32 to vector<32x16xf32>
    %61 = arith.maximumf %59, %60 : vector<32x16xf32>
    %c112 = arith.constant 112 : index
    %c0_24 = arith.constant 0 : index
    %62 = vector.load %arg2[%c112, %c0_24] : memref<224x32xbf16, #tpu.memory_space<vmem>>, vector<32x16xbf16>
    %cst_25 = arith.constant dense<0.000000e+00> : vector<32x16xf32>
    %63 = tpu.matmul %54, %62, %cst_25 {dimension_numbers = #tpu.dot_dimension_numbers<[1], [0], [0], [1], [0, 0, 1, 1], [], []>} : vector<32x32xbf16>, vector<32x16xbf16>, vector<32x16xf32> -> vector<32x16xf32>
    %c4 = arith.constant 4 : index
    %c0_26 = arith.constant 0 : index
    %64 = vector.load %arg3[%c4, %c0_26] : memref<8x32xf32, #tpu.memory_space<vmem>>, vector<1x16xf32>
    %65 = vector.broadcast %64 : vector<1x16xf32> to vector<32x16xf32>
    %66 = arith.addf %63, %65 : vector<32x16xf32>
    %cst_27 = arith.constant 0.000000e+00 : f32
    %67 = vector.broadcast %cst_27 : f32 to vector<32x16xf32>
    %68 = arith.maximumf %66, %67 : vector<32x16xf32>
    %69 = tpu.iota {dimensions = array<i32: 0>} : vector<8x32xi32>
    %70 = arith.sitofp %69 : vector<8x32xi32> to vector<8x32xf32>
    %71 = tpu.iota {dimensions = array<i32: 1>} : vector<8x32xi32>
    %72 = arith.sitofp %71 : vector<8x32xi32> to vector<8x32xf32>
    %cst_28 = arith.constant 2.500000e-01 : f32
    %73 = vector.broadcast %cst_28 : f32 to vector<8x32xf32>
    %74 = arith.mulf %70, %73 : vector<8x32xf32>
    %75 = math.floor %74 : vector<8x32xf32>
    %cst_29 = arith.constant 4.000000e+00 : f32
    %76 = vector.broadcast %cst_29 : f32 to vector<8x32xf32>
    %77 = arith.mulf %76, %75 : vector<8x32xf32>
    %78 = arith.subf %70, %77 : vector<8x32xf32>
    %cst_30 = arith.constant 2.500000e-01 : f32
    %79 = vector.broadcast %cst_30 : f32 to vector<8x32xf32>
    %80 = arith.mulf %72, %79 : vector<8x32xf32>
    %81 = math.floor %80 : vector<8x32xf32>
    %cst_31 = arith.constant 4.000000e+00 : f32
    %82 = vector.broadcast %cst_31 : f32 to vector<8x32xf32>
    %83 = arith.mulf %82, %81 : vector<8x32xf32>
    %84 = arith.subf %72, %83 : vector<8x32xf32>
    %cst_32 = arith.constant 2.500000e-01 : f32
    %85 = vector.broadcast %cst_32 : f32 to vector<8x32xf32>
    %86 = arith.mulf %70, %85 : vector<8x32xf32>
    %87 = math.floor %86 : vector<8x32xf32>
    %cst_33 = arith.constant 1.600000e+01 : f32
    %88 = vector.broadcast %cst_33 : f32 to vector<8x32xf32>
    %89 = arith.mulf %87, %88 : vector<8x32xf32>
    %90 = arith.subf %72, %89 : vector<8x32xf32>
    %91 = arith.cmpf oeq, %78, %84 : vector<8x32xf32>
    %cst_34 = arith.constant 0.000000e+00 : f32
    %92 = vector.broadcast %cst_34 : f32 to vector<8x32xf32>
    %93 = arith.cmpf oge, %90, %92 : vector<8x32xf32>
    %94 = arith.andi %91, %93 : vector<8x32xi1>
    %cst_35 = arith.constant 1.600000e+01 : f32
    %95 = vector.broadcast %cst_35 : f32 to vector<8x32xf32>
    %96 = arith.cmpf olt, %90, %95 : vector<8x32xf32>
    %97 = arith.andi %94, %96 : vector<8x32xi1>
    %cst_36 = arith.constant 2.500000e-01 : f32
    %cst_37 = arith.constant 0.000000e+00 : f32
    %98 = vector.broadcast %cst_36 : f32 to vector<8x32xf32>
    %99 = vector.broadcast %cst_37 : f32 to vector<8x32xf32>
    %100 = arith.select %97, %98, %99 : vector<8x32xi1>, vector<8x32xf32>
    %cst_38 = arith.constant dense<0.000000e+00> : vector<8x16xf32>
    %101 = tpu.matmul %100, %61, %cst_38 {dimension_numbers = #tpu.dot_dimension_numbers<[1], [0], [0], [1], [0, 0, 1, 1], [], []>} : vector<8x32xf32>, vector<32x16xf32>, vector<8x16xf32> -> vector<8x16xf32>
    %cst_39 = arith.constant dense<0.000000e+00> : vector<8x16xf32>
    %102 = tpu.matmul %100, %68, %cst_39 {dimension_numbers = #tpu.dot_dimension_numbers<[1], [0], [0], [1], [0, 0, 1, 1], [], []>} : vector<8x32xf32>, vector<32x16xf32>, vector<8x16xf32> -> vector<8x16xf32>
    %103 = arith.truncf %101 : vector<8x16xf32> to vector<8x16xbf16>
    %c144 = arith.constant 144 : index
    %c0_40 = arith.constant 0 : index
    %104 = vector.load %arg2[%c144, %c0_40] : memref<224x32xbf16, #tpu.memory_space<vmem>>, vector<16x32xbf16>
    %cst_41 = arith.constant dense<0.000000e+00> : vector<8x32xf32>
    %105 = tpu.matmul %103, %104, %cst_41 {dimension_numbers = #tpu.dot_dimension_numbers<[1], [0], [0], [1], [0, 0, 1, 1], [], []>} : vector<8x16xbf16>, vector<16x32xbf16>, vector<8x32xf32> -> vector<8x32xf32>
    %106 = arith.truncf %102 : vector<8x16xf32> to vector<8x16xbf16>
    %c160 = arith.constant 160 : index
    %c0_42 = arith.constant 0 : index
    %107 = vector.load %arg2[%c160, %c0_42] : memref<224x32xbf16, #tpu.memory_space<vmem>>, vector<16x32xbf16>
    %cst_43 = arith.constant dense<0.000000e+00> : vector<8x32xf32>
    %108 = tpu.matmul %106, %107, %cst_43 {dimension_numbers = #tpu.dot_dimension_numbers<[1], [0], [0], [1], [0, 0, 1, 1], [], []>} : vector<8x16xbf16>, vector<16x32xbf16>, vector<8x32xf32> -> vector<8x32xf32>
    %109 = arith.addf %105, %108 : vector<8x32xf32>
    %c5 = arith.constant 5 : index
    %c0_44 = arith.constant 0 : index
    %110 = vector.load %arg3[%c5, %c0_44] : memref<8x32xf32, #tpu.memory_space<vmem>>, vector<1x32xf32>
    %111 = vector.broadcast %110 : vector<1x32xf32> to vector<8x32xf32>
    %112 = arith.addf %109, %111 : vector<8x32xf32>
    %cst_45 = arith.constant 0.000000e+00 : f32
    %113 = vector.broadcast %cst_45 : f32 to vector<8x32xf32>
    %114 = arith.maximumf %112, %113 : vector<8x32xf32>
    %115 = arith.truncf %114 : vector<8x32xf32> to vector<8x32xbf16>
    %c176 = arith.constant 176 : index
    %c0_46 = arith.constant 0 : index
    %116 = vector.load %arg2[%c176, %c0_46] : memref<224x32xbf16, #tpu.memory_space<vmem>>, vector<32x8xbf16>
    %cst_47 = arith.constant dense<0.000000e+00> : vector<8x8xf32>
    %117 = tpu.matmul %115, %116, %cst_47 {dimension_numbers = #tpu.dot_dimension_numbers<[1], [0], [0], [1], [0, 0, 1, 1], [], []>} : vector<8x32xbf16>, vector<32x8xbf16>, vector<8x8xf32> -> vector<8x8xf32>
    %c6 = arith.constant 6 : index
    %c0_48 = arith.constant 0 : index
    %118 = vector.load %arg3[%c6, %c0_48] : memref<8x32xf32, #tpu.memory_space<vmem>>, vector<1x8xf32>
    %119 = vector.broadcast %118 : vector<1x8xf32> to vector<8x8xf32>
    %120 = arith.addf %117, %119 : vector<8x8xf32>
    %cst_49 = arith.constant 0.000000e+00 : f32
    %121 = vector.broadcast %cst_49 : f32 to vector<8x8xf32>
    %122 = arith.maximumf %120, %121 : vector<8x8xf32>
    %123 = arith.truncf %122 : vector<8x8xf32> to vector<8x8xbf16>
    %c208 = arith.constant 208 : index
    %c0_50 = arith.constant 0 : index
    %124 = vector.load %arg2[%c208, %c0_50] : memref<224x32xbf16, #tpu.memory_space<vmem>>, vector<8x16xbf16>
    %cst_51 = arith.constant dense<0.000000e+00> : vector<8x16xf32>
    %125 = tpu.matmul %123, %124, %cst_51 {dimension_numbers = #tpu.dot_dimension_numbers<[1], [0], [0], [1], [0, 0, 1, 1], [], []>} : vector<8x8xbf16>, vector<8x16xbf16>, vector<8x16xf32> -> vector<8x16xf32>
    %c7 = arith.constant 7 : index
    %c0_52 = arith.constant 0 : index
    %126 = vector.load %arg3[%c7, %c0_52] : memref<8x32xf32, #tpu.memory_space<vmem>>, vector<1x16xf32>
    %127 = vector.broadcast %126 : vector<1x16xf32> to vector<8x16xf32>
    %128 = arith.addf %125, %127 : vector<8x16xf32>
    %c0_53 = arith.constant 0 : index
    %c0_54 = arith.constant 0 : index
    %129 = vector.load %arg4[%c0_53, %c0_54] : memref<8x16xf32, #tpu.memory_space<vmem>>, vector<8x16xf32>
    tpu.vector_store %arg4[%c0_53, %c0_54], %128 {strides = array<i32>} : memref<8x16xf32, #tpu.memory_space<vmem>>, vector<8x16xf32>,
    return
  }
  func.func @transform_0(%arg0: i32) -> (i32, i32) {
    %c0_i32 = arith.constant 0 : i32
    %c0_i32_0 = arith.constant 0 : i32
    return %arg0, %c0_i32 : i32, i32
  }
  func.func @transform_1(%arg0: i32) -> (i32, i32) {
    %c0_i32 = arith.constant 0 : i32
    %c0_i32_0 = arith.constant 0 : i32
    %c0_i32_1 = arith.constant 0 : i32
    return %c0_i32, %c0_i32_0 : i32, i32
  }
  func.func @transform_2(%arg0: i32) -> (i32, i32) {
    %c0_i32 = arith.constant 0 : i32
    %c0_i32_0 = arith.constant 0 : i32
    %c0_i32_1 = arith.constant 0 : i32
    return %c0_i32, %c0_i32_0 : i32, i32
  }
  func.func @transform_3(%arg0: i32) -> (i32, i32) {
    %c0_i32 = arith.constant 0 : i32
    %c0_i32_0 = arith.constant 0 : i32
    return %arg0, %c0_i32 : i32, i32
  }
}

module attributes {stable_mosaic.version = 11 : i64} {
  func.func @_graph_block_kernel(%arg0: i32, %arg1: memref<48x3xf32, #tpu.memory_space<vmem>>, %arg2: memref<224x32xbf16, #tpu.memory_space<vmem>>, %arg3: memref<8x32xf32, #tpu.memory_space<vmem>>, %arg4: memref<8x16xf32, #tpu.memory_space<vmem>>) attributes {dimension_semantics = [#tpu.dimension_semantics<parallel>], iteration_bounds = array<i64: 1>, scalar_prefetch = 0 : i64, scratch_operands = 0 : i64, tpu.core_type = #tpu.core_type<tc>, window_params = [{transform_indices = @transform_0, window_bounds = array<i64: 48, 3>}, {pipeline_mode = #tpu.pipeline_mode<synchronous>, transform_indices = @transform_1, window_bounds = array<i64: 224, 32>}, {pipeline_mode = #tpu.pipeline_mode<synchronous>, transform_indices = @transform_2, window_bounds = array<i64: 8, 32>}, {transform_indices = @transform_3, window_bounds = array<i64: 8, 16>}]} {
    %c0 = arith.constant 0 : index
    %c0_0 = arith.constant 0 : index
    %0 = vector.load %arg1[%c0, %c0_0] : memref<48x3xf32, #tpu.memory_space<vmem>>, vector<48x3xf32>
    %1 = arith.truncf %0 : vector<48x3xf32> to vector<48x3xbf16>
    %c0_1 = arith.constant 0 : index
    %c0_2 = arith.constant 0 : index
    %2 = vector.load %arg2[%c0_1, %c0_2] : memref<224x32xbf16, #tpu.memory_space<vmem>>, vector<3x24xbf16>
    %cst = arith.constant dense<0.000000e+00> : vector<48x24xf32>
    %3 = tpu.matmul %1, %2, %cst {dimension_numbers = #tpu.dot_dimension_numbers<[1], [0], [0], [1], [0, 0, 1, 1], [], []>} : vector<48x3xbf16>, vector<3x24xbf16>, vector<48x24xf32> -> vector<48x24xf32>
    %c0_3 = arith.constant 0 : index
    %c0_4 = arith.constant 0 : index
    %4 = vector.load %arg3[%c0_3, %c0_4] : memref<8x32xf32, #tpu.memory_space<vmem>>, vector<1x24xf32>
    %5 = vector.broadcast %4 : vector<1x24xf32> to vector<48x24xf32>
    %6 = arith.addf %3, %5 : vector<48x24xf32>
    %cst_5 = arith.constant 0.000000e+00 : f32
    %7 = vector.broadcast %cst_5 : f32 to vector<48x24xf32>
    %8 = arith.maximumf %6, %7 : vector<48x24xf32>
    %9 = arith.truncf %8 : vector<48x24xf32> to vector<48x24xbf16>
    %c16 = arith.constant 16 : index
    %c0_6 = arith.constant 0 : index
    %10 = vector.load %arg2[%c16, %c0_6] : memref<224x32xbf16, #tpu.memory_space<vmem>>, vector<24x24xbf16>
    %cst_7 = arith.constant dense<0.000000e+00> : vector<48x24xf32>
    %11 = tpu.matmul %9, %10, %cst_7 {dimension_numbers = #tpu.dot_dimension_numbers<[1], [0], [0], [1], [0, 0, 1, 1], [], []>} : vector<48x24xbf16>, vector<24x24xbf16>, vector<48x24xf32> -> vector<48x24xf32>
    %c1 = arith.constant 1 : index
    %c0_8 = arith.constant 0 : index
    %12 = vector.load %arg3[%c1, %c0_8] : memref<8x32xf32, #tpu.memory_space<vmem>>, vector<1x24xf32>
    %13 = vector.broadcast %12 : vector<1x24xf32> to vector<48x24xf32>
    %14 = arith.addf %11, %13 : vector<48x24xf32>
    %cst_9 = arith.constant 0.000000e+00 : f32
    %15 = vector.broadcast %cst_9 : f32 to vector<48x24xf32>
    %16 = arith.maximumf %14, %15 : vector<48x24xf32>
    %17 = arith.truncf %16 : vector<48x24xf32> to vector<48x24xbf16>
    %c48 = arith.constant 48 : index
    %c0_10 = arith.constant 0 : index
    %18 = vector.load %arg2[%c48, %c0_10] : memref<224x32xbf16, #tpu.memory_space<vmem>>, vector<24x32xbf16>
    %cst_11 = arith.constant dense<0.000000e+00> : vector<48x32xf32>
    %19 = tpu.matmul %17, %18, %cst_11 {dimension_numbers = #tpu.dot_dimension_numbers<[1], [0], [0], [1], [0, 0, 1, 1], [], []>} : vector<48x24xbf16>, vector<24x32xbf16>, vector<48x32xf32> -> vector<48x32xf32>
    %c2 = arith.constant 2 : index
    %c0_12 = arith.constant 0 : index
    %20 = vector.load %arg3[%c2, %c0_12] : memref<8x32xf32, #tpu.memory_space<vmem>>, vector<1x32xf32>
    %21 = vector.broadcast %20 : vector<1x32xf32> to vector<48x32xf32>
    %22 = arith.addf %19, %21 : vector<48x32xf32>
    %23 = tpu.iota {dimensions = array<i32: 0>} : vector<48x48xi32>
    %24 = arith.sitofp %23 : vector<48x48xi32> to vector<48x48xf32>
    %25 = tpu.iota {dimensions = array<i32: 1>} : vector<48x48xi32>
    %26 = arith.sitofp %25 : vector<48x48xi32> to vector<48x48xf32>
    %cst_13 = arith.constant 2.500000e-01 : f32
    %27 = vector.broadcast %cst_13 : f32 to vector<48x48xf32>
    %28 = arith.mulf %24, %27 : vector<48x48xf32>
    %29 = math.floor %28 : vector<48x48xf32>
    %cst_14 = arith.constant 2.500000e-01 : f32
    %30 = vector.broadcast %cst_14 : f32 to vector<48x48xf32>
    %31 = arith.mulf %26, %30 : vector<48x48xf32>
    %32 = math.floor %31 : vector<48x48xf32>
    %33 = arith.cmpf oeq, %29, %32 : vector<48x48xf32>
    %34 = arith.extui %33 : vector<48x48xi1> to vector<48x48xi32>
    %35 = arith.sitofp %34 : vector<48x48xi32> to vector<48x48xf32>
    %36 = arith.truncf %22 : vector<48x32xf32> to vector<48x32xbf16>
    %cst_15 = arith.constant dense<0.000000e+00> : vector<48x48xf32>
    %37 = tpu.matmul %36, %36, %cst_15 {dimension_numbers = #tpu.dot_dimension_numbers<[1], [1], [0], [0], [0, 0, 1, 0], [], []>} : vector<48x32xbf16>, vector<48x32xbf16>, vector<48x48xf32> -> vector<48x48xf32>
    %cst_16 = arith.constant 0.000000e+00 : f32
    %38 = vector.broadcast %cst_16 : f32 to vector<48x48xf32>
    %39 = arith.maximumf %37, %38 : vector<48x48xf32>
    %40 = arith.mulf %39, %35 : vector<48x48xf32>
    %cst_17 = arith.constant dense<0xFF800000> : vector<48xf32>
    %41 = vector.multi_reduction <maximumf>, %40, %cst_17 [1] : vector<48x48xf32> to vector<48xf32>
    %42 = vector.shape_cast %41 : vector<48xf32> to vector<48x1xf32>
    %43 = vector.broadcast %42 : vector<48x1xf32> to vector<48x48xf32>
    %44 = arith.subf %40, %43 : vector<48x48xf32>
    %45 = math.exp %44 : vector<48x48xf32>
    %46 = arith.mulf %45, %35 : vector<48x48xf32>
    %cst_18 = arith.constant dense<0.000000e+00> : vector<48xf32>
    %47 = vector.multi_reduction <add>, %46, %cst_18 [1] : vector<48x48xf32> to vector<48xf32>
    %48 = vector.shape_cast %47 : vector<48xf32> to vector<48x1xf32>
    %49 = tpu.reciprocal %48 {approx = true} : vector<48x1xf32> -> vector<48x1xf32>
    %50 = vector.broadcast %49 : vector<48x1xf32> to vector<48x48xf32>
    %51 = arith.mulf %46, %50 : vector<48x48xf32>
    %52 = arith.truncf %51 : vector<48x48xf32> to vector<48x48xbf16>
    %cst_19 = arith.constant dense<0.000000e+00> : vector<48x32xf32>
    %53 = tpu.matmul %52, %36, %cst_19 {dimension_numbers = #tpu.dot_dimension_numbers<[1], [0], [0], [1], [0, 0, 1, 1], [], []>} : vector<48x48xbf16>, vector<48x32xbf16>, vector<48x32xf32> -> vector<48x32xf32>
    %54 = arith.truncf %53 : vector<48x32xf32> to vector<48x32xbf16>
    %c80 = arith.constant 80 : index
    %c0_20 = arith.constant 0 : index
    %55 = vector.load %arg2[%c80, %c0_20] : memref<224x32xbf16, #tpu.memory_space<vmem>>, vector<32x16xbf16>
    %cst_21 = arith.constant dense<0.000000e+00> : vector<48x16xf32>
    %56 = tpu.matmul %54, %55, %cst_21 {dimension_numbers = #tpu.dot_dimension_numbers<[1], [0], [0], [1], [0, 0, 1, 1], [], []>} : vector<48x32xbf16>, vector<32x16xbf16>, vector<48x16xf32> -> vector<48x16xf32>
    %c3 = arith.constant 3 : index
    %c0_22 = arith.constant 0 : index
    %57 = vector.load %arg3[%c3, %c0_22] : memref<8x32xf32, #tpu.memory_space<vmem>>, vector<1x16xf32>
    %58 = vector.broadcast %57 : vector<1x16xf32> to vector<48x16xf32>
    %59 = arith.addf %56, %58 : vector<48x16xf32>
    %cst_23 = arith.constant 0.000000e+00 : f32
    %60 = vector.broadcast %cst_23 : f32 to vector<48x16xf32>
    %61 = arith.maximumf %59, %60 : vector<48x16xf32>
    %c112 = arith.constant 112 : index
    %c0_24 = arith.constant 0 : index
    %62 = vector.load %arg2[%c112, %c0_24] : memref<224x32xbf16, #tpu.memory_space<vmem>>, vector<32x16xbf16>
    %cst_25 = arith.constant dense<0.000000e+00> : vector<48x16xf32>
    %63 = tpu.matmul %54, %62, %cst_25 {dimension_numbers = #tpu.dot_dimension_numbers<[1], [0], [0], [1], [0, 0, 1, 1], [], []>} : vector<48x32xbf16>, vector<32x16xbf16>, vector<48x16xf32> -> vector<48x16xf32>
    %c4 = arith.constant 4 : index
    %c0_26 = arith.constant 0 : index
    %64 = vector.load %arg3[%c4, %c0_26] : memref<8x32xf32, #tpu.memory_space<vmem>>, vector<1x16xf32>
    %65 = vector.broadcast %64 : vector<1x16xf32> to vector<48x16xf32>
    %66 = arith.addf %63, %65 : vector<48x16xf32>
    %cst_27 = arith.constant 0.000000e+00 : f32
    %67 = vector.broadcast %cst_27 : f32 to vector<48x16xf32>
    %68 = arith.maximumf %66, %67 : vector<48x16xf32>
    %69 = tpu.iota {dimensions = array<i32: 0>} : vector<8x48xi32>
    %70 = arith.sitofp %69 : vector<8x48xi32> to vector<8x48xf32>
    %71 = tpu.iota {dimensions = array<i32: 1>} : vector<8x48xi32>
    %72 = arith.sitofp %71 : vector<8x48xi32> to vector<8x48xf32>
    %cst_28 = arith.constant 2.500000e-01 : f32
    %73 = vector.broadcast %cst_28 : f32 to vector<8x48xf32>
    %74 = arith.mulf %70, %73 : vector<8x48xf32>
    %75 = math.floor %74 : vector<8x48xf32>
    %cst_29 = arith.constant 4.000000e+00 : f32
    %76 = vector.broadcast %cst_29 : f32 to vector<8x48xf32>
    %77 = arith.mulf %76, %75 : vector<8x48xf32>
    %78 = arith.subf %70, %77 : vector<8x48xf32>
    %cst_30 = arith.constant 2.500000e-01 : f32
    %79 = vector.broadcast %cst_30 : f32 to vector<8x48xf32>
    %80 = arith.mulf %72, %79 : vector<8x48xf32>
    %81 = math.floor %80 : vector<8x48xf32>
    %cst_31 = arith.constant 4.000000e+00 : f32
    %82 = vector.broadcast %cst_31 : f32 to vector<8x48xf32>
    %83 = arith.mulf %82, %81 : vector<8x48xf32>
    %84 = arith.subf %72, %83 : vector<8x48xf32>
    %cst_32 = arith.constant 2.500000e-01 : f32
    %85 = vector.broadcast %cst_32 : f32 to vector<8x48xf32>
    %86 = arith.mulf %70, %85 : vector<8x48xf32>
    %87 = math.floor %86 : vector<8x48xf32>
    %cst_33 = arith.constant 2.400000e+01 : f32
    %88 = vector.broadcast %cst_33 : f32 to vector<8x48xf32>
    %89 = arith.mulf %87, %88 : vector<8x48xf32>
    %90 = arith.subf %72, %89 : vector<8x48xf32>
    %91 = arith.cmpf oeq, %78, %84 : vector<8x48xf32>
    %cst_34 = arith.constant 0.000000e+00 : f32
    %92 = vector.broadcast %cst_34 : f32 to vector<8x48xf32>
    %93 = arith.cmpf oge, %90, %92 : vector<8x48xf32>
    %94 = arith.andi %91, %93 : vector<8x48xi1>
    %cst_35 = arith.constant 2.400000e+01 : f32
    %95 = vector.broadcast %cst_35 : f32 to vector<8x48xf32>
    %96 = arith.cmpf olt, %90, %95 : vector<8x48xf32>
    %97 = arith.andi %94, %96 : vector<8x48xi1>
    %cst_36 = arith.constant 0.166666672 : f32
    %cst_37 = arith.constant 0.000000e+00 : f32
    %98 = vector.broadcast %cst_36 : f32 to vector<8x48xf32>
    %99 = vector.broadcast %cst_37 : f32 to vector<8x48xf32>
    %100 = arith.select %97, %98, %99 : vector<8x48xi1>, vector<8x48xf32>
    %cst_38 = arith.constant dense<0.000000e+00> : vector<8x16xf32>
    %101 = tpu.matmul %100, %61, %cst_38 {dimension_numbers = #tpu.dot_dimension_numbers<[1], [0], [0], [1], [0, 0, 1, 1], [], []>} : vector<8x48xf32>, vector<48x16xf32>, vector<8x16xf32> -> vector<8x16xf32>
    %cst_39 = arith.constant dense<0.000000e+00> : vector<8x16xf32>
    %102 = tpu.matmul %100, %68, %cst_39 {dimension_numbers = #tpu.dot_dimension_numbers<[1], [0], [0], [1], [0, 0, 1, 1], [], []>} : vector<8x48xf32>, vector<48x16xf32>, vector<8x16xf32> -> vector<8x16xf32>
    %103 = arith.truncf %101 : vector<8x16xf32> to vector<8x16xbf16>
    %c144 = arith.constant 144 : index
    %c0_40 = arith.constant 0 : index
    %104 = vector.load %arg2[%c144, %c0_40] : memref<224x32xbf16, #tpu.memory_space<vmem>>, vector<16x32xbf16>
    %cst_41 = arith.constant dense<0.000000e+00> : vector<8x32xf32>
    %105 = tpu.matmul %103, %104, %cst_41 {dimension_numbers = #tpu.dot_dimension_numbers<[1], [0], [0], [1], [0, 0, 1, 1], [], []>} : vector<8x16xbf16>, vector<16x32xbf16>, vector<8x32xf32> -> vector<8x32xf32>
    %106 = arith.truncf %102 : vector<8x16xf32> to vector<8x16xbf16>
    %c160 = arith.constant 160 : index
    %c0_42 = arith.constant 0 : index
    %107 = vector.load %arg2[%c160, %c0_42] : memref<224x32xbf16, #tpu.memory_space<vmem>>, vector<16x32xbf16>
    %cst_43 = arith.constant dense<0.000000e+00> : vector<8x32xf32>
    %108 = tpu.matmul %106, %107, %cst_43 {dimension_numbers = #tpu.dot_dimension_numbers<[1], [0], [0], [1], [0, 0, 1, 1], [], []>} : vector<8x16xbf16>, vector<16x32xbf16>, vector<8x32xf32> -> vector<8x32xf32>
    %109 = arith.addf %105, %108 : vector<8x32xf32>
    %c5 = arith.constant 5 : index
    %c0_44 = arith.constant 0 : index
    %110 = vector.load %arg3[%c5, %c0_44] : memref<8x32xf32, #tpu.memory_space<vmem>>, vector<1x32xf32>
    %111 = vector.broadcast %110 : vector<1x32xf32> to vector<8x32xf32>
    %112 = arith.addf %109, %111 : vector<8x32xf32>
    %cst_45 = arith.constant 0.000000e+00 : f32
    %113 = vector.broadcast %cst_45 : f32 to vector<8x32xf32>
    %114 = arith.maximumf %112, %113 : vector<8x32xf32>
    %115 = arith.truncf %114 : vector<8x32xf32> to vector<8x32xbf16>
    %c176 = arith.constant 176 : index
    %c0_46 = arith.constant 0 : index
    %116 = vector.load %arg2[%c176, %c0_46] : memref<224x32xbf16, #tpu.memory_space<vmem>>, vector<32x8xbf16>
    %cst_47 = arith.constant dense<0.000000e+00> : vector<8x8xf32>
    %117 = tpu.matmul %115, %116, %cst_47 {dimension_numbers = #tpu.dot_dimension_numbers<[1], [0], [0], [1], [0, 0, 1, 1], [], []>} : vector<8x32xbf16>, vector<32x8xbf16>, vector<8x8xf32> -> vector<8x8xf32>
    %c6 = arith.constant 6 : index
    %c0_48 = arith.constant 0 : index
    %118 = vector.load %arg3[%c6, %c0_48] : memref<8x32xf32, #tpu.memory_space<vmem>>, vector<1x8xf32>
    %119 = vector.broadcast %118 : vector<1x8xf32> to vector<8x8xf32>
    %120 = arith.addf %117, %119 : vector<8x8xf32>
    %cst_49 = arith.constant 0.000000e+00 : f32
    %121 = vector.broadcast %cst_49 : f32 to vector<8x8xf32>
    %122 = arith.maximumf %120, %121 : vector<8x8xf32>
    %123 = arith.truncf %122 : vector<8x8xf32> to vector<8x8xbf16>
    %c208 = arith.constant 208 : index
    %c0_50 = arith.constant 0 : index
    %124 = vector.load %arg2[%c208, %c0_50] : memref<224x32xbf16, #tpu.memory_space<vmem>>, vector<8x16xbf16>
    %cst_51 = arith.constant dense<0.000000e+00> : vector<8x16xf32>
    %125 = tpu.matmul %123, %124, %cst_51 {dimension_numbers = #tpu.dot_dimension_numbers<[1], [0], [0], [1], [0, 0, 1, 1], [], []>} : vector<8x8xbf16>, vector<8x16xbf16>, vector<8x16xf32> -> vector<8x16xf32>
    %c7 = arith.constant 7 : index
    %c0_52 = arith.constant 0 : index
    %126 = vector.load %arg3[%c7, %c0_52] : memref<8x32xf32, #tpu.memory_space<vmem>>, vector<1x16xf32>
    %127 = vector.broadcast %126 : vector<1x16xf32> to vector<8x16xf32>
    %128 = arith.addf %125, %127 : vector<8x16xf32>
    %c0_53 = arith.constant 0 : index
    %c0_54 = arith.constant 0 : index
    %129 = vector.load %arg4[%c0_53, %c0_54] : memref<8x16xf32, #tpu.memory_space<vmem>>, vector<8x16xf32>
    tpu.vector_store %arg4[%c0_53, %c0_54], %128 {strides = array<i32>} : memref<8x16xf32, #tpu.memory_space<vmem>>, vector<8x16xf32>,
    return
  }
  func.func @transform_0(%arg0: i32) -> (i32, i32) {
    %c0_i32 = arith.constant 0 : i32
    %c0_i32_0 = arith.constant 0 : i32
    return %arg0, %c0_i32 : i32, i32
  }
  func.func @transform_1(%arg0: i32) -> (i32, i32) {
    %c0_i32 = arith.constant 0 : i32
    %c0_i32_0 = arith.constant 0 : i32
    %c0_i32_1 = arith.constant 0 : i32
    return %c0_i32, %c0_i32_0 : i32, i32
  }
  func.func @transform_2(%arg0: i32) -> (i32, i32) {
    %c0_i32 = arith.constant 0 : i32
    %c0_i32_0 = arith.constant 0 : i32
    %c0_i32_1 = arith.constant 0 : i32
    return %c0_i32, %c0_i32_0 : i32, i32
  }
  func.func @transform_3(%arg0: i32) -> (i32, i32) {
    %c0_i32 = arith.constant 0 : i32
    %c0_i32_0 = arith.constant 0 : i32
    return %arg0, %c0_i32 : i32, i32
  }
}

module attributes {stable_mosaic.version = 11 : i64} {
  func.func @_graph_block_kernel(%arg0: i32, %arg1: memref<64x2xf32, #tpu.memory_space<vmem>>, %arg2: memref<192x32xbf16, #tpu.memory_space<vmem>>, %arg3: memref<8x32xf32, #tpu.memory_space<vmem>>, %arg4: memref<8x16xf32, #tpu.memory_space<vmem>>) attributes {dimension_semantics = [#tpu.dimension_semantics<parallel>], iteration_bounds = array<i64: 1>, scalar_prefetch = 0 : i64, scratch_operands = 0 : i64, tpu.core_type = #tpu.core_type<tc>, window_params = [{transform_indices = @transform_0, window_bounds = array<i64: 64, 2>}, {pipeline_mode = #tpu.pipeline_mode<synchronous>, transform_indices = @transform_1, window_bounds = array<i64: 192, 32>}, {pipeline_mode = #tpu.pipeline_mode<synchronous>, transform_indices = @transform_2, window_bounds = array<i64: 8, 32>}, {transform_indices = @transform_3, window_bounds = array<i64: 8, 16>}]} {
    %c0 = arith.constant 0 : index
    %c0_0 = arith.constant 0 : index
    %0 = vector.load %arg1[%c0, %c0_0] : memref<64x2xf32, #tpu.memory_space<vmem>>, vector<64x2xf32>
    %1 = arith.truncf %0 : vector<64x2xf32> to vector<64x2xbf16>
    %c0_1 = arith.constant 0 : index
    %c0_2 = arith.constant 0 : index
    %2 = vector.load %arg2[%c0_1, %c0_2] : memref<192x32xbf16, #tpu.memory_space<vmem>>, vector<2x16xbf16>
    %cst = arith.constant dense<0.000000e+00> : vector<64x16xf32>
    %3 = tpu.matmul %1, %2, %cst {dimension_numbers = #tpu.dot_dimension_numbers<[1], [0], [0], [1], [0, 0, 1, 1], [], []>} : vector<64x2xbf16>, vector<2x16xbf16>, vector<64x16xf32> -> vector<64x16xf32>
    %c0_3 = arith.constant 0 : index
    %c0_4 = arith.constant 0 : index
    %4 = vector.load %arg3[%c0_3, %c0_4] : memref<8x32xf32, #tpu.memory_space<vmem>>, vector<1x16xf32>
    %5 = vector.broadcast %4 : vector<1x16xf32> to vector<64x16xf32>
    %6 = arith.addf %3, %5 : vector<64x16xf32>
    %cst_5 = arith.constant 0.000000e+00 : f32
    %7 = vector.broadcast %cst_5 : f32 to vector<64x16xf32>
    %8 = arith.maximumf %6, %7 : vector<64x16xf32>
    %9 = arith.truncf %8 : vector<64x16xf32> to vector<64x16xbf16>
    %c16 = arith.constant 16 : index
    %c0_6 = arith.constant 0 : index
    %10 = vector.load %arg2[%c16, %c0_6] : memref<192x32xbf16, #tpu.memory_space<vmem>>, vector<16x16xbf16>
    %cst_7 = arith.constant dense<0.000000e+00> : vector<64x16xf32>
    %11 = tpu.matmul %9, %10, %cst_7 {dimension_numbers = #tpu.dot_dimension_numbers<[1], [0], [0], [1], [0, 0, 1, 1], [], []>} : vector<64x16xbf16>, vector<16x16xbf16>, vector<64x16xf32> -> vector<64x16xf32>
    %c1 = arith.constant 1 : index
    %c0_8 = arith.constant 0 : index
    %12 = vector.load %arg3[%c1, %c0_8] : memref<8x32xf32, #tpu.memory_space<vmem>>, vector<1x16xf32>
    %13 = vector.broadcast %12 : vector<1x16xf32> to vector<64x16xf32>
    %14 = arith.addf %11, %13 : vector<64x16xf32>
    %cst_9 = arith.constant 0.000000e+00 : f32
    %15 = vector.broadcast %cst_9 : f32 to vector<64x16xf32>
    %16 = arith.maximumf %14, %15 : vector<64x16xf32>
    %17 = arith.truncf %16 : vector<64x16xf32> to vector<64x16xbf16>
    %c32 = arith.constant 32 : index
    %c0_10 = arith.constant 0 : index
    %18 = vector.load %arg2[%c32, %c0_10] : memref<192x32xbf16, #tpu.memory_space<vmem>>, vector<16x32xbf16>
    %cst_11 = arith.constant dense<0.000000e+00> : vector<64x32xf32>
    %19 = tpu.matmul %17, %18, %cst_11 {dimension_numbers = #tpu.dot_dimension_numbers<[1], [0], [0], [1], [0, 0, 1, 1], [], []>} : vector<64x16xbf16>, vector<16x32xbf16>, vector<64x32xf32> -> vector<64x32xf32>
    %c2 = arith.constant 2 : index
    %c0_12 = arith.constant 0 : index
    %20 = vector.load %arg3[%c2, %c0_12] : memref<8x32xf32, #tpu.memory_space<vmem>>, vector<1x32xf32>
    %21 = vector.broadcast %20 : vector<1x32xf32> to vector<64x32xf32>
    %22 = arith.addf %19, %21 : vector<64x32xf32>
    %23 = tpu.iota {dimensions = array<i32: 0>} : vector<64x64xi32>
    %24 = arith.sitofp %23 : vector<64x64xi32> to vector<64x64xf32>
    %25 = tpu.iota {dimensions = array<i32: 1>} : vector<64x64xi32>
    %26 = arith.sitofp %25 : vector<64x64xi32> to vector<64x64xf32>
    %cst_13 = arith.constant 2.500000e-01 : f32
    %27 = vector.broadcast %cst_13 : f32 to vector<64x64xf32>
    %28 = arith.mulf %24, %27 : vector<64x64xf32>
    %29 = math.floor %28 : vector<64x64xf32>
    %cst_14 = arith.constant 2.500000e-01 : f32
    %30 = vector.broadcast %cst_14 : f32 to vector<64x64xf32>
    %31 = arith.mulf %26, %30 : vector<64x64xf32>
    %32 = math.floor %31 : vector<64x64xf32>
    %33 = arith.cmpf oeq, %29, %32 : vector<64x64xf32>
    %34 = arith.extui %33 : vector<64x64xi1> to vector<64x64xi32>
    %35 = arith.sitofp %34 : vector<64x64xi32> to vector<64x64xf32>
    %36 = arith.truncf %22 : vector<64x32xf32> to vector<64x32xbf16>
    %cst_15 = arith.constant dense<0.000000e+00> : vector<64x64xf32>
    %37 = tpu.matmul %36, %36, %cst_15 {dimension_numbers = #tpu.dot_dimension_numbers<[1], [1], [0], [0], [0, 0, 1, 0], [], []>} : vector<64x32xbf16>, vector<64x32xbf16>, vector<64x64xf32> -> vector<64x64xf32>
    %cst_16 = arith.constant 0.000000e+00 : f32
    %38 = vector.broadcast %cst_16 : f32 to vector<64x64xf32>
    %39 = arith.maximumf %37, %38 : vector<64x64xf32>
    %40 = arith.mulf %39, %35 : vector<64x64xf32>
    %cst_17 = arith.constant dense<0xFF800000> : vector<64xf32>
    %41 = vector.multi_reduction <maximumf>, %40, %cst_17 [1] : vector<64x64xf32> to vector<64xf32>
    %42 = vector.shape_cast %41 : vector<64xf32> to vector<64x1xf32>
    %43 = vector.broadcast %42 : vector<64x1xf32> to vector<64x64xf32>
    %44 = arith.subf %40, %43 : vector<64x64xf32>
    %45 = math.exp %44 : vector<64x64xf32>
    %46 = arith.mulf %45, %35 : vector<64x64xf32>
    %cst_18 = arith.constant dense<0.000000e+00> : vector<64xf32>
    %47 = vector.multi_reduction <add>, %46, %cst_18 [1] : vector<64x64xf32> to vector<64xf32>
    %48 = vector.shape_cast %47 : vector<64xf32> to vector<64x1xf32>
    %49 = tpu.reciprocal %48 {approx = true} : vector<64x1xf32> -> vector<64x1xf32>
    %50 = vector.broadcast %49 : vector<64x1xf32> to vector<64x64xf32>
    %51 = arith.mulf %46, %50 : vector<64x64xf32>
    %52 = arith.truncf %51 : vector<64x64xf32> to vector<64x64xbf16>
    %cst_19 = arith.constant dense<0.000000e+00> : vector<64x32xf32>
    %53 = tpu.matmul %52, %36, %cst_19 {dimension_numbers = #tpu.dot_dimension_numbers<[1], [0], [0], [1], [0, 0, 1, 1], [], []>} : vector<64x64xbf16>, vector<64x32xbf16>, vector<64x32xf32> -> vector<64x32xf32>
    %54 = arith.truncf %53 : vector<64x32xf32> to vector<64x32xbf16>
    %c48 = arith.constant 48 : index
    %c0_20 = arith.constant 0 : index
    %55 = vector.load %arg2[%c48, %c0_20] : memref<192x32xbf16, #tpu.memory_space<vmem>>, vector<32x16xbf16>
    %cst_21 = arith.constant dense<0.000000e+00> : vector<64x16xf32>
    %56 = tpu.matmul %54, %55, %cst_21 {dimension_numbers = #tpu.dot_dimension_numbers<[1], [0], [0], [1], [0, 0, 1, 1], [], []>} : vector<64x32xbf16>, vector<32x16xbf16>, vector<64x16xf32> -> vector<64x16xf32>
    %c3 = arith.constant 3 : index
    %c0_22 = arith.constant 0 : index
    %57 = vector.load %arg3[%c3, %c0_22] : memref<8x32xf32, #tpu.memory_space<vmem>>, vector<1x16xf32>
    %58 = vector.broadcast %57 : vector<1x16xf32> to vector<64x16xf32>
    %59 = arith.addf %56, %58 : vector<64x16xf32>
    %cst_23 = arith.constant 0.000000e+00 : f32
    %60 = vector.broadcast %cst_23 : f32 to vector<64x16xf32>
    %61 = arith.maximumf %59, %60 : vector<64x16xf32>
    %c80 = arith.constant 80 : index
    %c0_24 = arith.constant 0 : index
    %62 = vector.load %arg2[%c80, %c0_24] : memref<192x32xbf16, #tpu.memory_space<vmem>>, vector<32x16xbf16>
    %cst_25 = arith.constant dense<0.000000e+00> : vector<64x16xf32>
    %63 = tpu.matmul %54, %62, %cst_25 {dimension_numbers = #tpu.dot_dimension_numbers<[1], [0], [0], [1], [0, 0, 1, 1], [], []>} : vector<64x32xbf16>, vector<32x16xbf16>, vector<64x16xf32> -> vector<64x16xf32>
    %c4 = arith.constant 4 : index
    %c0_26 = arith.constant 0 : index
    %64 = vector.load %arg3[%c4, %c0_26] : memref<8x32xf32, #tpu.memory_space<vmem>>, vector<1x16xf32>
    %65 = vector.broadcast %64 : vector<1x16xf32> to vector<64x16xf32>
    %66 = arith.addf %63, %65 : vector<64x16xf32>
    %cst_27 = arith.constant 0.000000e+00 : f32
    %67 = vector.broadcast %cst_27 : f32 to vector<64x16xf32>
    %68 = arith.maximumf %66, %67 : vector<64x16xf32>
    %69 = tpu.iota {dimensions = array<i32: 0>} : vector<8x64xi32>
    %70 = arith.sitofp %69 : vector<8x64xi32> to vector<8x64xf32>
    %71 = tpu.iota {dimensions = array<i32: 1>} : vector<8x64xi32>
    %72 = arith.sitofp %71 : vector<8x64xi32> to vector<8x64xf32>
    %cst_28 = arith.constant 2.500000e-01 : f32
    %73 = vector.broadcast %cst_28 : f32 to vector<8x64xf32>
    %74 = arith.mulf %70, %73 : vector<8x64xf32>
    %75 = math.floor %74 : vector<8x64xf32>
    %cst_29 = arith.constant 4.000000e+00 : f32
    %76 = vector.broadcast %cst_29 : f32 to vector<8x64xf32>
    %77 = arith.mulf %76, %75 : vector<8x64xf32>
    %78 = arith.subf %70, %77 : vector<8x64xf32>
    %cst_30 = arith.constant 2.500000e-01 : f32
    %79 = vector.broadcast %cst_30 : f32 to vector<8x64xf32>
    %80 = arith.mulf %72, %79 : vector<8x64xf32>
    %81 = math.floor %80 : vector<8x64xf32>
    %cst_31 = arith.constant 4.000000e+00 : f32
    %82 = vector.broadcast %cst_31 : f32 to vector<8x64xf32>
    %83 = arith.mulf %82, %81 : vector<8x64xf32>
    %84 = arith.subf %72, %83 : vector<8x64xf32>
    %cst_32 = arith.constant 2.500000e-01 : f32
    %85 = vector.broadcast %cst_32 : f32 to vector<8x64xf32>
    %86 = arith.mulf %70, %85 : vector<8x64xf32>
    %87 = math.floor %86 : vector<8x64xf32>
    %cst_33 = arith.constant 3.200000e+01 : f32
    %88 = vector.broadcast %cst_33 : f32 to vector<8x64xf32>
    %89 = arith.mulf %87, %88 : vector<8x64xf32>
    %90 = arith.subf %72, %89 : vector<8x64xf32>
    %91 = arith.cmpf oeq, %78, %84 : vector<8x64xf32>
    %cst_34 = arith.constant 0.000000e+00 : f32
    %92 = vector.broadcast %cst_34 : f32 to vector<8x64xf32>
    %93 = arith.cmpf oge, %90, %92 : vector<8x64xf32>
    %94 = arith.andi %91, %93 : vector<8x64xi1>
    %cst_35 = arith.constant 3.200000e+01 : f32
    %95 = vector.broadcast %cst_35 : f32 to vector<8x64xf32>
    %96 = arith.cmpf olt, %90, %95 : vector<8x64xf32>
    %97 = arith.andi %94, %96 : vector<8x64xi1>
    %cst_36 = arith.constant 1.250000e-01 : f32
    %cst_37 = arith.constant 0.000000e+00 : f32
    %98 = vector.broadcast %cst_36 : f32 to vector<8x64xf32>
    %99 = vector.broadcast %cst_37 : f32 to vector<8x64xf32>
    %100 = arith.select %97, %98, %99 : vector<8x64xi1>, vector<8x64xf32>
    %cst_38 = arith.constant dense<0.000000e+00> : vector<8x16xf32>
    %101 = tpu.matmul %100, %61, %cst_38 {dimension_numbers = #tpu.dot_dimension_numbers<[1], [0], [0], [1], [0, 0, 1, 1], [], []>} : vector<8x64xf32>, vector<64x16xf32>, vector<8x16xf32> -> vector<8x16xf32>
    %cst_39 = arith.constant dense<0.000000e+00> : vector<8x16xf32>
    %102 = tpu.matmul %100, %68, %cst_39 {dimension_numbers = #tpu.dot_dimension_numbers<[1], [0], [0], [1], [0, 0, 1, 1], [], []>} : vector<8x64xf32>, vector<64x16xf32>, vector<8x16xf32> -> vector<8x16xf32>
    %103 = arith.truncf %101 : vector<8x16xf32> to vector<8x16xbf16>
    %c112 = arith.constant 112 : index
    %c0_40 = arith.constant 0 : index
    %104 = vector.load %arg2[%c112, %c0_40] : memref<192x32xbf16, #tpu.memory_space<vmem>>, vector<16x32xbf16>
    %cst_41 = arith.constant dense<0.000000e+00> : vector<8x32xf32>
    %105 = tpu.matmul %103, %104, %cst_41 {dimension_numbers = #tpu.dot_dimension_numbers<[1], [0], [0], [1], [0, 0, 1, 1], [], []>} : vector<8x16xbf16>, vector<16x32xbf16>, vector<8x32xf32> -> vector<8x32xf32>
    %106 = arith.truncf %102 : vector<8x16xf32> to vector<8x16xbf16>
    %c128 = arith.constant 128 : index
    %c0_42 = arith.constant 0 : index
    %107 = vector.load %arg2[%c128, %c0_42] : memref<192x32xbf16, #tpu.memory_space<vmem>>, vector<16x32xbf16>
    %cst_43 = arith.constant dense<0.000000e+00> : vector<8x32xf32>
    %108 = tpu.matmul %106, %107, %cst_43 {dimension_numbers = #tpu.dot_dimension_numbers<[1], [0], [0], [1], [0, 0, 1, 1], [], []>} : vector<8x16xbf16>, vector<16x32xbf16>, vector<8x32xf32> -> vector<8x32xf32>
    %109 = arith.addf %105, %108 : vector<8x32xf32>
    %c5 = arith.constant 5 : index
    %c0_44 = arith.constant 0 : index
    %110 = vector.load %arg3[%c5, %c0_44] : memref<8x32xf32, #tpu.memory_space<vmem>>, vector<1x32xf32>
    %111 = vector.broadcast %110 : vector<1x32xf32> to vector<8x32xf32>
    %112 = arith.addf %109, %111 : vector<8x32xf32>
    %cst_45 = arith.constant 0.000000e+00 : f32
    %113 = vector.broadcast %cst_45 : f32 to vector<8x32xf32>
    %114 = arith.maximumf %112, %113 : vector<8x32xf32>
    %115 = arith.truncf %114 : vector<8x32xf32> to vector<8x32xbf16>
    %c144 = arith.constant 144 : index
    %c0_46 = arith.constant 0 : index
    %116 = vector.load %arg2[%c144, %c0_46] : memref<192x32xbf16, #tpu.memory_space<vmem>>, vector<32x8xbf16>
    %cst_47 = arith.constant dense<0.000000e+00> : vector<8x8xf32>
    %117 = tpu.matmul %115, %116, %cst_47 {dimension_numbers = #tpu.dot_dimension_numbers<[1], [0], [0], [1], [0, 0, 1, 1], [], []>} : vector<8x32xbf16>, vector<32x8xbf16>, vector<8x8xf32> -> vector<8x8xf32>
    %c6 = arith.constant 6 : index
    %c0_48 = arith.constant 0 : index
    %118 = vector.load %arg3[%c6, %c0_48] : memref<8x32xf32, #tpu.memory_space<vmem>>, vector<1x8xf32>
    %119 = vector.broadcast %118 : vector<1x8xf32> to vector<8x8xf32>
    %120 = arith.addf %117, %119 : vector<8x8xf32>
    %cst_49 = arith.constant 0.000000e+00 : f32
    %121 = vector.broadcast %cst_49 : f32 to vector<8x8xf32>
    %122 = arith.maximumf %120, %121 : vector<8x8xf32>
    %123 = arith.truncf %122 : vector<8x8xf32> to vector<8x8xbf16>
    %c176 = arith.constant 176 : index
    %c0_50 = arith.constant 0 : index
    %124 = vector.load %arg2[%c176, %c0_50] : memref<192x32xbf16, #tpu.memory_space<vmem>>, vector<8x16xbf16>
    %cst_51 = arith.constant dense<0.000000e+00> : vector<8x16xf32>
    %125 = tpu.matmul %123, %124, %cst_51 {dimension_numbers = #tpu.dot_dimension_numbers<[1], [0], [0], [1], [0, 0, 1, 1], [], []>} : vector<8x8xbf16>, vector<8x16xbf16>, vector<8x16xf32> -> vector<8x16xf32>
    %c7 = arith.constant 7 : index
    %c0_52 = arith.constant 0 : index
    %126 = vector.load %arg3[%c7, %c0_52] : memref<8x32xf32, #tpu.memory_space<vmem>>, vector<1x16xf32>
    %127 = vector.broadcast %126 : vector<1x16xf32> to vector<8x16xf32>
    %128 = arith.addf %125, %127 : vector<8x16xf32>
    %c0_53 = arith.constant 0 : index
    %c0_54 = arith.constant 0 : index
    %129 = vector.load %arg4[%c0_53, %c0_54] : memref<8x16xf32, #tpu.memory_space<vmem>>, vector<8x16xf32>
    tpu.vector_store %arg4[%c0_53, %c0_54], %128 {strides = array<i32>} : memref<8x16xf32, #tpu.memory_space<vmem>>, vector<8x16xf32>,
    return
  }
  func.func @transform_0(%arg0: i32) -> (i32, i32) {
    %c0_i32 = arith.constant 0 : i32
    %c0_i32_0 = arith.constant 0 : i32
    return %arg0, %c0_i32 : i32, i32
  }
  func.func @transform_1(%arg0: i32) -> (i32, i32) {
    %c0_i32 = arith.constant 0 : i32
    %c0_i32_0 = arith.constant 0 : i32
    %c0_i32_1 = arith.constant 0 : i32
    return %c0_i32, %c0_i32_0 : i32, i32
  }
  func.func @transform_2(%arg0: i32) -> (i32, i32) {
    %c0_i32 = arith.constant 0 : i32
    %c0_i32_0 = arith.constant 0 : i32
    %c0_i32_1 = arith.constant 0 : i32
    return %c0_i32, %c0_i32_0 : i32, i32
  }
  func.func @transform_3(%arg0: i32) -> (i32, i32) {
    %c0_i32 = arith.constant 0 : i32
    %c0_i32_0 = arith.constant 0 : i32
    return %arg0, %c0_i32 : i32, i32
  }
}

module attributes {stable_mosaic.version = 11 : i64} {
  func.func @_graph_block_kernel(%arg0: i32, %arg1: memref<8x16xf32, #tpu.memory_space<vmem>>, %arg2: memref<416x128xbf16, #tpu.memory_space<vmem>>, %arg3: memref<8x128xf32, #tpu.memory_space<vmem>>, %arg4: memref<8x16xf32, #tpu.memory_space<vmem>>) attributes {dimension_semantics = [#tpu.dimension_semantics<parallel>], iteration_bounds = array<i64: 1>, scalar_prefetch = 0 : i64, scratch_operands = 0 : i64, tpu.core_type = #tpu.core_type<tc>, window_params = [{transform_indices = @transform_0, window_bounds = array<i64: 8, 16>}, {pipeline_mode = #tpu.pipeline_mode<synchronous>, transform_indices = @transform_1, window_bounds = array<i64: 416, 128>}, {pipeline_mode = #tpu.pipeline_mode<synchronous>, transform_indices = @transform_2, window_bounds = array<i64: 8, 128>}, {transform_indices = @transform_3, window_bounds = array<i64: 8, 16>}]} {
    %c0 = arith.constant 0 : index
    %c0_0 = arith.constant 0 : index
    %0 = vector.load %arg1[%c0, %c0_0] : memref<8x16xf32, #tpu.memory_space<vmem>>, vector<8x16xf32>
    %1 = arith.truncf %0 : vector<8x16xf32> to vector<8x16xbf16>
    %c0_1 = arith.constant 0 : index
    %c0_2 = arith.constant 0 : index
    %2 = vector.load %arg2[%c0_1, %c0_2] : memref<416x128xbf16, #tpu.memory_space<vmem>>, vector<16x128xbf16>
    %cst = arith.constant dense<0.000000e+00> : vector<8x128xf32>
    %3 = tpu.matmul %1, %2, %cst {dimension_numbers = #tpu.dot_dimension_numbers<[1], [0], [0], [1], [0, 0, 1, 1], [], []>} : vector<8x16xbf16>, vector<16x128xbf16>, vector<8x128xf32> -> vector<8x128xf32>
    %c0_3 = arith.constant 0 : index
    %c0_4 = arith.constant 0 : index
    %4 = vector.load %arg3[%c0_3, %c0_4] : memref<8x128xf32, #tpu.memory_space<vmem>>, vector<1x128xf32>
    %5 = vector.broadcast %4 : vector<1x128xf32> to vector<8x128xf32>
    %6 = arith.addf %3, %5 : vector<8x128xf32>
    %cst_5 = arith.constant 0.000000e+00 : f32
    %7 = vector.broadcast %cst_5 : f32 to vector<8x128xf32>
    %8 = arith.maximumf %6, %7 : vector<8x128xf32>
    %9 = arith.truncf %8 : vector<8x128xf32> to vector<8x128xbf16>
    %c16 = arith.constant 16 : index
    %c0_6 = arith.constant 0 : index
    %10 = vector.load %arg2[%c16, %c0_6] : memref<416x128xbf16, #tpu.memory_space<vmem>>, vector<128x128xbf16>
    %cst_7 = arith.constant dense<0.000000e+00> : vector<8x128xf32>
    %11 = tpu.matmul %9, %10, %cst_7 {dimension_numbers = #tpu.dot_dimension_numbers<[1], [0], [0], [1], [0, 0, 1, 1], [], []>} : vector<8x128xbf16>, vector<128x128xbf16>, vector<8x128xf32> -> vector<8x128xf32>
    %c1 = arith.constant 1 : index
    %c0_8 = arith.constant 0 : index
    %12 = vector.load %arg3[%c1, %c0_8] : memref<8x128xf32, #tpu.memory_space<vmem>>, vector<1x128xf32>
    %13 = vector.broadcast %12 : vector<1x128xf32> to vector<8x128xf32>
    %14 = arith.addf %11, %13 : vector<8x128xf32>
    %cst_9 = arith.constant 0.000000e+00 : f32
    %15 = vector.broadcast %cst_9 : f32 to vector<8x128xf32>
    %16 = arith.maximumf %14, %15 : vector<8x128xf32>
    %17 = arith.truncf %16 : vector<8x128xf32> to vector<8x128xbf16>
    %c144 = arith.constant 144 : index
    %c0_10 = arith.constant 0 : index
    %18 = vector.load %arg2[%c144, %c0_10] : memref<416x128xbf16, #tpu.memory_space<vmem>>, vector<128x32xbf16>
    %cst_11 = arith.constant dense<0.000000e+00> : vector<8x32xf32>
    %19 = tpu.matmul %17, %18, %cst_11 {dimension_numbers = #tpu.dot_dimension_numbers<[1], [0], [0], [1], [0, 0, 1, 1], [], []>} : vector<8x128xbf16>, vector<128x32xbf16>, vector<8x32xf32> -> vector<8x32xf32>
    %c2 = arith.constant 2 : index
    %c0_12 = arith.constant 0 : index
    %20 = vector.load %arg3[%c2, %c0_12] : memref<8x128xf32, #tpu.memory_space<vmem>>, vector<1x32xf32>
    %21 = vector.broadcast %20 : vector<1x32xf32> to vector<8x32xf32>
    %22 = arith.addf %19, %21 : vector<8x32xf32>
    %23 = tpu.iota {dimensions = array<i32: 0>} : vector<8x8xi32>
    %24 = arith.sitofp %23 : vector<8x8xi32> to vector<8x8xf32>
    %25 = tpu.iota {dimensions = array<i32: 1>} : vector<8x8xi32>
    %26 = arith.sitofp %25 : vector<8x8xi32> to vector<8x8xf32>
    %cst_13 = arith.constant 2.500000e-01 : f32
    %27 = vector.broadcast %cst_13 : f32 to vector<8x8xf32>
    %28 = arith.mulf %24, %27 : vector<8x8xf32>
    %29 = math.floor %28 : vector<8x8xf32>
    %cst_14 = arith.constant 2.500000e-01 : f32
    %30 = vector.broadcast %cst_14 : f32 to vector<8x8xf32>
    %31 = arith.mulf %26, %30 : vector<8x8xf32>
    %32 = math.floor %31 : vector<8x8xf32>
    %33 = arith.cmpf oeq, %29, %32 : vector<8x8xf32>
    %34 = arith.extui %33 : vector<8x8xi1> to vector<8x8xi32>
    %35 = arith.sitofp %34 : vector<8x8xi32> to vector<8x8xf32>
    %36 = arith.truncf %22 : vector<8x32xf32> to vector<8x32xbf16>
    %cst_15 = arith.constant dense<0.000000e+00> : vector<8x8xf32>
    %37 = tpu.matmul %36, %36, %cst_15 {dimension_numbers = #tpu.dot_dimension_numbers<[1], [1], [0], [0], [0, 0, 1, 0], [], []>} : vector<8x32xbf16>, vector<8x32xbf16>, vector<8x8xf32> -> vector<8x8xf32>
    %cst_16 = arith.constant 0.000000e+00 : f32
    %38 = vector.broadcast %cst_16 : f32 to vector<8x8xf32>
    %39 = arith.maximumf %37, %38 : vector<8x8xf32>
    %40 = arith.mulf %39, %35 : vector<8x8xf32>
    %cst_17 = arith.constant dense<0xFF800000> : vector<8xf32>
    %41 = vector.multi_reduction <maximumf>, %40, %cst_17 [1] : vector<8x8xf32> to vector<8xf32>
    %42 = vector.shape_cast %41 : vector<8xf32> to vector<8x1xf32>
    %43 = vector.broadcast %42 : vector<8x1xf32> to vector<8x8xf32>
    %44 = arith.subf %40, %43 : vector<8x8xf32>
    %45 = math.exp %44 : vector<8x8xf32>
    %46 = arith.mulf %45, %35 : vector<8x8xf32>
    %cst_18 = arith.constant dense<0.000000e+00> : vector<8xf32>
    %47 = vector.multi_reduction <add>, %46, %cst_18 [1] : vector<8x8xf32> to vector<8xf32>
    %48 = vector.shape_cast %47 : vector<8xf32> to vector<8x1xf32>
    %49 = tpu.reciprocal %48 {approx = true} : vector<8x1xf32> -> vector<8x1xf32>
    %50 = vector.broadcast %49 : vector<8x1xf32> to vector<8x8xf32>
    %51 = arith.mulf %46, %50 : vector<8x8xf32>
    %52 = arith.truncf %51 : vector<8x8xf32> to vector<8x8xbf16>
    %cst_19 = arith.constant dense<0.000000e+00> : vector<8x32xf32>
    %53 = tpu.matmul %52, %36, %cst_19 {dimension_numbers = #tpu.dot_dimension_numbers<[1], [0], [0], [1], [0, 0, 1, 1], [], []>} : vector<8x8xbf16>, vector<8x32xbf16>, vector<8x32xf32> -> vector<8x32xf32>
    %54 = arith.truncf %53 : vector<8x32xf32> to vector<8x32xbf16>
    %c272 = arith.constant 272 : index
    %c0_20 = arith.constant 0 : index
    %55 = vector.load %arg2[%c272, %c0_20] : memref<416x128xbf16, #tpu.memory_space<vmem>>, vector<32x16xbf16>
    %cst_21 = arith.constant dense<0.000000e+00> : vector<8x16xf32>
    %56 = tpu.matmul %54, %55, %cst_21 {dimension_numbers = #tpu.dot_dimension_numbers<[1], [0], [0], [1], [0, 0, 1, 1], [], []>} : vector<8x32xbf16>, vector<32x16xbf16>, vector<8x16xf32> -> vector<8x16xf32>
    %c3 = arith.constant 3 : index
    %c0_22 = arith.constant 0 : index
    %57 = vector.load %arg3[%c3, %c0_22] : memref<8x128xf32, #tpu.memory_space<vmem>>, vector<1x16xf32>
    %58 = vector.broadcast %57 : vector<1x16xf32> to vector<8x16xf32>
    %59 = arith.addf %56, %58 : vector<8x16xf32>
    %cst_23 = arith.constant 0.000000e+00 : f32
    %60 = vector.broadcast %cst_23 : f32 to vector<8x16xf32>
    %61 = arith.maximumf %59, %60 : vector<8x16xf32>
    %c304 = arith.constant 304 : index
    %c0_24 = arith.constant 0 : index
    %62 = vector.load %arg2[%c304, %c0_24] : memref<416x128xbf16, #tpu.memory_space<vmem>>, vector<32x16xbf16>
    %cst_25 = arith.constant dense<0.000000e+00> : vector<8x16xf32>
    %63 = tpu.matmul %54, %62, %cst_25 {dimension_numbers = #tpu.dot_dimension_numbers<[1], [0], [0], [1], [0, 0, 1, 1], [], []>} : vector<8x32xbf16>, vector<32x16xbf16>, vector<8x16xf32> -> vector<8x16xf32>
    %c4 = arith.constant 4 : index
    %c0_26 = arith.constant 0 : index
    %64 = vector.load %arg3[%c4, %c0_26] : memref<8x128xf32, #tpu.memory_space<vmem>>, vector<1x16xf32>
    %65 = vector.broadcast %64 : vector<1x16xf32> to vector<8x16xf32>
    %66 = arith.addf %63, %65 : vector<8x16xf32>
    %cst_27 = arith.constant 0.000000e+00 : f32
    %67 = vector.broadcast %cst_27 : f32 to vector<8x16xf32>
    %68 = arith.maximumf %66, %67 : vector<8x16xf32>
    %69 = tpu.iota {dimensions = array<i32: 0>} : vector<8x8xi32>
    %70 = arith.sitofp %69 : vector<8x8xi32> to vector<8x8xf32>
    %71 = tpu.iota {dimensions = array<i32: 1>} : vector<8x8xi32>
    %72 = arith.sitofp %71 : vector<8x8xi32> to vector<8x8xf32>
    %cst_28 = arith.constant 2.500000e-01 : f32
    %73 = vector.broadcast %cst_28 : f32 to vector<8x8xf32>
    %74 = arith.mulf %70, %73 : vector<8x8xf32>
    %75 = math.floor %74 : vector<8x8xf32>
    %cst_29 = arith.constant 4.000000e+00 : f32
    %76 = vector.broadcast %cst_29 : f32 to vector<8x8xf32>
    %77 = arith.mulf %76, %75 : vector<8x8xf32>
    %78 = arith.subf %70, %77 : vector<8x8xf32>
    %cst_30 = arith.constant 2.500000e-01 : f32
    %79 = vector.broadcast %cst_30 : f32 to vector<8x8xf32>
    %80 = arith.mulf %72, %79 : vector<8x8xf32>
    %81 = math.floor %80 : vector<8x8xf32>
    %cst_31 = arith.constant 4.000000e+00 : f32
    %82 = vector.broadcast %cst_31 : f32 to vector<8x8xf32>
    %83 = arith.mulf %82, %81 : vector<8x8xf32>
    %84 = arith.subf %72, %83 : vector<8x8xf32>
    %cst_32 = arith.constant 2.500000e-01 : f32
    %85 = vector.broadcast %cst_32 : f32 to vector<8x8xf32>
    %86 = arith.mulf %70, %85 : vector<8x8xf32>
    %87 = math.floor %86 : vector<8x8xf32>
    %cst_33 = arith.constant 4.000000e+00 : f32
    %88 = vector.broadcast %cst_33 : f32 to vector<8x8xf32>
    %89 = arith.mulf %87, %88 : vector<8x8xf32>
    %90 = arith.subf %72, %89 : vector<8x8xf32>
    %91 = arith.cmpf oeq, %78, %84 : vector<8x8xf32>
    %cst_34 = arith.constant 0.000000e+00 : f32
    %92 = vector.broadcast %cst_34 : f32 to vector<8x8xf32>
    %93 = arith.cmpf oge, %90, %92 : vector<8x8xf32>
    %94 = arith.andi %91, %93 : vector<8x8xi1>
    %cst_35 = arith.constant 4.000000e+00 : f32
    %95 = vector.broadcast %cst_35 : f32 to vector<8x8xf32>
    %96 = arith.cmpf olt, %90, %95 : vector<8x8xf32>
    %97 = arith.andi %94, %96 : vector<8x8xi1>
    %cst_36 = arith.constant 1.000000e+00 : f32
    %cst_37 = arith.constant 0.000000e+00 : f32
    %98 = vector.broadcast %cst_36 : f32 to vector<8x8xf32>
    %99 = vector.broadcast %cst_37 : f32 to vector<8x8xf32>
    %100 = arith.select %97, %98, %99 : vector<8x8xi1>, vector<8x8xf32>
    %cst_38 = arith.constant dense<0.000000e+00> : vector<8x16xf32>
    %101 = tpu.matmul %100, %61, %cst_38 {dimension_numbers = #tpu.dot_dimension_numbers<[1], [0], [0], [1], [0, 0, 1, 1], [], []>} : vector<8x8xf32>, vector<8x16xf32>, vector<8x16xf32> -> vector<8x16xf32>
    %cst_39 = arith.constant dense<0.000000e+00> : vector<8x16xf32>
    %102 = tpu.matmul %100, %68, %cst_39 {dimension_numbers = #tpu.dot_dimension_numbers<[1], [0], [0], [1], [0, 0, 1, 1], [], []>} : vector<8x8xf32>, vector<8x16xf32>, vector<8x16xf32> -> vector<8x16xf32>
    %103 = arith.truncf %101 : vector<8x16xf32> to vector<8x16xbf16>
    %c336 = arith.constant 336 : index
    %c0_40 = arith.constant 0 : index
    %104 = vector.load %arg2[%c336, %c0_40] : memref<416x128xbf16, #tpu.memory_space<vmem>>, vector<16x32xbf16>
    %cst_41 = arith.constant dense<0.000000e+00> : vector<8x32xf32>
    %105 = tpu.matmul %103, %104, %cst_41 {dimension_numbers = #tpu.dot_dimension_numbers<[1], [0], [0], [1], [0, 0, 1, 1], [], []>} : vector<8x16xbf16>, vector<16x32xbf16>, vector<8x32xf32> -> vector<8x32xf32>
    %106 = arith.truncf %102 : vector<8x16xf32> to vector<8x16xbf16>
    %c352 = arith.constant 352 : index
    %c0_42 = arith.constant 0 : index
    %107 = vector.load %arg2[%c352, %c0_42] : memref<416x128xbf16, #tpu.memory_space<vmem>>, vector<16x32xbf16>
    %cst_43 = arith.constant dense<0.000000e+00> : vector<8x32xf32>
    %108 = tpu.matmul %106, %107, %cst_43 {dimension_numbers = #tpu.dot_dimension_numbers<[1], [0], [0], [1], [0, 0, 1, 1], [], []>} : vector<8x16xbf16>, vector<16x32xbf16>, vector<8x32xf32> -> vector<8x32xf32>
    %109 = arith.addf %105, %108 : vector<8x32xf32>
    %c5 = arith.constant 5 : index
    %c0_44 = arith.constant 0 : index
    %110 = vector.load %arg3[%c5, %c0_44] : memref<8x128xf32, #tpu.memory_space<vmem>>, vector<1x32xf32>
    %111 = vector.broadcast %110 : vector<1x32xf32> to vector<8x32xf32>
    %112 = arith.addf %109, %111 : vector<8x32xf32>
    %cst_45 = arith.constant 0.000000e+00 : f32
    %113 = vector.broadcast %cst_45 : f32 to vector<8x32xf32>
    %114 = arith.maximumf %112, %113 : vector<8x32xf32>
    %115 = arith.truncf %114 : vector<8x32xf32> to vector<8x32xbf16>
    %c368 = arith.constant 368 : index
    %c0_46 = arith.constant 0 : index
    %116 = vector.load %arg2[%c368, %c0_46] : memref<416x128xbf16, #tpu.memory_space<vmem>>, vector<32x8xbf16>
    %cst_47 = arith.constant dense<0.000000e+00> : vector<8x8xf32>
    %117 = tpu.matmul %115, %116, %cst_47 {dimension_numbers = #tpu.dot_dimension_numbers<[1], [0], [0], [1], [0, 0, 1, 1], [], []>} : vector<8x32xbf16>, vector<32x8xbf16>, vector<8x8xf32> -> vector<8x8xf32>
    %c6 = arith.constant 6 : index
    %c0_48 = arith.constant 0 : index
    %118 = vector.load %arg3[%c6, %c0_48] : memref<8x128xf32, #tpu.memory_space<vmem>>, vector<1x8xf32>
    %119 = vector.broadcast %118 : vector<1x8xf32> to vector<8x8xf32>
    %120 = arith.addf %117, %119 : vector<8x8xf32>
    %cst_49 = arith.constant 0.000000e+00 : f32
    %121 = vector.broadcast %cst_49 : f32 to vector<8x8xf32>
    %122 = arith.maximumf %120, %121 : vector<8x8xf32>
    %123 = arith.truncf %122 : vector<8x8xf32> to vector<8x8xbf16>
    %c400 = arith.constant 400 : index
    %c0_50 = arith.constant 0 : index
    %124 = vector.load %arg2[%c400, %c0_50] : memref<416x128xbf16, #tpu.memory_space<vmem>>, vector<8x16xbf16>
    %cst_51 = arith.constant dense<0.000000e+00> : vector<8x16xf32>
    %125 = tpu.matmul %123, %124, %cst_51 {dimension_numbers = #tpu.dot_dimension_numbers<[1], [0], [0], [1], [0, 0, 1, 1], [], []>} : vector<8x8xbf16>, vector<8x16xbf16>, vector<8x16xf32> -> vector<8x16xf32>
    %c7 = arith.constant 7 : index
    %c0_52 = arith.constant 0 : index
    %126 = vector.load %arg3[%c7, %c0_52] : memref<8x128xf32, #tpu.memory_space<vmem>>, vector<1x16xf32>
    %127 = vector.broadcast %126 : vector<1x16xf32> to vector<8x16xf32>
    %128 = arith.addf %125, %127 : vector<8x16xf32>
    %c0_53 = arith.constant 0 : index
    %c0_54 = arith.constant 0 : index
    %129 = vector.load %arg4[%c0_53, %c0_54] : memref<8x16xf32, #tpu.memory_space<vmem>>, vector<8x16xf32>
    tpu.vector_store %arg4[%c0_53, %c0_54], %128 {strides = array<i32>} : memref<8x16xf32, #tpu.memory_space<vmem>>, vector<8x16xf32>,
    return
  }
  func.func @transform_0(%arg0: i32) -> (i32, i32) {
    %c0_i32 = arith.constant 0 : i32
    %c0_i32_0 = arith.constant 0 : i32
    return %arg0, %c0_i32 : i32, i32
  }
  func.func @transform_1(%arg0: i32) -> (i32, i32) {
    %c0_i32 = arith.constant 0 : i32
    %c0_i32_0 = arith.constant 0 : i32
    %c0_i32_1 = arith.constant 0 : i32
    return %c0_i32, %c0_i32_0 : i32, i32
  }
  func.func @transform_2(%arg0: i32) -> (i32, i32) {
    %c0_i32 = arith.constant 0 : i32
    %c0_i32_0 = arith.constant 0 : i32
    %c0_i32_1 = arith.constant 0 : i32
    return %c0_i32, %c0_i32_0 : i32, i32
  }
  func.func @transform_3(%arg0: i32) -> (i32, i32) {
    %c0_i32 = arith.constant 0 : i32
    %c0_i32_0 = arith.constant 0 : i32
    return %arg0, %c0_i32 : i32, i32
  }
}

</mosaic_0001>

<llo_original>
// kernel: branch_0_fun.2
$region0: #{branch_0_fun.2}
  #allocation0 [shape = 'u32[]', space=smem, size = 0x4, offset = 0x4, fixed_abs, tag = 'smem constant byte address 0x4 - core index']
  #allocation1 [shape = 'u32[144,128]{1,0:T(1,128)}', space=vmem, size = 0x12000, scoped, tag = 'internal scratch']
  %s0 = inlined_call_operand.vmem [shape: f32[8,16], index: 0, kind: input, shape index: {}]
  %s1 = inlined_call_operand.hbm [shape: bf16[416,128], index: 1, kind: input, shape index: {}]
  %s2 = inlined_call_operand.hbm [shape: f32[8,128], index: 2, kind: input, shape index: {}]
  %s3 = inlined_call_operand.hbm [shape: f32[8,16], index: 3, kind: output, shape index: {}]
  %s4 = sld [smem:[#allocation0]]
  $region30: #{branch_0_fun.2} parent=0
    _
  %s6 = ssub.s32 1, %s4
  %s7 = scalar_select 0, %s6, %s4
  $region1: #{branch_0_fun.2} parent=0
    #allocation2 [shape = 'u8[106496]{0}', space=vmem, size = 0x1a000, scoped, tag = 'input window, operand 1, single buffered']
    #allocation3 [shape = 's32[1]{0}', space=sflag, size = 0x4, scoped, tag = 'scoped memory for branch_0_fun.2']
    #allocation4 [shape = 's32[1]{0}', space=sflag, size = 0x4, scoped, tag = 'scoped memory for branch_0_fun.2']
    #allocation5 [shape = 'u8[4096]{0}', space=vmem, size = 0x1000, scoped, tag = 'input window, operand 2, single buffered']
    #allocation6 [shape = 's32[1]{0}', space=sflag, size = 0x4, scoped, tag = 'scoped memory for branch_0_fun.2']
    #allocation7 [shape = 'u8[4096]{0}', space=vmem, size = 0x1000, scoped, tag = 'output window, operand 0, single buffered']
    %8 = vsyncpa [#allocation3], 0
    %9 = vsyncpa [#allocation6], 0
    %10 = vsyncpa [#allocation4], 0
    // Predicated region
    $region2: #{branch_0_fun.2} parent=1 // pred_check
      _
    $region3: #{branch_0_fun.2} parent=1 // pred_check_branch
      %12 = sbr.rel (0) target = $region5
    $region4: #{branch_0_fun.2} parent=1 // pred_region
      _
    $region5: #{branch_0_fun.2} parent=1 // pred_fallthru
      _
    // Predicated region
    $region6: #{branch_0_fun.2} parent=1 // pred_check
      _
    $region7: #{branch_0_fun.2} parent=1 // pred_check_branch
      %14 = sbr.rel (0) target = $region9
    $region8: #{branch_0_fun.2} parent=1 // pred_region
      %s16 = ssub.s32 3328, 3328
      %17 = vsyncadd [#allocation3], %s16
      %s18 = sshll.u32 [#allocation2], 4
      %s19 = int_to_ptr.vmem [resolvable:$true] %s18
      %24 = dma.hbm_to_vmem [thread:$0]  %s1, 3328, %s19, [#allocation3], 64, 64, 4
    $region9: #{branch_0_fun.2} parent=1 // pred_fallthru
      _
    // Predicated region
    $region10: #{branch_0_fun.2} parent=1 // pred_check
      _
    $region11: #{branch_0_fun.2} parent=1 // pred_check_branch
      %26 = sbr.rel (0) target = $region13
    $region12: #{branch_0_fun.2} parent=1 // pred_region
      %s28 = ssub.s32 128, 128
      %29 = vsyncadd [#allocation6], %s28
      %s31 = sshll.u32 [#allocation5], 4
      %s32 = int_to_ptr.vmem [resolvable:$true] %s31
      %34 = dma.hbm_to_vmem [thread:$0]  %s2, 128, %s32, [#allocation6]
    $region13: #{branch_0_fun.2} parent=1 // pred_fallthru
      _
    // Predicated region
    $region14: #{branch_0_fun.2} parent=1 // pred_check
      _
    $region15: #{branch_0_fun.2} parent=1 // pred_check_branch
      %36 = sbr.rel (0) target = $region17
    $region16: #{branch_0_fun.2} parent=1 // pred_region
      %37 = dma.done [#allocation3], 3328
    $region17: #{branch_0_fun.2} parent=1 // pred_fallthru
      _
    // Predicated region
    $region18: #{branch_0_fun.2} parent=1 // pred_check
      _
    $region19: #{branch_0_fun.2} parent=1 // pred_check_branch
      %39 = sbr.rel (0) target = $region21
    $region20: #{branch_0_fun.2} parent=1 // pred_region
      %40 = dma.done [#allocation6], 128
    $region21: #{branch_0_fun.2} parent=1 // pred_fallthru
      _
    %v42 = vld [vmem:[%s0] sm:$0xff]
    %v43 = vpack.c.bf16 %v42, %v42
    %v44 = vld [vmem:[#allocation2] sm:$0xf]
    %v45 = vld [vmem:[#allocation2 + $0x4] sm:$0xf]
    %v46 = vld [vmem:[#allocation5] sm:$0x1]
    %v47 = vlaneseq
    %v48 = vshrl.u32 %v47, 7
    %v49 = vsub.s32 0, %v48
    %v50 = vrot.slane %v46, %v49
    %v53 = vunpack.c.l.b16 %v44
    %v54 = vunpack.c.l.b16 %v45
    %v55 = vpack.c.b16 %v54, %v53
    %vm57 = vcmask 130048
    %v59 = vsel %vm57, %v43, 0
    %61 = vmatprep.subr.bf16.mxu0 0
    %62 = vmatpush1.bf16.msra.mxu0 %v55
    %63 = vmatprep.subr.bf16.mxu0 0
    %64 = vmatpush1.bf16.msra.mxu0 0
    %65 = vmatprep.subr.bf16.mxu0 0
    %66 = vmatpush1.bf16.msra.mxu0 0
    %67 = vmatprep.subr.bf16.mxu0 0
    %68 = vmatpush1.bf16.msra.mxu0 0
    %69 = vmatprep.subr.bf16.mxu0 0
    %70 = vmatpush1.bf16.msra.mxu0 0
    %71 = vmatprep.subr.bf16.mxu0 0
    %72 = vmatpush1.bf16.msra.mxu0 0
    %73 = vmatprep.subr.bf16.mxu0 0
    %74 = vmatpush1.bf16.msra.mxu0 0
    %75 = vmatprep.subr.bf16.mxu0 0
    %76 = vmatpush1.bf16.msra.mxu0 0
    %77 = vmatprep.subr.bf16.mxu0 0
    %78 = vmatpush1.bf16.msra.mxu0 0
    %79 = vmatprep.subr.bf16.mxu0 0
    %80 = vmatpush1.bf16.msra.mxu0 0
    %81 = vmatprep.subr.bf16.mxu0 0
    %82 = vmatpush1.bf16.msra.mxu0 0
    %83 = vmatprep.subr.bf16.mxu0 0
    %84 = vmatpush1.bf16.msra.mxu0 0
    %85 = vmatprep.subr.bf16.mxu0 0
    %86 = vmatpush1.bf16.msra.mxu0 0
    %87 = vmatprep.subr.bf16.mxu0 0
    %88 = vmatpush1.bf16.msra.mxu0 0
    %89 = vmatprep.subr.bf16.mxu0 0
    %90 = vmatpush1.bf16.msra.mxu0 0
    %91 = vmatprep.subr.bf16.mxu0 0
    %92 = vmatpush1.bf16.msra.mxu0 0
    %93 = vmatprep.mubr.bf16.mxu0 0
    %94 = vmatmul.mubr.bf16.gmra.mrb[0].mxu0 %v59
    %v95 = vpop.f32.mrb[0].mxu0
    %v96 = vadd.f32 %v50, %v95
    %v97 = vpop.f32.mrb[0].mxu0
    %v98 = vpop.f32.mrb[0].mxu0
    %v99 = vpop.f32.mrb[0].mxu0
    %100 = vdwg.mxu0
    %v101 = vmax.f32 %v96, 0.0
    %v102 = vpack.c.bf16 %v101, %v101
    %v103 = vld [vmem:[#allocation2 + $0x8] sm:$0xf]
    %v104 = vld [vmem:[#allocation2 + $0xc] sm:$0xf]
    %v105 = vld [vmem:[#allocation2 + $0x10] sm:$0xf]
    %v106 = vld [vmem:[#allocation2 + $0x14] sm:$0xf]
    %v107 = vld [vmem:[#allocation2 + $0x18] sm:$0xf]
    %v108 = vld [vmem:[#allocation2 + $0x1c] sm:$0xf]
    %v109 = vld [vmem:[#allocation2 + $0x20] sm:$0xf]
    %v110 = vld [vmem:[#allocation2 + $0x24] sm:$0xf]
    %v111 = vld [vmem:[#allocation2 + $0x28] sm:$0xf]
    %v112 = vld [vmem:[#allocation2 + $0x2c] sm:$0xf]
    %v113 = vld [vmem:[#allocation2 + $0x30] sm:$0xf]
    %v114 = vld [vmem:[#allocation2 + $0x34] sm:$0xf]
    %v115 = vld [vmem:[#allocation2 + $0x38] sm:$0xf]
    %v116 = vld [vmem:[#allocation2 + $0x3c] sm:$0xf]
    %v117 = vld [vmem:[#allocation2 + $0x40] sm:$0xf]
    %v118 = vld [vmem:[#allocation2 + $0x44] sm:$0xf]
    %v119 = vld [vmem:[#allocation5 + $0x1] sm:$0x1]
    %v120 = vlaneseq
    %v121 = vshrl.u32 %v120, 7
    %v122 = vsub.s32 0, %v121
    %v123 = vrot.slane %v119, %v122
    %v140 = vunpack.c.l.b16 %v103
    %v141 = vunpack.c.l.b16 %v104
    %v142 = vunpack.c.l.b16 %v105
    %v143 = vunpack.c.l.b16 %v106
    %v144 = vunpack.c.l.b16 %v107
    %v145 = vunpack.c.l.b16 %v108
    %v146 = vunpack.c.l.b16 %v109
    %v147 = vunpack.c.l.b16 %v110
    %v148 = vunpack.c.l.b16 %v111
    %v149 = vunpack.c.l.b16 %v112
    %v150 = vunpack.c.l.b16 %v113
    %v151 = vunpack.c.l.b16 %v114
    %v152 = vunpack.c.l.b16 %v115
    %v153 = vunpack.c.l.b16 %v116
    %v154 = vunpack.c.l.b16 %v117
    %v155 = vunpack.c.l.b16 %v118
    %v156 = vpack.c.b16 %v141, %v140
    %v157 = vpack.c.b16 %v143, %v142
    %v158 = vpack.c.b16 %v145, %v144
    %v159 = vpack.c.b16 %v147, %v146
    %v160 = vpack.c.b16 %v149, %v148
    %v161 = vpack.c.b16 %v151, %v150
    %v162 = vpack.c.b16 %v153, %v152
    %v163 = vpack.c.b16 %v155, %v154
    %172 = vmatprep.subr.bf16.mxu0 0
    %173 = vmatpush1.bf16.msra.mxu0 %v156
    %174 = vmatprep.subr.bf16.mxu0 0
    %175 = vmatpush1.bf16.msra.mxu0 %v157
    %176 = vmatprep.subr.bf16.mxu0 0
    %177 = vmatpush1.bf16.msra.mxu0 %v158
    %178 = vmatprep.subr.bf16.mxu0 0
    %179 = vmatpush1.bf16.msra.mxu0 %v159
    %180 = vmatprep.subr.bf16.mxu0 0
    %181 = vmatpush1.bf16.msra.mxu0 %v160
    %182 = vmatprep.subr.bf16.mxu0 0
    %183 = vmatpush1.bf16.msra.mxu0 %v161
    %184 = vmatprep.subr.bf16.mxu0 0
    %185 = vmatpush1.bf16.msra.mxu0 %v162
    %186 = vmatprep.subr.bf16.mxu0 0
    %187 = vmatpush1.bf16.msra.mxu0 %v163
    %188 = vmatprep.subr.bf16.mxu0 0
    %189 = vmatpush1.bf16.msra.mxu0 0
    %190 = vmatprep.subr.bf16.mxu0 0
    %191 = vmatpush1.bf16.msra.mxu0 0
    %192 = vmatprep.subr.bf16.mxu0 0
    %193 = vmatpush1.bf16.msra.mxu0 0
    %194 = vmatprep.subr.bf16.mxu0 0
    %195 = vmatpush1.bf16.msra.mxu0 0
    %196 = vmatprep.subr.bf16.mxu0 0
    %197 = vmatpush1.bf16.msra.mxu0 0
    %198 = vmatprep.subr.bf16.mxu0 0
    %199 = vmatpush1.bf16.msra.mxu0 0
    %200 = vmatprep.subr.bf16.mxu0 0
    %201 = vmatpush1.bf16.msra.mxu0 0
    %202 = vmatprep.subr.bf16.mxu0 0
    %203 = vmatpush1.bf16.msra.mxu0 0
    %204 = vmatprep.mubr.bf16.mxu0 0
    %205 = vmatmul.mubr.bf16.gmra.mrb[0].mxu0 %v102
    %v206 = vpop.f32.mrb[0].mxu0
    %v207 = vadd.f32 %v123, %v206
    %v208 = vpop.f32.mrb[0].mxu0
    %v209 = vpop.f32.mrb[0].mxu0
    %v210 = vpop.f32.mrb[0].mxu0
    %211 = vdwg.mxu0
    %v212 = vmax.f32 %v207, 0.0
    %v213 = vpack.c.bf16 %v212, %v212
    %v214 = vld [vmem:[#allocation2 + $0x48] sm:$0xf]
    %v215 = vld [vmem:[#allocation2 + $0x4c] sm:$0xf]
    %v216 = vld [vmem:[#allocation2 + $0x50] sm:$0xf]
    %v217 = vld [vmem:[#allocation2 + $0x54] sm:$0xf]
    %v218 = vld [vmem:[#allocation2 + $0x58] sm:$0xf]
    %v219 = vld [vmem:[#allocation2 + $0x5c] sm:$0xf]
    %v220 = vld [vmem:[#allocation2 + $0x60] sm:$0xf]
    %v221 = vld [vmem:[#allocation2 + $0x64] sm:$0xf]
    %v222 = vld [vmem:[#allocation2 + $0x68] sm:$0xf]
    %v223 = vld [vmem:[#allocation2 + $0x6c] sm:$0xf]
    %v224 = vld [vmem:[#allocation2 + $0x70] sm:$0xf]
    %v225 = vld [vmem:[#allocation2 + $0x74] sm:$0xf]
    %v226 = vld [vmem:[#allocation2 + $0x78] sm:$0xf]
    %v227 = vld [vmem:[#allocation2 + $0x7c] sm:$0xf]
    %v228 = vld [vmem:[#allocation2 + $0x80] sm:$0xf]
    %v229 = vld [vmem:[#allocation2 + $0x84] sm:$0xf]
    %v230 = vld [vmem:[#allocation5 + $0x2] sm:$0x1]
    %v231 = vlaneseq
    %v232 = vshrl.u32 %v231, 7
    %v233 = vsub.s32 0, %v232
    %v234 = vrot.slane %v230, %v233
    %v251 = vunpack.c.l.b16 %v214
    %v252 = vunpack.c.l.b16 %v215
    %v253 = vunpack.c.l.b16 %v216
    %v254 = vunpack.c.l.b16 %v217
    %v255 = vunpack.c.l.b16 %v218
    %v256 = vunpack.c.l.b16 %v219
    %v257 = vunpack.c.l.b16 %v220
    %v258 = vunpack.c.l.b16 %v221
    %v259 = vunpack.c.l.b16 %v222
    %v260 = vunpack.c.l.b16 %v223
    %v261 = vunpack.c.l.b16 %v224
    %v262 = vunpack.c.l.b16 %v225
    %v263 = vunpack.c.l.b16 %v226
    %v264 = vunpack.c.l.b16 %v227
    %v265 = vunpack.c.l.b16 %v228
    %v266 = vunpack.c.l.b16 %v229
    %v267 = vpack.c.b16 %v252, %v251
    %v268 = vpack.c.b16 %v254, %v253
    %v269 = vpack.c.b16 %v256, %v255
    %v270 = vpack.c.b16 %v258, %v257
    %v271 = vpack.c.b16 %v260, %v259
    %v272 = vpack.c.b16 %v262, %v261
    %v273 = vpack.c.b16 %v264, %v263
    %v274 = vpack.c.b16 %v266, %v265
    %283 = vmatprep.subr.bf16.mxu0 0
    %284 = vmatpush1.bf16.msra.mxu0 %v267
    %285 = vmatprep.subr.bf16.mxu0 0
    %286 = vmatpush1.bf16.msra.mxu0 %v268
    %287 = vmatprep.subr.bf16.mxu0 0
    %288 = vmatpush1.bf16.msra.mxu0 %v269
    %289 = vmatprep.subr.bf16.mxu0 0
    %290 = vmatpush1.bf16.msra.mxu0 %v270
    %291 = vmatprep.subr.bf16.mxu0 0
    %292 = vmatpush1.bf16.msra.mxu0 %v271
    %293 = vmatprep.subr.bf16.mxu0 0
    %294 = vmatpush1.bf16.msra.mxu0 %v272
    %295 = vmatprep.subr.bf16.mxu0 0
    %296 = vmatpush1.bf16.msra.mxu0 %v273
    %297 = vmatprep.subr.bf16.mxu0 0
    %298 = vmatpush1.bf16.msra.mxu0 %v274
    %299 = vmatprep.subr.bf16.mxu0 0
    %300 = vmatpush1.bf16.msra.mxu0 0
    %301 = vmatprep.subr.bf16.mxu0 0
    %302 = vmatpush1.bf16.msra.mxu0 0
    %303 = vmatprep.subr.bf16.mxu0 0
    %304 = vmatpush1.bf16.msra.mxu0 0
    %305 = vmatprep.subr.bf16.mxu0 0
    %306 = vmatpush1.bf16.msra.mxu0 0
    %307 = vmatprep.subr.bf16.mxu0 0
    %308 = vmatpush1.bf16.msra.mxu0 0
    %309 = vmatprep.subr.bf16.mxu0 0
    %310 = vmatpush1.bf16.msra.mxu0 0
    %311 = vmatprep.subr.bf16.mxu0 0
    %312 = vmatpush1.bf16.msra.mxu0 0
    %313 = vmatprep.subr.bf16.mxu0 0
    %314 = vmatpush1.bf16.msra.mxu0 0
    %315 = vmatprep.mubr.bf16.mxu0 0
    %316 = vmatmul.mubr.bf16.gmra.mrb[0].mxu0 %v213
    %v317 = vpop.f32.mrb[0].mxu0
    %v318 = vadd.f32 %v234, %v317
    %v319 = vpop.f32.mrb[0].mxu0
    %v320 = vpop.f32.mrb[0].mxu0
    %v321 = vpop.f32.mrb[0].mxu0
    %322 = vdwg.mxu0
    %v323 = vlaneseq
    %v324 = vshrl.u32 %v323, 7
    %v325 = vcvt.s32.f32 %v324
    %v326 = vlaneseq
    %v327 = vand.u32 %v326, 127
    %v328 = vcvt.s32.f32 %v327
    %v329 = vmul.f32 %v325, 0.25
    %v330 = vfloor.f32 %v329
    %v331 = vmul.f32 %v328, 0.25
    %v332 = vfloor.f32 %v331
    %vm333 = vcmp.eq.f32.partialorder %v330, %v332
    %v334 = vsel %vm333, 1, 0
    %v335 = vcvt.s32.f32 %v334
    %v336 = vpack.c.bf16 %v318, %v318
    %vm337 = vcmask 261120
    %v339 = vsel %vm337, %v336, 0
    %341 = vmatprep.subr.bf16.mxu0 0
    %342 = vmatpush1.bf16.xpose.msra.mxu0 %v339
    %343 = vmatprep.subr.bf16.mxu0 0
    %344 = vmatpush1.bf16.xpose.msra.mxu0 0
    %345 = vmatprep.subr.bf16.mxu0 0
    %346 = vmatpush1.bf16.xpose.msra.mxu0 0
    %347 = vmatprep.subr.bf16.mxu0 0
    %348 = vmatpush1.bf16.xpose.msra.mxu0 0
    %349 = vmatprep.subr.bf16.mxu0 0
    %350 = vmatpush1.bf16.xpose.msra.mxu0 0
    %351 = vmatprep.subr.bf16.mxu0 0
    %352 = vmatpush1.bf16.xpose.msra.mxu0 0
    %353 = vmatprep.subr.bf16.mxu0 0
    %354 = vmatpush1.bf16.xpose.msra.mxu0 0
    %355 = vmatprep.subr.bf16.mxu0 0
    %356 = vmatpush1.bf16.xpose.msra.mxu0 0
    %357 = vmatprep.subr.bf16.mxu0 0
    %358 = vmatpush1.bf16.xpose.msra.mxu0 0
    %359 = vmatprep.subr.bf16.mxu0 0
    %360 = vmatpush1.bf16.xpose.msra.mxu0 0
    %361 = vmatprep.subr.bf16.mxu0 0
    %362 = vmatpush1.bf16.xpose.msra.mxu0 0
    %363 = vmatprep.subr.bf16.mxu0 0
    %364 = vmatpush1.bf16.xpose.msra.mxu0 0
    %365 = vmatprep.subr.bf16.mxu0 0
    %366 = vmatpush1.bf16.xpose.msra.mxu0 0
    %367 = vmatprep.subr.bf16.mxu0 0
    %368 = vmatpush1.bf16.xpose.msra.mxu0 0
    %369 = vmatprep.subr.bf16.mxu0 0
    %370 = vmatpush1.bf16.xpose.msra.mxu0 0
    %371 = vmatprep.subr.bf16.mxu0 0
    %372 = vmatpush1.bf16.xpose.msra.mxu0 0
    %373 = vmatprep.mubr.bf16.mxu0 0
    %374 = vmatmul.mubr.bf16.gmra.mrb[0].mxu0 %v339
    %v375 = vpop.f32.mrb[0].mxu0
    %v376 = vadd.f32 0.0, %v375
    %v377 = vpop.f32.mrb[0].mxu0
    %v378 = vpop.f32.mrb[0].mxu0
    %v379 = vpop.f32.mrb[0].mxu0
    %380 = vdwg.mxu0
    %v381 = vmax.f32 %v376, 0.0
    %v382 = vmul.f32 %v381, %v335
    %vm383 = vcmask 64512
    %v384 = vsel %vm383, %v382, -inf
    %385 = vmax.xlane.f32.xlu0 %v384
    %v386 = vpop.xlane.xlu0 %385
    %v387 = vsub.f32 %v382, %v386
    %v388 = vmul.f32 %v387, 1.442695
    %v389 = vpow.pop %v388
    %v390 = vmul.f32 %v389, %v335
    %v391 = vsel %vm383, %v390, 0.0
    %392 = vadd.xlane.f32.xlu0 %v391
    %v393 = vpop.xlane.xlu0 %392
    %v394 = vrcp.pop %v393
    %v395 = vmul.f32 %v390, %v394
    %v396 = vpack.c.bf16 %v395, %v395
    %v398 = vsel %vm383, %v396, 0
    %vm400 = vcmask 1043456
    %v401 = vsel %vm400, %v336, 0
    %403 = vmatprep.subr.bf16.mxu0 0
    %404 = vmatpush1.bf16.msra.mxu0 %v401
    %405 = vmatprep.subr.bf16.mxu0 0
    %406 = vmatpush1.bf16.msra.mxu0 0
    %407 = vmatprep.subr.bf16.mxu0 0
    %408 = vmatpush1.bf16.msra.mxu0 0
    %409 = vmatprep.subr.bf16.mxu0 0
    %410 = vmatpush1.bf16.msra.mxu0 0
    %411 = vmatprep.subr.bf16.mxu0 0
    %412 = vmatpush1.bf16.msra.mxu0 0
    %413 = vmatprep.subr.bf16.mxu0 0
    %414 = vmatpush1.bf16.msra.mxu0 0
    %415 = vmatprep.subr.bf16.mxu0 0
    %416 = vmatpush1.bf16.msra.mxu0 0
    %417 = vmatprep.subr.bf16.mxu0 0
    %418 = vmatpush1.bf16.msra.mxu0 0
    %419 = vmatprep.subr.bf16.mxu0 0
    %420 = vmatpush1.bf16.msra.mxu0 0
    %421 = vmatprep.subr.bf16.mxu0 0
    %422 = vmatpush1.bf16.msra.mxu0 0
    %423 = vmatprep.subr.bf16.mxu0 0
    %424 = vmatpush1.bf16.msra.mxu0 0
    %425 = vmatprep.subr.bf16.mxu0 0
    %426 = vmatpush1.bf16.msra.mxu0 0
    %427 = vmatprep.subr.bf16.mxu0 0
    %428 = vmatpush1.bf16.msra.mxu0 0
    %429 = vmatprep.subr.bf16.mxu0 0
    %430 = vmatpush1.bf16.msra.mxu0 0
    %431 = vmatprep.subr.bf16.mxu0 0
    %432 = vmatpush1.bf16.msra.mxu0 0
    %433 = vmatprep.subr.bf16.mxu0 0
    %434 = vmatpush1.bf16.msra.mxu0 0
    %435 = vmatprep.mubr.bf16.mxu0 0
    %436 = vmatmul.mubr.bf16.gmra.mrb[0].mxu0 %v398
    %v437 = vpop.f32.mrb[0].mxu0
    %v438 = vadd.f32 0.0, %v437
    %v439 = vpop.f32.mrb[0].mxu0
    %v440 = vpop.f32.mrb[0].mxu0
    %v441 = vpop.f32.mrb[0].mxu0
    %442 = vdwg.mxu0
    %v443 = vpack.c.bf16 %v438, %v438
    %v444 = vld [vmem:[#allocation2 + $0x88] sm:$0xf]
    %v445 = vld [vmem:[#allocation2 + $0x8c] sm:$0xf]
    %v446 = vld [vmem:[#allocation2 + $0x90] sm:$0xf]
    %v447 = vld [vmem:[#allocation2 + $0x94] sm:$0xf]
    %v448 = vld [vmem:[#allocation5 + $0x3] sm:$0x1]
    %v449 = vlaneseq
    %v450 = vshrl.u32 %v449, 7
    %v451 = vsub.s32 0, %v450
    %v452 = vrot.slane %v448, %v451
    %v457 = vunpack.c.l.b16 %v444
    %v458 = vunpack.c.l.b16 %v445
    %v459 = vunpack.c.l.b16 %v446
    %v460 = vunpack.c.l.b16 %v447
    %v461 = vpack.c.b16 %v458, %v457
    %v462 = vpack.c.b16 %v460, %v459
    %v466 = vsel %vm337, %v443, 0
    %468 = vmatprep.subr.bf16.mxu0 0
    %469 = vmatpush1.bf16.msra.mxu0 %v461
    %470 = vmatprep.subr.bf16.mxu0 0
    %471 = vmatpush1.bf16.msra.mxu0 %v462
    %472 = vmatprep.subr.bf16.mxu0 0
    %473 = vmatpush1.bf16.msra.mxu0 0
    %474 = vmatprep.subr.bf16.mxu0 0
    %475 = vmatpush1.bf16.msra.mxu0 0
    %476 = vmatprep.subr.bf16.mxu0 0
    %477 = vmatpush1.bf16.msra.mxu0 0
    %478 = vmatprep.subr.bf16.mxu0 0
    %479 = vmatpush1.bf16.msra.mxu0 0
    %480 = vmatprep.subr.bf16.mxu0 0
    %481 = vmatpush1.bf16.msra.mxu0 0
    %482 = vmatprep.subr.bf16.mxu0 0
    %483 = vmatpush1.bf16.msra.mxu0 0
    %484 = vmatprep.subr.bf16.mxu0 0
    %485 = vmatpush1.bf16.msra.mxu0 0
    %486 = vmatprep.subr.bf16.mxu0 0
    %487 = vmatpush1.bf16.msra.mxu0 0
    %488 = vmatprep.subr.bf16.mxu0 0
    %489 = vmatpush1.bf16.msra.mxu0 0
    %490 = vmatprep.subr.bf16.mxu0 0
    %491 = vmatpush1.bf16.msra.mxu0 0
    %492 = vmatprep.subr.bf16.mxu0 0
    %493 = vmatpush1.bf16.msra.mxu0 0
    %494 = vmatprep.subr.bf16.mxu0 0
    %495 = vmatpush1.bf16.msra.mxu0 0
    %496 = vmatprep.subr.bf16.mxu0 0
    %497 = vmatpush1.bf16.msra.mxu0 0
    %498 = vmatprep.subr.bf16.mxu0 0
    %499 = vmatpush1.bf16.msra.mxu0 0
    %500 = vmatprep.mubr.bf16.mxu0 0
    %501 = vmatmul.mubr.bf16.gmra.mrb[0].mxu0 %v466
    %v502 = vpop.f32.mrb[0].mxu0
    %v503 = vadd.f32 %v452, %v502
    %v504 = vpop.f32.mrb[0].mxu0
    %v505 = vpop.f32.mrb[0].mxu0
    %v506 = vpop.f32.mrb[0].mxu0
    %507 = vdwg.mxu0
    %v508 = vmax.f32 %v503, 0.0
    %v509 = vld [vmem:[#allocation2 + $0x98] sm:$0xf]
    %v510 = vld [vmem:[#allocation2 + $0x9c] sm:$0xf]
    %v511 = vld [vmem:[#allocation2 + $0xa0] sm:$0xf]
    %v512 = vld [vmem:[#allocation2 + $0xa4] sm:$0xf]
    %v513 = vld [vmem:[#allocation5 + $0x4] sm:$0x1]
    %v514 = vlaneseq
    %v515 = vshrl.u32 %v514, 7
    %v516 = vsub.s32 0, %v515
    %v517 = vrot.slane %v513, %v516
    %v522 = vunpack.c.l.b16 %v509
    %v523 = vunpack.c.l.b16 %v510
    %v524 = vunpack.c.l.b16 %v511
    %v525 = vunpack.c.l.b16 %v512
    %v526 = vpack.c.b16 %v523, %v522
    %v527 = vpack.c.b16 %v525, %v524
    %530 = vmatprep.subr.bf16.mxu0 0
    %531 = vmatpush1.bf16.msra.mxu0 %v526
    %532 = vmatprep.subr.bf16.mxu0 0
    %533 = vmatpush1.bf16.msra.mxu0 %v527
    %534 = vmatprep.subr.bf16.mxu0 0
    %535 = vmatpush1.bf16.msra.mxu0 0
    %536 = vmatprep.subr.bf16.mxu0 0
    %537 = vmatpush1.bf16.msra.mxu0 0
    %538 = vmatprep.subr.bf16.mxu0 0
    %539 = vmatpush1.bf16.msra.mxu0 0
    %540 = vmatprep.subr.bf16.mxu0 0
    %541 = vmatpush1.bf16.msra.mxu0 0
    %542 = vmatprep.subr.bf16.mxu0 0
    %543 = vmatpush1.bf16.msra.mxu0 0
    %544 = vmatprep.subr.bf16.mxu0 0
    %545 = vmatpush1.bf16.msra.mxu0 0
    %546 = vmatprep.subr.bf16.mxu0 0
    %547 = vmatpush1.bf16.msra.mxu0 0
    %548 = vmatprep.subr.bf16.mxu0 0
    %549 = vmatpush1.bf16.msra.mxu0 0
    %550 = vmatprep.subr.bf16.mxu0 0
    %551 = vmatpush1.bf16.msra.mxu0 0
    %552 = vmatprep.subr.bf16.mxu0 0
    %553 = vmatpush1.bf16.msra.mxu0 0
    %554 = vmatprep.subr.bf16.mxu0 0
    %555 = vmatpush1.bf16.msra.mxu0 0
    %556 = vmatprep.subr.bf16.mxu0 0
    %557 = vmatpush1.bf16.msra.mxu0 0
    %558 = vmatprep.subr.bf16.mxu0 0
    %559 = vmatpush1.bf16.msra.mxu0 0
    %560 = vmatprep.subr.bf16.mxu0 0
    %561 = vmatpush1.bf16.msra.mxu0 0
    %562 = vmatprep.mubr.bf16.mxu0 0
    %563 = vmatmul.mubr.bf16.gmra.mrb[0].mxu0 %v466
    %v564 = vpop.f32.mrb[0].mxu0
    %v565 = vadd.f32 %v517, %v564
    %v566 = vpop.f32.mrb[0].mxu0
    %v567 = vpop.f32.mrb[0].mxu0
    %v568 = vpop.f32.mrb[0].mxu0
    %569 = vdwg.mxu0
    %v570 = vmax.f32 %v565, 0.0
    %v571 = vmul.f32 %v330, 4.0
    %v572 = vsub.f32 %v325, %v571
    %v573 = vmul.f32 %v332, 4.0
    %v574 = vsub.f32 %v328, %v573
    %v575 = vsub.f32 %v328, %v571
    %vm576 = vcmp.eq.f32.partialorder %v572, %v574
    %vm577 = vcmp.ge.f32.partialorder %v575, 0.0
    %vm578 = vmand %vm576, %vm577
    %vm579 = vcmp.lt.f32.partialorder %v575, 4.0
    %vm580 = vmand %vm578, %vm579
    %v581 = vsel %vm580, 1.0, 0.0
    %v583 = vsel %vm383, %v581, 0
    %585 = vmatprep.subr.mxu0 0.0
    %586 = vmatpush1.msra.mxu0 %v508
    %587 = vmatprep.subr.mxu0 0.0
    %588 = vmatpush1.msra.mxu0 0.0
    %589 = vmatprep.subr.mxu0 0.0
    %590 = vmatpush1.msra.mxu0 0.0
    %591 = vmatprep.subr.mxu0 0.0
    %592 = vmatpush1.msra.mxu0 0.0
    %593 = vmatprep.subr.mxu0 0.0
    %594 = vmatpush1.msra.mxu0 0.0
    %595 = vmatprep.subr.mxu0 0.0
    %596 = vmatpush1.msra.mxu0 0.0
    %597 = vmatprep.subr.mxu0 0.0
    %598 = vmatpush1.msra.mxu0 0.0
    %599 = vmatprep.subr.mxu0 0.0
    %600 = vmatpush1.msra.mxu0 0.0
    %601 = vmatprep.subr.mxu0 0.0
    %602 = vmatpush1.msra.mxu0 0.0
    %603 = vmatprep.subr.mxu0 0.0
    %604 = vmatpush1.msra.mxu0 0.0
    %605 = vmatprep.subr.mxu0 0.0
    %606 = vmatpush1.msra.mxu0 0.0
    %607 = vmatprep.subr.mxu0 0.0
    %608 = vmatpush1.msra.mxu0 0.0
    %609 = vmatprep.subr.mxu0 0.0
    %610 = vmatpush1.msra.mxu0 0.0
    %611 = vmatprep.subr.mxu0 0.0
    %612 = vmatpush1.msra.mxu0 0.0
    %613 = vmatprep.subr.mxu0 0.0
    %614 = vmatpush1.msra.mxu0 0.0
    %615 = vmatprep.subr.mxu0 0.0
    %616 = vmatpush1.msra.mxu0 0.0
    %617 = vmatprep.subr.mxu0 0.0
    %618 = vmatpush1.msra.mxu0 0.0
    %619 = vmatprep.subr.mxu0 0.0
    %620 = vmatpush1.msra.mxu0 0.0
    %621 = vmatprep.subr.mxu0 0.0
    %622 = vmatpush1.msra.mxu0 0.0
    %623 = vmatprep.subr.mxu0 0.0
    %624 = vmatpush1.msra.mxu0 0.0
    %625 = vmatprep.subr.mxu0 0.0
    %626 = vmatpush1.msra.mxu0 0.0
    %627 = vmatprep.subr.mxu0 0.0
    %628 = vmatpush1.msra.mxu0 0.0
    %629 = vmatprep.subr.mxu0 0.0
    %630 = vmatpush1.msra.mxu0 0.0
    %631 = vmatprep.subr.mxu0 0.0
    %632 = vmatpush1.msra.mxu0 0.0
    %633 = vmatprep.subr.mxu0 0.0
    %634 = vmatpush1.msra.mxu0 0.0
    %635 = vmatprep.subr.mxu0 0.0
    %636 = vmatpush1.msra.mxu0 0.0
    %637 = vmatprep.subr.mxu0 0.0
    %638 = vmatpush1.msra.mxu0 0.0
    %639 = vmatprep.subr.mxu0 0.0
    %640 = vmatpush1.msra.mxu0 0.0
    %641 = vmatprep.subr.mxu0 0.0
    %642 = vmatpush1.msra.mxu0 0.0
    %643 = vmatprep.subr.mxu0 0.0
    %644 = vmatpush1.msra.mxu0 0.0
    %645 = vmatprep.subr.mxu0 0.0
    %646 = vmatpush1.msra.mxu0 0.0
    %647 = vmatprep.subr.mxu0 0.0
    %648 = vmatpush1.msra.mxu0 0.0
    %649 = vmatprep.mubr.f32.mxu0 0.0
    %650 = vmatmul.mubr.f32.gmra.mrb[0].mxu0 %v583
    %v651 = vpop.f32.mrb[0].mxu0
    %v652 = vadd.f32 0.0, %v651
    %v653 = vpop.f32.mrb[0].mxu0
    %654 = vdwg.mxu0
    %655 = vmatprep.subr.mxu0 0.0
    %656 = vmatpush1.msra.mxu0 %v570
    %657 = vmatprep.subr.mxu0 0.0
    %658 = vmatpush1.msra.mxu0 0.0
    %659 = vmatprep.subr.mxu0 0.0
    %660 = vmatpush1.msra.mxu0 0.0
    %661 = vmatprep.subr.mxu0 0.0
    %662 = vmatpush1.msra.mxu0 0.0
    %663 = vmatprep.subr.mxu0 0.0
    %664 = vmatpush1.msra.mxu0 0.0
    %665 = vmatprep.subr.mxu0 0.0
    %666 = vmatpush1.msra.mxu0 0.0
    %667 = vmatprep.subr.mxu0 0.0
    %668 = vmatpush1.msra.mxu0 0.0
    %669 = vmatprep.subr.mxu0 0.0
    %670 = vmatpush1.msra.mxu0 0.0
    %671 = vmatprep.subr.mxu0 0.0
    %672 = vmatpush1.msra.mxu0 0.0
    %673 = vmatprep.subr.mxu0 0.0
    %674 = vmatpush1.msra.mxu0 0.0
    %675 = vmatprep.subr.mxu0 0.0
    %676 = vmatpush1.msra.mxu0 0.0
    %677 = vmatprep.subr.mxu0 0.0
    %678 = vmatpush1.msra.mxu0 0.0
    %679 = vmatprep.subr.mxu0 0.0
    %680 = vmatpush1.msra.mxu0 0.0
    %681 = vmatprep.subr.mxu0 0.0
    %682 = vmatpush1.msra.mxu0 0.0
    %683 = vmatprep.subr.mxu0 0.0
    %684 = vmatpush1.msra.mxu0 0.0
    %685 = vmatprep.subr.mxu0 0.0
    %686 = vmatpush1.msra.mxu0 0.0
    %687 = vmatprep.subr.mxu0 0.0
    %688 = vmatpush1.msra.mxu0 0.0
    %689 = vmatprep.subr.mxu0 0.0
    %690 = vmatpush1.msra.mxu0 0.0
    %691 = vmatprep.subr.mxu0 0.0
    %692 = vmatpush1.msra.mxu0 0.0
    %693 = vmatprep.subr.mxu0 0.0
    %694 = vmatpush1.msra.mxu0 0.0
    %695 = vmatprep.subr.mxu0 0.0
    %696 = vmatpush1.msra.mxu0 0.0
    %697 = vmatprep.subr.mxu0 0.0
    %698 = vmatpush1.msra.mxu0 0.0
    %699 = vmatprep.subr.mxu0 0.0
    %700 = vmatpush1.msra.mxu0 0.0
    %701 = vmatprep.subr.mxu0 0.0
    %702 = vmatpush1.msra.mxu0 0.0
    %703 = vmatprep.subr.mxu0 0.0
    %704 = vmatpush1.msra.mxu0 0.0
    %705 = vmatprep.subr.mxu0 0.0
    %706 = vmatpush1.msra.mxu0 0.0
    %707 = vmatprep.subr.mxu0 0.0
    %708 = vmatpush1.msra.mxu0 0.0
    %709 = vmatprep.subr.mxu0 0.0
    %710 = vmatpush1.msra.mxu0 0.0
    %711 = vmatprep.subr.mxu0 0.0
    %712 = vmatpush1.msra.mxu0 0.0
    %713 = vmatprep.subr.mxu0 0.0
    %714 = vmatpush1.msra.mxu0 0.0
    %715 = vmatprep.subr.mxu0 0.0
    %716 = vmatpush1.msra.mxu0 0.0
    %717 = vmatprep.subr.mxu0 0.0
    %718 = vmatpush1.msra.mxu0 0.0
    %719 = vmatprep.mubr.f32.mxu0 0.0
    %720 = vmatmul.mubr.f32.gmra.mrb[0].mxu0 %v583
    %v721 = vpop.f32.mrb[0].mxu0
    %v722 = vadd.f32 0.0, %v721
    %v723 = vpop.f32.mrb[0].mxu0
    %724 = vdwg.mxu0
    %v725 = vpack.c.bf16 %v652, %v652
    %v726 = vld [vmem:[#allocation2 + $0xa8] sm:$0xf]
    %v727 = vld [vmem:[#allocation2 + $0xac] sm:$0xf]
    %v728 = vpack.c.bf16 %v722, %v722
    %v729 = vld [vmem:[#allocation2 + $0xb0] sm:$0xf]
    %v730 = vld [vmem:[#allocation2 + $0xb4] sm:$0xf]
    %v733 = vunpack.c.l.b16 %v729
    %v734 = vunpack.c.l.b16 %v730
    %v735 = vpack.c.b16 %v734, %v733
    %v738 = vsel %vm57, %v728, 0
    %740 = vmatprep.subr.bf16.mxu0 0
    %741 = vmatpush1.bf16.msra.mxu0 %v735
    %742 = vmatprep.subr.bf16.mxu0 0
    %743 = vmatpush1.bf16.msra.mxu0 0
    %744 = vmatprep.subr.bf16.mxu0 0
    %745 = vmatpush1.bf16.msra.mxu0 0
    %746 = vmatprep.subr.bf16.mxu0 0
    %747 = vmatpush1.bf16.msra.mxu0 0
    %748 = vmatprep.subr.bf16.mxu0 0
    %749 = vmatpush1.bf16.msra.mxu0 0
    %750 = vmatprep.subr.bf16.mxu0 0
    %751 = vmatpush1.bf16.msra.mxu0 0
    %752 = vmatprep.subr.bf16.mxu0 0
    %753 = vmatpush1.bf16.msra.mxu0 0
    %754 = vmatprep.subr.bf16.mxu0 0
    %755 = vmatpush1.bf16.msra.mxu0 0
    %756 = vmatprep.subr.bf16.mxu0 0
    %757 = vmatpush1.bf16.msra.mxu0 0
    %758 = vmatprep.subr.bf16.mxu0 0
    %759 = vmatpush1.bf16.msra.mxu0 0
    %760 = vmatprep.subr.bf16.mxu0 0
    %761 = vmatpush1.bf16.msra.mxu0 0
    %762 = vmatprep.subr.bf16.mxu0 0
    %763 = vmatpush1.bf16.msra.mxu0 0
    %764 = vmatprep.subr.bf16.mxu0 0
    %765 = vmatpush1.bf16.msra.mxu0 0
    %766 = vmatprep.subr.bf16.mxu0 0
    %767 = vmatpush1.bf16.msra.mxu0 0
    %768 = vmatprep.subr.bf16.mxu0 0
    %769 = vmatpush1.bf16.msra.mxu0 0
    %770 = vmatprep.subr.bf16.mxu0 0
    %771 = vmatpush1.bf16.msra.mxu0 0
    %772 = vmatprep.mubr.bf16.mxu0 0
    %773 = vmatmul.mubr.bf16.gmra.mrb[0].mxu0 %v738
    %v774 = vpop.f32.mrb[0].mxu0
    %v775 = vadd.f32 0.0, %v774
    %v776 = vpop.f32.mrb[0].mxu0
    %v777 = vpop.f32.mrb[0].mxu0
    %v778 = vpop.f32.mrb[0].mxu0
    %779 = vdwg.mxu0
    %v782 = vunpack.c.l.b16 %v726
    %v783 = vunpack.c.l.b16 %v727
    %v784 = vpack.c.b16 %v783, %v782
    %v787 = vsel %vm57, %v725, 0
    %789 = vmatprep.subr.bf16.mxu0 0
    %790 = vmatpush1.bf16.msra.mxu0 %v784
    %791 = vmatprep.subr.bf16.mxu0 0
    %792 = vmatpush1.bf16.msra.mxu0 0
    %793 = vmatprep.subr.bf16.mxu0 0
    %794 = vmatpush1.bf16.msra.mxu0 0
    %795 = vmatprep.subr.bf16.mxu0 0
    %796 = vmatpush1.bf16.msra.mxu0 0
    %797 = vmatprep.subr.bf16.mxu0 0
    %798 = vmatpush1.bf16.msra.mxu0 0
    %799 = vmatprep.subr.bf16.mxu0 0
    %800 = vmatpush1.bf16.msra.mxu0 0
    %801 = vmatprep.subr.bf16.mxu0 0
    %802 = vmatpush1.bf16.msra.mxu0 0
    %803 = vmatprep.subr.bf16.mxu0 0
    %804 = vmatpush1.bf16.msra.mxu0 0
    %805 = vmatprep.subr.bf16.mxu0 0
    %806 = vmatpush1.bf16.msra.mxu0 0
    %807 = vmatprep.subr.bf16.mxu0 0
    %808 = vmatpush1.bf16.msra.mxu0 0
    %809 = vmatprep.subr.bf16.mxu0 0
    %810 = vmatpush1.bf16.msra.mxu0 0
    %811 = vmatprep.subr.bf16.mxu0 0
    %812 = vmatpush1.bf16.msra.mxu0 0
    %813 = vmatprep.subr.bf16.mxu0 0
    %814 = vmatpush1.bf16.msra.mxu0 0
    %815 = vmatprep.subr.bf16.mxu0 0
    %816 = vmatpush1.bf16.msra.mxu0 0
    %817 = vmatprep.subr.bf16.mxu0 0
    %818 = vmatpush1.bf16.msra.mxu0 0
    %819 = vmatprep.subr.bf16.mxu0 0
    %820 = vmatpush1.bf16.msra.mxu0 0
    %821 = vmatprep.mubr.bf16.mxu0 0
    %822 = vmatmul.mubr.bf16.gmra.mrb[0].mxu0 %v787
    %v823 = vpop.f32.mrb[0].mxu0
    %v824 = vadd.f32 %v775, %v823
    %v825 = vpop.f32.mrb[0].mxu0
    %v826 = vpop.f32.mrb[0].mxu0
    %v827 = vpop.f32.mrb[0].mxu0
    %828 = vdwg.mxu0
    %v829 = vld [vmem:[#allocation5 + $0x5] sm:$0x1]
    %v830 = vlaneseq
    %v831 = vshrl.u32 %v830, 7
    %v832 = vsub.s32 0, %v831
    %v833 = vrot.slane %v829, %v832
    %v834 = vadd.f32 %v824, %v833
    %v835 = vmax.f32 %v834, 0.0
    %v836 = vpack.c.bf16 %v835, %v835
    %v837 = vld [vmem:[#allocation2 + $0xb8] sm:$0xf]
    %v838 = vld [vmem:[#allocation2 + $0xbc] sm:$0xf]
    %v839 = vld [vmem:[#allocation2 + $0xc0] sm:$0xf]
    %v840 = vld [vmem:[#allocation2 + $0xc4] sm:$0xf]
    %v841 = vld [vmem:[#allocation5 + $0x6] sm:$0x1]
    %v842 = vlaneseq
    %v843 = vshrl.u32 %v842, 7
    %v844 = vsub.s32 0, %v843
    %v845 = vrot.slane %v841, %v844
    %v850 = vunpack.c.l.b16 %v837
    %v851 = vunpack.c.l.b16 %v838
    %v852 = vunpack.c.l.b16 %v839
    %v853 = vunpack.c.l.b16 %v840
    %v854 = vpack.c.b16 %v851, %v850
    %v855 = vpack.c.b16 %v853, %v852
    %v859 = vsel %vm337, %v836, 0
    %861 = vmatprep.subr.bf16.mxu0 0
    %862 = vmatpush1.bf16.msra.mxu0 %v854
    %863 = vmatprep.subr.bf16.mxu0 0
    %864 = vmatpush1.bf16.msra.mxu0 %v855
    %865 = vmatprep.subr.bf16.mxu0 0
    %866 = vmatpush1.bf16.msra.mxu0 0
    %867 = vmatprep.subr.bf16.mxu0 0
    %868 = vmatpush1.bf16.msra.mxu0 0
    %869 = vmatprep.subr.bf16.mxu0 0
    %870 = vmatpush1.bf16.msra.mxu0 0
    %871 = vmatprep.subr.bf16.mxu0 0
    %872 = vmatpush1.bf16.msra.mxu0 0
    %873 = vmatprep.subr.bf16.mxu0 0
    %874 = vmatpush1.bf16.msra.mxu0 0
    %875 = vmatprep.subr.bf16.mxu0 0
    %876 = vmatpush1.bf16.msra.mxu0 0
    %877 = vmatprep.subr.bf16.mxu0 0
    %878 = vmatpush1.bf16.msra.mxu0 0
    %879 = vmatprep.subr.bf16.mxu0 0
    %880 = vmatpush1.bf16.msra.mxu0 0
    %881 = vmatprep.subr.bf16.mxu0 0
    %882 = vmatpush1.bf16.msra.mxu0 0
    %883 = vmatprep.subr.bf16.mxu0 0
    %884 = vmatpush1.bf16.msra.mxu0 0
    %885 = vmatprep.subr.bf16.mxu0 0
    %886 = vmatpush1.bf16.msra.mxu0 0
    %887 = vmatprep.subr.bf16.mxu0 0
    %888 = vmatpush1.bf16.msra.mxu0 0
    %889 = vmatprep.subr.bf16.mxu0 0
    %890 = vmatpush1.bf16.msra.mxu0 0
    %891 = vmatprep.subr.bf16.mxu0 0
    %892 = vmatpush1.bf16.msra.mxu0 0
    %893 = vmatprep.mubr.bf16.mxu0 0
    %894 = vmatmul.mubr.bf16.gmra.mrb[0].mxu0 %v859
    %v895 = vpop.f32.mrb[0].mxu0
    %v896 = vadd.f32 %v845, %v895
    %v897 = vpop.f32.mrb[0].mxu0
    %v898 = vpop.f32.mrb[0].mxu0
    %v899 = vpop.f32.mrb[0].mxu0
    %900 = vdwg.mxu0
    %v901 = vmax.f32 %v896, 0.0
    %v902 = vpack.c.bf16 %v901, %v901
    %v903 = vld [vmem:[#allocation2 + $0xc8] sm:$0xf]
    %v904 = vld [vmem:[#allocation5 + $0x7] sm:$0x1]
    %v905 = vlaneseq
    %v906 = vshrl.u32 %v905, 7
    %v907 = vsub.s32 0, %v906
    %v908 = vrot.slane %v904, %v907
    %v910 = vsel %vm383, %v902, 0
    %v913 = vsel %vm400, %v903, 0
    %915 = vmatprep.subr.bf16.mxu0 0
    %916 = vmatpush1.bf16.msra.mxu0 %v913
    %917 = vmatprep.subr.bf16.mxu0 0
    %918 = vmatpush1.bf16.msra.mxu0 0
    %919 = vmatprep.subr.bf16.mxu0 0
    %920 = vmatpush1.bf16.msra.mxu0 0
    %921 = vmatprep.subr.bf16.mxu0 0
    %922 = vmatpush1.bf16.msra.mxu0 0
    %923 = vmatprep.subr.bf16.mxu0 0
    %924 = vmatpush1.bf16.msra.mxu0 0
    %925 = vmatprep.subr.bf16.mxu0 0
    %926 = vmatpush1.bf16.msra.mxu0 0
    %927 = vmatprep.subr.bf16.mxu0 0
    %928 = vmatpush1.bf16.msra.mxu0 0
    %929 = vmatprep.subr.bf16.mxu0 0
    %930 = vmatpush1.bf16.msra.mxu0 0
    %931 = vmatprep.subr.bf16.mxu0 0
    %932 = vmatpush1.bf16.msra.mxu0 0
    %933 = vmatprep.subr.bf16.mxu0 0
    %934 = vmatpush1.bf16.msra.mxu0 0
    %935 = vmatprep.subr.bf16.mxu0 0
    %936 = vmatpush1.bf16.msra.mxu0 0
    %937 = vmatprep.subr.bf16.mxu0 0
    %938 = vmatpush1.bf16.msra.mxu0 0
    %939 = vmatprep.subr.bf16.mxu0 0
    %940 = vmatpush1.bf16.msra.mxu0 0
    %941 = vmatprep.subr.bf16.mxu0 0
    %942 = vmatpush1.bf16.msra.mxu0 0
    %943 = vmatprep.subr.bf16.mxu0 0
    %944 = vmatpush1.bf16.msra.mxu0 0
    %945 = vmatprep.subr.bf16.mxu0 0
    %946 = vmatpush1.bf16.msra.mxu0 0
    %947 = vmatprep.mubr.bf16.mxu0 0
    %948 = vmatmul.mubr.bf16.gmra.mrb[0].mxu0 %v910
    %v949 = vpop.f32.mrb[0].mxu0
    %v950 = vadd.f32 %v908, %v949
    %v951 = vpop.f32.mrb[0].mxu0
    %v952 = vpop.f32.mrb[0].mxu0
    %v953 = vpop.f32.mrb[0].mxu0
    %954 = vdwg.mxu0
    %955 = vst.msk [vmem:[#allocation7] sm:$0xff] %vm57, %v950
    // Predicated region
    $region22: #{branch_0_fun.2} parent=1 // pred_check
      _
    $region23: #{branch_0_fun.2} parent=1 // pred_check_branch
      %957 = sbr.rel (0) target = $region25
    $region24: #{branch_0_fun.2} parent=1 // pred_region
      %s959 = ssub.s32 128, 128
      %960 = vsyncadd [#allocation4], %s959
      %s962 = sshll.u32 [#allocation7], 4
      %s963 = int_to_ptr.vmem [resolvable:$true] %s962
      %965 = dma.vmem_to_hbm [thread:$0]  %s963, 128, %s3, [#allocation4]
    $region25: #{branch_0_fun.2} parent=1 // pred_fallthru
      _
    // Predicated region
    $region26: #{branch_0_fun.2} parent=1 // pred_check
      _
    $region27: #{branch_0_fun.2} parent=1 // pred_check_branch
      %967 = sbr.rel (0) target = $region29
    $region28: #{branch_0_fun.2} parent=1 // pred_region
      %968 = dma.done [#allocation4], 128
    $region29: #{branch_0_fun.2} parent=1 // pred_fallthru
      _
    %969 = vsyncpa [#allocation3], 1
    %970 = vsyncpa [#allocation6], 1
    %971 = vsyncpa [#allocation4], 1

// kernel: branch_2_fun.2
$region0: #{branch_2_fun.2}
  #allocation0 [shape = 'u32[]', space=smem, size = 0x4, offset = 0x4, fixed_abs, tag = 'smem constant byte address 0x4 - core index']
  #allocation1 [shape = 'u32[144,128]{1,0:T(1,128)}', space=vmem, size = 0x12000, scoped, tag = 'internal scratch']
  %s0 = inlined_call_operand.vmem [shape: f32[32,5], index: 0, kind: input, shape index: {}]
  %s1 = inlined_call_operand.vmem [shape: bf16[256,40], index: 1, kind: input, shape index: {}]
  %s2 = inlined_call_operand.vmem [shape: f32[8,40], index: 2, kind: input, shape index: {}]
  %s3 = inlined_call_operand.hbm [shape: f32[8,16], index: 3, kind: output, shape index: {}]
  %s4 = sld [smem:[#allocation0]]
  $region22: #{branch_2_fun.2} parent=0
    _
  %s6 = ssub.s32 1, %s4
  %s7 = scalar_select 0, %s6, %s4
  $region1: #{branch_2_fun.2} parent=0
    #allocation2 [shape = 'u8[4096]{0}', space=vmem, size = 0x1000, scoped, tag = 'output window, operand 0, single buffered']
    #allocation3 [shape = 's32[1]{0}', space=sflag, size = 0x4, scoped, tag = 'scoped memory for branch_2_fun.2']
    %8 = vsyncpa [#allocation3], 0
    // Predicated region
    $region2: #{branch_2_fun.2} parent=1 // pred_check
      _
    $region3: #{branch_2_fun.2} parent=1 // pred_check_branch
      %10 = sbr.rel (0) target = $region5
    $region4: #{branch_2_fun.2} parent=1 // pred_region
      _
    $region5: #{branch_2_fun.2} parent=1 // pred_fallthru
      _
    // Predicated region
    $region6: #{branch_2_fun.2} parent=1 // pred_check
      _
    $region7: #{branch_2_fun.2} parent=1 // pred_check_branch
      %12 = sbr.rel (0) target = $region9
    $region8: #{branch_2_fun.2} parent=1 // pred_region
      _
    $region9: #{branch_2_fun.2} parent=1 // pred_fallthru
      _
    // Predicated region
    $region10: #{branch_2_fun.2} parent=1 // pred_check
      _
    $region11: #{branch_2_fun.2} parent=1 // pred_check_branch
      %14 = sbr.rel (0) target = $region13
    $region12: #{branch_2_fun.2} parent=1 // pred_region
      _
    $region13: #{branch_2_fun.2} parent=1 // pred_fallthru
      _
    %v16 = vld [vmem:[%s0] sm:$0xff]
    %v17 = vld [vmem:[%s0 + $0x8] sm:$0xff]
    %v18 = vld [vmem:[%s0 + $0x10] sm:$0xff]
    %v19 = vld [vmem:[%s0 + $0x18] sm:$0xff]
    %v20 = vpack.c.bf16 %v17, %v16
    %v21 = vpack.c.bf16 %v19, %v18
    %v22 = vld [vmem:[%s1] sm:$0x7]
    %v23 = vld [vmem:[%s2] sm:$0x1]
    %v24 = vlaneseq
    %v25 = vshrl.u32 %v24, 7
    %v26 = vsub.s32 0, %v25
    %v27 = vrot.slane %v23, %v26
    %vm28 = vcmask 39936
    %v30 = vsel %vm28, %v20, 0
    %v33 = vsel %vm28, %v21, 0
    %vm35 = vcmask 1041408
    %vm36 = vcmask 1042432
    %v37 = vsel %vm35, 4294967295, 65535
    %v38 = vsel %vm36, %v37, 0
    %v40 = vand.u32 %v22, %v38
    %42 = vmatprep.subr.bf16.mxu0 0
    %43 = vmatpush1.bf16.msra.mxu0 %v40
    %44 = vmatprep.subr.bf16.mxu0 0
    %45 = vmatpush1.bf16.msra.mxu0 0
    %46 = vmatprep.subr.bf16.mxu0 0
    %47 = vmatpush1.bf16.msra.mxu0 0
    %48 = vmatprep.subr.bf16.mxu0 0
    %49 = vmatpush1.bf16.msra.mxu0 0
    %50 = vmatprep.subr.bf16.mxu0 0
    %51 = vmatpush1.bf16.msra.mxu0 0
    %52 = vmatprep.subr.bf16.mxu0 0
    %53 = vmatpush1.bf16.msra.mxu0 0
    %54 = vmatprep.subr.bf16.mxu0 0
    %55 = vmatpush1.bf16.msra.mxu0 0
    %56 = vmatprep.subr.bf16.mxu0 0
    %57 = vmatpush1.bf16.msra.mxu0 0
    %58 = vmatprep.subr.bf16.mxu0 0
    %59 = vmatpush1.bf16.msra.mxu0 0
    %60 = vmatprep.subr.bf16.mxu0 0
    %61 = vmatpush1.bf16.msra.mxu0 0
    %62 = vmatprep.subr.bf16.mxu0 0
    %63 = vmatpush1.bf16.msra.mxu0 0
    %64 = vmatprep.subr.bf16.mxu0 0
    %65 = vmatpush1.bf16.msra.mxu0 0
    %66 = vmatprep.subr.bf16.mxu0 0
    %67 = vmatpush1.bf16.msra.mxu0 0
    %68 = vmatprep.subr.bf16.mxu0 0
    %69 = vmatpush1.bf16.msra.mxu0 0
    %70 = vmatprep.subr.bf16.mxu0 0
    %71 = vmatpush1.bf16.msra.mxu0 0
    %72 = vmatprep.subr.bf16.mxu0 0
    %73 = vmatpush1.bf16.msra.mxu0 0
    %74 = vmatprep.mubr.bf16.mxu0 0
    %75 = vmatmul.mubr.bf16.gmra.mrb[0].mxu0 %v30
    %v76 = vpop.f32.mrb[0].mxu0
    %v77 = vadd.f32 %v27, %v76
    %v78 = vpop.f32.mrb[0].mxu0
    %v79 = vpop.f32.mrb[0].mxu0
    %v80 = vadd.f32 %v27, %v79
    %v81 = vpop.f32.mrb[0].mxu0
    %82 = vmatprep.mubr.bf16.mxu0 0
    %83 = vmatmul.mubr.bf16.gmra.mrb[0].mxu0 %v33
    %v84 = vpop.f32.mrb[0].mxu0
    %v85 = vadd.f32 %v27, %v84
    %v86 = vpop.f32.mrb[0].mxu0
    %v87 = vpop.f32.mrb[0].mxu0
    %v88 = vadd.f32 %v27, %v87
    %v89 = vpop.f32.mrb[0].mxu0
    %90 = vdwg.mxu0
    %v91 = vmax.f32 %v77, 0.0
    %v92 = vmax.f32 %v80, 0.0
    %v93 = vmax.f32 %v85, 0.0
    %v94 = vmax.f32 %v88, 0.0
    %v95 = vpack.c.bf16 %v92, %v91
    %v96 = vpack.c.bf16 %v94, %v93
    %v97 = vld [vmem:[%s1 + $0x8] sm:$0xf]
    %v98 = vld [vmem:[%s1 + $0xc] sm:$0xf]
    %v99 = vld [vmem:[%s1 + $0x10] sm:$0xf]
    %v100 = vld [vmem:[%s1 + $0x14] sm:$0xf]
    %v101 = vld [vmem:[%s1 + $0x18] sm:$0xf]
    %v102 = vld [vmem:[%s2 + $0x1] sm:$0x1]
    %v103 = vlaneseq
    %v104 = vshrl.u32 %v103, 7
    %v105 = vsub.s32 0, %v104
    %v106 = vrot.slane %v102, %v105
    %v112 = vunpack.c.l.b16 %v97
    %v113 = vunpack.c.l.b16 %v98
    %v114 = vunpack.c.l.b16 %v99
    %v115 = vunpack.c.l.b16 %v100
    %v116 = vunpack.c.l.b16 %v101
    %v117 = vpack.c.b16 %v113, %v112
    %v118 = vpack.c.b16 %v115, %v114
    %v119 = vpack.c.b16 %v116, %v116
    %vm122 = vcmask 326656
    %v124 = vsel %vm122, %v95, 0
    %v127 = vsel %vm122, %v96, 0
    %vm129 = vcmask 1043456
    %v131 = vsel %vm129, %v119, 0
    %133 = vmatprep.subr.bf16.mxu0 0
    %134 = vmatpush1.bf16.msra.mxu0 %v117
    %135 = vmatprep.subr.bf16.mxu0 0
    %136 = vmatpush1.bf16.msra.mxu0 %v118
    %137 = vmatprep.subr.bf16.mxu0 0
    %138 = vmatpush1.bf16.msra.mxu0 %v131
    %139 = vmatprep.subr.bf16.mxu0 0
    %140 = vmatpush1.bf16.msra.mxu0 0
    %141 = vmatprep.subr.bf16.mxu0 0
    %142 = vmatpush1.bf16.msra.mxu0 0
    %143 = vmatprep.subr.bf16.mxu0 0
    %144 = vmatpush1.bf16.msra.mxu0 0
    %145 = vmatprep.subr.bf16.mxu0 0
    %146 = vmatpush1.bf16.msra.mxu0 0
    %147 = vmatprep.subr.bf16.mxu0 0
    %148 = vmatpush1.bf16.msra.mxu0 0
    %149 = vmatprep.subr.bf16.mxu0 0
    %150 = vmatpush1.bf16.msra.mxu0 0
    %151 = vmatprep.subr.bf16.mxu0 0
    %152 = vmatpush1.bf16.msra.mxu0 0
    %153 = vmatprep.subr.bf16.mxu0 0
    %154 = vmatpush1.bf16.msra.mxu0 0
    %155 = vmatprep.subr.bf16.mxu0 0
    %156 = vmatpush1.bf16.msra.mxu0 0
    %157 = vmatprep.subr.bf16.mxu0 0
    %158 = vmatpush1.bf16.msra.mxu0 0
    %159 = vmatprep.subr.bf16.mxu0 0
    %160 = vmatpush1.bf16.msra.mxu0 0
    %161 = vmatprep.subr.bf16.mxu0 0
    %162 = vmatpush1.bf16.msra.mxu0 0
    %163 = vmatprep.subr.bf16.mxu0 0
    %164 = vmatpush1.bf16.msra.mxu0 0
    %165 = vmatprep.mubr.bf16.mxu0 0
    %166 = vmatmul.mubr.bf16.gmra.mrb[0].mxu0 %v124
    %v167 = vpop.f32.mrb[0].mxu0
    %v168 = vadd.f32 %v106, %v167
    %v169 = vpop.f32.mrb[0].mxu0
    %v170 = vpop.f32.mrb[0].mxu0
    %v171 = vadd.f32 %v106, %v170
    %v172 = vpop.f32.mrb[0].mxu0
    %173 = vmatprep.mubr.bf16.mxu0 0
    %174 = vmatmul.mubr.bf16.gmra.mrb[0].mxu0 %v127
    %v175 = vpop.f32.mrb[0].mxu0
    %v176 = vadd.f32 %v106, %v175
    %v177 = vpop.f32.mrb[0].mxu0
    %v178 = vpop.f32.mrb[0].mxu0
    %v179 = vadd.f32 %v106, %v178
    %v180 = vpop.f32.mrb[0].mxu0
    %181 = vdwg.mxu0
    %v182 = vmax.f32 %v168, 0.0
    %v183 = vmax.f32 %v171, 0.0
    %v184 = vmax.f32 %v176, 0.0
    %v185 = vmax.f32 %v179, 0.0
    %v186 = vpack.c.bf16 %v183, %v182
    %v187 = vpack.c.bf16 %v185, %v184
    %v188 = vld [vmem:[%s1 + $0x20] sm:$0xf]
    %v189 = vld [vmem:[%s1 + $0x24] sm:$0xf]
    %v190 = vld [vmem:[%s1 + $0x28] sm:$0xf]
    %v191 = vld [vmem:[%s1 + $0x2c] sm:$0xf]
    %v192 = vld [vmem:[%s1 + $0x30] sm:$0xf]
    %v193 = vld [vmem:[%s2 + $0x2] sm:$0x1]
    %v194 = vlaneseq
    %v195 = vshrl.u32 %v194, 7
    %v196 = vsub.s32 0, %v195
    %v197 = vrot.slane %v193, %v196
    %v203 = vunpack.c.l.b16 %v188
    %v204 = vunpack.c.l.b16 %v189
    %v205 = vunpack.c.l.b16 %v190
    %v206 = vunpack.c.l.b16 %v191
    %v207 = vunpack.c.l.b16 %v192
    %v208 = vpack.c.b16 %v204, %v203
    %v209 = vpack.c.b16 %v206, %v205
    %v210 = vpack.c.b16 %v207, %v207
    %v214 = vsel %vm122, %v186, 0
    %v217 = vsel %vm122, %v187, 0
    %v220 = vsel %vm129, %v210, 0
    %222 = vmatprep.subr.bf16.mxu0 0
    %223 = vmatpush1.bf16.msra.mxu0 %v208
    %224 = vmatprep.subr.bf16.mxu0 0
    %225 = vmatpush1.bf16.msra.mxu0 %v209
    %226 = vmatprep.subr.bf16.mxu0 0
    %227 = vmatpush1.bf16.msra.mxu0 %v220
    %228 = vmatprep.subr.bf16.mxu0 0
    %229 = vmatpush1.bf16.msra.mxu0 0
    %230 = vmatprep.subr.bf16.mxu0 0
    %231 = vmatpush1.bf16.msra.mxu0 0
    %232 = vmatprep.subr.bf16.mxu0 0
    %233 = vmatpush1.bf16.msra.mxu0 0
    %234 = vmatprep.subr.bf16.mxu0 0
    %235 = vmatpush1.bf16.msra.mxu0 0
    %236 = vmatprep.subr.bf16.mxu0 0
    %237 = vmatpush1.bf16.msra.mxu0 0
    %238 = vmatprep.subr.bf16.mxu0 0
    %239 = vmatpush1.bf16.msra.mxu0 0
    %240 = vmatprep.subr.bf16.mxu0 0
    %241 = vmatpush1.bf16.msra.mxu0 0
    %242 = vmatprep.subr.bf16.mxu0 0
    %243 = vmatpush1.bf16.msra.mxu0 0
    %244 = vmatprep.subr.bf16.mxu0 0
    %245 = vmatpush1.bf16.msra.mxu0 0
    %246 = vmatprep.subr.bf16.mxu0 0
    %247 = vmatpush1.bf16.msra.mxu0 0
    %248 = vmatprep.subr.bf16.mxu0 0
    %249 = vmatpush1.bf16.msra.mxu0 0
    %250 = vmatprep.subr.bf16.mxu0 0
    %251 = vmatpush1.bf16.msra.mxu0 0
    %252 = vmatprep.subr.bf16.mxu0 0
    %253 = vmatpush1.bf16.msra.mxu0 0
    %254 = vmatprep.mubr.bf16.mxu0 0
    %255 = vmatmul.mubr.bf16.gmra.mrb[0].mxu0 %v214
    %v256 = vpop.f32.mrb[0].mxu0
    %v257 = vadd.f32 %v197, %v256
    %v258 = vpop.f32.mrb[0].mxu0
    %v259 = vpop.f32.mrb[0].mxu0
    %v260 = vadd.f32 %v197, %v259
    %v261 = vpop.f32.mrb[0].mxu0
    %262 = vmatprep.mubr.bf16.mxu0 0
    %263 = vmatmul.mubr.bf16.gmra.mrb[0].mxu0 %v217
    %v264 = vpop.f32.mrb[0].mxu0
    %v265 = vadd.f32 %v197, %v264
    %v266 = vpop.f32.mrb[0].mxu0
    %v267 = vpop.f32.mrb[0].mxu0
    %v268 = vadd.f32 %v197, %v267
    %v269 = vpop.f32.mrb[0].mxu0
    %270 = vdwg.mxu0
    %v271 = vlaneseq
    %v272 = vshrl.u32 %v271, 7
    %v273 = vadd.s32 %v272, 8
    %v274 = vadd.s32 %v272, 16
    %v275 = vadd.s32 %v272, 24
    %v276 = vcvt.s32.f32 %v272
    %v277 = vcvt.s32.f32 %v273
    %v278 = vcvt.s32.f32 %v274
    %v279 = vcvt.s32.f32 %v275
    %v280 = vlaneseq
    %v281 = vand.u32 %v280, 127
    %v282 = vcvt.s32.f32 %v281
    %v283 = vmul.f32 %v276, 0.25
    %v284 = vmul.f32 %v277, 0.25
    %v285 = vmul.f32 %v278, 0.25
    %v286 = vmul.f32 %v279, 0.25
    %v287 = vfloor.f32 %v283
    %v288 = vfloor.f32 %v284
    %v289 = vfloor.f32 %v285
    %v290 = vfloor.f32 %v286
    %v291 = vmul.f32 %v282, 0.25
    %v292 = vfloor.f32 %v291
    %vm293 = vcmp.eq.f32.partialorder %v287, %v292
    %vm294 = vcmp.eq.f32.partialorder %v288, %v292
    %vm295 = vcmp.eq.f32.partialorder %v289, %v292
    %vm296 = vcmp.eq.f32.partialorder %v290, %v292
    %v297 = vsel %vm293, 1, 0
    %v298 = vsel %vm294, 1, 0
    %v299 = vsel %vm295, 1, 0
    %v300 = vsel %vm296, 1, 0
    %v301 = vcvt.s32.f32 %v297
    %v302 = vcvt.s32.f32 %v298
    %v303 = vcvt.s32.f32 %v299
    %v304 = vcvt.s32.f32 %v300
    %v305 = vpack.c.bf16 %v260, %v257
    %v306 = vpack.c.bf16 %v268, %v265
    %vm307 = vcmask 261120
    %v309 = vsel %vm307, %v305, 0
    %v312 = vsel %vm307, %v306, 0
    %314 = vmatprep.subr.bf16.mxu0 0
    %315 = vmatpush1.bf16.xpose.msra.mxu0 %v309
    %316 = vmatprep.subr.bf16.mxu0 0
    %317 = vmatpush1.bf16.xpose.msra.mxu0 %v312
    %318 = vmatprep.subr.bf16.mxu0 0
    %319 = vmatpush1.bf16.xpose.msra.mxu0 0
    %320 = vmatprep.subr.bf16.mxu0 0
    %321 = vmatpush1.bf16.xpose.msra.mxu0 0
    %322 = vmatprep.subr.bf16.mxu0 0
    %323 = vmatpush1.bf16.xpose.msra.mxu0 0
    %324 = vmatprep.subr.bf16.mxu0 0
    %325 = vmatpush1.bf16.xpose.msra.mxu0 0
    %326 = vmatprep.subr.bf16.mxu0 0
    %327 = vmatpush1.bf16.xpose.msra.mxu0 0
    %328 = vmatprep.subr.bf16.mxu0 0
    %329 = vmatpush1.bf16.xpose.msra.mxu0 0
    %330 = vmatprep.subr.bf16.mxu0 0
    %331 = vmatpush1.bf16.xpose.msra.mxu0 0
    %332 = vmatprep.subr.bf16.mxu0 0
    %333 = vmatpush1.bf16.xpose.msra.mxu0 0
    %334 = vmatprep.subr.bf16.mxu0 0
    %335 = vmatpush1.bf16.xpose.msra.mxu0 0
    %336 = vmatprep.subr.bf16.mxu0 0
    %337 = vmatpush1.bf16.xpose.msra.mxu0 0
    %338 = vmatprep.subr.bf16.mxu0 0
    %339 = vmatpush1.bf16.xpose.msra.mxu0 0
    %340 = vmatprep.subr.bf16.mxu0 0
    %341 = vmatpush1.bf16.xpose.msra.mxu0 0
    %342 = vmatprep.subr.bf16.mxu0 0
    %343 = vmatpush1.bf16.xpose.msra.mxu0 0
    %344 = vmatprep.subr.bf16.mxu0 0
    %345 = vmatpush1.bf16.xpose.msra.mxu0 0
    %346 = vmatprep.mubr.bf16.mxu0 0
    %347 = vmatmul.mubr.bf16.gmra.mrb[0].mxu0 %v309
    %v348 = vpop.f32.mrb[0].mxu0
    %v349 = vadd.f32 0.0, %v348
    %v350 = vpop.f32.mrb[0].mxu0
    %v351 = vpop.f32.mrb[0].mxu0
    %v352 = vadd.f32 0.0, %v351
    %v353 = vpop.f32.mrb[0].mxu0
    %354 = vmatprep.mubr.bf16.mxu0 0
    %355 = vmatmul.mubr.bf16.gmra.mrb[0].mxu0 %v312
    %v356 = vpop.f32.mrb[0].mxu0
    %v357 = vadd.f32 0.0, %v356
    %v358 = vpop.f32.mrb[0].mxu0
    %v359 = vpop.f32.mrb[0].mxu0
    %v360 = vadd.f32 0.0, %v359
    %v361 = vpop.f32.mrb[0].mxu0
    %362 = vdwg.mxu0
    %v363 = vmax.f32 %v349, 0.0
    %v364 = vmax.f32 %v352, 0.0
    %v365 = vmax.f32 %v357, 0.0
    %v366 = vmax.f32 %v360, 0.0
    %v367 = vmul.f32 %v363, %v301
    %v368 = vmul.f32 %v364, %v302
    %v369 = vmul.f32 %v365, %v303
    %v370 = vmul.f32 %v366, %v304
    %v371 = vsel %vm307, %v367, -inf
    %372 = vmax.xlane.f32.xlu0 %v371
    %v373 = vpop.xlane.xlu0 %372
    %v374 = vsel %vm307, %v368, -inf
    %375 = vmax.xlane.f32.xlu0 %v374
    %v376 = vpop.xlane.xlu0 %375
    %v377 = vsel %vm307, %v369, -inf
    %378 = vmax.xlane.f32.xlu0 %v377
    %v379 = vpop.xlane.xlu0 %378
    %v380 = vsel %vm307, %v370, -inf
    %381 = vmax.xlane.f32.xlu0 %v380
    %v382 = vpop.xlane.xlu0 %381
    %v383 = vsub.f32 %v367, %v373
    %v384 = vsub.f32 %v368, %v376
    %v385 = vsub.f32 %v369, %v379
    %v386 = vsub.f32 %v370, %v382
    %v387 = vmul.f32 %v383, 1.442695
    %v388 = vpow.pop %v387
    %v389 = vmul.f32 %v384, 1.442695
    %v390 = vpow.pop %v389
    %v391 = vmul.f32 %v385, 1.442695
    %v392 = vpow.pop %v391
    %v393 = vmul.f32 %v386, 1.442695
    %v394 = vpow.pop %v393
    %v395 = vmul.f32 %v388, %v301
    %v396 = vmul.f32 %v390, %v302
    %v397 = vmul.f32 %v392, %v303
    %v398 = vmul.f32 %v394, %v304
    %v399 = vsel %vm307, %v395, 0.0
    %400 = vadd.xlane.f32.xlu0 %v399
    %v401 = vpop.xlane.xlu0 %400
    %v402 = vsel %vm307, %v396, 0.0
    %403 = vadd.xlane.f32.xlu0 %v402
    %v404 = vpop.xlane.xlu0 %403
    %v405 = vsel %vm307, %v397, 0.0
    %406 = vadd.xlane.f32.xlu0 %v405
    %v407 = vpop.xlane.xlu0 %406
    %v408 = vsel %vm307, %v398, 0.0
    %409 = vadd.xlane.f32.xlu0 %v408
    %v410 = vpop.xlane.xlu0 %409
    %v411 = vrcp.pop %v401
    %v412 = vrcp.pop %v404
    %v413 = vrcp.pop %v407
    %v414 = vrcp.pop %v410
    %v415 = vmul.f32 %v395, %v411
    %v416 = vmul.f32 %v396, %v412
    %v417 = vmul.f32 %v397, %v413
    %v418 = vmul.f32 %v398, %v414
    %v419 = vpack.c.bf16 %v416, %v415
    %v420 = vpack.c.bf16 %v418, %v417
    %v422 = vsel %vm307, %v419, 0
    %v425 = vsel %vm307, %v420, 0
    %427 = vmatprep.subr.bf16.mxu0 0
    %428 = vmatpush1.bf16.msra.mxu0 %v305
    %429 = vmatprep.subr.bf16.mxu0 0
    %430 = vmatpush1.bf16.msra.mxu0 %v306
    %431 = vmatprep.subr.bf16.mxu0 0
    %432 = vmatpush1.bf16.msra.mxu0 0
    %433 = vmatprep.subr.bf16.mxu0 0
    %434 = vmatpush1.bf16.msra.mxu0 0
    %435 = vmatprep.subr.bf16.mxu0 0
    %436 = vmatpush1.bf16.msra.mxu0 0
    %437 = vmatprep.subr.bf16.mxu0 0
    %438 = vmatpush1.bf16.msra.mxu0 0
    %439 = vmatprep.subr.bf16.mxu0 0
    %440 = vmatpush1.bf16.msra.mxu0 0
    %441 = vmatprep.subr.bf16.mxu0 0
    %442 = vmatpush1.bf16.msra.mxu0 0
    %443 = vmatprep.subr.bf16.mxu0 0
    %444 = vmatpush1.bf16.msra.mxu0 0
    %445 = vmatprep.subr.bf16.mxu0 0
    %446 = vmatpush1.bf16.msra.mxu0 0
    %447 = vmatprep.subr.bf16.mxu0 0
    %448 = vmatpush1.bf16.msra.mxu0 0
    %449 = vmatprep.subr.bf16.mxu0 0
    %450 = vmatpush1.bf16.msra.mxu0 0
    %451 = vmatprep.subr.bf16.mxu0 0
    %452 = vmatpush1.bf16.msra.mxu0 0
    %453 = vmatprep.subr.bf16.mxu0 0
    %454 = vmatpush1.bf16.msra.mxu0 0
    %455 = vmatprep.subr.bf16.mxu0 0
    %456 = vmatpush1.bf16.msra.mxu0 0
    %457 = vmatprep.subr.bf16.mxu0 0
    %458 = vmatpush1.bf16.msra.mxu0 0
    %459 = vmatprep.mubr.bf16.mxu0 0
    %460 = vmatmul.mubr.bf16.gmra.mrb[0].mxu0 %v422
    %v461 = vpop.f32.mrb[0].mxu0
    %v462 = vadd.f32 0.0, %v461
    %v463 = vpop.f32.mrb[0].mxu0
    %v464 = vpop.f32.mrb[0].mxu0
    %v465 = vadd.f32 0.0, %v464
    %v466 = vpop.f32.mrb[0].mxu0
    %467 = vmatprep.mubr.bf16.mxu0 0
    %468 = vmatmul.mubr.bf16.gmra.mrb[0].mxu0 %v425
    %v469 = vpop.f32.mrb[0].mxu0
    %v470 = vadd.f32 0.0, %v469
    %v471 = vpop.f32.mrb[0].mxu0
    %v472 = vpop.f32.mrb[0].mxu0
    %v473 = vadd.f32 0.0, %v472
    %v474 = vpop.f32.mrb[0].mxu0
    %475 = vdwg.mxu0
    %v476 = vpack.c.bf16 %v465, %v462
    %v477 = vpack.c.bf16 %v473, %v470
    %v478 = vld [vmem:[%s1 + $0x38] sm:$0xf]
    %v479 = vld [vmem:[%s1 + $0x3c] sm:$0xf]
    %v480 = vld [vmem:[%s1 + $0x40] sm:$0xf]
    %v481 = vld [vmem:[%s1 + $0x44] sm:$0xf]
    %v482 = vld [vmem:[%s2 + $0x3] sm:$0x1]
    %v483 = vlaneseq
    %v484 = vshrl.u32 %v483, 7
    %v485 = vsub.s32 0, %v484
    %v486 = vrot.slane %v482, %v485
    %v491 = vunpack.c.l.b16 %v478
    %v492 = vunpack.c.l.b16 %v479
    %v493 = vunpack.c.l.b16 %v480
    %v494 = vunpack.c.l.b16 %v481
    %v495 = vpack.c.b16 %v492, %v491
    %v496 = vpack.c.b16 %v494, %v493
    %v500 = vsel %vm307, %v476, 0
    %v503 = vsel %vm307, %v477, 0
    %505 = vmatprep.subr.bf16.mxu0 0
    %506 = vmatpush1.bf16.msra.mxu0 %v495
    %507 = vmatprep.subr.bf16.mxu0 0
    %508 = vmatpush1.bf16.msra.mxu0 %v496
    %509 = vmatprep.subr.bf16.mxu0 0
    %510 = vmatpush1.bf16.msra.mxu0 0
    %511 = vmatprep.subr.bf16.mxu0 0
    %512 = vmatpush1.bf16.msra.mxu0 0
    %513 = vmatprep.subr.bf16.mxu0 0
    %514 = vmatpush1.bf16.msra.mxu0 0
    %515 = vmatprep.subr.bf16.mxu0 0
    %516 = vmatpush1.bf16.msra.mxu0 0
    %517 = vmatprep.subr.bf16.mxu0 0
    %518 = vmatpush1.bf16.msra.mxu0 0
    %519 = vmatprep.subr.bf16.mxu0 0
    %520 = vmatpush1.bf16.msra.mxu0 0
    %521 = vmatprep.subr.bf16.mxu0 0
    %522 = vmatpush1.bf16.msra.mxu0 0
    %523 = vmatprep.subr.bf16.mxu0 0
    %524 = vmatpush1.bf16.msra.mxu0 0
    %525 = vmatprep.subr.bf16.mxu0 0
    %526 = vmatpush1.bf16.msra.mxu0 0
    %527 = vmatprep.subr.bf16.mxu0 0
    %528 = vmatpush1.bf16.msra.mxu0 0
    %529 = vmatprep.subr.bf16.mxu0 0
    %530 = vmatpush1.bf16.msra.mxu0 0
    %531 = vmatprep.subr.bf16.mxu0 0
    %532 = vmatpush1.bf16.msra.mxu0 0
    %533 = vmatprep.subr.bf16.mxu0 0
    %534 = vmatpush1.bf16.msra.mxu0 0
    %535 = vmatprep.subr.bf16.mxu0 0
    %536 = vmatpush1.bf16.msra.mxu0 0
    %537 = vmatprep.mubr.bf16.mxu0 0
    %538 = vmatmul.mubr.bf16.gmra.mrb[0].mxu0 %v500
    %v539 = vpop.f32.mrb[0].mxu0
    %v540 = vadd.f32 %v486, %v539
    %v541 = vpop.f32.mrb[0].mxu0
    %v542 = vpop.f32.mrb[0].mxu0
    %v543 = vadd.f32 %v486, %v542
    %v544 = vpop.f32.mrb[0].mxu0
    %545 = vmatprep.mubr.bf16.mxu0 0
    %546 = vmatmul.mubr.bf16.gmra.mrb[0].mxu0 %v503
    %v547 = vpop.f32.mrb[0].mxu0
    %v548 = vadd.f32 %v486, %v547
    %v549 = vpop.f32.mrb[0].mxu0
    %v550 = vpop.f32.mrb[0].mxu0
    %v551 = vadd.f32 %v486, %v550
    %v552 = vpop.f32.mrb[0].mxu0
    %553 = vdwg.mxu0
    %v554 = vmax.f32 %v540, 0.0
    %v555 = vmax.f32 %v543, 0.0
    %v556 = vmax.f32 %v548, 0.0
    %v557 = vmax.f32 %v551, 0.0
    %v558 = vld [vmem:[%s1 + $0x48] sm:$0xf]
    %v559 = vld [vmem:[%s1 + $0x4c] sm:$0xf]
    %v560 = vld [vmem:[%s1 + $0x50] sm:$0xf]
    %v561 = vld [vmem:[%s1 + $0x54] sm:$0xf]
    %v562 = vld [vmem:[%s2 + $0x4] sm:$0x1]
    %v563 = vlaneseq
    %v564 = vshrl.u32 %v563, 7
    %v565 = vsub.s32 0, %v564
    %v566 = vrot.slane %v562, %v565
    %v571 = vunpack.c.l.b16 %v558
    %v572 = vunpack.c.l.b16 %v559
    %v573 = vunpack.c.l.b16 %v560
    %v574 = vunpack.c.l.b16 %v561
    %v575 = vpack.c.b16 %v572, %v571
    %v576 = vpack.c.b16 %v574, %v573
    %579 = vmatprep.subr.bf16.mxu0 0
    %580 = vmatpush1.bf16.msra.mxu0 %v575
    %581 = vmatprep.subr.bf16.mxu0 0
    %582 = vmatpush1.bf16.msra.mxu0 %v576
    %583 = vmatprep.subr.bf16.mxu0 0
    %584 = vmatpush1.bf16.msra.mxu0 0
    %585 = vmatprep.subr.bf16.mxu0 0
    %586 = vmatpush1.bf16.msra.mxu0 0
    %587 = vmatprep.subr.bf16.mxu0 0
    %588 = vmatpush1.bf16.msra.mxu0 0
    %589 = vmatprep.subr.bf16.mxu0 0
    %590 = vmatpush1.bf16.msra.mxu0 0
    %591 = vmatprep.subr.bf16.mxu0 0
    %592 = vmatpush1.bf16.msra.mxu0 0
    %593 = vmatprep.subr.bf16.mxu0 0
    %594 = vmatpush1.bf16.msra.mxu0 0
    %595 = vmatprep.subr.bf16.mxu0 0
    %596 = vmatpush1.bf16.msra.mxu0 0
    %597 = vmatprep.subr.bf16.mxu0 0
    %598 = vmatpush1.bf16.msra.mxu0 0
    %599 = vmatprep.subr.bf16.mxu0 0
    %600 = vmatpush1.bf16.msra.mxu0 0
    %601 = vmatprep.subr.bf16.mxu0 0
    %602 = vmatpush1.bf16.msra.mxu0 0
    %603 = vmatprep.subr.bf16.mxu0 0
    %604 = vmatpush1.bf16.msra.mxu0 0
    %605 = vmatprep.subr.bf16.mxu0 0
    %606 = vmatpush1.bf16.msra.mxu0 0
    %607 = vmatprep.subr.bf16.mxu0 0
    %608 = vmatpush1.bf16.msra.mxu0 0
    %609 = vmatprep.subr.bf16.mxu0 0
    %610 = vmatpush1.bf16.msra.mxu0 0
    %611 = vmatprep.mubr.bf16.mxu0 0
    %612 = vmatmul.mubr.bf16.gmra.mrb[0].mxu0 %v500
    %v613 = vpop.f32.mrb[0].mxu0
    %v614 = vadd.f32 %v566, %v613
    %v615 = vpop.f32.mrb[0].mxu0
    %v616 = vpop.f32.mrb[0].mxu0
    %v617 = vadd.f32 %v566, %v616
    %v618 = vpop.f32.mrb[0].mxu0
    %619 = vmatprep.mubr.bf16.mxu0 0
    %620 = vmatmul.mubr.bf16.gmra.mrb[0].mxu0 %v503
    %v621 = vpop.f32.mrb[0].mxu0
    %v622 = vadd.f32 %v566, %v621
    %v623 = vpop.f32.mrb[0].mxu0
    %v624 = vpop.f32.mrb[0].mxu0
    %v625 = vadd.f32 %v566, %v624
    %v626 = vpop.f32.mrb[0].mxu0
    %627 = vdwg.mxu0
    %v628 = vmax.f32 %v614, 0.0
    %v629 = vmax.f32 %v617, 0.0
    %v630 = vmax.f32 %v622, 0.0
    %v631 = vmax.f32 %v625, 0.0
    %v632 = vmul.f32 %v287, 4.0
    %v633 = vsub.f32 %v276, %v632
    %v634 = vmul.f32 %v292, 4.0
    %v635 = vsub.f32 %v282, %v634
    %v636 = vmul.f32 %v287, 16.0
    %v637 = vsub.f32 %v282, %v636
    %vm638 = vcmp.eq.f32.partialorder %v633, %v635
    %vm639 = vcmp.ge.f32.partialorder %v637, 0.0
    %vm640 = vmand %vm638, %vm639
    %vm641 = vcmp.lt.f32.partialorder %v637, 16.0
    %vm642 = vmand %vm640, %vm641
    %v643 = vsel %vm642, 0.25, 0.0
    %v645 = vsel %vm307, %v643, 0
    %647 = vmatprep.subr.mxu0 0.0
    %648 = vmatpush1.msra.mxu0 %v554
    %649 = vmatprep.subr.mxu0 0.0
    %650 = vmatpush1.msra.mxu0 %v555
    %651 = vmatprep.subr.mxu0 0.0
    %652 = vmatpush1.msra.mxu0 %v556
    %653 = vmatprep.subr.mxu0 0.0
    %654 = vmatpush1.msra.mxu0 %v557
    %655 = vmatprep.subr.mxu0 0.0
    %656 = vmatpush1.msra.mxu0 0.0
    %657 = vmatprep.subr.mxu0 0.0
    %658 = vmatpush1.msra.mxu0 0.0
    %659 = vmatprep.subr.mxu0 0.0
    %660 = vmatpush1.msra.mxu0 0.0
    %661 = vmatprep.subr.mxu0 0.0
    %662 = vmatpush1.msra.mxu0 0.0
    %663 = vmatprep.subr.mxu0 0.0
    %664 = vmatpush1.msra.mxu0 0.0
    %665 = vmatprep.subr.mxu0 0.0
    %666 = vmatpush1.msra.mxu0 0.0
    %667 = vmatprep.subr.mxu0 0.0
    %668 = vmatpush1.msra.mxu0 0.0
    %669 = vmatprep.subr.mxu0 0.0
    %670 = vmatpush1.msra.mxu0 0.0
    %671 = vmatprep.subr.mxu0 0.0
    %672 = vmatpush1.msra.mxu0 0.0
    %673 = vmatprep.subr.mxu0 0.0
    %674 = vmatpush1.msra.mxu0 0.0
    %675 = vmatprep.subr.mxu0 0.0
    %676 = vmatpush1.msra.mxu0 0.0
    %677 = vmatprep.subr.mxu0 0.0
    %678 = vmatpush1.msra.mxu0 0.0
    %679 = vmatprep.subr.mxu0 0.0
    %680 = vmatpush1.msra.mxu0 0.0
    %681 = vmatprep.subr.mxu0 0.0
    %682 = vmatpush1.msra.mxu0 0.0
    %683 = vmatprep.subr.mxu0 0.0
    %684 = vmatpush1.msra.mxu0 0.0
    %685 = vmatprep.subr.mxu0 0.0
    %686 = vmatpush1.msra.mxu0 0.0
    %687 = vmatprep.subr.mxu0 0.0
    %688 = vmatpush1.msra.mxu0 0.0
    %689 = vmatprep.subr.mxu0 0.0
    %690 = vmatpush1.msra.mxu0 0.0
    %691 = vmatprep.subr.mxu0 0.0
    %692 = vmatpush1.msra.mxu0 0.0
    %693 = vmatprep.subr.mxu0 0.0
    %694 = vmatpush1.msra.mxu0 0.0
    %695 = vmatprep.subr.mxu0 0.0
    %696 = vmatpush1.msra.mxu0 0.0
    %697 = vmatprep.subr.mxu0 0.0
    %698 = vmatpush1.msra.mxu0 0.0
    %699 = vmatprep.subr.mxu0 0.0
    %700 = vmatpush1.msra.mxu0 0.0
    %701 = vmatprep.subr.mxu0 0.0
    %702 = vmatpush1.msra.mxu0 0.0
    %703 = vmatprep.subr.mxu0 0.0
    %704 = vmatpush1.msra.mxu0 0.0
    %705 = vmatprep.subr.mxu0 0.0
    %706 = vmatpush1.msra.mxu0 0.0
    %707 = vmatprep.subr.mxu0 0.0
    %708 = vmatpush1.msra.mxu0 0.0
    %709 = vmatprep.subr.mxu0 0.0
    %710 = vmatpush1.msra.mxu0 0.0
    %711 = vmatprep.mubr.f32.mxu0 0.0
    %712 = vmatmul.mubr.f32.gmra.mrb[0].mxu0 %v645
    %v713 = vpop.f32.mrb[0].mxu0
    %v714 = vadd.f32 0.0, %v713
    %v715 = vpop.f32.mrb[0].mxu0
    %716 = vdwg.mxu0
    %717 = vmatprep.subr.mxu0 0.0
    %718 = vmatpush1.msra.mxu0 %v628
    %719 = vmatprep.subr.mxu0 0.0
    %720 = vmatpush1.msra.mxu0 %v629
    %721 = vmatprep.subr.mxu0 0.0
    %722 = vmatpush1.msra.mxu0 %v630
    %723 = vmatprep.subr.mxu0 0.0
    %724 = vmatpush1.msra.mxu0 %v631
    %725 = vmatprep.subr.mxu0 0.0
    %726 = vmatpush1.msra.mxu0 0.0
    %727 = vmatprep.subr.mxu0 0.0
    %728 = vmatpush1.msra.mxu0 0.0
    %729 = vmatprep.subr.mxu0 0.0
    %730 = vmatpush1.msra.mxu0 0.0
    %731 = vmatprep.subr.mxu0 0.0
    %732 = vmatpush1.msra.mxu0 0.0
    %733 = vmatprep.subr.mxu0 0.0
    %734 = vmatpush1.msra.mxu0 0.0
    %735 = vmatprep.subr.mxu0 0.0
    %736 = vmatpush1.msra.mxu0 0.0
    %737 = vmatprep.subr.mxu0 0.0
    %738 = vmatpush1.msra.mxu0 0.0
    %739 = vmatprep.subr.mxu0 0.0
    %740 = vmatpush1.msra.mxu0 0.0
    %741 = vmatprep.subr.mxu0 0.0
    %742 = vmatpush1.msra.mxu0 0.0
    %743 = vmatprep.subr.mxu0 0.0
    %744 = vmatpush1.msra.mxu0 0.0
    %745 = vmatprep.subr.mxu0 0.0
    %746 = vmatpush1.msra.mxu0 0.0
    %747 = vmatprep.subr.mxu0 0.0
    %748 = vmatpush1.msra.mxu0 0.0
    %749 = vmatprep.subr.mxu0 0.0
    %750 = vmatpush1.msra.mxu0 0.0
    %751 = vmatprep.subr.mxu0 0.0
    %752 = vmatpush1.msra.mxu0 0.0
    %753 = vmatprep.subr.mxu0 0.0
    %754 = vmatpush1.msra.mxu0 0.0
    %755 = vmatprep.subr.mxu0 0.0
    %756 = vmatpush1.msra.mxu0 0.0
    %757 = vmatprep.subr.mxu0 0.0
    %758 = vmatpush1.msra.mxu0 0.0
    %759 = vmatprep.subr.mxu0 0.0
    %760 = vmatpush1.msra.mxu0 0.0
    %761 = vmatprep.subr.mxu0 0.0
    %762 = vmatpush1.msra.mxu0 0.0
    %763 = vmatprep.subr.mxu0 0.0
    %764 = vmatpush1.msra.mxu0 0.0
    %765 = vmatprep.subr.mxu0 0.0
    %766 = vmatpush1.msra.mxu0 0.0
    %767 = vmatprep.subr.mxu0 0.0
    %768 = vmatpush1.msra.mxu0 0.0
    %769 = vmatprep.subr.mxu0 0.0
    %770 = vmatpush1.msra.mxu0 0.0
    %771 = vmatprep.subr.mxu0 0.0
    %772 = vmatpush1.msra.mxu0 0.0
    %773 = vmatprep.subr.mxu0 0.0
    %774 = vmatpush1.msra.mxu0 0.0
    %775 = vmatprep.subr.mxu0 0.0
    %776 = vmatpush1.msra.mxu0 0.0
    %777 = vmatprep.subr.mxu0 0.0
    %778 = vmatpush1.msra.mxu0 0.0
    %779 = vmatprep.subr.mxu0 0.0
    %780 = vmatpush1.msra.mxu0 0.0
    %781 = vmatprep.mubr.f32.mxu0 0.0
    %782 = vmatmul.mubr.f32.gmra.mrb[0].mxu0 %v645
    %v783 = vpop.f32.mrb[0].mxu0
    %v784 = vadd.f32 0.0, %v783
    %v785 = vpop.f32.mrb[0].mxu0
    %786 = vdwg.mxu0
    %v787 = vpack.c.bf16 %v714, %v714
    %v788 = vld [vmem:[%s1 + $0x58] sm:$0xf]
    %v789 = vld [vmem:[%s1 + $0x5c] sm:$0xf]
    %v790 = vpack.c.bf16 %v784, %v784
    %v791 = vld [vmem:[%s1 + $0x60] sm:$0xf]
    %v792 = vld [vmem:[%s1 + $0x64] sm:$0xf]
    %v795 = vunpack.c.l.b16 %v791
    %v796 = vunpack.c.l.b16 %v792
    %v797 = vpack.c.b16 %v796, %v795
    %vm799 = vcmask 130048
    %v801 = vsel %vm799, %v790, 0
    %803 = vmatprep.subr.bf16.mxu0 0
    %804 = vmatpush1.bf16.msra.mxu0 %v797
    %805 = vmatprep.subr.bf16.mxu0 0
    %806 = vmatpush1.bf16.msra.mxu0 0
    %807 = vmatprep.subr.bf16.mxu0 0
    %808 = vmatpush1.bf16.msra.mxu0 0
    %809 = vmatprep.subr.bf16.mxu0 0
    %810 = vmatpush1.bf16.msra.mxu0 0
    %811 = vmatprep.subr.bf16.mxu0 0
    %812 = vmatpush1.bf16.msra.mxu0 0
    %813 = vmatprep.subr.bf16.mxu0 0
    %814 = vmatpush1.bf16.msra.mxu0 0
    %815 = vmatprep.subr.bf16.mxu0 0
    %816 = vmatpush1.bf16.msra.mxu0 0
    %817 = vmatprep.subr.bf16.mxu0 0
    %818 = vmatpush1.bf16.msra.mxu0 0
    %819 = vmatprep.subr.bf16.mxu0 0
    %820 = vmatpush1.bf16.msra.mxu0 0
    %821 = vmatprep.subr.bf16.mxu0 0
    %822 = vmatpush1.bf16.msra.mxu0 0
    %823 = vmatprep.subr.bf16.mxu0 0
    %824 = vmatpush1.bf16.msra.mxu0 0
    %825 = vmatprep.subr.bf16.mxu0 0
    %826 = vmatpush1.bf16.msra.mxu0 0
    %827 = vmatprep.subr.bf16.mxu0 0
    %828 = vmatpush1.bf16.msra.mxu0 0
    %829 = vmatprep.subr.bf16.mxu0 0
    %830 = vmatpush1.bf16.msra.mxu0 0
    %831 = vmatprep.subr.bf16.mxu0 0
    %832 = vmatpush1.bf16.msra.mxu0 0
    %833 = vmatprep.subr.bf16.mxu0 0
    %834 = vmatpush1.bf16.msra.mxu0 0
    %835 = vmatprep.mubr.bf16.mxu0 0
    %836 = vmatmul.mubr.bf16.gmra.mrb[0].mxu0 %v801
    %v837 = vpop.f32.mrb[0].mxu0
    %v838 = vadd.f32 0.0, %v837
    %v839 = vpop.f32.mrb[0].mxu0
    %v840 = vpop.f32.mrb[0].mxu0
    %v841 = vpop.f32.mrb[0].mxu0
    %842 = vdwg.mxu0
    %v845 = vunpack.c.l.b16 %v788
    %v846 = vunpack.c.l.b16 %v789
    %v847 = vpack.c.b16 %v846, %v845
    %v850 = vsel %vm799, %v787, 0
    %852 = vmatprep.subr.bf16.mxu0 0
    %853 = vmatpush1.bf16.msra.mxu0 %v847
    %854 = vmatprep.subr.bf16.mxu0 0
    %855 = vmatpush1.bf16.msra.mxu0 0
    %856 = vmatprep.subr.bf16.mxu0 0
    %857 = vmatpush1.bf16.msra.mxu0 0
    %858 = vmatprep.subr.bf16.mxu0 0
    %859 = vmatpush1.bf16.msra.mxu0 0
    %860 = vmatprep.subr.bf16.mxu0 0
    %861 = vmatpush1.bf16.msra.mxu0 0
    %862 = vmatprep.subr.bf16.mxu0 0
    %863 = vmatpush1.bf16.msra.mxu0 0
    %864 = vmatprep.subr.bf16.mxu0 0
    %865 = vmatpush1.bf16.msra.mxu0 0
    %866 = vmatprep.subr.bf16.mxu0 0
    %867 = vmatpush1.bf16.msra.mxu0 0
    %868 = vmatprep.subr.bf16.mxu0 0
    %869 = vmatpush1.bf16.msra.mxu0 0
    %870 = vmatprep.subr.bf16.mxu0 0
    %871 = vmatpush1.bf16.msra.mxu0 0
    %872 = vmatprep.subr.bf16.mxu0 0
    %873 = vmatpush1.bf16.msra.mxu0 0
    %874 = vmatprep.subr.bf16.mxu0 0
    %875 = vmatpush1.bf16.msra.mxu0 0
    %876 = vmatprep.subr.bf16.mxu0 0
    %877 = vmatpush1.bf16.msra.mxu0 0
    %878 = vmatprep.subr.bf16.mxu0 0
    %879 = vmatpush1.bf16.msra.mxu0 0
    %880 = vmatprep.subr.bf16.mxu0 0
    %881 = vmatpush1.bf16.msra.mxu0 0
    %882 = vmatprep.subr.bf16.mxu0 0
    %883 = vmatpush1.bf16.msra.mxu0 0
    %884 = vmatprep.mubr.bf16.mxu0 0
    %885 = vmatmul.mubr.bf16.gmra.mrb[0].mxu0 %v850
    %v886 = vpop.f32.mrb[0].mxu0
    %v887 = vadd.f32 %v838, %v886
    %v888 = vpop.f32.mrb[0].mxu0
    %v889 = vpop.f32.mrb[0].mxu0
    %v890 = vpop.f32.mrb[0].mxu0
    %891 = vdwg.mxu0
    %v892 = vld [vmem:[%s2 + $0x5] sm:$0x1]
    %v893 = vlaneseq
    %v894 = vshrl.u32 %v893, 7
    %v895 = vsub.s32 0, %v894
    %v896 = vrot.slane %v892, %v895
    %v897 = vadd.f32 %v887, %v896
    %v898 = vmax.f32 %v897, 0.0
    %v899 = vpack.c.bf16 %v898, %v898
    %v900 = vld [vmem:[%s1 + $0x68] sm:$0xf]
    %v901 = vld [vmem:[%s1 + $0x6c] sm:$0xf]
    %v902 = vld [vmem:[%s1 + $0x70] sm:$0xf]
    %v903 = vld [vmem:[%s1 + $0x74] sm:$0xf]
    %v904 = vld [vmem:[%s2 + $0x6] sm:$0x1]
    %v905 = vlaneseq
    %v906 = vshrl.u32 %v905, 7
    %v907 = vsub.s32 0, %v906
    %v908 = vrot.slane %v904, %v907
    %v913 = vunpack.c.l.b16 %v900
    %v914 = vunpack.c.l.b16 %v901
    %v915 = vunpack.c.l.b16 %v902
    %v916 = vunpack.c.l.b16 %v903
    %v917 = vpack.c.b16 %v914, %v913
    %v918 = vpack.c.b16 %v916, %v915
    %v922 = vsel %vm307, %v899, 0
    %924 = vmatprep.subr.bf16.mxu0 0
    %925 = vmatpush1.bf16.msra.mxu0 %v917
    %926 = vmatprep.subr.bf16.mxu0 0
    %927 = vmatpush1.bf16.msra.mxu0 %v918
    %928 = vmatprep.subr.bf16.mxu0 0
    %929 = vmatpush1.bf16.msra.mxu0 0
    %930 = vmatprep.subr.bf16.mxu0 0
    %931 = vmatpush1.bf16.msra.mxu0 0
    %932 = vmatprep.subr.bf16.mxu0 0
    %933 = vmatpush1.bf16.msra.mxu0 0
    %934 = vmatprep.subr.bf16.mxu0 0
    %935 = vmatpush1.bf16.msra.mxu0 0
    %936 = vmatprep.subr.bf16.mxu0 0
    %937 = vmatpush1.bf16.msra.mxu0 0
    %938 = vmatprep.subr.bf16.mxu0 0
    %939 = vmatpush1.bf16.msra.mxu0 0
    %940 = vmatprep.subr.bf16.mxu0 0
    %941 = vmatpush1.bf16.msra.mxu0 0
    %942 = vmatprep.subr.bf16.mxu0 0
    %943 = vmatpush1.bf16.msra.mxu0 0
    %944 = vmatprep.subr.bf16.mxu0 0
    %945 = vmatpush1.bf16.msra.mxu0 0
    %946 = vmatprep.subr.bf16.mxu0 0
    %947 = vmatpush1.bf16.msra.mxu0 0
    %948 = vmatprep.subr.bf16.mxu0 0
    %949 = vmatpush1.bf16.msra.mxu0 0
    %950 = vmatprep.subr.bf16.mxu0 0
    %951 = vmatpush1.bf16.msra.mxu0 0
    %952 = vmatprep.subr.bf16.mxu0 0
    %953 = vmatpush1.bf16.msra.mxu0 0
    %954 = vmatprep.subr.bf16.mxu0 0
    %955 = vmatpush1.bf16.msra.mxu0 0
    %956 = vmatprep.mubr.bf16.mxu0 0
    %957 = vmatmul.mubr.bf16.gmra.mrb[0].mxu0 %v922
    %v958 = vpop.f32.mrb[0].mxu0
    %v959 = vadd.f32 %v908, %v958
    %v960 = vpop.f32.mrb[0].mxu0
    %v961 = vpop.f32.mrb[0].mxu0
    %v962 = vpop.f32.mrb[0].mxu0
    %963 = vdwg.mxu0
    %v964 = vmax.f32 %v959, 0.0
    %v965 = vpack.c.bf16 %v964, %v964
    %v966 = vld [vmem:[%s1 + $0x78] sm:$0xf]
    %v967 = vld [vmem:[%s2 + $0x7] sm:$0x1]
    %v968 = vlaneseq
    %v969 = vshrl.u32 %v968, 7
    %v970 = vsub.s32 0, %v969
    %v971 = vrot.slane %v967, %v970
    %vm972 = vcmask 64512
    %v974 = vsel %vm972, %v965, 0
    %v977 = vsel %vm129, %v966, 0
    %979 = vmatprep.subr.bf16.mxu0 0
    %980 = vmatpush1.bf16.msra.mxu0 %v977
    %981 = vmatprep.subr.bf16.mxu0 0
    %982 = vmatpush1.bf16.msra.mxu0 0
    %983 = vmatprep.subr.bf16.mxu0 0
    %984 = vmatpush1.bf16.msra.mxu0 0
    %985 = vmatprep.subr.bf16.mxu0 0
    %986 = vmatpush1.bf16.msra.mxu0 0
    %987 = vmatprep.subr.bf16.mxu0 0
    %988 = vmatpush1.bf16.msra.mxu0 0
    %989 = vmatprep.subr.bf16.mxu0 0
    %990 = vmatpush1.bf16.msra.mxu0 0
    %991 = vmatprep.subr.bf16.mxu0 0
    %992 = vmatpush1.bf16.msra.mxu0 0
    %993 = vmatprep.subr.bf16.mxu0 0
    %994 = vmatpush1.bf16.msra.mxu0 0
    %995 = vmatprep.subr.bf16.mxu0 0
    %996 = vmatpush1.bf16.msra.mxu0 0
    %997 = vmatprep.subr.bf16.mxu0 0
    %998 = vmatpush1.bf16.msra.mxu0 0
    %999 = vmatprep.subr.bf16.mxu0 0
    %1000 = vmatpush1.bf16.msra.mxu0 0
    %1001 = vmatprep.subr.bf16.mxu0 0
    %1002 = vmatpush1.bf16.msra.mxu0 0
    %1003 = vmatprep.subr.bf16.mxu0 0
    %1004 = vmatpush1.bf16.msra.mxu0 0
    %1005 = vmatprep.subr.bf16.mxu0 0
    %1006 = vmatpush1.bf16.msra.mxu0 0
    %1007 = vmatprep.subr.bf16.mxu0 0
    %1008 = vmatpush1.bf16.msra.mxu0 0
    %1009 = vmatprep.subr.bf16.mxu0 0
    %1010 = vmatpush1.bf16.msra.mxu0 0
    %1011 = vmatprep.mubr.bf16.mxu0 0
    %1012 = vmatmul.mubr.bf16.gmra.mrb[0].mxu0 %v974
    %v1013 = vpop.f32.mrb[0].mxu0
    %v1014 = vadd.f32 %v971, %v1013
    %v1015 = vpop.f32.mrb[0].mxu0
    %v1016 = vpop.f32.mrb[0].mxu0
    %v1017 = vpop.f32.mrb[0].mxu0
    %1018 = vdwg.mxu0
    %1019 = vst.msk [vmem:[#allocation2] sm:$0xff] %vm799, %v1014
    // Predicated region
    $region14: #{branch_2_fun.2} parent=1 // pred_check
      _
    $region15: #{branch_2_fun.2} parent=1 // pred_check_branch
      %1021 = sbr.rel (0) target = $region17
    $region16: #{branch_2_fun.2} parent=1 // pred_region
      %s1023 = ssub.s32 128, 128
      %1024 = vsyncadd [#allocation3], %s1023
      %s1026 = sshll.u32 [#allocation2], 4
      %s1027 = int_to_ptr.vmem [resolvable:$true] %s1026
      %1029 = dma.vmem_to_hbm [thread:$0]  %s1027, 128, %s3, [#allocation3]
    $region17: #{branch_2_fun.2} parent=1 // pred_fallthru
      _
    // Predicated region
    $region18: #{branch_2_fun.2} parent=1 // pred_check
      _
    $region19: #{branch_2_fun.2} parent=1 // pred_check_branch
      %1031 = sbr.rel (0) target = $region21
    $region20: #{branch_2_fun.2} parent=1 // pred_region
      %1032 = dma.done [#allocation3], 128
    $region21: #{branch_2_fun.2} parent=1 // pred_fallthru
      _
    %1033 = vsyncpa [#allocation3], 1

// kernel: branch_1_fun.2
$region0: #{branch_1_fun.2}
  #allocation0 [shape = 'u32[]', space=smem, size = 0x4, offset = 0x4, fixed_abs, tag = 'smem constant byte address 0x4 - core index']
  #allocation1 [shape = 'u32[144,128]{1,0:T(1,128)}', space=vmem, size = 0x12000, scoped, tag = 'internal scratch']
  %s0 = inlined_call_operand.vmem [shape: f32[16,8], index: 0, kind: input, shape index: {}]
  %s1 = inlined_call_operand.vmem [shape: bf16[288,64], index: 1, kind: input, shape index: {}]
  %s2 = inlined_call_operand.vmem [shape: f32[8,64], index: 2, kind: input, shape index: {}]
  %s3 = inlined_call_operand.hbm [shape: f32[8,16], index: 3, kind: output, shape index: {}]
  %s4 = sld [smem:[#allocation0]]
  $region22: #{branch_1_fun.2} parent=0
    _
  %s6 = ssub.s32 1, %s4
  %s7 = scalar_select 0, %s6, %s4
  $region1: #{branch_1_fun.2} parent=0
    #allocation2 [shape = 'u8[4096]{0}', space=vmem, size = 0x1000, scoped, tag = 'output window, operand 0, single buffered']
    #allocation3 [shape = 's32[1]{0}', space=sflag, size = 0x4, scoped, tag = 'scoped memory for branch_1_fun.2']
    %8 = vsyncpa [#allocation3], 0
    // Predicated region
    $region2: #{branch_1_fun.2} parent=1 // pred_check
      _
    $region3: #{branch_1_fun.2} parent=1 // pred_check_branch
      %10 = sbr.rel (0) target = $region5
    $region4: #{branch_1_fun.2} parent=1 // pred_region
      _
    $region5: #{branch_1_fun.2} parent=1 // pred_fallthru
      _
    // Predicated region
    $region6: #{branch_1_fun.2} parent=1 // pred_check
      _
    $region7: #{branch_1_fun.2} parent=1 // pred_check_branch
      %12 = sbr.rel (0) target = $region9
    $region8: #{branch_1_fun.2} parent=1 // pred_region
      _
    $region9: #{branch_1_fun.2} parent=1 // pred_fallthru
      _
    // Predicated region
    $region10: #{branch_1_fun.2} parent=1 // pred_check
      _
    $region11: #{branch_1_fun.2} parent=1 // pred_check_branch
      %14 = sbr.rel (0) target = $region13
    $region12: #{branch_1_fun.2} parent=1 // pred_region
      _
    $region13: #{branch_1_fun.2} parent=1 // pred_fallthru
      _
    %v16 = vld [vmem:[%s0] sm:$0xff]
    %v17 = vld [vmem:[%s0 + $0x8] sm:$0xff]
    %v18 = vpack.c.bf16 %v17, %v16
    %v19 = vld [vmem:[%s1] sm:$0xf]
    %v20 = vld [vmem:[%s2] sm:$0x1]
    %v21 = vlaneseq
    %v22 = vshrl.u32 %v21, 7
    %v23 = vsub.s32 0, %v22
    %v24 = vrot.slane %v20, %v23
    %vm25 = vcmask 64512
    %v27 = vsel %vm25, %v18, 0
    %vm29 = vcmask 1043456
    %v31 = vsel %vm29, %v19, 0
    %33 = vmatprep.subr.bf16.mxu0 0
    %34 = vmatpush1.bf16.msra.mxu0 %v31
    %35 = vmatprep.subr.bf16.mxu0 0
    %36 = vmatpush1.bf16.msra.mxu0 0
    %37 = vmatprep.subr.bf16.mxu0 0
    %38 = vmatpush1.bf16.msra.mxu0 0
    %39 = vmatprep.subr.bf16.mxu0 0
    %40 = vmatpush1.bf16.msra.mxu0 0
    %41 = vmatprep.subr.bf16.mxu0 0
    %42 = vmatpush1.bf16.msra.mxu0 0
    %43 = vmatprep.subr.bf16.mxu0 0
    %44 = vmatpush1.bf16.msra.mxu0 0
    %45 = vmatprep.subr.bf16.mxu0 0
    %46 = vmatpush1.bf16.msra.mxu0 0
    %47 = vmatprep.subr.bf16.mxu0 0
    %48 = vmatpush1.bf16.msra.mxu0 0
    %49 = vmatprep.subr.bf16.mxu0 0
    %50 = vmatpush1.bf16.msra.mxu0 0
    %51 = vmatprep.subr.bf16.mxu0 0
    %52 = vmatpush1.bf16.msra.mxu0 0
    %53 = vmatprep.subr.bf16.mxu0 0
    %54 = vmatpush1.bf16.msra.mxu0 0
    %55 = vmatprep.subr.bf16.mxu0 0
    %56 = vmatpush1.bf16.msra.mxu0 0
    %57 = vmatprep.subr.bf16.mxu0 0
    %58 = vmatpush1.bf16.msra.mxu0 0
    %59 = vmatprep.subr.bf16.mxu0 0
    %60 = vmatpush1.bf16.msra.mxu0 0
    %61 = vmatprep.subr.bf16.mxu0 0
    %62 = vmatpush1.bf16.msra.mxu0 0
    %63 = vmatprep.subr.bf16.mxu0 0
    %64 = vmatpush1.bf16.msra.mxu0 0
    %65 = vmatprep.mubr.bf16.mxu0 0
    %66 = vmatmul.mubr.bf16.gmra.mrb[0].mxu0 %v27
    %v67 = vpop.f32.mrb[0].mxu0
    %v68 = vadd.f32 %v24, %v67
    %v69 = vpop.f32.mrb[0].mxu0
    %v70 = vpop.f32.mrb[0].mxu0
    %v71 = vadd.f32 %v24, %v70
    %v72 = vpop.f32.mrb[0].mxu0
    %73 = vdwg.mxu0
    %v74 = vmax.f32 %v68, 0.0
    %v75 = vmax.f32 %v71, 0.0
    %v76 = vpack.c.bf16 %v75, %v74
    %v77 = vld [vmem:[%s1 + $0x8] sm:$0xf]
    %v78 = vld [vmem:[%s1 + $0xc] sm:$0xf]
    %v79 = vld [vmem:[%s1 + $0x10] sm:$0xf]
    %v80 = vld [vmem:[%s1 + $0x14] sm:$0xf]
    %v81 = vld [vmem:[%s1 + $0x18] sm:$0xf]
    %v82 = vld [vmem:[%s1 + $0x1c] sm:$0xf]
    %v83 = vld [vmem:[%s1 + $0x20] sm:$0xf]
    %v84 = vld [vmem:[%s1 + $0x24] sm:$0xf]
    %v85 = vld [vmem:[%s2 + $0x1] sm:$0x1]
    %v86 = vlaneseq
    %v87 = vshrl.u32 %v86, 7
    %v88 = vsub.s32 0, %v87
    %v89 = vrot.slane %v85, %v88
    %v98 = vunpack.c.l.b16 %v77
    %v99 = vunpack.c.l.b16 %v78
    %v100 = vunpack.c.l.b16 %v79
    %v101 = vunpack.c.l.b16 %v80
    %v102 = vunpack.c.l.b16 %v81
    %v103 = vunpack.c.l.b16 %v82
    %v104 = vunpack.c.l.b16 %v83
    %v105 = vunpack.c.l.b16 %v84
    %v106 = vpack.c.b16 %v99, %v98
    %v107 = vpack.c.b16 %v101, %v100
    %v108 = vpack.c.b16 %v103, %v102
    %v109 = vpack.c.b16 %v105, %v104
    %vm114 = vcmask 523264
    %v116 = vsel %vm114, %v76, 0
    %118 = vmatprep.subr.bf16.mxu0 0
    %119 = vmatpush1.bf16.msra.mxu0 %v106
    %120 = vmatprep.subr.bf16.mxu0 0
    %121 = vmatpush1.bf16.msra.mxu0 %v107
    %122 = vmatprep.subr.bf16.mxu0 0
    %123 = vmatpush1.bf16.msra.mxu0 %v108
    %124 = vmatprep.subr.bf16.mxu0 0
    %125 = vmatpush1.bf16.msra.mxu0 %v109
    %126 = vmatprep.subr.bf16.mxu0 0
    %127 = vmatpush1.bf16.msra.mxu0 0
    %128 = vmatprep.subr.bf16.mxu0 0
    %129 = vmatpush1.bf16.msra.mxu0 0
    %130 = vmatprep.subr.bf16.mxu0 0
    %131 = vmatpush1.bf16.msra.mxu0 0
    %132 = vmatprep.subr.bf16.mxu0 0
    %133 = vmatpush1.bf16.msra.mxu0 0
    %134 = vmatprep.subr.bf16.mxu0 0
    %135 = vmatpush1.bf16.msra.mxu0 0
    %136 = vmatprep.subr.bf16.mxu0 0
    %137 = vmatpush1.bf16.msra.mxu0 0
    %138 = vmatprep.subr.bf16.mxu0 0
    %139 = vmatpush1.bf16.msra.mxu0 0
    %140 = vmatprep.subr.bf16.mxu0 0
    %141 = vmatpush1.bf16.msra.mxu0 0
    %142 = vmatprep.subr.bf16.mxu0 0
    %143 = vmatpush1.bf16.msra.mxu0 0
    %144 = vmatprep.subr.bf16.mxu0 0
    %145 = vmatpush1.bf16.msra.mxu0 0
    %146 = vmatprep.subr.bf16.mxu0 0
    %147 = vmatpush1.bf16.msra.mxu0 0
    %148 = vmatprep.subr.bf16.mxu0 0
    %149 = vmatpush1.bf16.msra.mxu0 0
    %150 = vmatprep.mubr.bf16.mxu0 0
    %151 = vmatmul.mubr.bf16.gmra.mrb[0].mxu0 %v116
    %v152 = vpop.f32.mrb[0].mxu0
    %v153 = vadd.f32 %v89, %v152
    %v154 = vpop.f32.mrb[0].mxu0
    %v155 = vpop.f32.mrb[0].mxu0
    %v156 = vadd.f32 %v89, %v155
    %v157 = vpop.f32.mrb[0].mxu0
    %158 = vdwg.mxu0
    %v159 = vmax.f32 %v153, 0.0
    %v160 = vmax.f32 %v156, 0.0
    %v161 = vpack.c.bf16 %v160, %v159
    %v162 = vld [vmem:[%s1 + $0x28] sm:$0xf]
    %v163 = vld [vmem:[%s1 + $0x2c] sm:$0xf]
    %v164 = vld [vmem:[%s1 + $0x30] sm:$0xf]
    %v165 = vld [vmem:[%s1 + $0x34] sm:$0xf]
    %v166 = vld [vmem:[%s1 + $0x38] sm:$0xf]
    %v167 = vld [vmem:[%s1 + $0x3c] sm:$0xf]
    %v168 = vld [vmem:[%s1 + $0x40] sm:$0xf]
    %v169 = vld [vmem:[%s1 + $0x44] sm:$0xf]
    %v170 = vld [vmem:[%s2 + $0x2] sm:$0x1]
    %v171 = vlaneseq
    %v172 = vshrl.u32 %v171, 7
    %v173 = vsub.s32 0, %v172
    %v174 = vrot.slane %v170, %v173
    %v183 = vunpack.c.l.b16 %v162
    %v184 = vunpack.c.l.b16 %v163
    %v185 = vunpack.c.l.b16 %v164
    %v186 = vunpack.c.l.b16 %v165
    %v187 = vunpack.c.l.b16 %v166
    %v188 = vunpack.c.l.b16 %v167
    %v189 = vunpack.c.l.b16 %v168
    %v190 = vunpack.c.l.b16 %v169
    %v191 = vpack.c.b16 %v184, %v183
    %v192 = vpack.c.b16 %v186, %v185
    %v193 = vpack.c.b16 %v188, %v187
    %v194 = vpack.c.b16 %v190, %v189
    %v200 = vsel %vm114, %v161, 0
    %202 = vmatprep.subr.bf16.mxu0 0
    %203 = vmatpush1.bf16.msra.mxu0 %v191
    %204 = vmatprep.subr.bf16.mxu0 0
    %205 = vmatpush1.bf16.msra.mxu0 %v192
    %206 = vmatprep.subr.bf16.mxu0 0
    %207 = vmatpush1.bf16.msra.mxu0 %v193
    %208 = vmatprep.subr.bf16.mxu0 0
    %209 = vmatpush1.bf16.msra.mxu0 %v194
    %210 = vmatprep.subr.bf16.mxu0 0
    %211 = vmatpush1.bf16.msra.mxu0 0
    %212 = vmatprep.subr.bf16.mxu0 0
    %213 = vmatpush1.bf16.msra.mxu0 0
    %214 = vmatprep.subr.bf16.mxu0 0
    %215 = vmatpush1.bf16.msra.mxu0 0
    %216 = vmatprep.subr.bf16.mxu0 0
    %217 = vmatpush1.bf16.msra.mxu0 0
    %218 = vmatprep.subr.bf16.mxu0 0
    %219 = vmatpush1.bf16.msra.mxu0 0
    %220 = vmatprep.subr.bf16.mxu0 0
    %221 = vmatpush1.bf16.msra.mxu0 0
    %222 = vmatprep.subr.bf16.mxu0 0
    %223 = vmatpush1.bf16.msra.mxu0 0
    %224 = vmatprep.subr.bf16.mxu0 0
    %225 = vmatpush1.bf16.msra.mxu0 0
    %226 = vmatprep.subr.bf16.mxu0 0
    %227 = vmatpush1.bf16.msra.mxu0 0
    %228 = vmatprep.subr.bf16.mxu0 0
    %229 = vmatpush1.bf16.msra.mxu0 0
    %230 = vmatprep.subr.bf16.mxu0 0
    %231 = vmatpush1.bf16.msra.mxu0 0
    %232 = vmatprep.subr.bf16.mxu0 0
    %233 = vmatpush1.bf16.msra.mxu0 0
    %234 = vmatprep.mubr.bf16.mxu0 0
    %235 = vmatmul.mubr.bf16.gmra.mrb[0].mxu0 %v200
    %v236 = vpop.f32.mrb[0].mxu0
    %v237 = vadd.f32 %v174, %v236
    %v238 = vpop.f32.mrb[0].mxu0
    %v239 = vpop.f32.mrb[0].mxu0
    %v240 = vadd.f32 %v174, %v239
    %v241 = vpop.f32.mrb[0].mxu0
    %242 = vdwg.mxu0
    %v243 = vlaneseq
    %v244 = vshrl.u32 %v243, 7
    %v245 = vadd.s32 %v244, 8
    %v246 = vcvt.s32.f32 %v244
    %v247 = vcvt.s32.f32 %v245
    %v248 = vlaneseq
    %v249 = vand.u32 %v248, 127
    %v250 = vcvt.s32.f32 %v249
    %v251 = vmul.f32 %v246, 0.25
    %v252 = vmul.f32 %v247, 0.25
    %v253 = vfloor.f32 %v251
    %v254 = vfloor.f32 %v252
    %v255 = vmul.f32 %v250, 0.25
    %v256 = vfloor.f32 %v255
    %vm257 = vcmp.eq.f32.partialorder %v253, %v256
    %vm258 = vcmp.eq.f32.partialorder %v254, %v256
    %v259 = vsel %vm257, 1, 0
    %v260 = vsel %vm258, 1, 0
    %v261 = vcvt.s32.f32 %v259
    %v262 = vcvt.s32.f32 %v260
    %v263 = vpack.c.bf16 %v240, %v237
    %vm264 = vcmask 261120
    %v266 = vsel %vm264, %v263, 0
    %268 = vmatprep.subr.bf16.mxu0 0
    %269 = vmatpush1.bf16.xpose.msra.mxu0 %v266
    %270 = vmatprep.subr.bf16.mxu0 0
    %271 = vmatpush1.bf16.xpose.msra.mxu0 0
    %272 = vmatprep.subr.bf16.mxu0 0
    %273 = vmatpush1.bf16.xpose.msra.mxu0 0
    %274 = vmatprep.subr.bf16.mxu0 0
    %275 = vmatpush1.bf16.xpose.msra.mxu0 0
    %276 = vmatprep.subr.bf16.mxu0 0
    %277 = vmatpush1.bf16.xpose.msra.mxu0 0
    %278 = vmatprep.subr.bf16.mxu0 0
    %279 = vmatpush1.bf16.xpose.msra.mxu0 0
    %280 = vmatprep.subr.bf16.mxu0 0
    %281 = vmatpush1.bf16.xpose.msra.mxu0 0
    %282 = vmatprep.subr.bf16.mxu0 0
    %283 = vmatpush1.bf16.xpose.msra.mxu0 0
    %284 = vmatprep.subr.bf16.mxu0 0
    %285 = vmatpush1.bf16.xpose.msra.mxu0 0
    %286 = vmatprep.subr.bf16.mxu0 0
    %287 = vmatpush1.bf16.xpose.msra.mxu0 0
    %288 = vmatprep.subr.bf16.mxu0 0
    %289 = vmatpush1.bf16.xpose.msra.mxu0 0
    %290 = vmatprep.subr.bf16.mxu0 0
    %291 = vmatpush1.bf16.xpose.msra.mxu0 0
    %292 = vmatprep.subr.bf16.mxu0 0
    %293 = vmatpush1.bf16.xpose.msra.mxu0 0
    %294 = vmatprep.subr.bf16.mxu0 0
    %295 = vmatpush1.bf16.xpose.msra.mxu0 0
    %296 = vmatprep.subr.bf16.mxu0 0
    %297 = vmatpush1.bf16.xpose.msra.mxu0 0
    %298 = vmatprep.subr.bf16.mxu0 0
    %299 = vmatpush1.bf16.xpose.msra.mxu0 0
    %300 = vmatprep.mubr.bf16.mxu0 0
    %301 = vmatmul.mubr.bf16.gmra.mrb[0].mxu0 %v266
    %v302 = vpop.f32.mrb[0].mxu0
    %v303 = vadd.f32 0.0, %v302
    %v304 = vpop.f32.mrb[0].mxu0
    %v305 = vpop.f32.mrb[0].mxu0
    %v306 = vadd.f32 0.0, %v305
    %v307 = vpop.f32.mrb[0].mxu0
    %308 = vdwg.mxu0
    %v309 = vmax.f32 %v303, 0.0
    %v310 = vmax.f32 %v306, 0.0
    %v311 = vmul.f32 %v309, %v261
    %v312 = vmul.f32 %v310, %v262
    %vm313 = vcmask 130048
    %v314 = vsel %vm313, %v311, -inf
    %315 = vmax.xlane.f32.xlu0 %v314
    %v316 = vpop.xlane.xlu0 %315
    %v317 = vsel %vm313, %v312, -inf
    %318 = vmax.xlane.f32.xlu0 %v317
    %v319 = vpop.xlane.xlu0 %318
    %v320 = vsub.f32 %v311, %v316
    %v321 = vsub.f32 %v312, %v319
    %v322 = vmul.f32 %v320, 1.442695
    %v323 = vpow.pop %v322
    %v324 = vmul.f32 %v321, 1.442695
    %v325 = vpow.pop %v324
    %v326 = vmul.f32 %v323, %v261
    %v327 = vmul.f32 %v325, %v262
    %v328 = vsel %vm313, %v326, 0.0
    %329 = vadd.xlane.f32.xlu0 %v328
    %v330 = vpop.xlane.xlu0 %329
    %v331 = vsel %vm313, %v327, 0.0
    %332 = vadd.xlane.f32.xlu0 %v331
    %v333 = vpop.xlane.xlu0 %332
    %v334 = vrcp.pop %v330
    %v335 = vrcp.pop %v333
    %v336 = vmul.f32 %v326, %v334
    %v337 = vmul.f32 %v327, %v335
    %v338 = vpack.c.bf16 %v337, %v336
    %v340 = vsel %vm313, %v338, 0
    %342 = vmatprep.subr.bf16.mxu0 0
    %343 = vmatpush1.bf16.msra.mxu0 %v263
    %344 = vmatprep.subr.bf16.mxu0 0
    %345 = vmatpush1.bf16.msra.mxu0 0
    %346 = vmatprep.subr.bf16.mxu0 0
    %347 = vmatpush1.bf16.msra.mxu0 0
    %348 = vmatprep.subr.bf16.mxu0 0
    %349 = vmatpush1.bf16.msra.mxu0 0
    %350 = vmatprep.subr.bf16.mxu0 0
    %351 = vmatpush1.bf16.msra.mxu0 0
    %352 = vmatprep.subr.bf16.mxu0 0
    %353 = vmatpush1.bf16.msra.mxu0 0
    %354 = vmatprep.subr.bf16.mxu0 0
    %355 = vmatpush1.bf16.msra.mxu0 0
    %356 = vmatprep.subr.bf16.mxu0 0
    %357 = vmatpush1.bf16.msra.mxu0 0
    %358 = vmatprep.subr.bf16.mxu0 0
    %359 = vmatpush1.bf16.msra.mxu0 0
    %360 = vmatprep.subr.bf16.mxu0 0
    %361 = vmatpush1.bf16.msra.mxu0 0
    %362 = vmatprep.subr.bf16.mxu0 0
    %363 = vmatpush1.bf16.msra.mxu0 0
    %364 = vmatprep.subr.bf16.mxu0 0
    %365 = vmatpush1.bf16.msra.mxu0 0
    %366 = vmatprep.subr.bf16.mxu0 0
    %367 = vmatpush1.bf16.msra.mxu0 0
    %368 = vmatprep.subr.bf16.mxu0 0
    %369 = vmatpush1.bf16.msra.mxu0 0
    %370 = vmatprep.subr.bf16.mxu0 0
    %371 = vmatpush1.bf16.msra.mxu0 0
    %372 = vmatprep.subr.bf16.mxu0 0
    %373 = vmatpush1.bf16.msra.mxu0 0
    %374 = vmatprep.mubr.bf16.mxu0 0
    %375 = vmatmul.mubr.bf16.gmra.mrb[0].mxu0 %v340
    %v376 = vpop.f32.mrb[0].mxu0
    %v377 = vadd.f32 0.0, %v376
    %v378 = vpop.f32.mrb[0].mxu0
    %v379 = vpop.f32.mrb[0].mxu0
    %v380 = vadd.f32 0.0, %v379
    %v381 = vpop.f32.mrb[0].mxu0
    %382 = vdwg.mxu0
    %v383 = vpack.c.bf16 %v380, %v377
    %v384 = vld [vmem:[%s1 + $0x48] sm:$0xf]
    %v385 = vld [vmem:[%s1 + $0x4c] sm:$0xf]
    %v386 = vld [vmem:[%s1 + $0x50] sm:$0xf]
    %v387 = vld [vmem:[%s1 + $0x54] sm:$0xf]
    %v388 = vld [vmem:[%s2 + $0x3] sm:$0x1]
    %v389 = vlaneseq
    %v390 = vshrl.u32 %v389, 7
    %v391 = vsub.s32 0, %v390
    %v392 = vrot.slane %v388, %v391
    %v397 = vunpack.c.l.b16 %v384
    %v398 = vunpack.c.l.b16 %v385
    %v399 = vunpack.c.l.b16 %v386
    %v400 = vunpack.c.l.b16 %v387
    %v401 = vpack.c.b16 %v398, %v397
    %v402 = vpack.c.b16 %v400, %v399
    %v406 = vsel %vm264, %v383, 0
    %408 = vmatprep.subr.bf16.mxu0 0
    %409 = vmatpush1.bf16.msra.mxu0 %v401
    %410 = vmatprep.subr.bf16.mxu0 0
    %411 = vmatpush1.bf16.msra.mxu0 %v402
    %412 = vmatprep.subr.bf16.mxu0 0
    %413 = vmatpush1.bf16.msra.mxu0 0
    %414 = vmatprep.subr.bf16.mxu0 0
    %415 = vmatpush1.bf16.msra.mxu0 0
    %416 = vmatprep.subr.bf16.mxu0 0
    %417 = vmatpush1.bf16.msra.mxu0 0
    %418 = vmatprep.subr.bf16.mxu0 0
    %419 = vmatpush1.bf16.msra.mxu0 0
    %420 = vmatprep.subr.bf16.mxu0 0
    %421 = vmatpush1.bf16.msra.mxu0 0
    %422 = vmatprep.subr.bf16.mxu0 0
    %423 = vmatpush1.bf16.msra.mxu0 0
    %424 = vmatprep.subr.bf16.mxu0 0
    %425 = vmatpush1.bf16.msra.mxu0 0
    %426 = vmatprep.subr.bf16.mxu0 0
    %427 = vmatpush1.bf16.msra.mxu0 0
    %428 = vmatprep.subr.bf16.mxu0 0
    %429 = vmatpush1.bf16.msra.mxu0 0
    %430 = vmatprep.subr.bf16.mxu0 0
    %431 = vmatpush1.bf16.msra.mxu0 0
    %432 = vmatprep.subr.bf16.mxu0 0
    %433 = vmatpush1.bf16.msra.mxu0 0
    %434 = vmatprep.subr.bf16.mxu0 0
    %435 = vmatpush1.bf16.msra.mxu0 0
    %436 = vmatprep.subr.bf16.mxu0 0
    %437 = vmatpush1.bf16.msra.mxu0 0
    %438 = vmatprep.subr.bf16.mxu0 0
    %439 = vmatpush1.bf16.msra.mxu0 0
    %440 = vmatprep.mubr.bf16.mxu0 0
    %441 = vmatmul.mubr.bf16.gmra.mrb[0].mxu0 %v406
    %v442 = vpop.f32.mrb[0].mxu0
    %v443 = vadd.f32 %v392, %v442
    %v444 = vpop.f32.mrb[0].mxu0
    %v445 = vpop.f32.mrb[0].mxu0
    %v446 = vadd.f32 %v392, %v445
    %v447 = vpop.f32.mrb[0].mxu0
    %448 = vdwg.mxu0
    %v449 = vmax.f32 %v443, 0.0
    %v450 = vmax.f32 %v446, 0.0
    %v451 = vld [vmem:[%s1 + $0x58] sm:$0xf]
    %v452 = vld [vmem:[%s1 + $0x5c] sm:$0xf]
    %v453 = vld [vmem:[%s1 + $0x60] sm:$0xf]
    %v454 = vld [vmem:[%s1 + $0x64] sm:$0xf]
    %v455 = vld [vmem:[%s2 + $0x4] sm:$0x1]
    %v456 = vlaneseq
    %v457 = vshrl.u32 %v456, 7
    %v458 = vsub.s32 0, %v457
    %v459 = vrot.slane %v455, %v458
    %v464 = vunpack.c.l.b16 %v451
    %v465 = vunpack.c.l.b16 %v452
    %v466 = vunpack.c.l.b16 %v453
    %v467 = vunpack.c.l.b16 %v454
    %v468 = vpack.c.b16 %v465, %v464
    %v469 = vpack.c.b16 %v467, %v466
    %472 = vmatprep.subr.bf16.mxu0 0
    %473 = vmatpush1.bf16.msra.mxu0 %v468
    %474 = vmatprep.subr.bf16.mxu0 0
    %475 = vmatpush1.bf16.msra.mxu0 %v469
    %476 = vmatprep.subr.bf16.mxu0 0
    %477 = vmatpush1.bf16.msra.mxu0 0
    %478 = vmatprep.subr.bf16.mxu0 0
    %479 = vmatpush1.bf16.msra.mxu0 0
    %480 = vmatprep.subr.bf16.mxu0 0
    %481 = vmatpush1.bf16.msra.mxu0 0
    %482 = vmatprep.subr.bf16.mxu0 0
    %483 = vmatpush1.bf16.msra.mxu0 0
    %484 = vmatprep.subr.bf16.mxu0 0
    %485 = vmatpush1.bf16.msra.mxu0 0
    %486 = vmatprep.subr.bf16.mxu0 0
    %487 = vmatpush1.bf16.msra.mxu0 0
    %488 = vmatprep.subr.bf16.mxu0 0
    %489 = vmatpush1.bf16.msra.mxu0 0
    %490 = vmatprep.subr.bf16.mxu0 0
    %491 = vmatpush1.bf16.msra.mxu0 0
    %492 = vmatprep.subr.bf16.mxu0 0
    %493 = vmatpush1.bf16.msra.mxu0 0
    %494 = vmatprep.subr.bf16.mxu0 0
    %495 = vmatpush1.bf16.msra.mxu0 0
    %496 = vmatprep.subr.bf16.mxu0 0
    %497 = vmatpush1.bf16.msra.mxu0 0
    %498 = vmatprep.subr.bf16.mxu0 0
    %499 = vmatpush1.bf16.msra.mxu0 0
    %500 = vmatprep.subr.bf16.mxu0 0
    %501 = vmatpush1.bf16.msra.mxu0 0
    %502 = vmatprep.subr.bf16.mxu0 0
    %503 = vmatpush1.bf16.msra.mxu0 0
    %504 = vmatprep.mubr.bf16.mxu0 0
    %505 = vmatmul.mubr.bf16.gmra.mrb[0].mxu0 %v406
    %v506 = vpop.f32.mrb[0].mxu0
    %v507 = vadd.f32 %v459, %v506
    %v508 = vpop.f32.mrb[0].mxu0
    %v509 = vpop.f32.mrb[0].mxu0
    %v510 = vadd.f32 %v459, %v509
    %v511 = vpop.f32.mrb[0].mxu0
    %512 = vdwg.mxu0
    %v513 = vmax.f32 %v507, 0.0
    %v514 = vmax.f32 %v510, 0.0
    %v515 = vmul.f32 %v253, 4.0
    %v516 = vsub.f32 %v246, %v515
    %v517 = vmul.f32 %v256, 4.0
    %v518 = vsub.f32 %v250, %v517
    %v519 = vmul.f32 %v253, 8.0
    %v520 = vsub.f32 %v250, %v519
    %vm521 = vcmp.eq.f32.partialorder %v516, %v518
    %vm522 = vcmp.ge.f32.partialorder %v520, 0.0
    %vm523 = vmand %vm521, %vm522
    %vm524 = vcmp.lt.f32.partialorder %v520, 8.0
    %vm525 = vmand %vm523, %vm524
    %v526 = vsel %vm525, 0.5, 0.0
    %v528 = vsel %vm313, %v526, 0
    %530 = vmatprep.subr.mxu0 0.0
    %531 = vmatpush1.msra.mxu0 %v449
    %532 = vmatprep.subr.mxu0 0.0
    %533 = vmatpush1.msra.mxu0 %v450
    %534 = vmatprep.subr.mxu0 0.0
    %535 = vmatpush1.msra.mxu0 0.0
    %536 = vmatprep.subr.mxu0 0.0
    %537 = vmatpush1.msra.mxu0 0.0
    %538 = vmatprep.subr.mxu0 0.0
    %539 = vmatpush1.msra.mxu0 0.0
    %540 = vmatprep.subr.mxu0 0.0
    %541 = vmatpush1.msra.mxu0 0.0
    %542 = vmatprep.subr.mxu0 0.0
    %543 = vmatpush1.msra.mxu0 0.0
    %544 = vmatprep.subr.mxu0 0.0
    %545 = vmatpush1.msra.mxu0 0.0
    %546 = vmatprep.subr.mxu0 0.0
    %547 = vmatpush1.msra.mxu0 0.0
    %548 = vmatprep.subr.mxu0 0.0
    %549 = vmatpush1.msra.mxu0 0.0
    %550 = vmatprep.subr.mxu0 0.0
    %551 = vmatpush1.msra.mxu0 0.0
    %552 = vmatprep.subr.mxu0 0.0
    %553 = vmatpush1.msra.mxu0 0.0
    %554 = vmatprep.subr.mxu0 0.0
    %555 = vmatpush1.msra.mxu0 0.0
    %556 = vmatprep.subr.mxu0 0.0
    %557 = vmatpush1.msra.mxu0 0.0
    %558 = vmatprep.subr.mxu0 0.0
    %559 = vmatpush1.msra.mxu0 0.0
    %560 = vmatprep.subr.mxu0 0.0
    %561 = vmatpush1.msra.mxu0 0.0
    %562 = vmatprep.subr.mxu0 0.0
    %563 = vmatpush1.msra.mxu0 0.0
    %564 = vmatprep.subr.mxu0 0.0
    %565 = vmatpush1.msra.mxu0 0.0
    %566 = vmatprep.subr.mxu0 0.0
    %567 = vmatpush1.msra.mxu0 0.0
    %568 = vmatprep.subr.mxu0 0.0
    %569 = vmatpush1.msra.mxu0 0.0
    %570 = vmatprep.subr.mxu0 0.0
    %571 = vmatpush1.msra.mxu0 0.0
    %572 = vmatprep.subr.mxu0 0.0
    %573 = vmatpush1.msra.mxu0 0.0
    %574 = vmatprep.subr.mxu0 0.0
    %575 = vmatpush1.msra.mxu0 0.0
    %576 = vmatprep.subr.mxu0 0.0
    %577 = vmatpush1.msra.mxu0 0.0
    %578 = vmatprep.subr.mxu0 0.0
    %579 = vmatpush1.msra.mxu0 0.0
    %580 = vmatprep.subr.mxu0 0.0
    %581 = vmatpush1.msra.mxu0 0.0
    %582 = vmatprep.subr.mxu0 0.0
    %583 = vmatpush1.msra.mxu0 0.0
    %584 = vmatprep.subr.mxu0 0.0
    %585 = vmatpush1.msra.mxu0 0.0
    %586 = vmatprep.subr.mxu0 0.0
    %587 = vmatpush1.msra.mxu0 0.0
    %588 = vmatprep.subr.mxu0 0.0
    %589 = vmatpush1.msra.mxu0 0.0
    %590 = vmatprep.subr.mxu0 0.0
    %591 = vmatpush1.msra.mxu0 0.0
    %592 = vmatprep.subr.mxu0 0.0
    %593 = vmatpush1.msra.mxu0 0.0
    %594 = vmatprep.mubr.f32.mxu0 0.0
    %595 = vmatmul.mubr.f32.gmra.mrb[0].mxu0 %v528
    %v596 = vpop.f32.mrb[0].mxu0
    %v597 = vadd.f32 0.0, %v596
    %v598 = vpop.f32.mrb[0].mxu0
    %599 = vdwg.mxu0
    %600 = vmatprep.subr.mxu0 0.0
    %601 = vmatpush1.msra.mxu0 %v513
    %602 = vmatprep.subr.mxu0 0.0
    %603 = vmatpush1.msra.mxu0 %v514
    %604 = vmatprep.subr.mxu0 0.0
    %605 = vmatpush1.msra.mxu0 0.0
    %606 = vmatprep.subr.mxu0 0.0
    %607 = vmatpush1.msra.mxu0 0.0
    %608 = vmatprep.subr.mxu0 0.0
    %609 = vmatpush1.msra.mxu0 0.0
    %610 = vmatprep.subr.mxu0 0.0
    %611 = vmatpush1.msra.mxu0 0.0
    %612 = vmatprep.subr.mxu0 0.0
    %613 = vmatpush1.msra.mxu0 0.0
    %614 = vmatprep.subr.mxu0 0.0
    %615 = vmatpush1.msra.mxu0 0.0
    %616 = vmatprep.subr.mxu0 0.0
    %617 = vmatpush1.msra.mxu0 0.0
    %618 = vmatprep.subr.mxu0 0.0
    %619 = vmatpush1.msra.mxu0 0.0
    %620 = vmatprep.subr.mxu0 0.0
    %621 = vmatpush1.msra.mxu0 0.0
    %622 = vmatprep.subr.mxu0 0.0
    %623 = vmatpush1.msra.mxu0 0.0
    %624 = vmatprep.subr.mxu0 0.0
    %625 = vmatpush1.msra.mxu0 0.0
    %626 = vmatprep.subr.mxu0 0.0
    %627 = vmatpush1.msra.mxu0 0.0
    %628 = vmatprep.subr.mxu0 0.0
    %629 = vmatpush1.msra.mxu0 0.0
    %630 = vmatprep.subr.mxu0 0.0
    %631 = vmatpush1.msra.mxu0 0.0
    %632 = vmatprep.subr.mxu0 0.0
    %633 = vmatpush1.msra.mxu0 0.0
    %634 = vmatprep.subr.mxu0 0.0
    %635 = vmatpush1.msra.mxu0 0.0
    %636 = vmatprep.subr.mxu0 0.0
    %637 = vmatpush1.msra.mxu0 0.0
    %638 = vmatprep.subr.mxu0 0.0
    %639 = vmatpush1.msra.mxu0 0.0
    %640 = vmatprep.subr.mxu0 0.0
    %641 = vmatpush1.msra.mxu0 0.0
    %642 = vmatprep.subr.mxu0 0.0
    %643 = vmatpush1.msra.mxu0 0.0
    %644 = vmatprep.subr.mxu0 0.0
    %645 = vmatpush1.msra.mxu0 0.0
    %646 = vmatprep.subr.mxu0 0.0
    %647 = vmatpush1.msra.mxu0 0.0
    %648 = vmatprep.subr.mxu0 0.0
    %649 = vmatpush1.msra.mxu0 0.0
    %650 = vmatprep.subr.mxu0 0.0
    %651 = vmatpush1.msra.mxu0 0.0
    %652 = vmatprep.subr.mxu0 0.0
    %653 = vmatpush1.msra.mxu0 0.0
    %654 = vmatprep.subr.mxu0 0.0
    %655 = vmatpush1.msra.mxu0 0.0
    %656 = vmatprep.subr.mxu0 0.0
    %657 = vmatpush1.msra.mxu0 0.0
    %658 = vmatprep.subr.mxu0 0.0
    %659 = vmatpush1.msra.mxu0 0.0
    %660 = vmatprep.subr.mxu0 0.0
    %661 = vmatpush1.msra.mxu0 0.0
    %662 = vmatprep.subr.mxu0 0.0
    %663 = vmatpush1.msra.mxu0 0.0
    %664 = vmatprep.mubr.f32.mxu0 0.0
    %665 = vmatmul.mubr.f32.gmra.mrb[0].mxu0 %v528
    %v666 = vpop.f32.mrb[0].mxu0
    %v667 = vadd.f32 0.0, %v666
    %v668 = vpop.f32.mrb[0].mxu0
    %669 = vdwg.mxu0
    %v670 = vpack.c.bf16 %v597, %v597
    %v671 = vld [vmem:[%s1 + $0x68] sm:$0xf]
    %v672 = vld [vmem:[%s1 + $0x6c] sm:$0xf]
    %v673 = vpack.c.bf16 %v667, %v667
    %v674 = vld [vmem:[%s1 + $0x70] sm:$0xf]
    %v675 = vld [vmem:[%s1 + $0x74] sm:$0xf]
    %v678 = vunpack.c.l.b16 %v674
    %v679 = vunpack.c.l.b16 %v675
    %v680 = vpack.c.b16 %v679, %v678
    %v683 = vsel %vm313, %v673, 0
    %685 = vmatprep.subr.bf16.mxu0 0
    %686 = vmatpush1.bf16.msra.mxu0 %v680
    %687 = vmatprep.subr.bf16.mxu0 0
    %688 = vmatpush1.bf16.msra.mxu0 0
    %689 = vmatprep.subr.bf16.mxu0 0
    %690 = vmatpush1.bf16.msra.mxu0 0
    %691 = vmatprep.subr.bf16.mxu0 0
    %692 = vmatpush1.bf16.msra.mxu0 0
    %693 = vmatprep.subr.bf16.mxu0 0
    %694 = vmatpush1.bf16.msra.mxu0 0
    %695 = vmatprep.subr.bf16.mxu0 0
    %696 = vmatpush1.bf16.msra.mxu0 0
    %697 = vmatprep.subr.bf16.mxu0 0
    %698 = vmatpush1.bf16.msra.mxu0 0
    %699 = vmatprep.subr.bf16.mxu0 0
    %700 = vmatpush1.bf16.msra.mxu0 0
    %701 = vmatprep.subr.bf16.mxu0 0
    %702 = vmatpush1.bf16.msra.mxu0 0
    %703 = vmatprep.subr.bf16.mxu0 0
    %704 = vmatpush1.bf16.msra.mxu0 0
    %705 = vmatprep.subr.bf16.mxu0 0
    %706 = vmatpush1.bf16.msra.mxu0 0
    %707 = vmatprep.subr.bf16.mxu0 0
    %708 = vmatpush1.bf16.msra.mxu0 0
    %709 = vmatprep.subr.bf16.mxu0 0
    %710 = vmatpush1.bf16.msra.mxu0 0
    %711 = vmatprep.subr.bf16.mxu0 0
    %712 = vmatpush1.bf16.msra.mxu0 0
    %713 = vmatprep.subr.bf16.mxu0 0
    %714 = vmatpush1.bf16.msra.mxu0 0
    %715 = vmatprep.subr.bf16.mxu0 0
    %716 = vmatpush1.bf16.msra.mxu0 0
    %717 = vmatprep.mubr.bf16.mxu0 0
    %718 = vmatmul.mubr.bf16.gmra.mrb[0].mxu0 %v683
    %v719 = vpop.f32.mrb[0].mxu0
    %v720 = vadd.f32 0.0, %v719
    %v721 = vpop.f32.mrb[0].mxu0
    %v722 = vpop.f32.mrb[0].mxu0
    %v723 = vpop.f32.mrb[0].mxu0
    %724 = vdwg.mxu0
    %v727 = vunpack.c.l.b16 %v671
    %v728 = vunpack.c.l.b16 %v672
    %v729 = vpack.c.b16 %v728, %v727
    %v732 = vsel %vm313, %v670, 0
    %734 = vmatprep.subr.bf16.mxu0 0
    %735 = vmatpush1.bf16.msra.mxu0 %v729
    %736 = vmatprep.subr.bf16.mxu0 0
    %737 = vmatpush1.bf16.msra.mxu0 0
    %738 = vmatprep.subr.bf16.mxu0 0
    %739 = vmatpush1.bf16.msra.mxu0 0
    %740 = vmatprep.subr.bf16.mxu0 0
    %741 = vmatpush1.bf16.msra.mxu0 0
    %742 = vmatprep.subr.bf16.mxu0 0
    %743 = vmatpush1.bf16.msra.mxu0 0
    %744 = vmatprep.subr.bf16.mxu0 0
    %745 = vmatpush1.bf16.msra.mxu0 0
    %746 = vmatprep.subr.bf16.mxu0 0
    %747 = vmatpush1.bf16.msra.mxu0 0
    %748 = vmatprep.subr.bf16.mxu0 0
    %749 = vmatpush1.bf16.msra.mxu0 0
    %750 = vmatprep.subr.bf16.mxu0 0
    %751 = vmatpush1.bf16.msra.mxu0 0
    %752 = vmatprep.subr.bf16.mxu0 0
    %753 = vmatpush1.bf16.msra.mxu0 0
    %754 = vmatprep.subr.bf16.mxu0 0
    %755 = vmatpush1.bf16.msra.mxu0 0
    %756 = vmatprep.subr.bf16.mxu0 0
    %757 = vmatpush1.bf16.msra.mxu0 0
    %758 = vmatprep.subr.bf16.mxu0 0
    %759 = vmatpush1.bf16.msra.mxu0 0
    %760 = vmatprep.subr.bf16.mxu0 0
    %761 = vmatpush1.bf16.msra.mxu0 0
    %762 = vmatprep.subr.bf16.mxu0 0
    %763 = vmatpush1.bf16.msra.mxu0 0
    %764 = vmatprep.subr.bf16.mxu0 0
    %765 = vmatpush1.bf16.msra.mxu0 0
    %766 = vmatprep.mubr.bf16.mxu0 0
    %767 = vmatmul.mubr.bf16.gmra.mrb[0].mxu0 %v732
    %v768 = vpop.f32.mrb[0].mxu0
    %v769 = vadd.f32 %v720, %v768
    %v770 = vpop.f32.mrb[0].mxu0
    %v771 = vpop.f32.mrb[0].mxu0
    %v772 = vpop.f32.mrb[0].mxu0
    %773 = vdwg.mxu0
    %v774 = vld [vmem:[%s2 + $0x5] sm:$0x1]
    %v775 = vlaneseq
    %v776 = vshrl.u32 %v775, 7
    %v777 = vsub.s32 0, %v776
    %v778 = vrot.slane %v774, %v777
    %v779 = vadd.f32 %v769, %v778
    %v780 = vmax.f32 %v779, 0.0
    %v781 = vpack.c.bf16 %v780, %v780
    %v782 = vld [vmem:[%s1 + $0x78] sm:$0xf]
    %v783 = vld [vmem:[%s1 + $0x7c] sm:$0xf]
    %v784 = vld [vmem:[%s1 + $0x80] sm:$0xf]
    %v785 = vld [vmem:[%s1 + $0x84] sm:$0xf]
    %v786 = vld [vmem:[%s2 + $0x6] sm:$0x1]
    %v787 = vlaneseq
    %v788 = vshrl.u32 %v787, 7
    %v789 = vsub.s32 0, %v788
    %v790 = vrot.slane %v786, %v789
    %v795 = vunpack.c.l.b16 %v782
    %v796 = vunpack.c.l.b16 %v783
    %v797 = vunpack.c.l.b16 %v784
    %v798 = vunpack.c.l.b16 %v785
    %v799 = vpack.c.b16 %v796, %v795
    %v800 = vpack.c.b16 %v798, %v797
    %v804 = vsel %vm264, %v781, 0
    %806 = vmatprep.subr.bf16.mxu0 0
    %807 = vmatpush1.bf16.msra.mxu0 %v799
    %808 = vmatprep.subr.bf16.mxu0 0
    %809 = vmatpush1.bf16.msra.mxu0 %v800
    %810 = vmatprep.subr.bf16.mxu0 0
    %811 = vmatpush1.bf16.msra.mxu0 0
    %812 = vmatprep.subr.bf16.mxu0 0
    %813 = vmatpush1.bf16.msra.mxu0 0
    %814 = vmatprep.subr.bf16.mxu0 0
    %815 = vmatpush1.bf16.msra.mxu0 0
    %816 = vmatprep.subr.bf16.mxu0 0
    %817 = vmatpush1.bf16.msra.mxu0 0
    %818 = vmatprep.subr.bf16.mxu0 0
    %819 = vmatpush1.bf16.msra.mxu0 0
    %820 = vmatprep.subr.bf16.mxu0 0
    %821 = vmatpush1.bf16.msra.mxu0 0
    %822 = vmatprep.subr.bf16.mxu0 0
    %823 = vmatpush1.bf16.msra.mxu0 0
    %824 = vmatprep.subr.bf16.mxu0 0
    %825 = vmatpush1.bf16.msra.mxu0 0
    %826 = vmatprep.subr.bf16.mxu0 0
    %827 = vmatpush1.bf16.msra.mxu0 0
    %828 = vmatprep.subr.bf16.mxu0 0
    %829 = vmatpush1.bf16.msra.mxu0 0
    %830 = vmatprep.subr.bf16.mxu0 0
    %831 = vmatpush1.bf16.msra.mxu0 0
    %832 = vmatprep.subr.bf16.mxu0 0
    %833 = vmatpush1.bf16.msra.mxu0 0
    %834 = vmatprep.subr.bf16.mxu0 0
    %835 = vmatpush1.bf16.msra.mxu0 0
    %836 = vmatprep.subr.bf16.mxu0 0
    %837 = vmatpush1.bf16.msra.mxu0 0
    %838 = vmatprep.mubr.bf16.mxu0 0
    %839 = vmatmul.mubr.bf16.gmra.mrb[0].mxu0 %v804
    %v840 = vpop.f32.mrb[0].mxu0
    %v841 = vadd.f32 %v790, %v840
    %v842 = vpop.f32.mrb[0].mxu0
    %v843 = vpop.f32.mrb[0].mxu0
    %v844 = vpop.f32.mrb[0].mxu0
    %845 = vdwg.mxu0
    %v846 = vmax.f32 %v841, 0.0
    %v847 = vpack.c.bf16 %v846, %v846
    %v848 = vld [vmem:[%s1 + $0x88] sm:$0xf]
    %v849 = vld [vmem:[%s2 + $0x7] sm:$0x1]
    %v850 = vlaneseq
    %v851 = vshrl.u32 %v850, 7
    %v852 = vsub.s32 0, %v851
    %v853 = vrot.slane %v849, %v852
    %v855 = vsel %vm25, %v847, 0
    %v858 = vsel %vm29, %v848, 0
    %860 = vmatprep.subr.bf16.mxu0 0
    %861 = vmatpush1.bf16.msra.mxu0 %v858
    %862 = vmatprep.subr.bf16.mxu0 0
    %863 = vmatpush1.bf16.msra.mxu0 0
    %864 = vmatprep.subr.bf16.mxu0 0
    %865 = vmatpush1.bf16.msra.mxu0 0
    %866 = vmatprep.subr.bf16.mxu0 0
    %867 = vmatpush1.bf16.msra.mxu0 0
    %868 = vmatprep.subr.bf16.mxu0 0
    %869 = vmatpush1.bf16.msra.mxu0 0
    %870 = vmatprep.subr.bf16.mxu0 0
    %871 = vmatpush1.bf16.msra.mxu0 0
    %872 = vmatprep.subr.bf16.mxu0 0
    %873 = vmatpush1.bf16.msra.mxu0 0
    %874 = vmatprep.subr.bf16.mxu0 0
    %875 = vmatpush1.bf16.msra.mxu0 0
    %876 = vmatprep.subr.bf16.mxu0 0
    %877 = vmatpush1.bf16.msra.mxu0 0
    %878 = vmatprep.subr.bf16.mxu0 0
    %879 = vmatpush1.bf16.msra.mxu0 0
    %880 = vmatprep.subr.bf16.mxu0 0
    %881 = vmatpush1.bf16.msra.mxu0 0
    %882 = vmatprep.subr.bf16.mxu0 0
    %883 = vmatpush1.bf16.msra.mxu0 0
    %884 = vmatprep.subr.bf16.mxu0 0
    %885 = vmatpush1.bf16.msra.mxu0 0
    %886 = vmatprep.subr.bf16.mxu0 0
    %887 = vmatpush1.bf16.msra.mxu0 0
    %888 = vmatprep.subr.bf16.mxu0 0
    %889 = vmatpush1.bf16.msra.mxu0 0
    %890 = vmatprep.subr.bf16.mxu0 0
    %891 = vmatpush1.bf16.msra.mxu0 0
    %892 = vmatprep.mubr.bf16.mxu0 0
    %893 = vmatmul.mubr.bf16.gmra.mrb[0].mxu0 %v855
    %v894 = vpop.f32.mrb[0].mxu0
    %v895 = vadd.f32 %v853, %v894
    %v896 = vpop.f32.mrb[0].mxu0
    %v897 = vpop.f32.mrb[0].mxu0
    %v898 = vpop.f32.mrb[0].mxu0
    %899 = vdwg.mxu0
    %900 = vst.msk [vmem:[#allocation2] sm:$0xff] %vm313, %v895
    // Predicated region
    $region14: #{branch_1_fun.2} parent=1 // pred_check
      _
    $region15: #{branch_1_fun.2} parent=1 // pred_check_branch
      %902 = sbr.rel (0) target = $region17
    $region16: #{branch_1_fun.2} parent=1 // pred_region
      %s904 = ssub.s32 128, 128
      %905 = vsyncadd [#allocation3], %s904
      %s907 = sshll.u32 [#allocation2], 4
      %s908 = int_to_ptr.vmem [resolvable:$true] %s907
      %910 = dma.vmem_to_hbm [thread:$0]  %s908, 128, %s3, [#allocation3]
    $region17: #{branch_1_fun.2} parent=1 // pred_fallthru
      _
    // Predicated region
    $region18: #{branch_1_fun.2} parent=1 // pred_check
      _
    $region19: #{branch_1_fun.2} parent=1 // pred_check_branch
      %912 = sbr.rel (0) target = $region21
    $region20: #{branch_1_fun.2} parent=1 // pred_region
      %913 = dma.done [#allocation3], 128
    $region21: #{branch_1_fun.2} parent=1 // pred_fallthru
      _
    %914 = vsyncpa [#allocation3], 1

// kernel: branch_3_fun.2
$region0: #{branch_3_fun.2}
  #allocation0 [shape = 'u32[]', space=smem, size = 0x4, offset = 0x4, fixed_abs, tag = 'smem constant byte address 0x4 - core index']
  #allocation1 [shape = 'u32[144,128]{1,0:T(1,128)}', space=vmem, size = 0x12000, scoped, tag = 'internal scratch']
  %s0 = inlined_call_operand.vmem [shape: f32[32,4], index: 0, kind: input, shape index: {}]
  %s1 = inlined_call_operand.vmem [shape: bf16[224,32], index: 1, kind: input, shape index: {}]
  %s2 = inlined_call_operand.vmem [shape: f32[8,32], index: 2, kind: input, shape index: {}]
  %s3 = inlined_call_operand.hbm [shape: f32[8,16], index: 3, kind: output, shape index: {}]
  %s4 = sld [smem:[#allocation0]]
  $region22: #{branch_3_fun.2} parent=0
    _
  %s6 = ssub.s32 1, %s4
  %s7 = scalar_select 0, %s6, %s4
  $region1: #{branch_3_fun.2} parent=0
    #allocation2 [shape = 'u8[4096]{0}', space=vmem, size = 0x1000, scoped, tag = 'output window, operand 0, single buffered']
    #allocation3 [shape = 's32[1]{0}', space=sflag, size = 0x4, scoped, tag = 'scoped memory for branch_3_fun.2']
    %8 = vsyncpa [#allocation3], 0
    // Predicated region
    $region2: #{branch_3_fun.2} parent=1 // pred_check
      _
    $region3: #{branch_3_fun.2} parent=1 // pred_check_branch
      %10 = sbr.rel (0) target = $region5
    $region4: #{branch_3_fun.2} parent=1 // pred_region
      _
    $region5: #{branch_3_fun.2} parent=1 // pred_fallthru
      _
    // Predicated region
    $region6: #{branch_3_fun.2} parent=1 // pred_check
      _
    $region7: #{branch_3_fun.2} parent=1 // pred_check_branch
      %12 = sbr.rel (0) target = $region9
    $region8: #{branch_3_fun.2} parent=1 // pred_region
      _
    $region9: #{branch_3_fun.2} parent=1 // pred_fallthru
      _
    // Predicated region
    $region10: #{branch_3_fun.2} parent=1 // pred_check
      _
    $region11: #{branch_3_fun.2} parent=1 // pred_check_branch
      %14 = sbr.rel (0) target = $region13
    $region12: #{branch_3_fun.2} parent=1 // pred_region
      _
    $region13: #{branch_3_fun.2} parent=1 // pred_fallthru
      _
    %v16 = vld [vmem:[%s0] sm:$0xff]
    %v17 = vld [vmem:[%s0 + $0x8] sm:$0xff]
    %v18 = vld [vmem:[%s0 + $0x10] sm:$0xff]
    %v19 = vld [vmem:[%s0 + $0x18] sm:$0xff]
    %v20 = vpack.c.bf16 %v17, %v16
    %v21 = vpack.c.bf16 %v19, %v18
    %v22 = vld [vmem:[%s1] sm:$0x3]
    %v23 = vld [vmem:[%s2] sm:$0x1]
    %v24 = vlaneseq
    %v25 = vshrl.u32 %v24, 7
    %v26 = vsub.s32 0, %v25
    %v27 = vrot.slane %v23, %v26
    %vm28 = vcmask 31744
    %v30 = vsel %vm28, %v20, 0
    %v33 = vsel %vm28, %v21, 0
    %vm35 = vcmask 1041408
    %v37 = vsel %vm35, %v22, 0
    %39 = vmatprep.subr.bf16.mxu0 0
    %40 = vmatpush1.bf16.msra.mxu0 %v37
    %41 = vmatprep.subr.bf16.mxu0 0
    %42 = vmatpush1.bf16.msra.mxu0 0
    %43 = vmatprep.subr.bf16.mxu0 0
    %44 = vmatpush1.bf16.msra.mxu0 0
    %45 = vmatprep.subr.bf16.mxu0 0
    %46 = vmatpush1.bf16.msra.mxu0 0
    %47 = vmatprep.subr.bf16.mxu0 0
    %48 = vmatpush1.bf16.msra.mxu0 0
    %49 = vmatprep.subr.bf16.mxu0 0
    %50 = vmatpush1.bf16.msra.mxu0 0
    %51 = vmatprep.subr.bf16.mxu0 0
    %52 = vmatpush1.bf16.msra.mxu0 0
    %53 = vmatprep.subr.bf16.mxu0 0
    %54 = vmatpush1.bf16.msra.mxu0 0
    %55 = vmatprep.subr.bf16.mxu0 0
    %56 = vmatpush1.bf16.msra.mxu0 0
    %57 = vmatprep.subr.bf16.mxu0 0
    %58 = vmatpush1.bf16.msra.mxu0 0
    %59 = vmatprep.subr.bf16.mxu0 0
    %60 = vmatpush1.bf16.msra.mxu0 0
    %61 = vmatprep.subr.bf16.mxu0 0
    %62 = vmatpush1.bf16.msra.mxu0 0
    %63 = vmatprep.subr.bf16.mxu0 0
    %64 = vmatpush1.bf16.msra.mxu0 0
    %65 = vmatprep.subr.bf16.mxu0 0
    %66 = vmatpush1.bf16.msra.mxu0 0
    %67 = vmatprep.subr.bf16.mxu0 0
    %68 = vmatpush1.bf16.msra.mxu0 0
    %69 = vmatprep.subr.bf16.mxu0 0
    %70 = vmatpush1.bf16.msra.mxu0 0
    %71 = vmatprep.mubr.bf16.mxu0 0
    %72 = vmatmul.mubr.bf16.gmra.mrb[0].mxu0 %v30
    %v73 = vpop.f32.mrb[0].mxu0
    %v74 = vadd.f32 %v27, %v73
    %v75 = vpop.f32.mrb[0].mxu0
    %v76 = vpop.f32.mrb[0].mxu0
    %v77 = vadd.f32 %v27, %v76
    %v78 = vpop.f32.mrb[0].mxu0
    %79 = vmatprep.mubr.bf16.mxu0 0
    %80 = vmatmul.mubr.bf16.gmra.mrb[0].mxu0 %v33
    %v81 = vpop.f32.mrb[0].mxu0
    %v82 = vadd.f32 %v27, %v81
    %v83 = vpop.f32.mrb[0].mxu0
    %v84 = vpop.f32.mrb[0].mxu0
    %v85 = vadd.f32 %v27, %v84
    %v86 = vpop.f32.mrb[0].mxu0
    %87 = vdwg.mxu0
    %v88 = vmax.f32 %v74, 0.0
    %v89 = vmax.f32 %v77, 0.0
    %v90 = vmax.f32 %v82, 0.0
    %v91 = vmax.f32 %v85, 0.0
    %v92 = vpack.c.bf16 %v89, %v88
    %v93 = vpack.c.bf16 %v91, %v90
    %v94 = vld [vmem:[%s1 + $0x8] sm:$0xf]
    %v95 = vld [vmem:[%s1 + $0xc] sm:$0xf]
    %v96 = vld [vmem:[%s1 + $0x10] sm:$0xf]
    %v97 = vld [vmem:[%s1 + $0x14] sm:$0xf]
    %v98 = vld [vmem:[%s2 + $0x1] sm:$0x1]
    %v99 = vlaneseq
    %v100 = vshrl.u32 %v99, 7
    %v101 = vsub.s32 0, %v100
    %v102 = vrot.slane %v98, %v101
    %v107 = vunpack.c.l.b16 %v94
    %v108 = vunpack.c.l.b16 %v95
    %v109 = vunpack.c.l.b16 %v96
    %v110 = vunpack.c.l.b16 %v97
    %v111 = vpack.c.b16 %v108, %v107
    %v112 = vpack.c.b16 %v110, %v109
    %vm115 = vcmask 261120
    %v117 = vsel %vm115, %v92, 0
    %v120 = vsel %vm115, %v93, 0
    %122 = vmatprep.subr.bf16.mxu0 0
    %123 = vmatpush1.bf16.msra.mxu0 %v111
    %124 = vmatprep.subr.bf16.mxu0 0
    %125 = vmatpush1.bf16.msra.mxu0 %v112
    %126 = vmatprep.subr.bf16.mxu0 0
    %127 = vmatpush1.bf16.msra.mxu0 0
    %128 = vmatprep.subr.bf16.mxu0 0
    %129 = vmatpush1.bf16.msra.mxu0 0
    %130 = vmatprep.subr.bf16.mxu0 0
    %131 = vmatpush1.bf16.msra.mxu0 0
    %132 = vmatprep.subr.bf16.mxu0 0
    %133 = vmatpush1.bf16.msra.mxu0 0
    %134 = vmatprep.subr.bf16.mxu0 0
    %135 = vmatpush1.bf16.msra.mxu0 0
    %136 = vmatprep.subr.bf16.mxu0 0
    %137 = vmatpush1.bf16.msra.mxu0 0
    %138 = vmatprep.subr.bf16.mxu0 0
    %139 = vmatpush1.bf16.msra.mxu0 0
    %140 = vmatprep.subr.bf16.mxu0 0
    %141 = vmatpush1.bf16.msra.mxu0 0
    %142 = vmatprep.subr.bf16.mxu0 0
    %143 = vmatpush1.bf16.msra.mxu0 0
    %144 = vmatprep.subr.bf16.mxu0 0
    %145 = vmatpush1.bf16.msra.mxu0 0
    %146 = vmatprep.subr.bf16.mxu0 0
    %147 = vmatpush1.bf16.msra.mxu0 0
    %148 = vmatprep.subr.bf16.mxu0 0
    %149 = vmatpush1.bf16.msra.mxu0 0
    %150 = vmatprep.subr.bf16.mxu0 0
    %151 = vmatpush1.bf16.msra.mxu0 0
    %152 = vmatprep.subr.bf16.mxu0 0
    %153 = vmatpush1.bf16.msra.mxu0 0
    %154 = vmatprep.mubr.bf16.mxu0 0
    %155 = vmatmul.mubr.bf16.gmra.mrb[0].mxu0 %v117
    %v156 = vpop.f32.mrb[0].mxu0
    %v157 = vadd.f32 %v102, %v156
    %v158 = vpop.f32.mrb[0].mxu0
    %v159 = vpop.f32.mrb[0].mxu0
    %v160 = vadd.f32 %v102, %v159
    %v161 = vpop.f32.mrb[0].mxu0
    %162 = vmatprep.mubr.bf16.mxu0 0
    %163 = vmatmul.mubr.bf16.gmra.mrb[0].mxu0 %v120
    %v164 = vpop.f32.mrb[0].mxu0
    %v165 = vadd.f32 %v102, %v164
    %v166 = vpop.f32.mrb[0].mxu0
    %v167 = vpop.f32.mrb[0].mxu0
    %v168 = vadd.f32 %v102, %v167
    %v169 = vpop.f32.mrb[0].mxu0
    %170 = vdwg.mxu0
    %v171 = vmax.f32 %v157, 0.0
    %v172 = vmax.f32 %v160, 0.0
    %v173 = vmax.f32 %v165, 0.0
    %v174 = vmax.f32 %v168, 0.0
    %v175 = vpack.c.bf16 %v172, %v171
    %v176 = vpack.c.bf16 %v174, %v173
    %v177 = vld [vmem:[%s1 + $0x18] sm:$0xf]
    %v178 = vld [vmem:[%s1 + $0x1c] sm:$0xf]
    %v179 = vld [vmem:[%s1 + $0x20] sm:$0xf]
    %v180 = vld [vmem:[%s1 + $0x24] sm:$0xf]
    %v181 = vld [vmem:[%s2 + $0x2] sm:$0x1]
    %v182 = vlaneseq
    %v183 = vshrl.u32 %v182, 7
    %v184 = vsub.s32 0, %v183
    %v185 = vrot.slane %v181, %v184
    %v190 = vunpack.c.l.b16 %v177
    %v191 = vunpack.c.l.b16 %v178
    %v192 = vunpack.c.l.b16 %v179
    %v193 = vunpack.c.l.b16 %v180
    %v194 = vpack.c.b16 %v191, %v190
    %v195 = vpack.c.b16 %v193, %v192
    %v199 = vsel %vm115, %v175, 0
    %v202 = vsel %vm115, %v176, 0
    %204 = vmatprep.subr.bf16.mxu0 0
    %205 = vmatpush1.bf16.msra.mxu0 %v194
    %206 = vmatprep.subr.bf16.mxu0 0
    %207 = vmatpush1.bf16.msra.mxu0 %v195
    %208 = vmatprep.subr.bf16.mxu0 0
    %209 = vmatpush1.bf16.msra.mxu0 0
    %210 = vmatprep.subr.bf16.mxu0 0
    %211 = vmatpush1.bf16.msra.mxu0 0
    %212 = vmatprep.subr.bf16.mxu0 0
    %213 = vmatpush1.bf16.msra.mxu0 0
    %214 = vmatprep.subr.bf16.mxu0 0
    %215 = vmatpush1.bf16.msra.mxu0 0
    %216 = vmatprep.subr.bf16.mxu0 0
    %217 = vmatpush1.bf16.msra.mxu0 0
    %218 = vmatprep.subr.bf16.mxu0 0
    %219 = vmatpush1.bf16.msra.mxu0 0
    %220 = vmatprep.subr.bf16.mxu0 0
    %221 = vmatpush1.bf16.msra.mxu0 0
    %222 = vmatprep.subr.bf16.mxu0 0
    %223 = vmatpush1.bf16.msra.mxu0 0
    %224 = vmatprep.subr.bf16.mxu0 0
    %225 = vmatpush1.bf16.msra.mxu0 0
    %226 = vmatprep.subr.bf16.mxu0 0
    %227 = vmatpush1.bf16.msra.mxu0 0
    %228 = vmatprep.subr.bf16.mxu0 0
    %229 = vmatpush1.bf16.msra.mxu0 0
    %230 = vmatprep.subr.bf16.mxu0 0
    %231 = vmatpush1.bf16.msra.mxu0 0
    %232 = vmatprep.subr.bf16.mxu0 0
    %233 = vmatpush1.bf16.msra.mxu0 0
    %234 = vmatprep.subr.bf16.mxu0 0
    %235 = vmatpush1.bf16.msra.mxu0 0
    %236 = vmatprep.mubr.bf16.mxu0 0
    %237 = vmatmul.mubr.bf16.gmra.mrb[0].mxu0 %v199
    %v238 = vpop.f32.mrb[0].mxu0
    %v239 = vadd.f32 %v185, %v238
    %v240 = vpop.f32.mrb[0].mxu0
    %v241 = vpop.f32.mrb[0].mxu0
    %v242 = vadd.f32 %v185, %v241
    %v243 = vpop.f32.mrb[0].mxu0
    %244 = vmatprep.mubr.bf16.mxu0 0
    %245 = vmatmul.mubr.bf16.gmra.mrb[0].mxu0 %v202
    %v246 = vpop.f32.mrb[0].mxu0
    %v247 = vadd.f32 %v185, %v246
    %v248 = vpop.f32.mrb[0].mxu0
    %v249 = vpop.f32.mrb[0].mxu0
    %v250 = vadd.f32 %v185, %v249
    %v251 = vpop.f32.mrb[0].mxu0
    %252 = vdwg.mxu0
    %v253 = vlaneseq
    %v254 = vshrl.u32 %v253, 7
    %v255 = vadd.s32 %v254, 8
    %v256 = vadd.s32 %v254, 16
    %v257 = vadd.s32 %v254, 24
    %v258 = vcvt.s32.f32 %v254
    %v259 = vcvt.s32.f32 %v255
    %v260 = vcvt.s32.f32 %v256
    %v261 = vcvt.s32.f32 %v257
    %v262 = vlaneseq
    %v263 = vand.u32 %v262, 127
    %v264 = vcvt.s32.f32 %v263
    %v265 = vmul.f32 %v258, 0.25
    %v266 = vmul.f32 %v259, 0.25
    %v267 = vmul.f32 %v260, 0.25
    %v268 = vmul.f32 %v261, 0.25
    %v269 = vfloor.f32 %v265
    %v270 = vfloor.f32 %v266
    %v271 = vfloor.f32 %v267
    %v272 = vfloor.f32 %v268
    %v273 = vmul.f32 %v264, 0.25
    %v274 = vfloor.f32 %v273
    %vm275 = vcmp.eq.f32.partialorder %v269, %v274
    %vm276 = vcmp.eq.f32.partialorder %v270, %v274
    %vm277 = vcmp.eq.f32.partialorder %v271, %v274
    %vm278 = vcmp.eq.f32.partialorder %v272, %v274
    %v279 = vsel %vm275, 1, 0
    %v280 = vsel %vm276, 1, 0
    %v281 = vsel %vm277, 1, 0
    %v282 = vsel %vm278, 1, 0
    %v283 = vcvt.s32.f32 %v279
    %v284 = vcvt.s32.f32 %v280
    %v285 = vcvt.s32.f32 %v281
    %v286 = vcvt.s32.f32 %v282
    %v287 = vpack.c.bf16 %v242, %v239
    %v288 = vpack.c.bf16 %v250, %v247
    %v290 = vsel %vm115, %v287, 0
    %v293 = vsel %vm115, %v288, 0
    %295 = vmatprep.subr.bf16.mxu0 0
    %296 = vmatpush1.bf16.xpose.msra.mxu0 %v290
    %297 = vmatprep.subr.bf16.mxu0 0
    %298 = vmatpush1.bf16.xpose.msra.mxu0 %v293
    %299 = vmatprep.subr.bf16.mxu0 0
    %300 = vmatpush1.bf16.xpose.msra.mxu0 0
    %301 = vmatprep.subr.bf16.mxu0 0
    %302 = vmatpush1.bf16.xpose.msra.mxu0 0
    %303 = vmatprep.subr.bf16.mxu0 0
    %304 = vmatpush1.bf16.xpose.msra.mxu0 0
    %305 = vmatprep.subr.bf16.mxu0 0
    %306 = vmatpush1.bf16.xpose.msra.mxu0 0
    %307 = vmatprep.subr.bf16.mxu0 0
    %308 = vmatpush1.bf16.xpose.msra.mxu0 0
    %309 = vmatprep.subr.bf16.mxu0 0
    %310 = vmatpush1.bf16.xpose.msra.mxu0 0
    %311 = vmatprep.subr.bf16.mxu0 0
    %312 = vmatpush1.bf16.xpose.msra.mxu0 0
    %313 = vmatprep.subr.bf16.mxu0 0
    %314 = vmatpush1.bf16.xpose.msra.mxu0 0
    %315 = vmatprep.subr.bf16.mxu0 0
    %316 = vmatpush1.bf16.xpose.msra.mxu0 0
    %317 = vmatprep.subr.bf16.mxu0 0
    %318 = vmatpush1.bf16.xpose.msra.mxu0 0
    %319 = vmatprep.subr.bf16.mxu0 0
    %320 = vmatpush1.bf16.xpose.msra.mxu0 0
    %321 = vmatprep.subr.bf16.mxu0 0
    %322 = vmatpush1.bf16.xpose.msra.mxu0 0
    %323 = vmatprep.subr.bf16.mxu0 0
    %324 = vmatpush1.bf16.xpose.msra.mxu0 0
    %325 = vmatprep.subr.bf16.mxu0 0
    %326 = vmatpush1.bf16.xpose.msra.mxu0 0
    %327 = vmatprep.mubr.bf16.mxu0 0
    %328 = vmatmul.mubr.bf16.gmra.mrb[0].mxu0 %v290
    %v329 = vpop.f32.mrb[0].mxu0
    %v330 = vadd.f32 0.0, %v329
    %v331 = vpop.f32.mrb[0].mxu0
    %v332 = vpop.f32.mrb[0].mxu0
    %v333 = vadd.f32 0.0, %v332
    %v334 = vpop.f32.mrb[0].mxu0
    %335 = vmatprep.mubr.bf16.mxu0 0
    %336 = vmatmul.mubr.bf16.gmra.mrb[0].mxu0 %v293
    %v337 = vpop.f32.mrb[0].mxu0
    %v338 = vadd.f32 0.0, %v337
    %v339 = vpop.f32.mrb[0].mxu0
    %v340 = vpop.f32.mrb[0].mxu0
    %v341 = vadd.f32 0.0, %v340
    %v342 = vpop.f32.mrb[0].mxu0
    %343 = vdwg.mxu0
    %v344 = vmax.f32 %v330, 0.0
    %v345 = vmax.f32 %v333, 0.0
    %v346 = vmax.f32 %v338, 0.0
    %v347 = vmax.f32 %v341, 0.0
    %v348 = vmul.f32 %v344, %v283
    %v349 = vmul.f32 %v345, %v284
    %v350 = vmul.f32 %v346, %v285
    %v351 = vmul.f32 %v347, %v286
    %v352 = vsel %vm115, %v348, -inf
    %353 = vmax.xlane.f32.xlu0 %v352
    %v354 = vpop.xlane.xlu0 %353
    %v355 = vsel %vm115, %v349, -inf
    %356 = vmax.xlane.f32.xlu0 %v355
    %v357 = vpop.xlane.xlu0 %356
    %v358 = vsel %vm115, %v350, -inf
    %359 = vmax.xlane.f32.xlu0 %v358
    %v360 = vpop.xlane.xlu0 %359
    %v361 = vsel %vm115, %v351, -inf
    %362 = vmax.xlane.f32.xlu0 %v361
    %v363 = vpop.xlane.xlu0 %362
    %v364 = vsub.f32 %v348, %v354
    %v365 = vsub.f32 %v349, %v357
    %v366 = vsub.f32 %v350, %v360
    %v367 = vsub.f32 %v351, %v363
    %v368 = vmul.f32 %v364, 1.442695
    %v369 = vpow.pop %v368
    %v370 = vmul.f32 %v365, 1.442695
    %v371 = vpow.pop %v370
    %v372 = vmul.f32 %v366, 1.442695
    %v373 = vpow.pop %v372
    %v374 = vmul.f32 %v367, 1.442695
    %v375 = vpow.pop %v374
    %v376 = vmul.f32 %v369, %v283
    %v377 = vmul.f32 %v371, %v284
    %v378 = vmul.f32 %v373, %v285
    %v379 = vmul.f32 %v375, %v286
    %v380 = vsel %vm115, %v376, 0.0
    %381 = vadd.xlane.f32.xlu0 %v380
    %v382 = vpop.xlane.xlu0 %381
    %v383 = vsel %vm115, %v377, 0.0
    %384 = vadd.xlane.f32.xlu0 %v383
    %v385 = vpop.xlane.xlu0 %384
    %v386 = vsel %vm115, %v378, 0.0
    %387 = vadd.xlane.f32.xlu0 %v386
    %v388 = vpop.xlane.xlu0 %387
    %v389 = vsel %vm115, %v379, 0.0
    %390 = vadd.xlane.f32.xlu0 %v389
    %v391 = vpop.xlane.xlu0 %390
    %v392 = vrcp.pop %v382
    %v393 = vrcp.pop %v385
    %v394 = vrcp.pop %v388
    %v395 = vrcp.pop %v391
    %v396 = vmul.f32 %v376, %v392
    %v397 = vmul.f32 %v377, %v393
    %v398 = vmul.f32 %v378, %v394
    %v399 = vmul.f32 %v379, %v395
    %v400 = vpack.c.bf16 %v397, %v396
    %v401 = vpack.c.bf16 %v399, %v398
    %v403 = vsel %vm115, %v400, 0
    %v406 = vsel %vm115, %v401, 0
    %408 = vmatprep.subr.bf16.mxu0 0
    %409 = vmatpush1.bf16.msra.mxu0 %v287
    %410 = vmatprep.subr.bf16.mxu0 0
    %411 = vmatpush1.bf16.msra.mxu0 %v288
    %412 = vmatprep.subr.bf16.mxu0 0
    %413 = vmatpush1.bf16.msra.mxu0 0
    %414 = vmatprep.subr.bf16.mxu0 0
    %415 = vmatpush1.bf16.msra.mxu0 0
    %416 = vmatprep.subr.bf16.mxu0 0
    %417 = vmatpush1.bf16.msra.mxu0 0
    %418 = vmatprep.subr.bf16.mxu0 0
    %419 = vmatpush1.bf16.msra.mxu0 0
    %420 = vmatprep.subr.bf16.mxu0 0
    %421 = vmatpush1.bf16.msra.mxu0 0
    %422 = vmatprep.subr.bf16.mxu0 0
    %423 = vmatpush1.bf16.msra.mxu0 0
    %424 = vmatprep.subr.bf16.mxu0 0
    %425 = vmatpush1.bf16.msra.mxu0 0
    %426 = vmatprep.subr.bf16.mxu0 0
    %427 = vmatpush1.bf16.msra.mxu0 0
    %428 = vmatprep.subr.bf16.mxu0 0
    %429 = vmatpush1.bf16.msra.mxu0 0
    %430 = vmatprep.subr.bf16.mxu0 0
    %431 = vmatpush1.bf16.msra.mxu0 0
    %432 = vmatprep.subr.bf16.mxu0 0
    %433 = vmatpush1.bf16.msra.mxu0 0
    %434 = vmatprep.subr.bf16.mxu0 0
    %435 = vmatpush1.bf16.msra.mxu0 0
    %436 = vmatprep.subr.bf16.mxu0 0
    %437 = vmatpush1.bf16.msra.mxu0 0
    %438 = vmatprep.subr.bf16.mxu0 0
    %439 = vmatpush1.bf16.msra.mxu0 0
    %440 = vmatprep.mubr.bf16.mxu0 0
    %441 = vmatmul.mubr.bf16.gmra.mrb[0].mxu0 %v403
    %v442 = vpop.f32.mrb[0].mxu0
    %v443 = vadd.f32 0.0, %v442
    %v444 = vpop.f32.mrb[0].mxu0
    %v445 = vpop.f32.mrb[0].mxu0
    %v446 = vadd.f32 0.0, %v445
    %v447 = vpop.f32.mrb[0].mxu0
    %448 = vmatprep.mubr.bf16.mxu0 0
    %449 = vmatmul.mubr.bf16.gmra.mrb[0].mxu0 %v406
    %v450 = vpop.f32.mrb[0].mxu0
    %v451 = vadd.f32 0.0, %v450
    %v452 = vpop.f32.mrb[0].mxu0
    %v453 = vpop.f32.mrb[0].mxu0
    %v454 = vadd.f32 0.0, %v453
    %v455 = vpop.f32.mrb[0].mxu0
    %456 = vdwg.mxu0
    %v457 = vpack.c.bf16 %v446, %v443
    %v458 = vpack.c.bf16 %v454, %v451
    %v459 = vld [vmem:[%s1 + $0x28] sm:$0xf]
    %v460 = vld [vmem:[%s1 + $0x2c] sm:$0xf]
    %v461 = vld [vmem:[%s1 + $0x30] sm:$0xf]
    %v462 = vld [vmem:[%s1 + $0x34] sm:$0xf]
    %v463 = vld [vmem:[%s2 + $0x3] sm:$0x1]
    %v464 = vlaneseq
    %v465 = vshrl.u32 %v464, 7
    %v466 = vsub.s32 0, %v465
    %v467 = vrot.slane %v463, %v466
    %v472 = vunpack.c.l.b16 %v459
    %v473 = vunpack.c.l.b16 %v460
    %v474 = vunpack.c.l.b16 %v461
    %v475 = vunpack.c.l.b16 %v462
    %v476 = vpack.c.b16 %v473, %v472
    %v477 = vpack.c.b16 %v475, %v474
    %v481 = vsel %vm115, %v457, 0
    %v484 = vsel %vm115, %v458, 0
    %486 = vmatprep.subr.bf16.mxu0 0
    %487 = vmatpush1.bf16.msra.mxu0 %v476
    %488 = vmatprep.subr.bf16.mxu0 0
    %489 = vmatpush1.bf16.msra.mxu0 %v477
    %490 = vmatprep.subr.bf16.mxu0 0
    %491 = vmatpush1.bf16.msra.mxu0 0
    %492 = vmatprep.subr.bf16.mxu0 0
    %493 = vmatpush1.bf16.msra.mxu0 0
    %494 = vmatprep.subr.bf16.mxu0 0
    %495 = vmatpush1.bf16.msra.mxu0 0
    %496 = vmatprep.subr.bf16.mxu0 0
    %497 = vmatpush1.bf16.msra.mxu0 0
    %498 = vmatprep.subr.bf16.mxu0 0
    %499 = vmatpush1.bf16.msra.mxu0 0
    %500 = vmatprep.subr.bf16.mxu0 0
    %501 = vmatpush1.bf16.msra.mxu0 0
    %502 = vmatprep.subr.bf16.mxu0 0
    %503 = vmatpush1.bf16.msra.mxu0 0
    %504 = vmatprep.subr.bf16.mxu0 0
    %505 = vmatpush1.bf16.msra.mxu0 0
    %506 = vmatprep.subr.bf16.mxu0 0
    %507 = vmatpush1.bf16.msra.mxu0 0
    %508 = vmatprep.subr.bf16.mxu0 0
    %509 = vmatpush1.bf16.msra.mxu0 0
    %510 = vmatprep.subr.bf16.mxu0 0
    %511 = vmatpush1.bf16.msra.mxu0 0
    %512 = vmatprep.subr.bf16.mxu0 0
    %513 = vmatpush1.bf16.msra.mxu0 0
    %514 = vmatprep.subr.bf16.mxu0 0
    %515 = vmatpush1.bf16.msra.mxu0 0
    %516 = vmatprep.subr.bf16.mxu0 0
    %517 = vmatpush1.bf16.msra.mxu0 0
    %518 = vmatprep.mubr.bf16.mxu0 0
    %519 = vmatmul.mubr.bf16.gmra.mrb[0].mxu0 %v481
    %v520 = vpop.f32.mrb[0].mxu0
    %v521 = vadd.f32 %v467, %v520
    %v522 = vpop.f32.mrb[0].mxu0
    %v523 = vpop.f32.mrb[0].mxu0
    %v524 = vadd.f32 %v467, %v523
    %v525 = vpop.f32.mrb[0].mxu0
    %526 = vmatprep.mubr.bf16.mxu0 0
    %527 = vmatmul.mubr.bf16.gmra.mrb[0].mxu0 %v484
    %v528 = vpop.f32.mrb[0].mxu0
    %v529 = vadd.f32 %v467, %v528
    %v530 = vpop.f32.mrb[0].mxu0
    %v531 = vpop.f32.mrb[0].mxu0
    %v532 = vadd.f32 %v467, %v531
    %v533 = vpop.f32.mrb[0].mxu0
    %534 = vdwg.mxu0
    %v535 = vmax.f32 %v521, 0.0
    %v536 = vmax.f32 %v524, 0.0
    %v537 = vmax.f32 %v529, 0.0
    %v538 = vmax.f32 %v532, 0.0
    %v539 = vld [vmem:[%s1 + $0x38] sm:$0xf]
    %v540 = vld [vmem:[%s1 + $0x3c] sm:$0xf]
    %v541 = vld [vmem:[%s1 + $0x40] sm:$0xf]
    %v542 = vld [vmem:[%s1 + $0x44] sm:$0xf]
    %v543 = vld [vmem:[%s2 + $0x4] sm:$0x1]
    %v544 = vlaneseq
    %v545 = vshrl.u32 %v544, 7
    %v546 = vsub.s32 0, %v545
    %v547 = vrot.slane %v543, %v546
    %v552 = vunpack.c.l.b16 %v539
    %v553 = vunpack.c.l.b16 %v540
    %v554 = vunpack.c.l.b16 %v541
    %v555 = vunpack.c.l.b16 %v542
    %v556 = vpack.c.b16 %v553, %v552
    %v557 = vpack.c.b16 %v555, %v554
    %560 = vmatprep.subr.bf16.mxu0 0
    %561 = vmatpush1.bf16.msra.mxu0 %v556
    %562 = vmatprep.subr.bf16.mxu0 0
    %563 = vmatpush1.bf16.msra.mxu0 %v557
    %564 = vmatprep.subr.bf16.mxu0 0
    %565 = vmatpush1.bf16.msra.mxu0 0
    %566 = vmatprep.subr.bf16.mxu0 0
    %567 = vmatpush1.bf16.msra.mxu0 0
    %568 = vmatprep.subr.bf16.mxu0 0
    %569 = vmatpush1.bf16.msra.mxu0 0
    %570 = vmatprep.subr.bf16.mxu0 0
    %571 = vmatpush1.bf16.msra.mxu0 0
    %572 = vmatprep.subr.bf16.mxu0 0
    %573 = vmatpush1.bf16.msra.mxu0 0
    %574 = vmatprep.subr.bf16.mxu0 0
    %575 = vmatpush1.bf16.msra.mxu0 0
    %576 = vmatprep.subr.bf16.mxu0 0
    %577 = vmatpush1.bf16.msra.mxu0 0
    %578 = vmatprep.subr.bf16.mxu0 0
    %579 = vmatpush1.bf16.msra.mxu0 0
    %580 = vmatprep.subr.bf16.mxu0 0
    %581 = vmatpush1.bf16.msra.mxu0 0
    %582 = vmatprep.subr.bf16.mxu0 0
    %583 = vmatpush1.bf16.msra.mxu0 0
    %584 = vmatprep.subr.bf16.mxu0 0
    %585 = vmatpush1.bf16.msra.mxu0 0
    %586 = vmatprep.subr.bf16.mxu0 0
    %587 = vmatpush1.bf16.msra.mxu0 0
    %588 = vmatprep.subr.bf16.mxu0 0
    %589 = vmatpush1.bf16.msra.mxu0 0
    %590 = vmatprep.subr.bf16.mxu0 0
    %591 = vmatpush1.bf16.msra.mxu0 0
    %592 = vmatprep.mubr.bf16.mxu0 0
    %593 = vmatmul.mubr.bf16.gmra.mrb[0].mxu0 %v481
    %v594 = vpop.f32.mrb[0].mxu0
    %v595 = vadd.f32 %v547, %v594
    %v596 = vpop.f32.mrb[0].mxu0
    %v597 = vpop.f32.mrb[0].mxu0
    %v598 = vadd.f32 %v547, %v597
    %v599 = vpop.f32.mrb[0].mxu0
    %600 = vmatprep.mubr.bf16.mxu0 0
    %601 = vmatmul.mubr.bf16.gmra.mrb[0].mxu0 %v484
    %v602 = vpop.f32.mrb[0].mxu0
    %v603 = vadd.f32 %v547, %v602
    %v604 = vpop.f32.mrb[0].mxu0
    %v605 = vpop.f32.mrb[0].mxu0
    %v606 = vadd.f32 %v547, %v605
    %v607 = vpop.f32.mrb[0].mxu0
    %608 = vdwg.mxu0
    %v609 = vmax.f32 %v595, 0.0
    %v610 = vmax.f32 %v598, 0.0
    %v611 = vmax.f32 %v603, 0.0
    %v612 = vmax.f32 %v606, 0.0
    %v613 = vmul.f32 %v269, 4.0
    %v614 = vsub.f32 %v258, %v613
    %v615 = vmul.f32 %v274, 4.0
    %v616 = vsub.f32 %v264, %v615
    %v617 = vmul.f32 %v269, 16.0
    %v618 = vsub.f32 %v264, %v617
    %vm619 = vcmp.eq.f32.partialorder %v614, %v616
    %vm620 = vcmp.ge.f32.partialorder %v618, 0.0
    %vm621 = vmand %vm619, %vm620
    %vm622 = vcmp.lt.f32.partialorder %v618, 16.0
    %vm623 = vmand %vm621, %vm622
    %v624 = vsel %vm623, 0.25, 0.0
    %v626 = vsel %vm115, %v624, 0
    %628 = vmatprep.subr.mxu0 0.0
    %629 = vmatpush1.msra.mxu0 %v535
    %630 = vmatprep.subr.mxu0 0.0
    %631 = vmatpush1.msra.mxu0 %v536
    %632 = vmatprep.subr.mxu0 0.0
    %633 = vmatpush1.msra.mxu0 %v537
    %634 = vmatprep.subr.mxu0 0.0
    %635 = vmatpush1.msra.mxu0 %v538
    %636 = vmatprep.subr.mxu0 0.0
    %637 = vmatpush1.msra.mxu0 0.0
    %638 = vmatprep.subr.mxu0 0.0
    %639 = vmatpush1.msra.mxu0 0.0
    %640 = vmatprep.subr.mxu0 0.0
    %641 = vmatpush1.msra.mxu0 0.0
    %642 = vmatprep.subr.mxu0 0.0
    %643 = vmatpush1.msra.mxu0 0.0
    %644 = vmatprep.subr.mxu0 0.0
    %645 = vmatpush1.msra.mxu0 0.0
    %646 = vmatprep.subr.mxu0 0.0
    %647 = vmatpush1.msra.mxu0 0.0
    %648 = vmatprep.subr.mxu0 0.0
    %649 = vmatpush1.msra.mxu0 0.0
    %650 = vmatprep.subr.mxu0 0.0
    %651 = vmatpush1.msra.mxu0 0.0
    %652 = vmatprep.subr.mxu0 0.0
    %653 = vmatpush1.msra.mxu0 0.0
    %654 = vmatprep.subr.mxu0 0.0
    %655 = vmatpush1.msra.mxu0 0.0
    %656 = vmatprep.subr.mxu0 0.0
    %657 = vmatpush1.msra.mxu0 0.0
    %658 = vmatprep.subr.mxu0 0.0
    %659 = vmatpush1.msra.mxu0 0.0
    %660 = vmatprep.subr.mxu0 0.0
    %661 = vmatpush1.msra.mxu0 0.0
    %662 = vmatprep.subr.mxu0 0.0
    %663 = vmatpush1.msra.mxu0 0.0
    %664 = vmatprep.subr.mxu0 0.0
    %665 = vmatpush1.msra.mxu0 0.0
    %666 = vmatprep.subr.mxu0 0.0
    %667 = vmatpush1.msra.mxu0 0.0
    %668 = vmatprep.subr.mxu0 0.0
    %669 = vmatpush1.msra.mxu0 0.0
    %670 = vmatprep.subr.mxu0 0.0
    %671 = vmatpush1.msra.mxu0 0.0
    %672 = vmatprep.subr.mxu0 0.0
    %673 = vmatpush1.msra.mxu0 0.0
    %674 = vmatprep.subr.mxu0 0.0
    %675 = vmatpush1.msra.mxu0 0.0
    %676 = vmatprep.subr.mxu0 0.0
    %677 = vmatpush1.msra.mxu0 0.0
    %678 = vmatprep.subr.mxu0 0.0
    %679 = vmatpush1.msra.mxu0 0.0
    %680 = vmatprep.subr.mxu0 0.0
    %681 = vmatpush1.msra.mxu0 0.0
    %682 = vmatprep.subr.mxu0 0.0
    %683 = vmatpush1.msra.mxu0 0.0
    %684 = vmatprep.subr.mxu0 0.0
    %685 = vmatpush1.msra.mxu0 0.0
    %686 = vmatprep.subr.mxu0 0.0
    %687 = vmatpush1.msra.mxu0 0.0
    %688 = vmatprep.subr.mxu0 0.0
    %689 = vmatpush1.msra.mxu0 0.0
    %690 = vmatprep.subr.mxu0 0.0
    %691 = vmatpush1.msra.mxu0 0.0
    %692 = vmatprep.mubr.f32.mxu0 0.0
    %693 = vmatmul.mubr.f32.gmra.mrb[0].mxu0 %v626
    %v694 = vpop.f32.mrb[0].mxu0
    %v695 = vadd.f32 0.0, %v694
    %v696 = vpop.f32.mrb[0].mxu0
    %697 = vdwg.mxu0
    %698 = vmatprep.subr.mxu0 0.0
    %699 = vmatpush1.msra.mxu0 %v609
    %700 = vmatprep.subr.mxu0 0.0
    %701 = vmatpush1.msra.mxu0 %v610
    %702 = vmatprep.subr.mxu0 0.0
    %703 = vmatpush1.msra.mxu0 %v611
    %704 = vmatprep.subr.mxu0 0.0
    %705 = vmatpush1.msra.mxu0 %v612
    %706 = vmatprep.subr.mxu0 0.0
    %707 = vmatpush1.msra.mxu0 0.0
    %708 = vmatprep.subr.mxu0 0.0
    %709 = vmatpush1.msra.mxu0 0.0
    %710 = vmatprep.subr.mxu0 0.0
    %711 = vmatpush1.msra.mxu0 0.0
    %712 = vmatprep.subr.mxu0 0.0
    %713 = vmatpush1.msra.mxu0 0.0
    %714 = vmatprep.subr.mxu0 0.0
    %715 = vmatpush1.msra.mxu0 0.0
    %716 = vmatprep.subr.mxu0 0.0
    %717 = vmatpush1.msra.mxu0 0.0
    %718 = vmatprep.subr.mxu0 0.0
    %719 = vmatpush1.msra.mxu0 0.0
    %720 = vmatprep.subr.mxu0 0.0
    %721 = vmatpush1.msra.mxu0 0.0
    %722 = vmatprep.subr.mxu0 0.0
    %723 = vmatpush1.msra.mxu0 0.0
    %724 = vmatprep.subr.mxu0 0.0
    %725 = vmatpush1.msra.mxu0 0.0
    %726 = vmatprep.subr.mxu0 0.0
    %727 = vmatpush1.msra.mxu0 0.0
    %728 = vmatprep.subr.mxu0 0.0
    %729 = vmatpush1.msra.mxu0 0.0
    %730 = vmatprep.subr.mxu0 0.0
    %731 = vmatpush1.msra.mxu0 0.0
    %732 = vmatprep.subr.mxu0 0.0
    %733 = vmatpush1.msra.mxu0 0.0
    %734 = vmatprep.subr.mxu0 0.0
    %735 = vmatpush1.msra.mxu0 0.0
    %736 = vmatprep.subr.mxu0 0.0
    %737 = vmatpush1.msra.mxu0 0.0
    %738 = vmatprep.subr.mxu0 0.0
    %739 = vmatpush1.msra.mxu0 0.0
    %740 = vmatprep.subr.mxu0 0.0
    %741 = vmatpush1.msra.mxu0 0.0
    %742 = vmatprep.subr.mxu0 0.0
    %743 = vmatpush1.msra.mxu0 0.0
    %744 = vmatprep.subr.mxu0 0.0
    %745 = vmatpush1.msra.mxu0 0.0
    %746 = vmatprep.subr.mxu0 0.0
    %747 = vmatpush1.msra.mxu0 0.0
    %748 = vmatprep.subr.mxu0 0.0
    %749 = vmatpush1.msra.mxu0 0.0
    %750 = vmatprep.subr.mxu0 0.0
    %751 = vmatpush1.msra.mxu0 0.0
    %752 = vmatprep.subr.mxu0 0.0
    %753 = vmatpush1.msra.mxu0 0.0
    %754 = vmatprep.subr.mxu0 0.0
    %755 = vmatpush1.msra.mxu0 0.0
    %756 = vmatprep.subr.mxu0 0.0
    %757 = vmatpush1.msra.mxu0 0.0
    %758 = vmatprep.subr.mxu0 0.0
    %759 = vmatpush1.msra.mxu0 0.0
    %760 = vmatprep.subr.mxu0 0.0
    %761 = vmatpush1.msra.mxu0 0.0
    %762 = vmatprep.mubr.f32.mxu0 0.0
    %763 = vmatmul.mubr.f32.gmra.mrb[0].mxu0 %v626
    %v764 = vpop.f32.mrb[0].mxu0
    %v765 = vadd.f32 0.0, %v764
    %v766 = vpop.f32.mrb[0].mxu0
    %767 = vdwg.mxu0
    %v768 = vpack.c.bf16 %v695, %v695
    %v769 = vld [vmem:[%s1 + $0x48] sm:$0xf]
    %v770 = vld [vmem:[%s1 + $0x4c] sm:$0xf]
    %v771 = vpack.c.bf16 %v765, %v765
    %v772 = vld [vmem:[%s1 + $0x50] sm:$0xf]
    %v773 = vld [vmem:[%s1 + $0x54] sm:$0xf]
    %v776 = vunpack.c.l.b16 %v772
    %v777 = vunpack.c.l.b16 %v773
    %v778 = vpack.c.b16 %v777, %v776
    %vm780 = vcmask 130048
    %v782 = vsel %vm780, %v771, 0
    %784 = vmatprep.subr.bf16.mxu0 0
    %785 = vmatpush1.bf16.msra.mxu0 %v778
    %786 = vmatprep.subr.bf16.mxu0 0
    %787 = vmatpush1.bf16.msra.mxu0 0
    %788 = vmatprep.subr.bf16.mxu0 0
    %789 = vmatpush1.bf16.msra.mxu0 0
    %790 = vmatprep.subr.bf16.mxu0 0
    %791 = vmatpush1.bf16.msra.mxu0 0
    %792 = vmatprep.subr.bf16.mxu0 0
    %793 = vmatpush1.bf16.msra.mxu0 0
    %794 = vmatprep.subr.bf16.mxu0 0
    %795 = vmatpush1.bf16.msra.mxu0 0
    %796 = vmatprep.subr.bf16.mxu0 0
    %797 = vmatpush1.bf16.msra.mxu0 0
    %798 = vmatprep.subr.bf16.mxu0 0
    %799 = vmatpush1.bf16.msra.mxu0 0
    %800 = vmatprep.subr.bf16.mxu0 0
    %801 = vmatpush1.bf16.msra.mxu0 0
    %802 = vmatprep.subr.bf16.mxu0 0
    %803 = vmatpush1.bf16.msra.mxu0 0
    %804 = vmatprep.subr.bf16.mxu0 0
    %805 = vmatpush1.bf16.msra.mxu0 0
    %806 = vmatprep.subr.bf16.mxu0 0
    %807 = vmatpush1.bf16.msra.mxu0 0
    %808 = vmatprep.subr.bf16.mxu0 0
    %809 = vmatpush1.bf16.msra.mxu0 0
    %810 = vmatprep.subr.bf16.mxu0 0
    %811 = vmatpush1.bf16.msra.mxu0 0
    %812 = vmatprep.subr.bf16.mxu0 0
    %813 = vmatpush1.bf16.msra.mxu0 0
    %814 = vmatprep.subr.bf16.mxu0 0
    %815 = vmatpush1.bf16.msra.mxu0 0
    %816 = vmatprep.mubr.bf16.mxu0 0
    %817 = vmatmul.mubr.bf16.gmra.mrb[0].mxu0 %v782
    %v818 = vpop.f32.mrb[0].mxu0
    %v819 = vadd.f32 0.0, %v818
    %v820 = vpop.f32.mrb[0].mxu0
    %v821 = vpop.f32.mrb[0].mxu0
    %v822 = vpop.f32.mrb[0].mxu0
    %823 = vdwg.mxu0
    %v826 = vunpack.c.l.b16 %v769
    %v827 = vunpack.c.l.b16 %v770
    %v828 = vpack.c.b16 %v827, %v826
    %v831 = vsel %vm780, %v768, 0
    %833 = vmatprep.subr.bf16.mxu0 0
    %834 = vmatpush1.bf16.msra.mxu0 %v828
    %835 = vmatprep.subr.bf16.mxu0 0
    %836 = vmatpush1.bf16.msra.mxu0 0
    %837 = vmatprep.subr.bf16.mxu0 0
    %838 = vmatpush1.bf16.msra.mxu0 0
    %839 = vmatprep.subr.bf16.mxu0 0
    %840 = vmatpush1.bf16.msra.mxu0 0
    %841 = vmatprep.subr.bf16.mxu0 0
    %842 = vmatpush1.bf16.msra.mxu0 0
    %843 = vmatprep.subr.bf16.mxu0 0
    %844 = vmatpush1.bf16.msra.mxu0 0
    %845 = vmatprep.subr.bf16.mxu0 0
    %846 = vmatpush1.bf16.msra.mxu0 0
    %847 = vmatprep.subr.bf16.mxu0 0
    %848 = vmatpush1.bf16.msra.mxu0 0
    %849 = vmatprep.subr.bf16.mxu0 0
    %850 = vmatpush1.bf16.msra.mxu0 0
    %851 = vmatprep.subr.bf16.mxu0 0
    %852 = vmatpush1.bf16.msra.mxu0 0
    %853 = vmatprep.subr.bf16.mxu0 0
    %854 = vmatpush1.bf16.msra.mxu0 0
    %855 = vmatprep.subr.bf16.mxu0 0
    %856 = vmatpush1.bf16.msra.mxu0 0
    %857 = vmatprep.subr.bf16.mxu0 0
    %858 = vmatpush1.bf16.msra.mxu0 0
    %859 = vmatprep.subr.bf16.mxu0 0
    %860 = vmatpush1.bf16.msra.mxu0 0
    %861 = vmatprep.subr.bf16.mxu0 0
    %862 = vmatpush1.bf16.msra.mxu0 0
    %863 = vmatprep.subr.bf16.mxu0 0
    %864 = vmatpush1.bf16.msra.mxu0 0
    %865 = vmatprep.mubr.bf16.mxu0 0
    %866 = vmatmul.mubr.bf16.gmra.mrb[0].mxu0 %v831
    %v867 = vpop.f32.mrb[0].mxu0
    %v868 = vadd.f32 %v819, %v867
    %v869 = vpop.f32.mrb[0].mxu0
    %v870 = vpop.f32.mrb[0].mxu0
    %v871 = vpop.f32.mrb[0].mxu0
    %872 = vdwg.mxu0
    %v873 = vld [vmem:[%s2 + $0x5] sm:$0x1]
    %v874 = vlaneseq
    %v875 = vshrl.u32 %v874, 7
    %v876 = vsub.s32 0, %v875
    %v877 = vrot.slane %v873, %v876
    %v878 = vadd.f32 %v868, %v877
    %v879 = vmax.f32 %v878, 0.0
    %v880 = vpack.c.bf16 %v879, %v879
    %v881 = vld [vmem:[%s1 + $0x58] sm:$0xf]
    %v882 = vld [vmem:[%s1 + $0x5c] sm:$0xf]
    %v883 = vld [vmem:[%s1 + $0x60] sm:$0xf]
    %v884 = vld [vmem:[%s1 + $0x64] sm:$0xf]
    %v885 = vld [vmem:[%s2 + $0x6] sm:$0x1]
    %v886 = vlaneseq
    %v887 = vshrl.u32 %v886, 7
    %v888 = vsub.s32 0, %v887
    %v889 = vrot.slane %v885, %v888
    %v894 = vunpack.c.l.b16 %v881
    %v895 = vunpack.c.l.b16 %v882
    %v896 = vunpack.c.l.b16 %v883
    %v897 = vunpack.c.l.b16 %v884
    %v898 = vpack.c.b16 %v895, %v894
    %v899 = vpack.c.b16 %v897, %v896
    %v903 = vsel %vm115, %v880, 0
    %905 = vmatprep.subr.bf16.mxu0 0
    %906 = vmatpush1.bf16.msra.mxu0 %v898
    %907 = vmatprep.subr.bf16.mxu0 0
    %908 = vmatpush1.bf16.msra.mxu0 %v899
    %909 = vmatprep.subr.bf16.mxu0 0
    %910 = vmatpush1.bf16.msra.mxu0 0
    %911 = vmatprep.subr.bf16.mxu0 0
    %912 = vmatpush1.bf16.msra.mxu0 0
    %913 = vmatprep.subr.bf16.mxu0 0
    %914 = vmatpush1.bf16.msra.mxu0 0
    %915 = vmatprep.subr.bf16.mxu0 0
    %916 = vmatpush1.bf16.msra.mxu0 0
    %917 = vmatprep.subr.bf16.mxu0 0
    %918 = vmatpush1.bf16.msra.mxu0 0
    %919 = vmatprep.subr.bf16.mxu0 0
    %920 = vmatpush1.bf16.msra.mxu0 0
    %921 = vmatprep.subr.bf16.mxu0 0
    %922 = vmatpush1.bf16.msra.mxu0 0
    %923 = vmatprep.subr.bf16.mxu0 0
    %924 = vmatpush1.bf16.msra.mxu0 0
    %925 = vmatprep.subr.bf16.mxu0 0
    %926 = vmatpush1.bf16.msra.mxu0 0
    %927 = vmatprep.subr.bf16.mxu0 0
    %928 = vmatpush1.bf16.msra.mxu0 0
    %929 = vmatprep.subr.bf16.mxu0 0
    %930 = vmatpush1.bf16.msra.mxu0 0
    %931 = vmatprep.subr.bf16.mxu0 0
    %932 = vmatpush1.bf16.msra.mxu0 0
    %933 = vmatprep.subr.bf16.mxu0 0
    %934 = vmatpush1.bf16.msra.mxu0 0
    %935 = vmatprep.subr.bf16.mxu0 0
    %936 = vmatpush1.bf16.msra.mxu0 0
    %937 = vmatprep.mubr.bf16.mxu0 0
    %938 = vmatmul.mubr.bf16.gmra.mrb[0].mxu0 %v903
    %v939 = vpop.f32.mrb[0].mxu0
    %v940 = vadd.f32 %v889, %v939
    %v941 = vpop.f32.mrb[0].mxu0
    %v942 = vpop.f32.mrb[0].mxu0
    %v943 = vpop.f32.mrb[0].mxu0
    %944 = vdwg.mxu0
    %v945 = vmax.f32 %v940, 0.0
    %v946 = vpack.c.bf16 %v945, %v945
    %v947 = vld [vmem:[%s1 + $0x68] sm:$0xf]
    %v948 = vld [vmem:[%s2 + $0x7] sm:$0x1]
    %v949 = vlaneseq
    %v950 = vshrl.u32 %v949, 7
    %v951 = vsub.s32 0, %v950
    %v952 = vrot.slane %v948, %v951
    %vm953 = vcmask 64512
    %v955 = vsel %vm953, %v946, 0
    %vm957 = vcmask 1043456
    %v959 = vsel %vm957, %v947, 0
    %961 = vmatprep.subr.bf16.mxu0 0
    %962 = vmatpush1.bf16.msra.mxu0 %v959
    %963 = vmatprep.subr.bf16.mxu0 0
    %964 = vmatpush1.bf16.msra.mxu0 0
    %965 = vmatprep.subr.bf16.mxu0 0
    %966 = vmatpush1.bf16.msra.mxu0 0
    %967 = vmatprep.subr.bf16.mxu0 0
    %968 = vmatpush1.bf16.msra.mxu0 0
    %969 = vmatprep.subr.bf16.mxu0 0
    %970 = vmatpush1.bf16.msra.mxu0 0
    %971 = vmatprep.subr.bf16.mxu0 0
    %972 = vmatpush1.bf16.msra.mxu0 0
    %973 = vmatprep.subr.bf16.mxu0 0
    %974 = vmatpush1.bf16.msra.mxu0 0
    %975 = vmatprep.subr.bf16.mxu0 0
    %976 = vmatpush1.bf16.msra.mxu0 0
    %977 = vmatprep.subr.bf16.mxu0 0
    %978 = vmatpush1.bf16.msra.mxu0 0
    %979 = vmatprep.subr.bf16.mxu0 0
    %980 = vmatpush1.bf16.msra.mxu0 0
    %981 = vmatprep.subr.bf16.mxu0 0
    %982 = vmatpush1.bf16.msra.mxu0 0
    %983 = vmatprep.subr.bf16.mxu0 0
    %984 = vmatpush1.bf16.msra.mxu0 0
    %985 = vmatprep.subr.bf16.mxu0 0
    %986 = vmatpush1.bf16.msra.mxu0 0
    %987 = vmatprep.subr.bf16.mxu0 0
    %988 = vmatpush1.bf16.msra.mxu0 0
    %989 = vmatprep.subr.bf16.mxu0 0
    %990 = vmatpush1.bf16.msra.mxu0 0
    %991 = vmatprep.subr.bf16.mxu0 0
    %992 = vmatpush1.bf16.msra.mxu0 0
    %993 = vmatprep.mubr.bf16.mxu0 0
    %994 = vmatmul.mubr.bf16.gmra.mrb[0].mxu0 %v955
    %v995 = vpop.f32.mrb[0].mxu0
    %v996 = vadd.f32 %v952, %v995
    %v997 = vpop.f32.mrb[0].mxu0
    %v998 = vpop.f32.mrb[0].mxu0
    %v999 = vpop.f32.mrb[0].mxu0
    %1000 = vdwg.mxu0
    %1001 = vst.msk [vmem:[#allocation2] sm:$0xff] %vm780, %v996
    // Predicated region
    $region14: #{branch_3_fun.2} parent=1 // pred_check
      _
    $region15: #{branch_3_fun.2} parent=1 // pred_check_branch
      %1003 = sbr.rel (0) target = $region17
    $region16: #{branch_3_fun.2} parent=1 // pred_region
      %s1005 = ssub.s32 128, 128
      %1006 = vsyncadd [#allocation3], %s1005
      %s1008 = sshll.u32 [#allocation2], 4
      %s1009 = int_to_ptr.vmem [resolvable:$true] %s1008
      %1011 = dma.vmem_to_hbm [thread:$0]  %s1009, 128, %s3, [#allocation3]
    $region17: #{branch_3_fun.2} parent=1 // pred_fallthru
      _
    // Predicated region
    $region18: #{branch_3_fun.2} parent=1 // pred_check
      _
    $region19: #{branch_3_fun.2} parent=1 // pred_check_branch
      %1013 = sbr.rel (0) target = $region21
    $region20: #{branch_3_fun.2} parent=1 // pred_region
      %1014 = dma.done [#allocation3], 128
    $region21: #{branch_3_fun.2} parent=1 // pred_fallthru
      _
    %1015 = vsyncpa [#allocation3], 1

// kernel: branch_4_fun.2
$region0: #{branch_4_fun.2}
  #allocation0 [shape = 'u32[]', space=smem, size = 0x4, offset = 0x4, fixed_abs, tag = 'smem constant byte address 0x4 - core index']
  #allocation1 [shape = 'u32[144,128]{1,0:T(1,128)}', space=vmem, size = 0x12000, scoped, tag = 'internal scratch']
  %s0 = inlined_call_operand.vmem [shape: f32[48,3], index: 0, kind: input, shape index: {}]
  %s1 = inlined_call_operand.vmem [shape: bf16[224,32], index: 1, kind: input, shape index: {}]
  %s2 = inlined_call_operand.vmem [shape: f32[8,32], index: 2, kind: input, shape index: {}]
  %s3 = inlined_call_operand.hbm [shape: f32[8,16], index: 3, kind: output, shape index: {}]
  %s4 = sld [smem:[#allocation0]]
  $region22: #{branch_4_fun.2} parent=0
    _
  %s6 = ssub.s32 1, %s4
  %s7 = scalar_select 0, %s6, %s4
  $region1: #{branch_4_fun.2} parent=0
    #allocation2 [shape = 'u8[4096]{0}', space=vmem, size = 0x1000, scoped, tag = 'output window, operand 0, single buffered']
    #allocation3 [shape = 's32[1]{0}', space=sflag, size = 0x4, scoped, tag = 'scoped memory for branch_4_fun.2']
    %8 = vsyncpa [#allocation3], 0
    // Predicated region
    $region2: #{branch_4_fun.2} parent=1 // pred_check
      _
    $region3: #{branch_4_fun.2} parent=1 // pred_check_branch
      %10 = sbr.rel (0) target = $region5
    $region4: #{branch_4_fun.2} parent=1 // pred_region
      _
    $region5: #{branch_4_fun.2} parent=1 // pred_fallthru
      _
    // Predicated region
    $region6: #{branch_4_fun.2} parent=1 // pred_check
      _
    $region7: #{branch_4_fun.2} parent=1 // pred_check_branch
      %12 = sbr.rel (0) target = $region9
    $region8: #{branch_4_fun.2} parent=1 // pred_region
      _
    $region9: #{branch_4_fun.2} parent=1 // pred_fallthru
      _
    // Predicated region
    $region10: #{branch_4_fun.2} parent=1 // pred_check
      _
    $region11: #{branch_4_fun.2} parent=1 // pred_check_branch
      %14 = sbr.rel (0) target = $region13
    $region12: #{branch_4_fun.2} parent=1 // pred_region
      _
    $region13: #{branch_4_fun.2} parent=1 // pred_fallthru
      _
    %v16 = vld [vmem:[%s0] sm:$0xff]
    %v17 = vld [vmem:[%s0 + $0x8] sm:$0xff]
    %v18 = vld [vmem:[%s0 + $0x10] sm:$0xff]
    %v19 = vld [vmem:[%s0 + $0x18] sm:$0xff]
    %v20 = vld [vmem:[%s0 + $0x20] sm:$0xff]
    %v21 = vld [vmem:[%s0 + $0x28] sm:$0xff]
    %v22 = vpack.c.bf16 %v17, %v16
    %v23 = vpack.c.bf16 %v19, %v18
    %v24 = vpack.c.bf16 %v21, %v20
    %v25 = vld [vmem:[%s1] sm:$0x3]
    %v26 = vld [vmem:[%s2] sm:$0x1]
    %v27 = vlaneseq
    %v28 = vshrl.u32 %v27, 7
    %v29 = vsub.s32 0, %v28
    %v30 = vrot.slane %v26, %v29
    %vm31 = vcmask 23552
    %v33 = vsel %vm31, %v22, 0
    %v36 = vsel %vm31, %v23, 0
    %v39 = vsel %vm31, %v24, 0
    %vm41 = vcmask 1040384
    %vm42 = vcmask 1041408
    %v43 = vsel %vm41, 4294967295, 65535
    %v44 = vsel %vm42, %v43, 0
    %v46 = vand.u32 %v25, %v44
    %48 = vmatprep.subr.bf16.mxu0 0
    %49 = vmatpush1.bf16.msra.mxu0 %v46
    %50 = vmatprep.subr.bf16.mxu0 0
    %51 = vmatpush1.bf16.msra.mxu0 0
    %52 = vmatprep.subr.bf16.mxu0 0
    %53 = vmatpush1.bf16.msra.mxu0 0
    %54 = vmatprep.subr.bf16.mxu0 0
    %55 = vmatpush1.bf16.msra.mxu0 0
    %56 = vmatprep.subr.bf16.mxu0 0
    %57 = vmatpush1.bf16.msra.mxu0 0
    %58 = vmatprep.subr.bf16.mxu0 0
    %59 = vmatpush1.bf16.msra.mxu0 0
    %60 = vmatprep.subr.bf16.mxu0 0
    %61 = vmatpush1.bf16.msra.mxu0 0
    %62 = vmatprep.subr.bf16.mxu0 0
    %63 = vmatpush1.bf16.msra.mxu0 0
    %64 = vmatprep.subr.bf16.mxu0 0
    %65 = vmatpush1.bf16.msra.mxu0 0
    %66 = vmatprep.subr.bf16.mxu0 0
    %67 = vmatpush1.bf16.msra.mxu0 0
    %68 = vmatprep.subr.bf16.mxu0 0
    %69 = vmatpush1.bf16.msra.mxu0 0
    %70 = vmatprep.subr.bf16.mxu0 0
    %71 = vmatpush1.bf16.msra.mxu0 0
    %72 = vmatprep.subr.bf16.mxu0 0
    %73 = vmatpush1.bf16.msra.mxu0 0
    %74 = vmatprep.subr.bf16.mxu0 0
    %75 = vmatpush1.bf16.msra.mxu0 0
    %76 = vmatprep.subr.bf16.mxu0 0
    %77 = vmatpush1.bf16.msra.mxu0 0
    %78 = vmatprep.subr.bf16.mxu0 0
    %79 = vmatpush1.bf16.msra.mxu0 0
    %80 = vmatprep.mubr.bf16.mxu0 0
    %81 = vmatmul.mubr.bf16.gmra.mrb[0].mxu0 %v33
    %v82 = vpop.f32.mrb[0].mxu0
    %v83 = vadd.f32 %v30, %v82
    %v84 = vpop.f32.mrb[0].mxu0
    %v85 = vpop.f32.mrb[0].mxu0
    %v86 = vadd.f32 %v30, %v85
    %v87 = vpop.f32.mrb[0].mxu0
    %88 = vmatprep.mubr.bf16.mxu0 0
    %89 = vmatmul.mubr.bf16.gmra.mrb[0].mxu0 %v36
    %v90 = vpop.f32.mrb[0].mxu0
    %v91 = vadd.f32 %v30, %v90
    %v92 = vpop.f32.mrb[0].mxu0
    %v93 = vpop.f32.mrb[0].mxu0
    %v94 = vadd.f32 %v30, %v93
    %v95 = vpop.f32.mrb[0].mxu0
    %96 = vmatprep.mubr.bf16.mxu0 0
    %97 = vmatmul.mubr.bf16.gmra.mrb[0].mxu0 %v39
    %v98 = vpop.f32.mrb[0].mxu0
    %v99 = vadd.f32 %v30, %v98
    %v100 = vpop.f32.mrb[0].mxu0
    %v101 = vpop.f32.mrb[0].mxu0
    %v102 = vadd.f32 %v30, %v101
    %v103 = vpop.f32.mrb[0].mxu0
    %104 = vdwg.mxu0
    %v105 = vmax.f32 %v83, 0.0
    %v106 = vmax.f32 %v86, 0.0
    %v107 = vmax.f32 %v91, 0.0
    %v108 = vmax.f32 %v94, 0.0
    %v109 = vmax.f32 %v99, 0.0
    %v110 = vmax.f32 %v102, 0.0
    %v111 = vpack.c.bf16 %v106, %v105
    %v112 = vpack.c.bf16 %v108, %v107
    %v113 = vpack.c.bf16 %v110, %v109
    %v114 = vld [vmem:[%s1 + $0x8] sm:$0xf]
    %v115 = vld [vmem:[%s1 + $0xc] sm:$0xf]
    %v116 = vld [vmem:[%s1 + $0x10] sm:$0xf]
    %v117 = vld [vmem:[%s2 + $0x1] sm:$0x1]
    %v118 = vlaneseq
    %v119 = vshrl.u32 %v118, 7
    %v120 = vsub.s32 0, %v119
    %v121 = vrot.slane %v117, %v120
    %v125 = vunpack.c.l.b16 %v114
    %v126 = vunpack.c.l.b16 %v115
    %v127 = vunpack.c.l.b16 %v116
    %v128 = vpack.c.b16 %v126, %v125
    %v129 = vpack.c.b16 %v127, %v127
    %vm131 = vcmask 195584
    %v133 = vsel %vm131, %v111, 0
    %v136 = vsel %vm131, %v112, 0
    %v139 = vsel %vm131, %v113, 0
    %vm141 = vcmask 1043456
    %v143 = vsel %vm141, %v129, 0
    %145 = vmatprep.subr.bf16.mxu0 0
    %146 = vmatpush1.bf16.msra.mxu0 %v128
    %147 = vmatprep.subr.bf16.mxu0 0
    %148 = vmatpush1.bf16.msra.mxu0 %v143
    %149 = vmatprep.subr.bf16.mxu0 0
    %150 = vmatpush1.bf16.msra.mxu0 0
    %151 = vmatprep.subr.bf16.mxu0 0
    %152 = vmatpush1.bf16.msra.mxu0 0
    %153 = vmatprep.subr.bf16.mxu0 0
    %154 = vmatpush1.bf16.msra.mxu0 0
    %155 = vmatprep.subr.bf16.mxu0 0
    %156 = vmatpush1.bf16.msra.mxu0 0
    %157 = vmatprep.subr.bf16.mxu0 0
    %158 = vmatpush1.bf16.msra.mxu0 0
    %159 = vmatprep.subr.bf16.mxu0 0
    %160 = vmatpush1.bf16.msra.mxu0 0
    %161 = vmatprep.subr.bf16.mxu0 0
    %162 = vmatpush1.bf16.msra.mxu0 0
    %163 = vmatprep.subr.bf16.mxu0 0
    %164 = vmatpush1.bf16.msra.mxu0 0
    %165 = vmatprep.subr.bf16.mxu0 0
    %166 = vmatpush1.bf16.msra.mxu0 0
    %167 = vmatprep.subr.bf16.mxu0 0
    %168 = vmatpush1.bf16.msra.mxu0 0
    %169 = vmatprep.subr.bf16.mxu0 0
    %170 = vmatpush1.bf16.msra.mxu0 0
    %171 = vmatprep.subr.bf16.mxu0 0
    %172 = vmatpush1.bf16.msra.mxu0 0
    %173 = vmatprep.subr.bf16.mxu0 0
    %174 = vmatpush1.bf16.msra.mxu0 0
    %175 = vmatprep.subr.bf16.mxu0 0
    %176 = vmatpush1.bf16.msra.mxu0 0
    %177 = vmatprep.mubr.bf16.mxu0 0
    %178 = vmatmul.mubr.bf16.gmra.mrb[0].mxu0 %v133
    %v179 = vpop.f32.mrb[0].mxu0
    %v180 = vadd.f32 %v121, %v179
    %v181 = vpop.f32.mrb[0].mxu0
    %v182 = vpop.f32.mrb[0].mxu0
    %v183 = vadd.f32 %v121, %v182
    %v184 = vpop.f32.mrb[0].mxu0
    %185 = vmatprep.mubr.bf16.mxu0 0
    %186 = vmatmul.mubr.bf16.gmra.mrb[0].mxu0 %v136
    %v187 = vpop.f32.mrb[0].mxu0
    %v188 = vadd.f32 %v121, %v187
    %v189 = vpop.f32.mrb[0].mxu0
    %v190 = vpop.f32.mrb[0].mxu0
    %v191 = vadd.f32 %v121, %v190
    %v192 = vpop.f32.mrb[0].mxu0
    %193 = vmatprep.mubr.bf16.mxu0 0
    %194 = vmatmul.mubr.bf16.gmra.mrb[0].mxu0 %v139
    %v195 = vpop.f32.mrb[0].mxu0
    %v196 = vadd.f32 %v121, %v195
    %v197 = vpop.f32.mrb[0].mxu0
    %v198 = vpop.f32.mrb[0].mxu0
    %v199 = vadd.f32 %v121, %v198
    %v200 = vpop.f32.mrb[0].mxu0
    %201 = vdwg.mxu0
    %v202 = vmax.f32 %v180, 0.0
    %v203 = vmax.f32 %v183, 0.0
    %v204 = vmax.f32 %v188, 0.0
    %v205 = vmax.f32 %v191, 0.0
    %v206 = vmax.f32 %v196, 0.0
    %v207 = vmax.f32 %v199, 0.0
    %v208 = vpack.c.bf16 %v203, %v202
    %v209 = vpack.c.bf16 %v205, %v204
    %v210 = vpack.c.bf16 %v207, %v206
    %v211 = vld [vmem:[%s1 + $0x18] sm:$0xf]
    %v212 = vld [vmem:[%s1 + $0x1c] sm:$0xf]
    %v213 = vld [vmem:[%s1 + $0x20] sm:$0xf]
    %v214 = vld [vmem:[%s2 + $0x2] sm:$0x1]
    %v215 = vlaneseq
    %v216 = vshrl.u32 %v215, 7
    %v217 = vsub.s32 0, %v216
    %v218 = vrot.slane %v214, %v217
    %v222 = vunpack.c.l.b16 %v211
    %v223 = vunpack.c.l.b16 %v212
    %v224 = vunpack.c.l.b16 %v213
    %v225 = vpack.c.b16 %v223, %v222
    %v226 = vpack.c.b16 %v224, %v224
    %v229 = vsel %vm131, %v208, 0
    %v232 = vsel %vm131, %v209, 0
    %v235 = vsel %vm131, %v210, 0
    %v238 = vsel %vm141, %v226, 0
    %240 = vmatprep.subr.bf16.mxu0 0
    %241 = vmatpush1.bf16.msra.mxu0 %v225
    %242 = vmatprep.subr.bf16.mxu0 0
    %243 = vmatpush1.bf16.msra.mxu0 %v238
    %244 = vmatprep.subr.bf16.mxu0 0
    %245 = vmatpush1.bf16.msra.mxu0 0
    %246 = vmatprep.subr.bf16.mxu0 0
    %247 = vmatpush1.bf16.msra.mxu0 0
    %248 = vmatprep.subr.bf16.mxu0 0
    %249 = vmatpush1.bf16.msra.mxu0 0
    %250 = vmatprep.subr.bf16.mxu0 0
    %251 = vmatpush1.bf16.msra.mxu0 0
    %252 = vmatprep.subr.bf16.mxu0 0
    %253 = vmatpush1.bf16.msra.mxu0 0
    %254 = vmatprep.subr.bf16.mxu0 0
    %255 = vmatpush1.bf16.msra.mxu0 0
    %256 = vmatprep.subr.bf16.mxu0 0
    %257 = vmatpush1.bf16.msra.mxu0 0
    %258 = vmatprep.subr.bf16.mxu0 0
    %259 = vmatpush1.bf16.msra.mxu0 0
    %260 = vmatprep.subr.bf16.mxu0 0
    %261 = vmatpush1.bf16.msra.mxu0 0
    %262 = vmatprep.subr.bf16.mxu0 0
    %263 = vmatpush1.bf16.msra.mxu0 0
    %264 = vmatprep.subr.bf16.mxu0 0
    %265 = vmatpush1.bf16.msra.mxu0 0
    %266 = vmatprep.subr.bf16.mxu0 0
    %267 = vmatpush1.bf16.msra.mxu0 0
    %268 = vmatprep.subr.bf16.mxu0 0
    %269 = vmatpush1.bf16.msra.mxu0 0
    %270 = vmatprep.subr.bf16.mxu0 0
    %271 = vmatpush1.bf16.msra.mxu0 0
    %272 = vmatprep.mubr.bf16.mxu0 0
    %273 = vmatmul.mubr.bf16.gmra.mrb[0].mxu0 %v229
    %v274 = vpop.f32.mrb[0].mxu0
    %v275 = vadd.f32 %v218, %v274
    %v276 = vpop.f32.mrb[0].mxu0
    %v277 = vpop.f32.mrb[0].mxu0
    %v278 = vadd.f32 %v218, %v277
    %v279 = vpop.f32.mrb[0].mxu0
    %280 = vmatprep.mubr.bf16.mxu0 0
    %281 = vmatmul.mubr.bf16.gmra.mrb[0].mxu0 %v232
    %v282 = vpop.f32.mrb[0].mxu0
    %v283 = vadd.f32 %v218, %v282
    %v284 = vpop.f32.mrb[0].mxu0
    %v285 = vpop.f32.mrb[0].mxu0
    %v286 = vadd.f32 %v218, %v285
    %v287 = vpop.f32.mrb[0].mxu0
    %288 = vmatprep.mubr.bf16.mxu0 0
    %289 = vmatmul.mubr.bf16.gmra.mrb[0].mxu0 %v235
    %v290 = vpop.f32.mrb[0].mxu0
    %v291 = vadd.f32 %v218, %v290
    %v292 = vpop.f32.mrb[0].mxu0
    %v293 = vpop.f32.mrb[0].mxu0
    %v294 = vadd.f32 %v218, %v293
    %v295 = vpop.f32.mrb[0].mxu0
    %296 = vdwg.mxu0
    %v297 = vlaneseq
    %v298 = vshrl.u32 %v297, 7
    %v299 = vadd.s32 %v298, 8
    %v300 = vadd.s32 %v298, 16
    %v301 = vadd.s32 %v298, 24
    %v302 = vadd.s32 %v298, 32
    %v303 = vadd.s32 %v298, 40
    %v304 = vcvt.s32.f32 %v298
    %v305 = vcvt.s32.f32 %v299
    %v306 = vcvt.s32.f32 %v300
    %v307 = vcvt.s32.f32 %v301
    %v308 = vcvt.s32.f32 %v302
    %v309 = vcvt.s32.f32 %v303
    %v310 = vlaneseq
    %v311 = vand.u32 %v310, 127
    %v312 = vcvt.s32.f32 %v311
    %v313 = vmul.f32 %v304, 0.25
    %v314 = vmul.f32 %v305, 0.25
    %v315 = vmul.f32 %v306, 0.25
    %v316 = vmul.f32 %v307, 0.25
    %v317 = vmul.f32 %v308, 0.25
    %v318 = vmul.f32 %v309, 0.25
    %v319 = vfloor.f32 %v313
    %v320 = vfloor.f32 %v314
    %v321 = vfloor.f32 %v315
    %v322 = vfloor.f32 %v316
    %v323 = vfloor.f32 %v317
    %v324 = vfloor.f32 %v318
    %v325 = vmul.f32 %v312, 0.25
    %v326 = vfloor.f32 %v325
    %vm327 = vcmp.eq.f32.partialorder %v319, %v326
    %vm328 = vcmp.eq.f32.partialorder %v320, %v326
    %vm329 = vcmp.eq.f32.partialorder %v321, %v326
    %vm330 = vcmp.eq.f32.partialorder %v322, %v326
    %vm331 = vcmp.eq.f32.partialorder %v323, %v326
    %vm332 = vcmp.eq.f32.partialorder %v324, %v326
    %v333 = vsel %vm327, 1, 0
    %v334 = vsel %vm328, 1, 0
    %v335 = vsel %vm329, 1, 0
    %v336 = vsel %vm330, 1, 0
    %v337 = vsel %vm331, 1, 0
    %v338 = vsel %vm332, 1, 0
    %v339 = vcvt.s32.f32 %v333
    %v340 = vcvt.s32.f32 %v334
    %v341 = vcvt.s32.f32 %v335
    %v342 = vcvt.s32.f32 %v336
    %v343 = vcvt.s32.f32 %v337
    %v344 = vcvt.s32.f32 %v338
    %v345 = vpack.c.bf16 %v278, %v275
    %v346 = vpack.c.bf16 %v286, %v283
    %v347 = vpack.c.bf16 %v294, %v291
    %vm348 = vcmask 261120
    %v350 = vsel %vm348, %v345, 0
    %v353 = vsel %vm348, %v346, 0
    %v356 = vsel %vm348, %v347, 0
    %358 = vmatprep.subr.bf16.mxu0 0
    %359 = vmatpush1.bf16.xpose.msra.mxu0 %v350
    %360 = vmatprep.subr.bf16.mxu0 0
    %361 = vmatpush1.bf16.xpose.msra.mxu0 %v353
    %362 = vmatprep.subr.bf16.mxu0 0
    %363 = vmatpush1.bf16.xpose.msra.mxu0 %v356
    %364 = vmatprep.subr.bf16.mxu0 0
    %365 = vmatpush1.bf16.xpose.msra.mxu0 0
    %366 = vmatprep.subr.bf16.mxu0 0
    %367 = vmatpush1.bf16.xpose.msra.mxu0 0
    %368 = vmatprep.subr.bf16.mxu0 0
    %369 = vmatpush1.bf16.xpose.msra.mxu0 0
    %370 = vmatprep.subr.bf16.mxu0 0
    %371 = vmatpush1.bf16.xpose.msra.mxu0 0
    %372 = vmatprep.subr.bf16.mxu0 0
    %373 = vmatpush1.bf16.xpose.msra.mxu0 0
    %374 = vmatprep.subr.bf16.mxu0 0
    %375 = vmatpush1.bf16.xpose.msra.mxu0 0
    %376 = vmatprep.subr.bf16.mxu0 0
    %377 = vmatpush1.bf16.xpose.msra.mxu0 0
    %378 = vmatprep.subr.bf16.mxu0 0
    %379 = vmatpush1.bf16.xpose.msra.mxu0 0
    %380 = vmatprep.subr.bf16.mxu0 0
    %381 = vmatpush1.bf16.xpose.msra.mxu0 0
    %382 = vmatprep.subr.bf16.mxu0 0
    %383 = vmatpush1.bf16.xpose.msra.mxu0 0
    %384 = vmatprep.subr.bf16.mxu0 0
    %385 = vmatpush1.bf16.xpose.msra.mxu0 0
    %386 = vmatprep.subr.bf16.mxu0 0
    %387 = vmatpush1.bf16.xpose.msra.mxu0 0
    %388 = vmatprep.subr.bf16.mxu0 0
    %389 = vmatpush1.bf16.xpose.msra.mxu0 0
    %390 = vmatprep.mubr.bf16.mxu0 0
    %391 = vmatmul.mubr.bf16.gmra.mrb[0].mxu0 %v350
    %v392 = vpop.f32.mrb[0].mxu0
    %v393 = vadd.f32 0.0, %v392
    %v394 = vpop.f32.mrb[0].mxu0
    %v395 = vpop.f32.mrb[0].mxu0
    %v396 = vadd.f32 0.0, %v395
    %v397 = vpop.f32.mrb[0].mxu0
    %398 = vmatprep.mubr.bf16.mxu0 0
    %399 = vmatmul.mubr.bf16.gmra.mrb[0].mxu0 %v353
    %v400 = vpop.f32.mrb[0].mxu0
    %v401 = vadd.f32 0.0, %v400
    %v402 = vpop.f32.mrb[0].mxu0
    %v403 = vpop.f32.mrb[0].mxu0
    %v404 = vadd.f32 0.0, %v403
    %v405 = vpop.f32.mrb[0].mxu0
    %406 = vmatprep.mubr.bf16.mxu0 0
    %407 = vmatmul.mubr.bf16.gmra.mrb[0].mxu0 %v356
    %v408 = vpop.f32.mrb[0].mxu0
    %v409 = vadd.f32 0.0, %v408
    %v410 = vpop.f32.mrb[0].mxu0
    %v411 = vpop.f32.mrb[0].mxu0
    %v412 = vadd.f32 0.0, %v411
    %v413 = vpop.f32.mrb[0].mxu0
    %414 = vdwg.mxu0
    %v415 = vmax.f32 %v393, 0.0
    %v416 = vmax.f32 %v396, 0.0
    %v417 = vmax.f32 %v401, 0.0
    %v418 = vmax.f32 %v404, 0.0
    %v419 = vmax.f32 %v409, 0.0
    %v420 = vmax.f32 %v412, 0.0
    %v421 = vmul.f32 %v415, %v339
    %v422 = vmul.f32 %v416, %v340
    %v423 = vmul.f32 %v417, %v341
    %v424 = vmul.f32 %v418, %v342
    %v425 = vmul.f32 %v419, %v343
    %v426 = vmul.f32 %v420, %v344
    %vm427 = vcmask 392192
    %v428 = vsel %vm427, %v421, -inf
    %429 = vmax.xlane.f32.xlu0 %v428
    %v430 = vpop.xlane.xlu0 %429
    %v431 = vsel %vm427, %v422, -inf
    %432 = vmax.xlane.f32.xlu0 %v431
    %v433 = vpop.xlane.xlu0 %432
    %v434 = vsel %vm427, %v423, -inf
    %435 = vmax.xlane.f32.xlu0 %v434
    %v436 = vpop.xlane.xlu0 %435
    %v437 = vsel %vm427, %v424, -inf
    %438 = vmax.xlane.f32.xlu0 %v437
    %v439 = vpop.xlane.xlu0 %438
    %v440 = vsel %vm427, %v425, -inf
    %441 = vmax.xlane.f32.xlu0 %v440
    %v442 = vpop.xlane.xlu0 %441
    %v443 = vsel %vm427, %v426, -inf
    %444 = vmax.xlane.f32.xlu0 %v443
    %v445 = vpop.xlane.xlu0 %444
    %v446 = vsub.f32 %v421, %v430
    %v447 = vsub.f32 %v422, %v433
    %v448 = vsub.f32 %v423, %v436
    %v449 = vsub.f32 %v424, %v439
    %v450 = vsub.f32 %v425, %v442
    %v451 = vsub.f32 %v426, %v445
    %v452 = vmul.f32 %v446, 1.442695
    %v453 = vpow.pop %v452
    %v454 = vmul.f32 %v447, 1.442695
    %v455 = vpow.pop %v454
    %v456 = vmul.f32 %v448, 1.442695
    %v457 = vpow.pop %v456
    %v458 = vmul.f32 %v449, 1.442695
    %v459 = vpow.pop %v458
    %v460 = vmul.f32 %v450, 1.442695
    %v461 = vpow.pop %v460
    %v462 = vmul.f32 %v451, 1.442695
    %v463 = vpow.pop %v462
    %v464 = vmul.f32 %v453, %v339
    %v465 = vmul.f32 %v455, %v340
    %v466 = vmul.f32 %v457, %v341
    %v467 = vmul.f32 %v459, %v342
    %v468 = vmul.f32 %v461, %v343
    %v469 = vmul.f32 %v463, %v344
    %v470 = vsel %vm427, %v464, 0.0
    %471 = vadd.xlane.f32.xlu0 %v470
    %v472 = vpop.xlane.xlu0 %471
    %v473 = vsel %vm427, %v465, 0.0
    %474 = vadd.xlane.f32.xlu0 %v473
    %v475 = vpop.xlane.xlu0 %474
    %v476 = vsel %vm427, %v466, 0.0
    %477 = vadd.xlane.f32.xlu0 %v476
    %v478 = vpop.xlane.xlu0 %477
    %v479 = vsel %vm427, %v467, 0.0
    %480 = vadd.xlane.f32.xlu0 %v479
    %v481 = vpop.xlane.xlu0 %480
    %v482 = vsel %vm427, %v468, 0.0
    %483 = vadd.xlane.f32.xlu0 %v482
    %v484 = vpop.xlane.xlu0 %483
    %v485 = vsel %vm427, %v469, 0.0
    %486 = vadd.xlane.f32.xlu0 %v485
    %v487 = vpop.xlane.xlu0 %486
    %v488 = vrcp.pop %v472
    %v489 = vrcp.pop %v475
    %v490 = vrcp.pop %v478
    %v491 = vrcp.pop %v481
    %v492 = vrcp.pop %v484
    %v493 = vrcp.pop %v487
    %v494 = vmul.f32 %v464, %v488
    %v495 = vmul.f32 %v465, %v489
    %v496 = vmul.f32 %v466, %v490
    %v497 = vmul.f32 %v467, %v491
    %v498 = vmul.f32 %v468, %v492
    %v499 = vmul.f32 %v469, %v493
    %v500 = vpack.c.bf16 %v495, %v494
    %v501 = vpack.c.bf16 %v497, %v496
    %v502 = vpack.c.bf16 %v499, %v498
    %v504 = vsel %vm427, %v500, 0
    %v507 = vsel %vm427, %v501, 0
    %v510 = vsel %vm427, %v502, 0
    %512 = vmatprep.subr.bf16.mxu0 0
    %513 = vmatpush1.bf16.msra.mxu0 %v345
    %514 = vmatprep.subr.bf16.mxu0 0
    %515 = vmatpush1.bf16.msra.mxu0 %v346
    %516 = vmatprep.subr.bf16.mxu0 0
    %517 = vmatpush1.bf16.msra.mxu0 %v347
    %518 = vmatprep.subr.bf16.mxu0 0
    %519 = vmatpush1.bf16.msra.mxu0 0
    %520 = vmatprep.subr.bf16.mxu0 0
    %521 = vmatpush1.bf16.msra.mxu0 0
    %522 = vmatprep.subr.bf16.mxu0 0
    %523 = vmatpush1.bf16.msra.mxu0 0
    %524 = vmatprep.subr.bf16.mxu0 0
    %525 = vmatpush1.bf16.msra.mxu0 0
    %526 = vmatprep.subr.bf16.mxu0 0
    %527 = vmatpush1.bf16.msra.mxu0 0
    %528 = vmatprep.subr.bf16.mxu0 0
    %529 = vmatpush1.bf16.msra.mxu0 0
    %530 = vmatprep.subr.bf16.mxu0 0
    %531 = vmatpush1.bf16.msra.mxu0 0
    %532 = vmatprep.subr.bf16.mxu0 0
    %533 = vmatpush1.bf16.msra.mxu0 0
    %534 = vmatprep.subr.bf16.mxu0 0
    %535 = vmatpush1.bf16.msra.mxu0 0
    %536 = vmatprep.subr.bf16.mxu0 0
    %537 = vmatpush1.bf16.msra.mxu0 0
    %538 = vmatprep.subr.bf16.mxu0 0
    %539 = vmatpush1.bf16.msra.mxu0 0
    %540 = vmatprep.subr.bf16.mxu0 0
    %541 = vmatpush1.bf16.msra.mxu0 0
    %542 = vmatprep.subr.bf16.mxu0 0
    %543 = vmatpush1.bf16.msra.mxu0 0
    %544 = vmatprep.mubr.bf16.mxu0 0
    %545 = vmatmul.mubr.bf16.gmra.mrb[0].mxu0 %v504
    %v546 = vpop.f32.mrb[0].mxu0
    %v547 = vadd.f32 0.0, %v546
    %v548 = vpop.f32.mrb[0].mxu0
    %v549 = vpop.f32.mrb[0].mxu0
    %v550 = vadd.f32 0.0, %v549
    %v551 = vpop.f32.mrb[0].mxu0
    %552 = vmatprep.mubr.bf16.mxu0 0
    %553 = vmatmul.mubr.bf16.gmra.mrb[0].mxu0 %v507
    %v554 = vpop.f32.mrb[0].mxu0
    %v555 = vadd.f32 0.0, %v554
    %v556 = vpop.f32.mrb[0].mxu0
    %v557 = vpop.f32.mrb[0].mxu0
    %v558 = vadd.f32 0.0, %v557
    %v559 = vpop.f32.mrb[0].mxu0
    %560 = vmatprep.mubr.bf16.mxu0 0
    %561 = vmatmul.mubr.bf16.gmra.mrb[0].mxu0 %v510
    %v562 = vpop.f32.mrb[0].mxu0
    %v563 = vadd.f32 0.0, %v562
    %v564 = vpop.f32.mrb[0].mxu0
    %v565 = vpop.f32.mrb[0].mxu0
    %v566 = vadd.f32 0.0, %v565
    %v567 = vpop.f32.mrb[0].mxu0
    %568 = vdwg.mxu0
    %v569 = vpack.c.bf16 %v550, %v547
    %v570 = vpack.c.bf16 %v558, %v555
    %v571 = vpack.c.bf16 %v566, %v563
    %v572 = vld [vmem:[%s1 + $0x28] sm:$0xf]
    %v573 = vld [vmem:[%s1 + $0x2c] sm:$0xf]
    %v574 = vld [vmem:[%s1 + $0x30] sm:$0xf]
    %v575 = vld [vmem:[%s1 + $0x34] sm:$0xf]
    %v576 = vld [vmem:[%s2 + $0x3] sm:$0x1]
    %v577 = vlaneseq
    %v578 = vshrl.u32 %v577, 7
    %v579 = vsub.s32 0, %v578
    %v580 = vrot.slane %v576, %v579
    %v585 = vunpack.c.l.b16 %v572
    %v586 = vunpack.c.l.b16 %v573
    %v587 = vunpack.c.l.b16 %v574
    %v588 = vunpack.c.l.b16 %v575
    %v589 = vpack.c.b16 %v586, %v585
    %v590 = vpack.c.b16 %v588, %v587
    %v594 = vsel %vm348, %v569, 0
    %v597 = vsel %vm348, %v570, 0
    %v600 = vsel %vm348, %v571, 0
    %602 = vmatprep.subr.bf16.mxu0 0
    %603 = vmatpush1.bf16.msra.mxu0 %v589
    %604 = vmatprep.subr.bf16.mxu0 0
    %605 = vmatpush1.bf16.msra.mxu0 %v590
    %606 = vmatprep.subr.bf16.mxu0 0
    %607 = vmatpush1.bf16.msra.mxu0 0
    %608 = vmatprep.subr.bf16.mxu0 0
    %609 = vmatpush1.bf16.msra.mxu0 0
    %610 = vmatprep.subr.bf16.mxu0 0
    %611 = vmatpush1.bf16.msra.mxu0 0
    %612 = vmatprep.subr.bf16.mxu0 0
    %613 = vmatpush1.bf16.msra.mxu0 0
    %614 = vmatprep.subr.bf16.mxu0 0
    %615 = vmatpush1.bf16.msra.mxu0 0
    %616 = vmatprep.subr.bf16.mxu0 0
    %617 = vmatpush1.bf16.msra.mxu0 0
    %618 = vmatprep.subr.bf16.mxu0 0
    %619 = vmatpush1.bf16.msra.mxu0 0
    %620 = vmatprep.subr.bf16.mxu0 0
    %621 = vmatpush1.bf16.msra.mxu0 0
    %622 = vmatprep.subr.bf16.mxu0 0
    %623 = vmatpush1.bf16.msra.mxu0 0
    %624 = vmatprep.subr.bf16.mxu0 0
    %625 = vmatpush1.bf16.msra.mxu0 0
    %626 = vmatprep.subr.bf16.mxu0 0
    %627 = vmatpush1.bf16.msra.mxu0 0
    %628 = vmatprep.subr.bf16.mxu0 0
    %629 = vmatpush1.bf16.msra.mxu0 0
    %630 = vmatprep.subr.bf16.mxu0 0
    %631 = vmatpush1.bf16.msra.mxu0 0
    %632 = vmatprep.subr.bf16.mxu0 0
    %633 = vmatpush1.bf16.msra.mxu0 0
    %634 = vmatprep.mubr.bf16.mxu0 0
    %635 = vmatmul.mubr.bf16.gmra.mrb[0].mxu0 %v594
    %v636 = vpop.f32.mrb[0].mxu0
    %v637 = vadd.f32 %v580, %v636
    %v638 = vpop.f32.mrb[0].mxu0
    %v639 = vpop.f32.mrb[0].mxu0
    %v640 = vadd.f32 %v580, %v639
    %v641 = vpop.f32.mrb[0].mxu0
    %642 = vmatprep.mubr.bf16.mxu0 0
    %643 = vmatmul.mubr.bf16.gmra.mrb[0].mxu0 %v597
    %v644 = vpop.f32.mrb[0].mxu0
    %v645 = vadd.f32 %v580, %v644
    %v646 = vpop.f32.mrb[0].mxu0
    %v647 = vpop.f32.mrb[0].mxu0
    %v648 = vadd.f32 %v580, %v647
    %v649 = vpop.f32.mrb[0].mxu0
    %650 = vmatprep.mubr.bf16.mxu0 0
    %651 = vmatmul.mubr.bf16.gmra.mrb[0].mxu0 %v600
    %v652 = vpop.f32.mrb[0].mxu0
    %v653 = vadd.f32 %v580, %v652
    %v654 = vpop.f32.mrb[0].mxu0
    %v655 = vpop.f32.mrb[0].mxu0
    %v656 = vadd.f32 %v580, %v655
    %v657 = vpop.f32.mrb[0].mxu0
    %658 = vdwg.mxu0
    %v659 = vmax.f32 %v637, 0.0
    %v660 = vmax.f32 %v640, 0.0
    %v661 = vmax.f32 %v645, 0.0
    %v662 = vmax.f32 %v648, 0.0
    %v663 = vmax.f32 %v653, 0.0
    %v664 = vmax.f32 %v656, 0.0
    %v665 = vld [vmem:[%s1 + $0x38] sm:$0xf]
    %v666 = vld [vmem:[%s1 + $0x3c] sm:$0xf]
    %v667 = vld [vmem:[%s1 + $0x40] sm:$0xf]
    %v668 = vld [vmem:[%s1 + $0x44] sm:$0xf]
    %v669 = vld [vmem:[%s2 + $0x4] sm:$0x1]
    %v670 = vlaneseq
    %v671 = vshrl.u32 %v670, 7
    %v672 = vsub.s32 0, %v671
    %v673 = vrot.slane %v669, %v672
    %v678 = vunpack.c.l.b16 %v665
    %v679 = vunpack.c.l.b16 %v666
    %v680 = vunpack.c.l.b16 %v667
    %v681 = vunpack.c.l.b16 %v668
    %v682 = vpack.c.b16 %v679, %v678
    %v683 = vpack.c.b16 %v681, %v680
    %686 = vmatprep.subr.bf16.mxu0 0
    %687 = vmatpush1.bf16.msra.mxu0 %v682
    %688 = vmatprep.subr.bf16.mxu0 0
    %689 = vmatpush1.bf16.msra.mxu0 %v683
    %690 = vmatprep.subr.bf16.mxu0 0
    %691 = vmatpush1.bf16.msra.mxu0 0
    %692 = vmatprep.subr.bf16.mxu0 0
    %693 = vmatpush1.bf16.msra.mxu0 0
    %694 = vmatprep.subr.bf16.mxu0 0
    %695 = vmatpush1.bf16.msra.mxu0 0
    %696 = vmatprep.subr.bf16.mxu0 0
    %697 = vmatpush1.bf16.msra.mxu0 0
    %698 = vmatprep.subr.bf16.mxu0 0
    %699 = vmatpush1.bf16.msra.mxu0 0
    %700 = vmatprep.subr.bf16.mxu0 0
    %701 = vmatpush1.bf16.msra.mxu0 0
    %702 = vmatprep.subr.bf16.mxu0 0
    %703 = vmatpush1.bf16.msra.mxu0 0
    %704 = vmatprep.subr.bf16.mxu0 0
    %705 = vmatpush1.bf16.msra.mxu0 0
    %706 = vmatprep.subr.bf16.mxu0 0
    %707 = vmatpush1.bf16.msra.mxu0 0
    %708 = vmatprep.subr.bf16.mxu0 0
    %709 = vmatpush1.bf16.msra.mxu0 0
    %710 = vmatprep.subr.bf16.mxu0 0
    %711 = vmatpush1.bf16.msra.mxu0 0
    %712 = vmatprep.subr.bf16.mxu0 0
    %713 = vmatpush1.bf16.msra.mxu0 0
    %714 = vmatprep.subr.bf16.mxu0 0
    %715 = vmatpush1.bf16.msra.mxu0 0
    %716 = vmatprep.subr.bf16.mxu0 0
    %717 = vmatpush1.bf16.msra.mxu0 0
    %718 = vmatprep.mubr.bf16.mxu0 0
    %719 = vmatmul.mubr.bf16.gmra.mrb[0].mxu0 %v594
    %v720 = vpop.f32.mrb[0].mxu0
    %v721 = vadd.f32 %v673, %v720
    %v722 = vpop.f32.mrb[0].mxu0
    %v723 = vpop.f32.mrb[0].mxu0
    %v724 = vadd.f32 %v673, %v723
    %v725 = vpop.f32.mrb[0].mxu0
    %726 = vmatprep.mubr.bf16.mxu0 0
    %727 = vmatmul.mubr.bf16.gmra.mrb[0].mxu0 %v597
    %v728 = vpop.f32.mrb[0].mxu0
    %v729 = vadd.f32 %v673, %v728
    %v730 = vpop.f32.mrb[0].mxu0
    %v731 = vpop.f32.mrb[0].mxu0
    %v732 = vadd.f32 %v673, %v731
    %v733 = vpop.f32.mrb[0].mxu0
    %734 = vmatprep.mubr.bf16.mxu0 0
    %735 = vmatmul.mubr.bf16.gmra.mrb[0].mxu0 %v600
    %v736 = vpop.f32.mrb[0].mxu0
    %v737 = vadd.f32 %v673, %v736
    %v738 = vpop.f32.mrb[0].mxu0
    %v739 = vpop.f32.mrb[0].mxu0
    %v740 = vadd.f32 %v673, %v739
    %v741 = vpop.f32.mrb[0].mxu0
    %742 = vdwg.mxu0
    %v743 = vmax.f32 %v721, 0.0
    %v744 = vmax.f32 %v724, 0.0
    %v745 = vmax.f32 %v729, 0.0
    %v746 = vmax.f32 %v732, 0.0
    %v747 = vmax.f32 %v737, 0.0
    %v748 = vmax.f32 %v740, 0.0
    %v749 = vmul.f32 %v319, 4.0
    %v750 = vsub.f32 %v304, %v749
    %v751 = vmul.f32 %v326, 4.0
    %v752 = vsub.f32 %v312, %v751
    %v753 = vmul.f32 %v319, 24.0
    %v754 = vsub.f32 %v312, %v753
    %vm755 = vcmp.eq.f32.partialorder %v750, %v752
    %vm756 = vcmp.ge.f32.partialorder %v754, 0.0
    %vm757 = vmand %vm755, %vm756
    %vm758 = vcmp.lt.f32.partialorder %v754, 24.0
    %vm759 = vmand %vm757, %vm758
    %v760 = vsel %vm759, 0.16666667, 0.0
    %v762 = vsel %vm427, %v760, 0
    %764 = vmatprep.subr.mxu0 0.0
    %765 = vmatpush1.msra.mxu0 %v659
    %766 = vmatprep.subr.mxu0 0.0
    %767 = vmatpush1.msra.mxu0 %v660
    %768 = vmatprep.subr.mxu0 0.0
    %769 = vmatpush1.msra.mxu0 %v661
    %770 = vmatprep.subr.mxu0 0.0
    %771 = vmatpush1.msra.mxu0 %v662
    %772 = vmatprep.subr.mxu0 0.0
    %773 = vmatpush1.msra.mxu0 %v663
    %774 = vmatprep.subr.mxu0 0.0
    %775 = vmatpush1.msra.mxu0 %v664
    %776 = vmatprep.subr.mxu0 0.0
    %777 = vmatpush1.msra.mxu0 0.0
    %778 = vmatprep.subr.mxu0 0.0
    %779 = vmatpush1.msra.mxu0 0.0
    %780 = vmatprep.subr.mxu0 0.0
    %781 = vmatpush1.msra.mxu0 0.0
    %782 = vmatprep.subr.mxu0 0.0
    %783 = vmatpush1.msra.mxu0 0.0
    %784 = vmatprep.subr.mxu0 0.0
    %785 = vmatpush1.msra.mxu0 0.0
    %786 = vmatprep.subr.mxu0 0.0
    %787 = vmatpush1.msra.mxu0 0.0
    %788 = vmatprep.subr.mxu0 0.0
    %789 = vmatpush1.msra.mxu0 0.0
    %790 = vmatprep.subr.mxu0 0.0
    %791 = vmatpush1.msra.mxu0 0.0
    %792 = vmatprep.subr.mxu0 0.0
    %793 = vmatpush1.msra.mxu0 0.0
    %794 = vmatprep.subr.mxu0 0.0
    %795 = vmatpush1.msra.mxu0 0.0
    %796 = vmatprep.subr.mxu0 0.0
    %797 = vmatpush1.msra.mxu0 0.0
    %798 = vmatprep.subr.mxu0 0.0
    %799 = vmatpush1.msra.mxu0 0.0
    %800 = vmatprep.subr.mxu0 0.0
    %801 = vmatpush1.msra.mxu0 0.0
    %802 = vmatprep.subr.mxu0 0.0
    %803 = vmatpush1.msra.mxu0 0.0
    %804 = vmatprep.subr.mxu0 0.0
    %805 = vmatpush1.msra.mxu0 0.0
    %806 = vmatprep.subr.mxu0 0.0
    %807 = vmatpush1.msra.mxu0 0.0
    %808 = vmatprep.subr.mxu0 0.0
    %809 = vmatpush1.msra.mxu0 0.0
    %810 = vmatprep.subr.mxu0 0.0
    %811 = vmatpush1.msra.mxu0 0.0
    %812 = vmatprep.subr.mxu0 0.0
    %813 = vmatpush1.msra.mxu0 0.0
    %814 = vmatprep.subr.mxu0 0.0
    %815 = vmatpush1.msra.mxu0 0.0
    %816 = vmatprep.subr.mxu0 0.0
    %817 = vmatpush1.msra.mxu0 0.0
    %818 = vmatprep.subr.mxu0 0.0
    %819 = vmatpush1.msra.mxu0 0.0
    %820 = vmatprep.subr.mxu0 0.0
    %821 = vmatpush1.msra.mxu0 0.0
    %822 = vmatprep.subr.mxu0 0.0
    %823 = vmatpush1.msra.mxu0 0.0
    %824 = vmatprep.subr.mxu0 0.0
    %825 = vmatpush1.msra.mxu0 0.0
    %826 = vmatprep.subr.mxu0 0.0
    %827 = vmatpush1.msra.mxu0 0.0
    %828 = vmatprep.mubr.f32.mxu0 0.0
    %829 = vmatmul.mubr.f32.gmra.mrb[0].mxu0 %v762
    %v830 = vpop.f32.mrb[0].mxu0
    %v831 = vadd.f32 0.0, %v830
    %v832 = vpop.f32.mrb[0].mxu0
    %833 = vdwg.mxu0
    %834 = vmatprep.subr.mxu0 0.0
    %835 = vmatpush1.msra.mxu0 %v743
    %836 = vmatprep.subr.mxu0 0.0
    %837 = vmatpush1.msra.mxu0 %v744
    %838 = vmatprep.subr.mxu0 0.0
    %839 = vmatpush1.msra.mxu0 %v745
    %840 = vmatprep.subr.mxu0 0.0
    %841 = vmatpush1.msra.mxu0 %v746
    %842 = vmatprep.subr.mxu0 0.0
    %843 = vmatpush1.msra.mxu0 %v747
    %844 = vmatprep.subr.mxu0 0.0
    %845 = vmatpush1.msra.mxu0 %v748
    %846 = vmatprep.subr.mxu0 0.0
    %847 = vmatpush1.msra.mxu0 0.0
    %848 = vmatprep.subr.mxu0 0.0
    %849 = vmatpush1.msra.mxu0 0.0
    %850 = vmatprep.subr.mxu0 0.0
    %851 = vmatpush1.msra.mxu0 0.0
    %852 = vmatprep.subr.mxu0 0.0
    %853 = vmatpush1.msra.mxu0 0.0
    %854 = vmatprep.subr.mxu0 0.0
    %855 = vmatpush1.msra.mxu0 0.0
    %856 = vmatprep.subr.mxu0 0.0
    %857 = vmatpush1.msra.mxu0 0.0
    %858 = vmatprep.subr.mxu0 0.0
    %859 = vmatpush1.msra.mxu0 0.0
    %860 = vmatprep.subr.mxu0 0.0
    %861 = vmatpush1.msra.mxu0 0.0
    %862 = vmatprep.subr.mxu0 0.0
    %863 = vmatpush1.msra.mxu0 0.0
    %864 = vmatprep.subr.mxu0 0.0
    %865 = vmatpush1.msra.mxu0 0.0
    %866 = vmatprep.subr.mxu0 0.0
    %867 = vmatpush1.msra.mxu0 0.0
    %868 = vmatprep.subr.mxu0 0.0
    %869 = vmatpush1.msra.mxu0 0.0
    %870 = vmatprep.subr.mxu0 0.0
    %871 = vmatpush1.msra.mxu0 0.0
    %872 = vmatprep.subr.mxu0 0.0
    %873 = vmatpush1.msra.mxu0 0.0
    %874 = vmatprep.subr.mxu0 0.0
    %875 = vmatpush1.msra.mxu0 0.0
    %876 = vmatprep.subr.mxu0 0.0
    %877 = vmatpush1.msra.mxu0 0.0
    %878 = vmatprep.subr.mxu0 0.0
    %879 = vmatpush1.msra.mxu0 0.0
    %880 = vmatprep.subr.mxu0 0.0
    %881 = vmatpush1.msra.mxu0 0.0
    %882 = vmatprep.subr.mxu0 0.0
    %883 = vmatpush1.msra.mxu0 0.0
    %884 = vmatprep.subr.mxu0 0.0
    %885 = vmatpush1.msra.mxu0 0.0
    %886 = vmatprep.subr.mxu0 0.0
    %887 = vmatpush1.msra.mxu0 0.0
    %888 = vmatprep.subr.mxu0 0.0
    %889 = vmatpush1.msra.mxu0 0.0
    %890 = vmatprep.subr.mxu0 0.0
    %891 = vmatpush1.msra.mxu0 0.0
    %892 = vmatprep.subr.mxu0 0.0
    %893 = vmatpush1.msra.mxu0 0.0
    %894 = vmatprep.subr.mxu0 0.0
    %895 = vmatpush1.msra.mxu0 0.0
    %896 = vmatprep.subr.mxu0 0.0
    %897 = vmatpush1.msra.mxu0 0.0
    %898 = vmatprep.mubr.f32.mxu0 0.0
    %899 = vmatmul.mubr.f32.gmra.mrb[0].mxu0 %v762
    %v900 = vpop.f32.mrb[0].mxu0
    %v901 = vadd.f32 0.0, %v900
    %v902 = vpop.f32.mrb[0].mxu0
    %903 = vdwg.mxu0
    %v904 = vpack.c.bf16 %v831, %v831
    %v905 = vld [vmem:[%s1 + $0x48] sm:$0xf]
    %v906 = vld [vmem:[%s1 + $0x4c] sm:$0xf]
    %v907 = vpack.c.bf16 %v901, %v901
    %v908 = vld [vmem:[%s1 + $0x50] sm:$0xf]
    %v909 = vld [vmem:[%s1 + $0x54] sm:$0xf]
    %v912 = vunpack.c.l.b16 %v908
    %v913 = vunpack.c.l.b16 %v909
    %v914 = vpack.c.b16 %v913, %v912
    %vm916 = vcmask 130048
    %v918 = vsel %vm916, %v907, 0
    %920 = vmatprep.subr.bf16.mxu0 0
    %921 = vmatpush1.bf16.msra.mxu0 %v914
    %922 = vmatprep.subr.bf16.mxu0 0
    %923 = vmatpush1.bf16.msra.mxu0 0
    %924 = vmatprep.subr.bf16.mxu0 0
    %925 = vmatpush1.bf16.msra.mxu0 0
    %926 = vmatprep.subr.bf16.mxu0 0
    %927 = vmatpush1.bf16.msra.mxu0 0
    %928 = vmatprep.subr.bf16.mxu0 0
    %929 = vmatpush1.bf16.msra.mxu0 0
    %930 = vmatprep.subr.bf16.mxu0 0
    %931 = vmatpush1.bf16.msra.mxu0 0
    %932 = vmatprep.subr.bf16.mxu0 0
    %933 = vmatpush1.bf16.msra.mxu0 0
    %934 = vmatprep.subr.bf16.mxu0 0
    %935 = vmatpush1.bf16.msra.mxu0 0
    %936 = vmatprep.subr.bf16.mxu0 0
    %937 = vmatpush1.bf16.msra.mxu0 0
    %938 = vmatprep.subr.bf16.mxu0 0
    %939 = vmatpush1.bf16.msra.mxu0 0
    %940 = vmatprep.subr.bf16.mxu0 0
    %941 = vmatpush1.bf16.msra.mxu0 0
    %942 = vmatprep.subr.bf16.mxu0 0
    %943 = vmatpush1.bf16.msra.mxu0 0
    %944 = vmatprep.subr.bf16.mxu0 0
    %945 = vmatpush1.bf16.msra.mxu0 0
    %946 = vmatprep.subr.bf16.mxu0 0
    %947 = vmatpush1.bf16.msra.mxu0 0
    %948 = vmatprep.subr.bf16.mxu0 0
    %949 = vmatpush1.bf16.msra.mxu0 0
    %950 = vmatprep.subr.bf16.mxu0 0
    %951 = vmatpush1.bf16.msra.mxu0 0
    %952 = vmatprep.mubr.bf16.mxu0 0
    %953 = vmatmul.mubr.bf16.gmra.mrb[0].mxu0 %v918
    %v954 = vpop.f32.mrb[0].mxu0
    %v955 = vadd.f32 0.0, %v954
    %v956 = vpop.f32.mrb[0].mxu0
    %v957 = vpop.f32.mrb[0].mxu0
    %v958 = vpop.f32.mrb[0].mxu0
    %959 = vdwg.mxu0
    %v962 = vunpack.c.l.b16 %v905
    %v963 = vunpack.c.l.b16 %v906
    %v964 = vpack.c.b16 %v963, %v962
    %v967 = vsel %vm916, %v904, 0
    %969 = vmatprep.subr.bf16.mxu0 0
    %970 = vmatpush1.bf16.msra.mxu0 %v964
    %971 = vmatprep.subr.bf16.mxu0 0
    %972 = vmatpush1.bf16.msra.mxu0 0
    %973 = vmatprep.subr.bf16.mxu0 0
    %974 = vmatpush1.bf16.msra.mxu0 0
    %975 = vmatprep.subr.bf16.mxu0 0
    %976 = vmatpush1.bf16.msra.mxu0 0
    %977 = vmatprep.subr.bf16.mxu0 0
    %978 = vmatpush1.bf16.msra.mxu0 0
    %979 = vmatprep.subr.bf16.mxu0 0
    %980 = vmatpush1.bf16.msra.mxu0 0
    %981 = vmatprep.subr.bf16.mxu0 0
    %982 = vmatpush1.bf16.msra.mxu0 0
    %983 = vmatprep.subr.bf16.mxu0 0
    %984 = vmatpush1.bf16.msra.mxu0 0
    %985 = vmatprep.subr.bf16.mxu0 0
    %986 = vmatpush1.bf16.msra.mxu0 0
    %987 = vmatprep.subr.bf16.mxu0 0
    %988 = vmatpush1.bf16.msra.mxu0 0
    %989 = vmatprep.subr.bf16.mxu0 0
    %990 = vmatpush1.bf16.msra.mxu0 0
    %991 = vmatprep.subr.bf16.mxu0 0
    %992 = vmatpush1.bf16.msra.mxu0 0
    %993 = vmatprep.subr.bf16.mxu0 0
    %994 = vmatpush1.bf16.msra.mxu0 0
    %995 = vmatprep.subr.bf16.mxu0 0
    %996 = vmatpush1.bf16.msra.mxu0 0
    %997 = vmatprep.subr.bf16.mxu0 0
    %998 = vmatpush1.bf16.msra.mxu0 0
    %999 = vmatprep.subr.bf16.mxu0 0
    %1000 = vmatpush1.bf16.msra.mxu0 0
    %1001 = vmatprep.mubr.bf16.mxu0 0
    %1002 = vmatmul.mubr.bf16.gmra.mrb[0].mxu0 %v967
    %v1003 = vpop.f32.mrb[0].mxu0
    %v1004 = vadd.f32 %v955, %v1003
    %v1005 = vpop.f32.mrb[0].mxu0
    %v1006 = vpop.f32.mrb[0].mxu0
    %v1007 = vpop.f32.mrb[0].mxu0
    %1008 = vdwg.mxu0
    %v1009 = vld [vmem:[%s2 + $0x5] sm:$0x1]
    %v1010 = vlaneseq
    %v1011 = vshrl.u32 %v1010, 7
    %v1012 = vsub.s32 0, %v1011
    %v1013 = vrot.slane %v1009, %v1012
    %v1014 = vadd.f32 %v1004, %v1013
    %v1015 = vmax.f32 %v1014, 0.0
    %v1016 = vpack.c.bf16 %v1015, %v1015
    %v1017 = vld [vmem:[%s1 + $0x58] sm:$0xf]
    %v1018 = vld [vmem:[%s1 + $0x5c] sm:$0xf]
    %v1019 = vld [vmem:[%s1 + $0x60] sm:$0xf]
    %v1020 = vld [vmem:[%s1 + $0x64] sm:$0xf]
    %v1021 = vld [vmem:[%s2 + $0x6] sm:$0x1]
    %v1022 = vlaneseq
    %v1023 = vshrl.u32 %v1022, 7
    %v1024 = vsub.s32 0, %v1023
    %v1025 = vrot.slane %v1021, %v1024
    %v1030 = vunpack.c.l.b16 %v1017
    %v1031 = vunpack.c.l.b16 %v1018
    %v1032 = vunpack.c.l.b16 %v1019
    %v1033 = vunpack.c.l.b16 %v1020
    %v1034 = vpack.c.b16 %v1031, %v1030
    %v1035 = vpack.c.b16 %v1033, %v1032
    %v1039 = vsel %vm348, %v1016, 0
    %1041 = vmatprep.subr.bf16.mxu0 0
    %1042 = vmatpush1.bf16.msra.mxu0 %v1034
    %1043 = vmatprep.subr.bf16.mxu0 0
    %1044 = vmatpush1.bf16.msra.mxu0 %v1035
    %1045 = vmatprep.subr.bf16.mxu0 0
    %1046 = vmatpush1.bf16.msra.mxu0 0
    %1047 = vmatprep.subr.bf16.mxu0 0
    %1048 = vmatpush1.bf16.msra.mxu0 0
    %1049 = vmatprep.subr.bf16.mxu0 0
    %1050 = vmatpush1.bf16.msra.mxu0 0
    %1051 = vmatprep.subr.bf16.mxu0 0
    %1052 = vmatpush1.bf16.msra.mxu0 0
    %1053 = vmatprep.subr.bf16.mxu0 0
    %1054 = vmatpush1.bf16.msra.mxu0 0
    %1055 = vmatprep.subr.bf16.mxu0 0
    %1056 = vmatpush1.bf16.msra.mxu0 0
    %1057 = vmatprep.subr.bf16.mxu0 0
    %1058 = vmatpush1.bf16.msra.mxu0 0
    %1059 = vmatprep.subr.bf16.mxu0 0
    %1060 = vmatpush1.bf16.msra.mxu0 0
    %1061 = vmatprep.subr.bf16.mxu0 0
    %1062 = vmatpush1.bf16.msra.mxu0 0
    %1063 = vmatprep.subr.bf16.mxu0 0
    %1064 = vmatpush1.bf16.msra.mxu0 0
    %1065 = vmatprep.subr.bf16.mxu0 0
    %1066 = vmatpush1.bf16.msra.mxu0 0
    %1067 = vmatprep.subr.bf16.mxu0 0
    %1068 = vmatpush1.bf16.msra.mxu0 0
    %1069 = vmatprep.subr.bf16.mxu0 0
    %1070 = vmatpush1.bf16.msra.mxu0 0
    %1071 = vmatprep.subr.bf16.mxu0 0
    %1072 = vmatpush1.bf16.msra.mxu0 0
    %1073 = vmatprep.mubr.bf16.mxu0 0
    %1074 = vmatmul.mubr.bf16.gmra.mrb[0].mxu0 %v1039
    %v1075 = vpop.f32.mrb[0].mxu0
    %v1076 = vadd.f32 %v1025, %v1075
    %v1077 = vpop.f32.mrb[0].mxu0
    %v1078 = vpop.f32.mrb[0].mxu0
    %v1079 = vpop.f32.mrb[0].mxu0
    %1080 = vdwg.mxu0
    %v1081 = vmax.f32 %v1076, 0.0
    %v1082 = vpack.c.bf16 %v1081, %v1081
    %v1083 = vld [vmem:[%s1 + $0x68] sm:$0xf]
    %v1084 = vld [vmem:[%s2 + $0x7] sm:$0x1]
    %v1085 = vlaneseq
    %v1086 = vshrl.u32 %v1085, 7
    %v1087 = vsub.s32 0, %v1086
    %v1088 = vrot.slane %v1084, %v1087
    %vm1089 = vcmask 64512
    %v1091 = vsel %vm1089, %v1082, 0
    %v1094 = vsel %vm141, %v1083, 0
    %1096 = vmatprep.subr.bf16.mxu0 0
    %1097 = vmatpush1.bf16.msra.mxu0 %v1094
    %1098 = vmatprep.subr.bf16.mxu0 0
    %1099 = vmatpush1.bf16.msra.mxu0 0
    %1100 = vmatprep.subr.bf16.mxu0 0
    %1101 = vmatpush1.bf16.msra.mxu0 0
    %1102 = vmatprep.subr.bf16.mxu0 0
    %1103 = vmatpush1.bf16.msra.mxu0 0
    %1104 = vmatprep.subr.bf16.mxu0 0
    %1105 = vmatpush1.bf16.msra.mxu0 0
    %1106 = vmatprep.subr.bf16.mxu0 0
    %1107 = vmatpush1.bf16.msra.mxu0 0
    %1108 = vmatprep.subr.bf16.mxu0 0
    %1109 = vmatpush1.bf16.msra.mxu0 0
    %1110 = vmatprep.subr.bf16.mxu0 0
    %1111 = vmatpush1.bf16.msra.mxu0 0
    %1112 = vmatprep.subr.bf16.mxu0 0
    %1113 = vmatpush1.bf16.msra.mxu0 0
    %1114 = vmatprep.subr.bf16.mxu0 0
    %1115 = vmatpush1.bf16.msra.mxu0 0
    %1116 = vmatprep.subr.bf16.mxu0 0
    %1117 = vmatpush1.bf16.msra.mxu0 0
    %1118 = vmatprep.subr.bf16.mxu0 0
    %1119 = vmatpush1.bf16.msra.mxu0 0
    %1120 = vmatprep.subr.bf16.mxu0 0
    %1121 = vmatpush1.bf16.msra.mxu0 0
    %1122 = vmatprep.subr.bf16.mxu0 0
    %1123 = vmatpush1.bf16.msra.mxu0 0
    %1124 = vmatprep.subr.bf16.mxu0 0
    %1125 = vmatpush1.bf16.msra.mxu0 0
    %1126 = vmatprep.subr.bf16.mxu0 0
    %1127 = vmatpush1.bf16.msra.mxu0 0
    %1128 = vmatprep.mubr.bf16.mxu0 0
    %1129 = vmatmul.mubr.bf16.gmra.mrb[0].mxu0 %v1091
    %v1130 = vpop.f32.mrb[0].mxu0
    %v1131 = vadd.f32 %v1088, %v1130
    %v1132 = vpop.f32.mrb[0].mxu0
    %v1133 = vpop.f32.mrb[0].mxu0
    %v1134 = vpop.f32.mrb[0].mxu0
    %1135 = vdwg.mxu0
    %1136 = vst.msk [vmem:[#allocation2] sm:$0xff] %vm916, %v1131
    // Predicated region
    $region14: #{branch_4_fun.2} parent=1 // pred_check
      _
    $region15: #{branch_4_fun.2} parent=1 // pred_check_branch
      %1138 = sbr.rel (0) target = $region17
    $region16: #{branch_4_fun.2} parent=1 // pred_region
      %s1140 = ssub.s32 128, 128
      %1141 = vsyncadd [#allocation3], %s1140
      %s1143 = sshll.u32 [#allocation2], 4
      %s1144 = int_to_ptr.vmem [resolvable:$true] %s1143
      %1146 = dma.vmem_to_hbm [thread:$0]  %s1144, 128, %s3, [#allocation3]
    $region17: #{branch_4_fun.2} parent=1 // pred_fallthru
      _
    // Predicated region
    $region18: #{branch_4_fun.2} parent=1 // pred_check
      _
    $region19: #{branch_4_fun.2} parent=1 // pred_check_branch
      %1148 = sbr.rel (0) target = $region21
    $region20: #{branch_4_fun.2} parent=1 // pred_region
      %1149 = dma.done [#allocation3], 128
    $region21: #{branch_4_fun.2} parent=1 // pred_fallthru
      _
    %1150 = vsyncpa [#allocation3], 1

// kernel: branch_5_fun.2
$region0: #{branch_5_fun.2}
  #allocation0 [shape = 'u32[]', space=smem, size = 0x4, offset = 0x4, fixed_abs, tag = 'smem constant byte address 0x4 - core index']
  #allocation1 [shape = 'u32[144,128]{1,0:T(1,128)}', space=vmem, size = 0x12000, scoped, tag = 'internal scratch']
  %s0 = inlined_call_operand.vmem [shape: f32[64,2], index: 0, kind: input, shape index: {}]
  %s1 = inlined_call_operand.vmem [shape: bf16[192,32], index: 1, kind: input, shape index: {}]
  %s2 = inlined_call_operand.vmem [shape: f32[8,32], index: 2, kind: input, shape index: {}]
  %s3 = inlined_call_operand.hbm [shape: f32[8,16], index: 3, kind: output, shape index: {}]
  %s4 = sld [smem:[#allocation0]]
  $region22: #{branch_5_fun.2} parent=0
    _
  %s6 = ssub.s32 1, %s4
  %s7 = scalar_select 0, %s6, %s4
  $region1: #{branch_5_fun.2} parent=0
    #allocation2 [shape = 'u8[4096]{0}', space=vmem, size = 0x1000, scoped, tag = 'output window, operand 0, single buffered']
    #allocation3 [shape = 's32[1]{0}', space=sflag, size = 0x4, scoped, tag = 'scoped memory for branch_5_fun.2']
    %8 = vsyncpa [#allocation3], 0
    // Predicated region
    $region2: #{branch_5_fun.2} parent=1 // pred_check
      _
    $region3: #{branch_5_fun.2} parent=1 // pred_check_branch
      %10 = sbr.rel (0) target = $region5
    $region4: #{branch_5_fun.2} parent=1 // pred_region
      _
    $region5: #{branch_5_fun.2} parent=1 // pred_fallthru
      _
    // Predicated region
    $region6: #{branch_5_fun.2} parent=1 // pred_check
      _
    $region7: #{branch_5_fun.2} parent=1 // pred_check_branch
      %12 = sbr.rel (0) target = $region9
    $region8: #{branch_5_fun.2} parent=1 // pred_region
      _
    $region9: #{branch_5_fun.2} parent=1 // pred_fallthru
      _
    // Predicated region
    $region10: #{branch_5_fun.2} parent=1 // pred_check
      _
    $region11: #{branch_5_fun.2} parent=1 // pred_check_branch
      %14 = sbr.rel (0) target = $region13
    $region12: #{branch_5_fun.2} parent=1 // pred_region
      _
    $region13: #{branch_5_fun.2} parent=1 // pred_fallthru
      _
    %v16 = vld [vmem:[%s0] sm:$0xff]
    %v17 = vld [vmem:[%s0 + $0x8] sm:$0xff]
    %v18 = vld [vmem:[%s0 + $0x10] sm:$0xff]
    %v19 = vld [vmem:[%s0 + $0x18] sm:$0xff]
    %v20 = vld [vmem:[%s0 + $0x20] sm:$0xff]
    %v21 = vld [vmem:[%s0 + $0x28] sm:$0xff]
    %v22 = vld [vmem:[%s0 + $0x30] sm:$0xff]
    %v23 = vld [vmem:[%s0 + $0x38] sm:$0xff]
    %v24 = vpack.c.bf16 %v17, %v16
    %v25 = vpack.c.bf16 %v19, %v18
    %v26 = vpack.c.bf16 %v21, %v20
    %v27 = vpack.c.bf16 %v23, %v22
    %v28 = vld [vmem:[%s1] sm:$0x1]
    %v29 = vld [vmem:[%s2] sm:$0x1]
    %v30 = vlaneseq
    %v31 = vshrl.u32 %v30, 7
    %v32 = vsub.s32 0, %v31
    %v33 = vrot.slane %v29, %v32
    %vm34 = vcmask 15360
    %v36 = vsel %vm34, %v24, 0
    %v39 = vsel %vm34, %v25, 0
    %v42 = vsel %vm34, %v26, 0
    %v45 = vsel %vm34, %v27, 0
    %vm47 = vcmask 1040384
    %v49 = vsel %vm47, %v28, 0
    %51 = vmatprep.subr.bf16.mxu0 0
    %52 = vmatpush1.bf16.msra.mxu0 %v49
    %53 = vmatprep.subr.bf16.mxu0 0
    %54 = vmatpush1.bf16.msra.mxu0 0
    %55 = vmatprep.subr.bf16.mxu0 0
    %56 = vmatpush1.bf16.msra.mxu0 0
    %57 = vmatprep.subr.bf16.mxu0 0
    %58 = vmatpush1.bf16.msra.mxu0 0
    %59 = vmatprep.subr.bf16.mxu0 0
    %60 = vmatpush1.bf16.msra.mxu0 0
    %61 = vmatprep.subr.bf16.mxu0 0
    %62 = vmatpush1.bf16.msra.mxu0 0
    %63 = vmatprep.subr.bf16.mxu0 0
    %64 = vmatpush1.bf16.msra.mxu0 0
    %65 = vmatprep.subr.bf16.mxu0 0
    %66 = vmatpush1.bf16.msra.mxu0 0
    %67 = vmatprep.subr.bf16.mxu0 0
    %68 = vmatpush1.bf16.msra.mxu0 0
    %69 = vmatprep.subr.bf16.mxu0 0
    %70 = vmatpush1.bf16.msra.mxu0 0
    %71 = vmatprep.subr.bf16.mxu0 0
    %72 = vmatpush1.bf16.msra.mxu0 0
    %73 = vmatprep.subr.bf16.mxu0 0
    %74 = vmatpush1.bf16.msra.mxu0 0
    %75 = vmatprep.subr.bf16.mxu0 0
    %76 = vmatpush1.bf16.msra.mxu0 0
    %77 = vmatprep.subr.bf16.mxu0 0
    %78 = vmatpush1.bf16.msra.mxu0 0
    %79 = vmatprep.subr.bf16.mxu0 0
    %80 = vmatpush1.bf16.msra.mxu0 0
    %81 = vmatprep.subr.bf16.mxu0 0
    %82 = vmatpush1.bf16.msra.mxu0 0
    %83 = vmatprep.mubr.bf16.mxu0 0
    %84 = vmatmul.mubr.bf16.gmra.mrb[0].mxu0 %v36
    %v85 = vpop.f32.mrb[0].mxu0
    %v86 = vadd.f32 %v33, %v85
    %v87 = vpop.f32.mrb[0].mxu0
    %v88 = vpop.f32.mrb[0].mxu0
    %v89 = vadd.f32 %v33, %v88
    %v90 = vpop.f32.mrb[0].mxu0
    %91 = vmatprep.mubr.bf16.mxu0 0
    %92 = vmatmul.mubr.bf16.gmra.mrb[0].mxu0 %v39
    %v93 = vpop.f32.mrb[0].mxu0
    %v94 = vadd.f32 %v33, %v93
    %v95 = vpop.f32.mrb[0].mxu0
    %v96 = vpop.f32.mrb[0].mxu0
    %v97 = vadd.f32 %v33, %v96
    %v98 = vpop.f32.mrb[0].mxu0
    %99 = vmatprep.mubr.bf16.mxu0 0
    %100 = vmatmul.mubr.bf16.gmra.mrb[0].mxu0 %v42
    %v101 = vpop.f32.mrb[0].mxu0
    %v102 = vadd.f32 %v33, %v101
    %v103 = vpop.f32.mrb[0].mxu0
    %v104 = vpop.f32.mrb[0].mxu0
    %v105 = vadd.f32 %v33, %v104
    %v106 = vpop.f32.mrb[0].mxu0
    %107 = vmatprep.mubr.bf16.mxu0 0
    %108 = vmatmul.mubr.bf16.gmra.mrb[0].mxu0 %v45
    %v109 = vpop.f32.mrb[0].mxu0
    %v110 = vadd.f32 %v33, %v109
    %v111 = vpop.f32.mrb[0].mxu0
    %v112 = vpop.f32.mrb[0].mxu0
    %v113 = vadd.f32 %v33, %v112
    %v114 = vpop.f32.mrb[0].mxu0
    %115 = vdwg.mxu0
    %v116 = vmax.f32 %v86, 0.0
    %v117 = vmax.f32 %v89, 0.0
    %v118 = vmax.f32 %v94, 0.0
    %v119 = vmax.f32 %v97, 0.0
    %v120 = vmax.f32 %v102, 0.0
    %v121 = vmax.f32 %v105, 0.0
    %v122 = vmax.f32 %v110, 0.0
    %v123 = vmax.f32 %v113, 0.0
    %v124 = vpack.c.bf16 %v117, %v116
    %v125 = vpack.c.bf16 %v119, %v118
    %v126 = vpack.c.bf16 %v121, %v120
    %v127 = vpack.c.bf16 %v123, %v122
    %v128 = vld [vmem:[%s1 + $0x8] sm:$0xf]
    %v129 = vld [vmem:[%s1 + $0xc] sm:$0xf]
    %v130 = vld [vmem:[%s2 + $0x1] sm:$0x1]
    %v131 = vlaneseq
    %v132 = vshrl.u32 %v131, 7
    %v133 = vsub.s32 0, %v132
    %v134 = vrot.slane %v130, %v133
    %v137 = vunpack.c.l.b16 %v128
    %v138 = vunpack.c.l.b16 %v129
    %v139 = vpack.c.b16 %v138, %v137
    %vm141 = vcmask 130048
    %v143 = vsel %vm141, %v124, 0
    %v146 = vsel %vm141, %v125, 0
    %v149 = vsel %vm141, %v126, 0
    %v152 = vsel %vm141, %v127, 0
    %154 = vmatprep.subr.bf16.mxu0 0
    %155 = vmatpush1.bf16.msra.mxu0 %v139
    %156 = vmatprep.subr.bf16.mxu0 0
    %157 = vmatpush1.bf16.msra.mxu0 0
    %158 = vmatprep.subr.bf16.mxu0 0
    %159 = vmatpush1.bf16.msra.mxu0 0
    %160 = vmatprep.subr.bf16.mxu0 0
    %161 = vmatpush1.bf16.msra.mxu0 0
    %162 = vmatprep.subr.bf16.mxu0 0
    %163 = vmatpush1.bf16.msra.mxu0 0
    %164 = vmatprep.subr.bf16.mxu0 0
    %165 = vmatpush1.bf16.msra.mxu0 0
    %166 = vmatprep.subr.bf16.mxu0 0
    %167 = vmatpush1.bf16.msra.mxu0 0
    %168 = vmatprep.subr.bf16.mxu0 0
    %169 = vmatpush1.bf16.msra.mxu0 0
    %170 = vmatprep.subr.bf16.mxu0 0
    %171 = vmatpush1.bf16.msra.mxu0 0
    %172 = vmatprep.subr.bf16.mxu0 0
    %173 = vmatpush1.bf16.msra.mxu0 0
    %174 = vmatprep.subr.bf16.mxu0 0
    %175 = vmatpush1.bf16.msra.mxu0 0
    %176 = vmatprep.subr.bf16.mxu0 0
    %177 = vmatpush1.bf16.msra.mxu0 0
    %178 = vmatprep.subr.bf16.mxu0 0
    %179 = vmatpush1.bf16.msra.mxu0 0
    %180 = vmatprep.subr.bf16.mxu0 0
    %181 = vmatpush1.bf16.msra.mxu0 0
    %182 = vmatprep.subr.bf16.mxu0 0
    %183 = vmatpush1.bf16.msra.mxu0 0
    %184 = vmatprep.subr.bf16.mxu0 0
    %185 = vmatpush1.bf16.msra.mxu0 0
    %186 = vmatprep.mubr.bf16.mxu0 0
    %187 = vmatmul.mubr.bf16.gmra.mrb[0].mxu0 %v143
    %v188 = vpop.f32.mrb[0].mxu0
    %v189 = vadd.f32 %v134, %v188
    %v190 = vpop.f32.mrb[0].mxu0
    %v191 = vpop.f32.mrb[0].mxu0
    %v192 = vadd.f32 %v134, %v191
    %v193 = vpop.f32.mrb[0].mxu0
    %194 = vmatprep.mubr.bf16.mxu0 0
    %195 = vmatmul.mubr.bf16.gmra.mrb[0].mxu0 %v146
    %v196 = vpop.f32.mrb[0].mxu0
    %v197 = vadd.f32 %v134, %v196
    %v198 = vpop.f32.mrb[0].mxu0
    %v199 = vpop.f32.mrb[0].mxu0
    %v200 = vadd.f32 %v134, %v199
    %v201 = vpop.f32.mrb[0].mxu0
    %202 = vmatprep.mubr.bf16.mxu0 0
    %203 = vmatmul.mubr.bf16.gmra.mrb[0].mxu0 %v149
    %v204 = vpop.f32.mrb[0].mxu0
    %v205 = vadd.f32 %v134, %v204
    %v206 = vpop.f32.mrb[0].mxu0
    %v207 = vpop.f32.mrb[0].mxu0
    %v208 = vadd.f32 %v134, %v207
    %v209 = vpop.f32.mrb[0].mxu0
    %210 = vmatprep.mubr.bf16.mxu0 0
    %211 = vmatmul.mubr.bf16.gmra.mrb[0].mxu0 %v152
    %v212 = vpop.f32.mrb[0].mxu0
    %v213 = vadd.f32 %v134, %v212
    %v214 = vpop.f32.mrb[0].mxu0
    %v215 = vpop.f32.mrb[0].mxu0
    %v216 = vadd.f32 %v134, %v215
    %v217 = vpop.f32.mrb[0].mxu0
    %218 = vdwg.mxu0
    %v219 = vmax.f32 %v189, 0.0
    %v220 = vmax.f32 %v192, 0.0
    %v221 = vmax.f32 %v197, 0.0
    %v222 = vmax.f32 %v200, 0.0
    %v223 = vmax.f32 %v205, 0.0
    %v224 = vmax.f32 %v208, 0.0
    %v225 = vmax.f32 %v213, 0.0
    %v226 = vmax.f32 %v216, 0.0
    %v227 = vpack.c.bf16 %v220, %v219
    %v228 = vpack.c.bf16 %v222, %v221
    %v229 = vpack.c.bf16 %v224, %v223
    %v230 = vpack.c.bf16 %v226, %v225
    %v231 = vld [vmem:[%s1 + $0x10] sm:$0xf]
    %v232 = vld [vmem:[%s1 + $0x14] sm:$0xf]
    %v233 = vld [vmem:[%s2 + $0x2] sm:$0x1]
    %v234 = vlaneseq
    %v235 = vshrl.u32 %v234, 7
    %v236 = vsub.s32 0, %v235
    %v237 = vrot.slane %v233, %v236
    %v240 = vunpack.c.l.b16 %v231
    %v241 = vunpack.c.l.b16 %v232
    %v242 = vpack.c.b16 %v241, %v240
    %v245 = vsel %vm141, %v227, 0
    %v248 = vsel %vm141, %v228, 0
    %v251 = vsel %vm141, %v229, 0
    %v254 = vsel %vm141, %v230, 0
    %256 = vmatprep.subr.bf16.mxu0 0
    %257 = vmatpush1.bf16.msra.mxu0 %v242
    %258 = vmatprep.subr.bf16.mxu0 0
    %259 = vmatpush1.bf16.msra.mxu0 0
    %260 = vmatprep.subr.bf16.mxu0 0
    %261 = vmatpush1.bf16.msra.mxu0 0
    %262 = vmatprep.subr.bf16.mxu0 0
    %263 = vmatpush1.bf16.msra.mxu0 0
    %264 = vmatprep.subr.bf16.mxu0 0
    %265 = vmatpush1.bf16.msra.mxu0 0
    %266 = vmatprep.subr.bf16.mxu0 0
    %267 = vmatpush1.bf16.msra.mxu0 0
    %268 = vmatprep.subr.bf16.mxu0 0
    %269 = vmatpush1.bf16.msra.mxu0 0
    %270 = vmatprep.subr.bf16.mxu0 0
    %271 = vmatpush1.bf16.msra.mxu0 0
    %272 = vmatprep.subr.bf16.mxu0 0
    %273 = vmatpush1.bf16.msra.mxu0 0
    %274 = vmatprep.subr.bf16.mxu0 0
    %275 = vmatpush1.bf16.msra.mxu0 0
    %276 = vmatprep.subr.bf16.mxu0 0
    %277 = vmatpush1.bf16.msra.mxu0 0
    %278 = vmatprep.subr.bf16.mxu0 0
    %279 = vmatpush1.bf16.msra.mxu0 0
    %280 = vmatprep.subr.bf16.mxu0 0
    %281 = vmatpush1.bf16.msra.mxu0 0
    %282 = vmatprep.subr.bf16.mxu0 0
    %283 = vmatpush1.bf16.msra.mxu0 0
    %284 = vmatprep.subr.bf16.mxu0 0
    %285 = vmatpush1.bf16.msra.mxu0 0
    %286 = vmatprep.subr.bf16.mxu0 0
    %287 = vmatpush1.bf16.msra.mxu0 0
    %288 = vmatprep.mubr.bf16.mxu0 0
    %289 = vmatmul.mubr.bf16.gmra.mrb[0].mxu0 %v245
    %v290 = vpop.f32.mrb[0].mxu0
    %v291 = vadd.f32 %v237, %v290
    %v292 = vpop.f32.mrb[0].mxu0
    %v293 = vpop.f32.mrb[0].mxu0
    %v294 = vadd.f32 %v237, %v293
    %v295 = vpop.f32.mrb[0].mxu0
    %296 = vmatprep.mubr.bf16.mxu0 0
    %297 = vmatmul.mubr.bf16.gmra.mrb[0].mxu0 %v248
    %v298 = vpop.f32.mrb[0].mxu0
    %v299 = vadd.f32 %v237, %v298
    %v300 = vpop.f32.mrb[0].mxu0
    %v301 = vpop.f32.mrb[0].mxu0
    %v302 = vadd.f32 %v237, %v301
    %v303 = vpop.f32.mrb[0].mxu0
    %304 = vmatprep.mubr.bf16.mxu0 0
    %305 = vmatmul.mubr.bf16.gmra.mrb[0].mxu0 %v251
    %v306 = vpop.f32.mrb[0].mxu0
    %v307 = vadd.f32 %v237, %v306
    %v308 = vpop.f32.mrb[0].mxu0
    %v309 = vpop.f32.mrb[0].mxu0
    %v310 = vadd.f32 %v237, %v309
    %v311 = vpop.f32.mrb[0].mxu0
    %312 = vmatprep.mubr.bf16.mxu0 0
    %313 = vmatmul.mubr.bf16.gmra.mrb[0].mxu0 %v254
    %v314 = vpop.f32.mrb[0].mxu0
    %v315 = vadd.f32 %v237, %v314
    %v316 = vpop.f32.mrb[0].mxu0
    %v317 = vpop.f32.mrb[0].mxu0
    %v318 = vadd.f32 %v237, %v317
    %v319 = vpop.f32.mrb[0].mxu0
    %320 = vdwg.mxu0
    %v321 = vlaneseq
    %v322 = vshrl.u32 %v321, 7
    %v323 = vadd.s32 %v322, 8
    %v324 = vadd.s32 %v322, 16
    %v325 = vadd.s32 %v322, 24
    %v326 = vadd.s32 %v322, 32
    %v327 = vadd.s32 %v322, 40
    %v328 = vadd.s32 %v322, 48
    %v329 = vadd.s32 %v322, 56
    %v330 = vcvt.s32.f32 %v322
    %v331 = vcvt.s32.f32 %v323
    %v332 = vcvt.s32.f32 %v324
    %v333 = vcvt.s32.f32 %v325
    %v334 = vcvt.s32.f32 %v326
    %v335 = vcvt.s32.f32 %v327
    %v336 = vcvt.s32.f32 %v328
    %v337 = vcvt.s32.f32 %v329
    %v338 = vlaneseq
    %v339 = vand.u32 %v338, 127
    %v340 = vcvt.s32.f32 %v339
    %v341 = vmul.f32 %v330, 0.25
    %v342 = vmul.f32 %v331, 0.25
    %v343 = vmul.f32 %v332, 0.25
    %v344 = vmul.f32 %v333, 0.25
    %v345 = vmul.f32 %v334, 0.25
    %v346 = vmul.f32 %v335, 0.25
    %v347 = vmul.f32 %v336, 0.25
    %v348 = vmul.f32 %v337, 0.25
    %v349 = vfloor.f32 %v341
    %v350 = vfloor.f32 %v342
    %v351 = vfloor.f32 %v343
    %v352 = vfloor.f32 %v344
    %v353 = vfloor.f32 %v345
    %v354 = vfloor.f32 %v346
    %v355 = vfloor.f32 %v347
    %v356 = vfloor.f32 %v348
    %v357 = vmul.f32 %v340, 0.25
    %v358 = vfloor.f32 %v357
    %vm359 = vcmp.eq.f32.partialorder %v349, %v358
    %vm360 = vcmp.eq.f32.partialorder %v350, %v358
    %vm361 = vcmp.eq.f32.partialorder %v351, %v358
    %vm362 = vcmp.eq.f32.partialorder %v352, %v358
    %vm363 = vcmp.eq.f32.partialorder %v353, %v358
    %vm364 = vcmp.eq.f32.partialorder %v354, %v358
    %vm365 = vcmp.eq.f32.partialorder %v355, %v358
    %vm366 = vcmp.eq.f32.partialorder %v356, %v358
    %v367 = vsel %vm359, 1, 0
    %v368 = vsel %vm360, 1, 0
    %v369 = vsel %vm361, 1, 0
    %v370 = vsel %vm362, 1, 0
    %v371 = vsel %vm363, 1, 0
    %v372 = vsel %vm364, 1, 0
    %v373 = vsel %vm365, 1, 0
    %v374 = vsel %vm366, 1, 0
    %v375 = vcvt.s32.f32 %v367
    %v376 = vcvt.s32.f32 %v368
    %v377 = vcvt.s32.f32 %v369
    %v378 = vcvt.s32.f32 %v370
    %v379 = vcvt.s32.f32 %v371
    %v380 = vcvt.s32.f32 %v372
    %v381 = vcvt.s32.f32 %v373
    %v382 = vcvt.s32.f32 %v374
    %v383 = vpack.c.bf16 %v294, %v291
    %v384 = vpack.c.bf16 %v302, %v299
    %v385 = vpack.c.bf16 %v310, %v307
    %v386 = vpack.c.bf16 %v318, %v315
    %vm387 = vcmask 261120
    %v389 = vsel %vm387, %v383, 0
    %v392 = vsel %vm387, %v384, 0
    %v395 = vsel %vm387, %v385, 0
    %v398 = vsel %vm387, %v386, 0
    %400 = vmatprep.subr.bf16.mxu0 0
    %401 = vmatpush1.bf16.xpose.msra.mxu0 %v389
    %402 = vmatprep.subr.bf16.mxu0 0
    %403 = vmatpush1.bf16.xpose.msra.mxu0 %v392
    %404 = vmatprep.subr.bf16.mxu0 0
    %405 = vmatpush1.bf16.xpose.msra.mxu0 %v395
    %406 = vmatprep.subr.bf16.mxu0 0
    %407 = vmatpush1.bf16.xpose.msra.mxu0 %v398
    %408 = vmatprep.subr.bf16.mxu0 0
    %409 = vmatpush1.bf16.xpose.msra.mxu0 0
    %410 = vmatprep.subr.bf16.mxu0 0
    %411 = vmatpush1.bf16.xpose.msra.mxu0 0
    %412 = vmatprep.subr.bf16.mxu0 0
    %413 = vmatpush1.bf16.xpose.msra.mxu0 0
    %414 = vmatprep.subr.bf16.mxu0 0
    %415 = vmatpush1.bf16.xpose.msra.mxu0 0
    %416 = vmatprep.subr.bf16.mxu0 0
    %417 = vmatpush1.bf16.xpose.msra.mxu0 0
    %418 = vmatprep.subr.bf16.mxu0 0
    %419 = vmatpush1.bf16.xpose.msra.mxu0 0
    %420 = vmatprep.subr.bf16.mxu0 0
    %421 = vmatpush1.bf16.xpose.msra.mxu0 0
    %422 = vmatprep.subr.bf16.mxu0 0
    %423 = vmatpush1.bf16.xpose.msra.mxu0 0
    %424 = vmatprep.subr.bf16.mxu0 0
    %425 = vmatpush1.bf16.xpose.msra.mxu0 0
    %426 = vmatprep.subr.bf16.mxu0 0
    %427 = vmatpush1.bf16.xpose.msra.mxu0 0
    %428 = vmatprep.subr.bf16.mxu0 0
    %429 = vmatpush1.bf16.xpose.msra.mxu0 0
    %430 = vmatprep.subr.bf16.mxu0 0
    %431 = vmatpush1.bf16.xpose.msra.mxu0 0
    %432 = vmatprep.mubr.bf16.mxu0 0
    %433 = vmatmul.mubr.bf16.gmra.mrb[0].mxu0 %v389
    %v434 = vpop.f32.mrb[0].mxu0
    %v435 = vadd.f32 0.0, %v434
    %v436 = vpop.f32.mrb[0].mxu0
    %v437 = vpop.f32.mrb[0].mxu0
    %v438 = vadd.f32 0.0, %v437
    %v439 = vpop.f32.mrb[0].mxu0
    %440 = vmatprep.mubr.bf16.mxu0 0
    %441 = vmatmul.mubr.bf16.gmra.mrb[0].mxu0 %v392
    %v442 = vpop.f32.mrb[0].mxu0
    %v443 = vadd.f32 0.0, %v442
    %v444 = vpop.f32.mrb[0].mxu0
    %v445 = vpop.f32.mrb[0].mxu0
    %v446 = vadd.f32 0.0, %v445
    %v447 = vpop.f32.mrb[0].mxu0
    %448 = vmatprep.mubr.bf16.mxu0 0
    %449 = vmatmul.mubr.bf16.gmra.mrb[0].mxu0 %v395
    %v450 = vpop.f32.mrb[0].mxu0
    %v451 = vadd.f32 0.0, %v450
    %v452 = vpop.f32.mrb[0].mxu0
    %v453 = vpop.f32.mrb[0].mxu0
    %v454 = vadd.f32 0.0, %v453
    %v455 = vpop.f32.mrb[0].mxu0
    %456 = vmatprep.mubr.bf16.mxu0 0
    %457 = vmatmul.mubr.bf16.gmra.mrb[0].mxu0 %v398
    %v458 = vpop.f32.mrb[0].mxu0
    %v459 = vadd.f32 0.0, %v458
    %v460 = vpop.f32.mrb[0].mxu0
    %v461 = vpop.f32.mrb[0].mxu0
    %v462 = vadd.f32 0.0, %v461
    %v463 = vpop.f32.mrb[0].mxu0
    %464 = vdwg.mxu0
    %v465 = vmax.f32 %v435, 0.0
    %v466 = vmax.f32 %v438, 0.0
    %v467 = vmax.f32 %v443, 0.0
    %v468 = vmax.f32 %v446, 0.0
    %v469 = vmax.f32 %v451, 0.0
    %v470 = vmax.f32 %v454, 0.0
    %v471 = vmax.f32 %v459, 0.0
    %v472 = vmax.f32 %v462, 0.0
    %v473 = vmul.f32 %v465, %v375
    %v474 = vmul.f32 %v466, %v376
    %v475 = vmul.f32 %v467, %v377
    %v476 = vmul.f32 %v468, %v378
    %v477 = vmul.f32 %v469, %v379
    %v478 = vmul.f32 %v470, %v380
    %v479 = vmul.f32 %v471, %v381
    %v480 = vmul.f32 %v472, %v382
    %vm481 = vcmask 523264
    %v482 = vsel %vm481, %v473, -inf
    %483 = vmax.xlane.f32.xlu0 %v482
    %v484 = vpop.xlane.xlu0 %483
    %v485 = vsel %vm481, %v474, -inf
    %486 = vmax.xlane.f32.xlu0 %v485
    %v487 = vpop.xlane.xlu0 %486
    %v488 = vsel %vm481, %v475, -inf
    %489 = vmax.xlane.f32.xlu0 %v488
    %v490 = vpop.xlane.xlu0 %489
    %v491 = vsel %vm481, %v476, -inf
    %492 = vmax.xlane.f32.xlu0 %v491
    %v493 = vpop.xlane.xlu0 %492
    %v494 = vsel %vm481, %v477, -inf
    %495 = vmax.xlane.f32.xlu0 %v494
    %v496 = vpop.xlane.xlu0 %495
    %v497 = vsel %vm481, %v478, -inf
    %498 = vmax.xlane.f32.xlu0 %v497
    %v499 = vpop.xlane.xlu0 %498
    %v500 = vsel %vm481, %v479, -inf
    %501 = vmax.xlane.f32.xlu0 %v500
    %v502 = vpop.xlane.xlu0 %501
    %v503 = vsel %vm481, %v480, -inf
    %504 = vmax.xlane.f32.xlu0 %v503
    %v505 = vpop.xlane.xlu0 %504
    %v506 = vsub.f32 %v473, %v484
    %v507 = vsub.f32 %v474, %v487
    %v508 = vsub.f32 %v475, %v490
    %v509 = vsub.f32 %v476, %v493
    %v510 = vsub.f32 %v477, %v496
    %v511 = vsub.f32 %v478, %v499
    %v512 = vsub.f32 %v479, %v502
    %v513 = vsub.f32 %v480, %v505
    %v514 = vmul.f32 %v506, 1.442695
    %v515 = vpow.pop %v514
    %v516 = vmul.f32 %v507, 1.442695
    %v517 = vpow.pop %v516
    %v518 = vmul.f32 %v508, 1.442695
    %v519 = vpow.pop %v518
    %v520 = vmul.f32 %v509, 1.442695
    %v521 = vpow.pop %v520
    %v522 = vmul.f32 %v510, 1.442695
    %v523 = vpow.pop %v522
    %v524 = vmul.f32 %v511, 1.442695
    %v525 = vpow.pop %v524
    %v526 = vmul.f32 %v512, 1.442695
    %v527 = vpow.pop %v526
    %v528 = vmul.f32 %v513, 1.442695
    %v529 = vpow.pop %v528
    %v530 = vmul.f32 %v515, %v375
    %v531 = vmul.f32 %v517, %v376
    %v532 = vmul.f32 %v519, %v377
    %v533 = vmul.f32 %v521, %v378
    %v534 = vmul.f32 %v523, %v379
    %v535 = vmul.f32 %v525, %v380
    %v536 = vmul.f32 %v527, %v381
    %v537 = vmul.f32 %v529, %v382
    %v538 = vsel %vm481, %v530, 0.0
    %539 = vadd.xlane.f32.xlu0 %v538
    %v540 = vpop.xlane.xlu0 %539
    %v541 = vsel %vm481, %v531, 0.0
    %542 = vadd.xlane.f32.xlu0 %v541
    %v543 = vpop.xlane.xlu0 %542
    %v544 = vsel %vm481, %v532, 0.0
    %545 = vadd.xlane.f32.xlu0 %v544
    %v546 = vpop.xlane.xlu0 %545
    %v547 = vsel %vm481, %v533, 0.0
    %548 = vadd.xlane.f32.xlu0 %v547
    %v549 = vpop.xlane.xlu0 %548
    %v550 = vsel %vm481, %v534, 0.0
    %551 = vadd.xlane.f32.xlu0 %v550
    %v552 = vpop.xlane.xlu0 %551
    %v553 = vsel %vm481, %v535, 0.0
    %554 = vadd.xlane.f32.xlu0 %v553
    %v555 = vpop.xlane.xlu0 %554
    %v556 = vsel %vm481, %v536, 0.0
    %557 = vadd.xlane.f32.xlu0 %v556
    %v558 = vpop.xlane.xlu0 %557
    %v559 = vsel %vm481, %v537, 0.0
    %560 = vadd.xlane.f32.xlu0 %v559
    %v561 = vpop.xlane.xlu0 %560
    %v562 = vrcp.pop %v540
    %v563 = vrcp.pop %v543
    %v564 = vrcp.pop %v546
    %v565 = vrcp.pop %v549
    %v566 = vrcp.pop %v552
    %v567 = vrcp.pop %v555
    %v568 = vrcp.pop %v558
    %v569 = vrcp.pop %v561
    %v570 = vmul.f32 %v530, %v562
    %v571 = vmul.f32 %v531, %v563
    %v572 = vmul.f32 %v532, %v564
    %v573 = vmul.f32 %v533, %v565
    %v574 = vmul.f32 %v534, %v566
    %v575 = vmul.f32 %v535, %v567
    %v576 = vmul.f32 %v536, %v568
    %v577 = vmul.f32 %v537, %v569
    %v578 = vpack.c.bf16 %v571, %v570
    %v579 = vpack.c.bf16 %v573, %v572
    %v580 = vpack.c.bf16 %v575, %v574
    %v581 = vpack.c.bf16 %v577, %v576
    %v583 = vsel %vm481, %v578, 0
    %v586 = vsel %vm481, %v579, 0
    %v589 = vsel %vm481, %v580, 0
    %v592 = vsel %vm481, %v581, 0
    %594 = vmatprep.subr.bf16.mxu0 0
    %595 = vmatpush1.bf16.msra.mxu0 %v383
    %596 = vmatprep.subr.bf16.mxu0 0
    %597 = vmatpush1.bf16.msra.mxu0 %v384
    %598 = vmatprep.subr.bf16.mxu0 0
    %599 = vmatpush1.bf16.msra.mxu0 %v385
    %600 = vmatprep.subr.bf16.mxu0 0
    %601 = vmatpush1.bf16.msra.mxu0 %v386
    %602 = vmatprep.subr.bf16.mxu0 0
    %603 = vmatpush1.bf16.msra.mxu0 0
    %604 = vmatprep.subr.bf16.mxu0 0
    %605 = vmatpush1.bf16.msra.mxu0 0
    %606 = vmatprep.subr.bf16.mxu0 0
    %607 = vmatpush1.bf16.msra.mxu0 0
    %608 = vmatprep.subr.bf16.mxu0 0
    %609 = vmatpush1.bf16.msra.mxu0 0
    %610 = vmatprep.subr.bf16.mxu0 0
    %611 = vmatpush1.bf16.msra.mxu0 0
    %612 = vmatprep.subr.bf16.mxu0 0
    %613 = vmatpush1.bf16.msra.mxu0 0
    %614 = vmatprep.subr.bf16.mxu0 0
    %615 = vmatpush1.bf16.msra.mxu0 0
    %616 = vmatprep.subr.bf16.mxu0 0
    %617 = vmatpush1.bf16.msra.mxu0 0
    %618 = vmatprep.subr.bf16.mxu0 0
    %619 = vmatpush1.bf16.msra.mxu0 0
    %620 = vmatprep.subr.bf16.mxu0 0
    %621 = vmatpush1.bf16.msra.mxu0 0
    %622 = vmatprep.subr.bf16.mxu0 0
    %623 = vmatpush1.bf16.msra.mxu0 0
    %624 = vmatprep.subr.bf16.mxu0 0
    %625 = vmatpush1.bf16.msra.mxu0 0
    %626 = vmatprep.mubr.bf16.mxu0 0
    %627 = vmatmul.mubr.bf16.gmra.mrb[0].mxu0 %v583
    %v628 = vpop.f32.mrb[0].mxu0
    %v629 = vadd.f32 0.0, %v628
    %v630 = vpop.f32.mrb[0].mxu0
    %v631 = vpop.f32.mrb[0].mxu0
    %v632 = vadd.f32 0.0, %v631
    %v633 = vpop.f32.mrb[0].mxu0
    %634 = vmatprep.mubr.bf16.mxu0 0
    %635 = vmatmul.mubr.bf16.gmra.mrb[0].mxu0 %v586
    %v636 = vpop.f32.mrb[0].mxu0
    %v637 = vadd.f32 0.0, %v636
    %v638 = vpop.f32.mrb[0].mxu0
    %v639 = vpop.f32.mrb[0].mxu0
    %v640 = vadd.f32 0.0, %v639
    %v641 = vpop.f32.mrb[0].mxu0
    %642 = vmatprep.mubr.bf16.mxu0 0
    %643 = vmatmul.mubr.bf16.gmra.mrb[0].mxu0 %v589
    %v644 = vpop.f32.mrb[0].mxu0
    %v645 = vadd.f32 0.0, %v644
    %v646 = vpop.f32.mrb[0].mxu0
    %v647 = vpop.f32.mrb[0].mxu0
    %v648 = vadd.f32 0.0, %v647
    %v649 = vpop.f32.mrb[0].mxu0
    %650 = vmatprep.mubr.bf16.mxu0 0
    %651 = vmatmul.mubr.bf16.gmra.mrb[0].mxu0 %v592
    %v652 = vpop.f32.mrb[0].mxu0
    %v653 = vadd.f32 0.0, %v652
    %v654 = vpop.f32.mrb[0].mxu0
    %v655 = vpop.f32.mrb[0].mxu0
    %v656 = vadd.f32 0.0, %v655
    %v657 = vpop.f32.mrb[0].mxu0
    %658 = vdwg.mxu0
    %v659 = vpack.c.bf16 %v632, %v629
    %v660 = vpack.c.bf16 %v640, %v637
    %v661 = vpack.c.bf16 %v648, %v645
    %v662 = vpack.c.bf16 %v656, %v653
    %v663 = vld [vmem:[%s1 + $0x18] sm:$0xf]
    %v664 = vld [vmem:[%s1 + $0x1c] sm:$0xf]
    %v665 = vld [vmem:[%s1 + $0x20] sm:$0xf]
    %v666 = vld [vmem:[%s1 + $0x24] sm:$0xf]
    %v667 = vld [vmem:[%s2 + $0x3] sm:$0x1]
    %v668 = vlaneseq
    %v669 = vshrl.u32 %v668, 7
    %v670 = vsub.s32 0, %v669
    %v671 = vrot.slane %v667, %v670
    %v676 = vunpack.c.l.b16 %v663
    %v677 = vunpack.c.l.b16 %v664
    %v678 = vunpack.c.l.b16 %v665
    %v679 = vunpack.c.l.b16 %v666
    %v680 = vpack.c.b16 %v677, %v676
    %v681 = vpack.c.b16 %v679, %v678
    %v685 = vsel %vm387, %v659, 0
    %v688 = vsel %vm387, %v660, 0
    %v691 = vsel %vm387, %v661, 0
    %v694 = vsel %vm387, %v662, 0
    %696 = vmatprep.subr.bf16.mxu0 0
    %697 = vmatpush1.bf16.msra.mxu0 %v680
    %698 = vmatprep.subr.bf16.mxu0 0
    %699 = vmatpush1.bf16.msra.mxu0 %v681
    %700 = vmatprep.subr.bf16.mxu0 0
    %701 = vmatpush1.bf16.msra.mxu0 0
    %702 = vmatprep.subr.bf16.mxu0 0
    %703 = vmatpush1.bf16.msra.mxu0 0
    %704 = vmatprep.subr.bf16.mxu0 0
    %705 = vmatpush1.bf16.msra.mxu0 0
    %706 = vmatprep.subr.bf16.mxu0 0
    %707 = vmatpush1.bf16.msra.mxu0 0
    %708 = vmatprep.subr.bf16.mxu0 0
    %709 = vmatpush1.bf16.msra.mxu0 0
    %710 = vmatprep.subr.bf16.mxu0 0
    %711 = vmatpush1.bf16.msra.mxu0 0
    %712 = vmatprep.subr.bf16.mxu0 0
    %713 = vmatpush1.bf16.msra.mxu0 0
    %714 = vmatprep.subr.bf16.mxu0 0
    %715 = vmatpush1.bf16.msra.mxu0 0
    %716 = vmatprep.subr.bf16.mxu0 0
    %717 = vmatpush1.bf16.msra.mxu0 0
    %718 = vmatprep.subr.bf16.mxu0 0
    %719 = vmatpush1.bf16.msra.mxu0 0
    %720 = vmatprep.subr.bf16.mxu0 0
    %721 = vmatpush1.bf16.msra.mxu0 0
    %722 = vmatprep.subr.bf16.mxu0 0
    %723 = vmatpush1.bf16.msra.mxu0 0
    %724 = vmatprep.subr.bf16.mxu0 0
    %725 = vmatpush1.bf16.msra.mxu0 0
    %726 = vmatprep.subr.bf16.mxu0 0
    %727 = vmatpush1.bf16.msra.mxu0 0
    %728 = vmatprep.mubr.bf16.mxu0 0
    %729 = vmatmul.mubr.bf16.gmra.mrb[0].mxu0 %v685
    %v730 = vpop.f32.mrb[0].mxu0
    %v731 = vadd.f32 %v671, %v730
    %v732 = vpop.f32.mrb[0].mxu0
    %v733 = vpop.f32.mrb[0].mxu0
    %v734 = vadd.f32 %v671, %v733
    %v735 = vpop.f32.mrb[0].mxu0
    %736 = vmatprep.mubr.bf16.mxu0 0
    %737 = vmatmul.mubr.bf16.gmra.mrb[0].mxu0 %v688
    %v738 = vpop.f32.mrb[0].mxu0
    %v739 = vadd.f32 %v671, %v738
    %v740 = vpop.f32.mrb[0].mxu0
    %v741 = vpop.f32.mrb[0].mxu0
    %v742 = vadd.f32 %v671, %v741
    %v743 = vpop.f32.mrb[0].mxu0
    %744 = vmatprep.mubr.bf16.mxu0 0
    %745 = vmatmul.mubr.bf16.gmra.mrb[0].mxu0 %v691
    %v746 = vpop.f32.mrb[0].mxu0
    %v747 = vadd.f32 %v671, %v746
    %v748 = vpop.f32.mrb[0].mxu0
    %v749 = vpop.f32.mrb[0].mxu0
    %v750 = vadd.f32 %v671, %v749
    %v751 = vpop.f32.mrb[0].mxu0
    %752 = vmatprep.mubr.bf16.mxu0 0
    %753 = vmatmul.mubr.bf16.gmra.mrb[0].mxu0 %v694
    %v754 = vpop.f32.mrb[0].mxu0
    %v755 = vadd.f32 %v671, %v754
    %v756 = vpop.f32.mrb[0].mxu0
    %v757 = vpop.f32.mrb[0].mxu0
    %v758 = vadd.f32 %v671, %v757
    %v759 = vpop.f32.mrb[0].mxu0
    %760 = vdwg.mxu0
    %v761 = vmax.f32 %v731, 0.0
    %v762 = vmax.f32 %v734, 0.0
    %v763 = vmax.f32 %v739, 0.0
    %v764 = vmax.f32 %v742, 0.0
    %v765 = vmax.f32 %v747, 0.0
    %v766 = vmax.f32 %v750, 0.0
    %v767 = vmax.f32 %v755, 0.0
    %v768 = vmax.f32 %v758, 0.0
    %v769 = vld [vmem:[%s1 + $0x28] sm:$0xf]
    %v770 = vld [vmem:[%s1 + $0x2c] sm:$0xf]
    %v771 = vld [vmem:[%s1 + $0x30] sm:$0xf]
    %v772 = vld [vmem:[%s1 + $0x34] sm:$0xf]
    %v773 = vld [vmem:[%s2 + $0x4] sm:$0x1]
    %v774 = vlaneseq
    %v775 = vshrl.u32 %v774, 7
    %v776 = vsub.s32 0, %v775
    %v777 = vrot.slane %v773, %v776
    %v782 = vunpack.c.l.b16 %v769
    %v783 = vunpack.c.l.b16 %v770
    %v784 = vunpack.c.l.b16 %v771
    %v785 = vunpack.c.l.b16 %v772
    %v786 = vpack.c.b16 %v783, %v782
    %v787 = vpack.c.b16 %v785, %v784
    %790 = vmatprep.subr.bf16.mxu0 0
    %791 = vmatpush1.bf16.msra.mxu0 %v786
    %792 = vmatprep.subr.bf16.mxu0 0
    %793 = vmatpush1.bf16.msra.mxu0 %v787
    %794 = vmatprep.subr.bf16.mxu0 0
    %795 = vmatpush1.bf16.msra.mxu0 0
    %796 = vmatprep.subr.bf16.mxu0 0
    %797 = vmatpush1.bf16.msra.mxu0 0
    %798 = vmatprep.subr.bf16.mxu0 0
    %799 = vmatpush1.bf16.msra.mxu0 0
    %800 = vmatprep.subr.bf16.mxu0 0
    %801 = vmatpush1.bf16.msra.mxu0 0
    %802 = vmatprep.subr.bf16.mxu0 0
    %803 = vmatpush1.bf16.msra.mxu0 0
    %804 = vmatprep.subr.bf16.mxu0 0
    %805 = vmatpush1.bf16.msra.mxu0 0
    %806 = vmatprep.subr.bf16.mxu0 0
    %807 = vmatpush1.bf16.msra.mxu0 0
    %808 = vmatprep.subr.bf16.mxu0 0
    %809 = vmatpush1.bf16.msra.mxu0 0
    %810 = vmatprep.subr.bf16.mxu0 0
    %811 = vmatpush1.bf16.msra.mxu0 0
    %812 = vmatprep.subr.bf16.mxu0 0
    %813 = vmatpush1.bf16.msra.mxu0 0
    %814 = vmatprep.subr.bf16.mxu0 0
    %815 = vmatpush1.bf16.msra.mxu0 0
    %816 = vmatprep.subr.bf16.mxu0 0
    %817 = vmatpush1.bf16.msra.mxu0 0
    %818 = vmatprep.subr.bf16.mxu0 0
    %819 = vmatpush1.bf16.msra.mxu0 0
    %820 = vmatprep.subr.bf16.mxu0 0
    %821 = vmatpush1.bf16.msra.mxu0 0
    %822 = vmatprep.mubr.bf16.mxu0 0
    %823 = vmatmul.mubr.bf16.gmra.mrb[0].mxu0 %v685
    %v824 = vpop.f32.mrb[0].mxu0
    %v825 = vadd.f32 %v777, %v824
    %v826 = vpop.f32.mrb[0].mxu0
    %v827 = vpop.f32.mrb[0].mxu0
    %v828 = vadd.f32 %v777, %v827
    %v829 = vpop.f32.mrb[0].mxu0
    %830 = vmatprep.mubr.bf16.mxu0 0
    %831 = vmatmul.mubr.bf16.gmra.mrb[0].mxu0 %v688
    %v832 = vpop.f32.mrb[0].mxu0
    %v833 = vadd.f32 %v777, %v832
    %v834 = vpop.f32.mrb[0].mxu0
    %v835 = vpop.f32.mrb[0].mxu0
    %v836 = vadd.f32 %v777, %v835
    %v837 = vpop.f32.mrb[0].mxu0
    %838 = vmatprep.mubr.bf16.mxu0 0
    %839 = vmatmul.mubr.bf16.gmra.mrb[0].mxu0 %v691
    %v840 = vpop.f32.mrb[0].mxu0
    %v841 = vadd.f32 %v777, %v840
    %v842 = vpop.f32.mrb[0].mxu0
    %v843 = vpop.f32.mrb[0].mxu0
    %v844 = vadd.f32 %v777, %v843
    %v845 = vpop.f32.mrb[0].mxu0
    %846 = vmatprep.mubr.bf16.mxu0 0
    %847 = vmatmul.mubr.bf16.gmra.mrb[0].mxu0 %v694
    %v848 = vpop.f32.mrb[0].mxu0
    %v849 = vadd.f32 %v777, %v848
    %v850 = vpop.f32.mrb[0].mxu0
    %v851 = vpop.f32.mrb[0].mxu0
    %v852 = vadd.f32 %v777, %v851
    %v853 = vpop.f32.mrb[0].mxu0
    %854 = vdwg.mxu0
    %v855 = vmax.f32 %v825, 0.0
    %v856 = vmax.f32 %v828, 0.0
    %v857 = vmax.f32 %v833, 0.0
    %v858 = vmax.f32 %v836, 0.0
    %v859 = vmax.f32 %v841, 0.0
    %v860 = vmax.f32 %v844, 0.0
    %v861 = vmax.f32 %v849, 0.0
    %v862 = vmax.f32 %v852, 0.0
    %v863 = vmul.f32 %v349, 4.0
    %v864 = vsub.f32 %v330, %v863
    %v865 = vmul.f32 %v358, 4.0
    %v866 = vsub.f32 %v340, %v865
    %v867 = vmul.f32 %v349, 32.0
    %v868 = vsub.f32 %v340, %v867
    %vm869 = vcmp.eq.f32.partialorder %v864, %v866
    %vm870 = vcmp.ge.f32.partialorder %v868, 0.0
    %vm871 = vmand %vm869, %vm870
    %vm872 = vcmp.lt.f32.partialorder %v868, 32.0
    %vm873 = vmand %vm871, %vm872
    %v874 = vsel %vm873, 0.125, 0.0
    %v876 = vsel %vm481, %v874, 0
    %878 = vmatprep.subr.mxu0 0.0
    %879 = vmatpush1.msra.mxu0 %v761
    %880 = vmatprep.subr.mxu0 0.0
    %881 = vmatpush1.msra.mxu0 %v762
    %882 = vmatprep.subr.mxu0 0.0
    %883 = vmatpush1.msra.mxu0 %v763
    %884 = vmatprep.subr.mxu0 0.0
    %885 = vmatpush1.msra.mxu0 %v764
    %886 = vmatprep.subr.mxu0 0.0
    %887 = vmatpush1.msra.mxu0 %v765
    %888 = vmatprep.subr.mxu0 0.0
    %889 = vmatpush1.msra.mxu0 %v766
    %890 = vmatprep.subr.mxu0 0.0
    %891 = vmatpush1.msra.mxu0 %v767
    %892 = vmatprep.subr.mxu0 0.0
    %893 = vmatpush1.msra.mxu0 %v768
    %894 = vmatprep.subr.mxu0 0.0
    %895 = vmatpush1.msra.mxu0 0.0
    %896 = vmatprep.subr.mxu0 0.0
    %897 = vmatpush1.msra.mxu0 0.0
    %898 = vmatprep.subr.mxu0 0.0
    %899 = vmatpush1.msra.mxu0 0.0
    %900 = vmatprep.subr.mxu0 0.0
    %901 = vmatpush1.msra.mxu0 0.0
    %902 = vmatprep.subr.mxu0 0.0
    %903 = vmatpush1.msra.mxu0 0.0
    %904 = vmatprep.subr.mxu0 0.0
    %905 = vmatpush1.msra.mxu0 0.0
    %906 = vmatprep.subr.mxu0 0.0
    %907 = vmatpush1.msra.mxu0 0.0
    %908 = vmatprep.subr.mxu0 0.0
    %909 = vmatpush1.msra.mxu0 0.0
    %910 = vmatprep.subr.mxu0 0.0
    %911 = vmatpush1.msra.mxu0 0.0
    %912 = vmatprep.subr.mxu0 0.0
    %913 = vmatpush1.msra.mxu0 0.0
    %914 = vmatprep.subr.mxu0 0.0
    %915 = vmatpush1.msra.mxu0 0.0
    %916 = vmatprep.subr.mxu0 0.0
    %917 = vmatpush1.msra.mxu0 0.0
    %918 = vmatprep.subr.mxu0 0.0
    %919 = vmatpush1.msra.mxu0 0.0
    %920 = vmatprep.subr.mxu0 0.0
    %921 = vmatpush1.msra.mxu0 0.0
    %922 = vmatprep.subr.mxu0 0.0
    %923 = vmatpush1.msra.mxu0 0.0
    %924 = vmatprep.subr.mxu0 0.0
    %925 = vmatpush1.msra.mxu0 0.0
    %926 = vmatprep.subr.mxu0 0.0
    %927 = vmatpush1.msra.mxu0 0.0
    %928 = vmatprep.subr.mxu0 0.0
    %929 = vmatpush1.msra.mxu0 0.0
    %930 = vmatprep.subr.mxu0 0.0
    %931 = vmatpush1.msra.mxu0 0.0
    %932 = vmatprep.subr.mxu0 0.0
    %933 = vmatpush1.msra.mxu0 0.0
    %934 = vmatprep.subr.mxu0 0.0
    %935 = vmatpush1.msra.mxu0 0.0
    %936 = vmatprep.subr.mxu0 0.0
    %937 = vmatpush1.msra.mxu0 0.0
    %938 = vmatprep.subr.mxu0 0.0
    %939 = vmatpush1.msra.mxu0 0.0
    %940 = vmatprep.subr.mxu0 0.0
    %941 = vmatpush1.msra.mxu0 0.0
    %942 = vmatprep.mubr.f32.mxu0 0.0
    %943 = vmatmul.mubr.f32.gmra.mrb[0].mxu0 %v876
    %v944 = vpop.f32.mrb[0].mxu0
    %v945 = vadd.f32 0.0, %v944
    %v946 = vpop.f32.mrb[0].mxu0
    %947 = vdwg.mxu0
    %948 = vmatprep.subr.mxu0 0.0
    %949 = vmatpush1.msra.mxu0 %v855
    %950 = vmatprep.subr.mxu0 0.0
    %951 = vmatpush1.msra.mxu0 %v856
    %952 = vmatprep.subr.mxu0 0.0
    %953 = vmatpush1.msra.mxu0 %v857
    %954 = vmatprep.subr.mxu0 0.0
    %955 = vmatpush1.msra.mxu0 %v858
    %956 = vmatprep.subr.mxu0 0.0
    %957 = vmatpush1.msra.mxu0 %v859
    %958 = vmatprep.subr.mxu0 0.0
    %959 = vmatpush1.msra.mxu0 %v860
    %960 = vmatprep.subr.mxu0 0.0
    %961 = vmatpush1.msra.mxu0 %v861
    %962 = vmatprep.subr.mxu0 0.0
    %963 = vmatpush1.msra.mxu0 %v862
    %964 = vmatprep.subr.mxu0 0.0
    %965 = vmatpush1.msra.mxu0 0.0
    %966 = vmatprep.subr.mxu0 0.0
    %967 = vmatpush1.msra.mxu0 0.0
    %968 = vmatprep.subr.mxu0 0.0
    %969 = vmatpush1.msra.mxu0 0.0
    %970 = vmatprep.subr.mxu0 0.0
    %971 = vmatpush1.msra.mxu0 0.0
    %972 = vmatprep.subr.mxu0 0.0
    %973 = vmatpush1.msra.mxu0 0.0
    %974 = vmatprep.subr.mxu0 0.0
    %975 = vmatpush1.msra.mxu0 0.0
    %976 = vmatprep.subr.mxu0 0.0
    %977 = vmatpush1.msra.mxu0 0.0
    %978 = vmatprep.subr.mxu0 0.0
    %979 = vmatpush1.msra.mxu0 0.0
    %980 = vmatprep.subr.mxu0 0.0
    %981 = vmatpush1.msra.mxu0 0.0
    %982 = vmatprep.subr.mxu0 0.0
    %983 = vmatpush1.msra.mxu0 0.0
    %984 = vmatprep.subr.mxu0 0.0
    %985 = vmatpush1.msra.mxu0 0.0
    %986 = vmatprep.subr.mxu0 0.0
    %987 = vmatpush1.msra.mxu0 0.0
    %988 = vmatprep.subr.mxu0 0.0
    %989 = vmatpush1.msra.mxu0 0.0
    %990 = vmatprep.subr.mxu0 0.0
    %991 = vmatpush1.msra.mxu0 0.0
    %992 = vmatprep.subr.mxu0 0.0
    %993 = vmatpush1.msra.mxu0 0.0
    %994 = vmatprep.subr.mxu0 0.0
    %995 = vmatpush1.msra.mxu0 0.0
    %996 = vmatprep.subr.mxu0 0.0
    %997 = vmatpush1.msra.mxu0 0.0
    %998 = vmatprep.subr.mxu0 0.0
    %999 = vmatpush1.msra.mxu0 0.0
    %1000 = vmatprep.subr.mxu0 0.0
    %1001 = vmatpush1.msra.mxu0 0.0
    %1002 = vmatprep.subr.mxu0 0.0
    %1003 = vmatpush1.msra.mxu0 0.0
    %1004 = vmatprep.subr.mxu0 0.0
    %1005 = vmatpush1.msra.mxu0 0.0
    %1006 = vmatprep.subr.mxu0 0.0
    %1007 = vmatpush1.msra.mxu0 0.0
    %1008 = vmatprep.subr.mxu0 0.0
    %1009 = vmatpush1.msra.mxu0 0.0
    %1010 = vmatprep.subr.mxu0 0.0
    %1011 = vmatpush1.msra.mxu0 0.0
    %1012 = vmatprep.mubr.f32.mxu0 0.0
    %1013 = vmatmul.mubr.f32.gmra.mrb[0].mxu0 %v876
    %v1014 = vpop.f32.mrb[0].mxu0
    %v1015 = vadd.f32 0.0, %v1014
    %v1016 = vpop.f32.mrb[0].mxu0
    %1017 = vdwg.mxu0
    %v1018 = vpack.c.bf16 %v945, %v945
    %v1019 = vld [vmem:[%s1 + $0x38] sm:$0xf]
    %v1020 = vld [vmem:[%s1 + $0x3c] sm:$0xf]
    %v1021 = vpack.c.bf16 %v1015, %v1015
    %v1022 = vld [vmem:[%s1 + $0x40] sm:$0xf]
    %v1023 = vld [vmem:[%s1 + $0x44] sm:$0xf]
    %v1026 = vunpack.c.l.b16 %v1022
    %v1027 = vunpack.c.l.b16 %v1023
    %v1028 = vpack.c.b16 %v1027, %v1026
    %v1031 = vsel %vm141, %v1021, 0
    %1033 = vmatprep.subr.bf16.mxu0 0
    %1034 = vmatpush1.bf16.msra.mxu0 %v1028
    %1035 = vmatprep.subr.bf16.mxu0 0
    %1036 = vmatpush1.bf16.msra.mxu0 0
    %1037 = vmatprep.subr.bf16.mxu0 0
    %1038 = vmatpush1.bf16.msra.mxu0 0
    %1039 = vmatprep.subr.bf16.mxu0 0
    %1040 = vmatpush1.bf16.msra.mxu0 0
    %1041 = vmatprep.subr.bf16.mxu0 0
    %1042 = vmatpush1.bf16.msra.mxu0 0
    %1043 = vmatprep.subr.bf16.mxu0 0
    %1044 = vmatpush1.bf16.msra.mxu0 0
    %1045 = vmatprep.subr.bf16.mxu0 0
    %1046 = vmatpush1.bf16.msra.mxu0 0
    %1047 = vmatprep.subr.bf16.mxu0 0
    %1048 = vmatpush1.bf16.msra.mxu0 0
    %1049 = vmatprep.subr.bf16.mxu0 0
    %1050 = vmatpush1.bf16.msra.mxu0 0
    %1051 = vmatprep.subr.bf16.mxu0 0
    %1052 = vmatpush1.bf16.msra.mxu0 0
    %1053 = vmatprep.subr.bf16.mxu0 0
    %1054 = vmatpush1.bf16.msra.mxu0 0
    %1055 = vmatprep.subr.bf16.mxu0 0
    %1056 = vmatpush1.bf16.msra.mxu0 0
    %1057 = vmatprep.subr.bf16.mxu0 0
    %1058 = vmatpush1.bf16.msra.mxu0 0
    %1059 = vmatprep.subr.bf16.mxu0 0
    %1060 = vmatpush1.bf16.msra.mxu0 0
    %1061 = vmatprep.subr.bf16.mxu0 0
    %1062 = vmatpush1.bf16.msra.mxu0 0
    %1063 = vmatprep.subr.bf16.mxu0 0
    %1064 = vmatpush1.bf16.msra.mxu0 0
    %1065 = vmatprep.mubr.bf16.mxu0 0
    %1066 = vmatmul.mubr.bf16.gmra.mrb[0].mxu0 %v1031
    %v1067 = vpop.f32.mrb[0].mxu0
    %v1068 = vadd.f32 0.0, %v1067
    %v1069 = vpop.f32.mrb[0].mxu0
    %v1070 = vpop.f32.mrb[0].mxu0
    %v1071 = vpop.f32.mrb[0].mxu0
    %1072 = vdwg.mxu0
    %v1075 = vunpack.c.l.b16 %v1019
    %v1076 = vunpack.c.l.b16 %v1020
    %v1077 = vpack.c.b16 %v1076, %v1075
    %v1080 = vsel %vm141, %v1018, 0
    %1082 = vmatprep.subr.bf16.mxu0 0
    %1083 = vmatpush1.bf16.msra.mxu0 %v1077
    %1084 = vmatprep.subr.bf16.mxu0 0
    %1085 = vmatpush1.bf16.msra.mxu0 0
    %1086 = vmatprep.subr.bf16.mxu0 0
    %1087 = vmatpush1.bf16.msra.mxu0 0
    %1088 = vmatprep.subr.bf16.mxu0 0
    %1089 = vmatpush1.bf16.msra.mxu0 0
    %1090 = vmatprep.subr.bf16.mxu0 0
    %1091 = vmatpush1.bf16.msra.mxu0 0
    %1092 = vmatprep.subr.bf16.mxu0 0
    %1093 = vmatpush1.bf16.msra.mxu0 0
    %1094 = vmatprep.subr.bf16.mxu0 0
    %1095 = vmatpush1.bf16.msra.mxu0 0
    %1096 = vmatprep.subr.bf16.mxu0 0
    %1097 = vmatpush1.bf16.msra.mxu0 0
    %1098 = vmatprep.subr.bf16.mxu0 0
    %1099 = vmatpush1.bf16.msra.mxu0 0
    %1100 = vmatprep.subr.bf16.mxu0 0
    %1101 = vmatpush1.bf16.msra.mxu0 0
    %1102 = vmatprep.subr.bf16.mxu0 0
    %1103 = vmatpush1.bf16.msra.mxu0 0
    %1104 = vmatprep.subr.bf16.mxu0 0
    %1105 = vmatpush1.bf16.msra.mxu0 0
    %1106 = vmatprep.subr.bf16.mxu0 0
    %1107 = vmatpush1.bf16.msra.mxu0 0
    %1108 = vmatprep.subr.bf16.mxu0 0
    %1109 = vmatpush1.bf16.msra.mxu0 0
    %1110 = vmatprep.subr.bf16.mxu0 0
    %1111 = vmatpush1.bf16.msra.mxu0 0
    %1112 = vmatprep.subr.bf16.mxu0 0
    %1113 = vmatpush1.bf16.msra.mxu0 0
    %1114 = vmatprep.mubr.bf16.mxu0 0
    %1115 = vmatmul.mubr.bf16.gmra.mrb[0].mxu0 %v1080
    %v1116 = vpop.f32.mrb[0].mxu0
    %v1117 = vadd.f32 %v1068, %v1116
    %v1118 = vpop.f32.mrb[0].mxu0
    %v1119 = vpop.f32.mrb[0].mxu0
    %v1120 = vpop.f32.mrb[0].mxu0
    %1121 = vdwg.mxu0
    %v1122 = vld [vmem:[%s2 + $0x5] sm:$0x1]
    %v1123 = vlaneseq
    %v1124 = vshrl.u32 %v1123, 7
    %v1125 = vsub.s32 0, %v1124
    %v1126 = vrot.slane %v1122, %v1125
    %v1127 = vadd.f32 %v1117, %v1126
    %v1128 = vmax.f32 %v1127, 0.0
    %v1129 = vpack.c.bf16 %v1128, %v1128
    %v1130 = vld [vmem:[%s1 + $0x48] sm:$0xf]
    %v1131 = vld [vmem:[%s1 + $0x4c] sm:$0xf]
    %v1132 = vld [vmem:[%s1 + $0x50] sm:$0xf]
    %v1133 = vld [vmem:[%s1 + $0x54] sm:$0xf]
    %v1134 = vld [vmem:[%s2 + $0x6] sm:$0x1]
    %v1135 = vlaneseq
    %v1136 = vshrl.u32 %v1135, 7
    %v1137 = vsub.s32 0, %v1136
    %v1138 = vrot.slane %v1134, %v1137
    %v1143 = vunpack.c.l.b16 %v1130
    %v1144 = vunpack.c.l.b16 %v1131
    %v1145 = vunpack.c.l.b16 %v1132
    %v1146 = vunpack.c.l.b16 %v1133
    %v1147 = vpack.c.b16 %v1144, %v1143
    %v1148 = vpack.c.b16 %v1146, %v1145
    %v1152 = vsel %vm387, %v1129, 0
    %1154 = vmatprep.subr.bf16.mxu0 0
    %1155 = vmatpush1.bf16.msra.mxu0 %v1147
    %1156 = vmatprep.subr.bf16.mxu0 0
    %1157 = vmatpush1.bf16.msra.mxu0 %v1148
    %1158 = vmatprep.subr.bf16.mxu0 0
    %1159 = vmatpush1.bf16.msra.mxu0 0
    %1160 = vmatprep.subr.bf16.mxu0 0
    %1161 = vmatpush1.bf16.msra.mxu0 0
    %1162 = vmatprep.subr.bf16.mxu0 0
    %1163 = vmatpush1.bf16.msra.mxu0 0
    %1164 = vmatprep.subr.bf16.mxu0 0
    %1165 = vmatpush1.bf16.msra.mxu0 0
    %1166 = vmatprep.subr.bf16.mxu0 0
    %1167 = vmatpush1.bf16.msra.mxu0 0
    %1168 = vmatprep.subr.bf16.mxu0 0
    %1169 = vmatpush1.bf16.msra.mxu0 0
    %1170 = vmatprep.subr.bf16.mxu0 0
    %1171 = vmatpush1.bf16.msra.mxu0 0
    %1172 = vmatprep.subr.bf16.mxu0 0
    %1173 = vmatpush1.bf16.msra.mxu0 0
    %1174 = vmatprep.subr.bf16.mxu0 0
    %1175 = vmatpush1.bf16.msra.mxu0 0
    %1176 = vmatprep.subr.bf16.mxu0 0
    %1177 = vmatpush1.bf16.msra.mxu0 0
    %1178 = vmatprep.subr.bf16.mxu0 0
    %1179 = vmatpush1.bf16.msra.mxu0 0
    %1180 = vmatprep.subr.bf16.mxu0 0
    %1181 = vmatpush1.bf16.msra.mxu0 0
    %1182 = vmatprep.subr.bf16.mxu0 0
    %1183 = vmatpush1.bf16.msra.mxu0 0
    %1184 = vmatprep.subr.bf16.mxu0 0
    %1185 = vmatpush1.bf16.msra.mxu0 0
    %1186 = vmatprep.mubr.bf16.mxu0 0
    %1187 = vmatmul.mubr.bf16.gmra.mrb[0].mxu0 %v1152
    %v1188 = vpop.f32.mrb[0].mxu0
    %v1189 = vadd.f32 %v1138, %v1188
    %v1190 = vpop.f32.mrb[0].mxu0
    %v1191 = vpop.f32.mrb[0].mxu0
    %v1192 = vpop.f32.mrb[0].mxu0
    %1193 = vdwg.mxu0
    %v1194 = vmax.f32 %v1189, 0.0
    %v1195 = vpack.c.bf16 %v1194, %v1194
    %v1196 = vld [vmem:[%s1 + $0x58] sm:$0xf]
    %v1197 = vld [vmem:[%s2 + $0x7] sm:$0x1]
    %v1198 = vlaneseq
    %v1199 = vshrl.u32 %v1198, 7
    %v1200 = vsub.s32 0, %v1199
    %v1201 = vrot.slane %v1197, %v1200
    %vm1202 = vcmask 64512
    %v1204 = vsel %vm1202, %v1195, 0
    %vm1206 = vcmask 1043456
    %v1208 = vsel %vm1206, %v1196, 0
    %1210 = vmatprep.subr.bf16.mxu0 0
    %1211 = vmatpush1.bf16.msra.mxu0 %v1208
    %1212 = vmatprep.subr.bf16.mxu0 0
    %1213 = vmatpush1.bf16.msra.mxu0 0
    %1214 = vmatprep.subr.bf16.mxu0 0
    %1215 = vmatpush1.bf16.msra.mxu0 0
    %1216 = vmatprep.subr.bf16.mxu0 0
    %1217 = vmatpush1.bf16.msra.mxu0 0
    %1218 = vmatprep.subr.bf16.mxu0 0
    %1219 = vmatpush1.bf16.msra.mxu0 0
    %1220 = vmatprep.subr.bf16.mxu0 0
    %1221 = vmatpush1.bf16.msra.mxu0 0
    %1222 = vmatprep.subr.bf16.mxu0 0
    %1223 = vmatpush1.bf16.msra.mxu0 0
    %1224 = vmatprep.subr.bf16.mxu0 0
    %1225 = vmatpush1.bf16.msra.mxu0 0
    %1226 = vmatprep.subr.bf16.mxu0 0
    %1227 = vmatpush1.bf16.msra.mxu0 0
    %1228 = vmatprep.subr.bf16.mxu0 0
    %1229 = vmatpush1.bf16.msra.mxu0 0
    %1230 = vmatprep.subr.bf16.mxu0 0
    %1231 = vmatpush1.bf16.msra.mxu0 0
    %1232 = vmatprep.subr.bf16.mxu0 0
    %1233 = vmatpush1.bf16.msra.mxu0 0
    %1234 = vmatprep.subr.bf16.mxu0 0
    %1235 = vmatpush1.bf16.msra.mxu0 0
    %1236 = vmatprep.subr.bf16.mxu0 0
    %1237 = vmatpush1.bf16.msra.mxu0 0
    %1238 = vmatprep.subr.bf16.mxu0 0
    %1239 = vmatpush1.bf16.msra.mxu0 0
    %1240 = vmatprep.subr.bf16.mxu0 0
    %1241 = vmatpush1.bf16.msra.mxu0 0
    %1242 = vmatprep.mubr.bf16.mxu0 0
    %1243 = vmatmul.mubr.bf16.gmra.mrb[0].mxu0 %v1204
    %v1244 = vpop.f32.mrb[0].mxu0
    %v1245 = vadd.f32 %v1201, %v1244
    %v1246 = vpop.f32.mrb[0].mxu0
    %v1247 = vpop.f32.mrb[0].mxu0
    %v1248 = vpop.f32.mrb[0].mxu0
    %1249 = vdwg.mxu0
    %1250 = vst.msk [vmem:[#allocation2] sm:$0xff] %vm141, %v1245
    // Predicated region
    $region14: #{branch_5_fun.2} parent=1 // pred_check
      _
    $region15: #{branch_5_fun.2} parent=1 // pred_check_branch
      %1252 = sbr.rel (0) target = $region17
    $region16: #{branch_5_fun.2} parent=1 // pred_region
      %s1254 = ssub.s32 128, 128
      %1255 = vsyncadd [#allocation3], %s1254
      %s1257 = sshll.u32 [#allocation2], 4
      %s1258 = int_to_ptr.vmem [resolvable:$true] %s1257
      %1260 = dma.vmem_to_hbm [thread:$0]  %s1258, 128, %s3, [#allocation3]
    $region17: #{branch_5_fun.2} parent=1 // pred_fallthru
      _
    // Predicated region
    $region18: #{branch_5_fun.2} parent=1 // pred_check
      _
    $region19: #{branch_5_fun.2} parent=1 // pred_check_branch
      %1262 = sbr.rel (0) target = $region21
    $region20: #{branch_5_fun.2} parent=1 // pred_region
      %1263 = dma.done [#allocation3], 128
    $region21: #{branch_5_fun.2} parent=1 // pred_fallthru
      _
    %1264 = vsyncpa [#allocation3], 1

// kernel: branch_0_fun.3
$region0: #{branch_0_fun.3}
  #allocation0 [shape = 'u32[]', space=smem, size = 0x4, offset = 0x4, fixed_abs, tag = 'smem constant byte address 0x4 - core index']
  #allocation1 [shape = 'u32[144,128]{1,0:T(1,128)}', space=vmem, size = 0x12000, scoped, tag = 'internal scratch']
  %s0 = inlined_call_operand.vmem [shape: f32[8,16], index: 0, kind: input, shape index: {}]
  %s1 = inlined_call_operand.vmem [shape: bf16[416,128], index: 1, kind: input, shape index: {}]
  %s2 = inlined_call_operand.vmem [shape: f32[8,128], index: 2, kind: input, shape index: {}]
  %s3 = inlined_call_operand.hbm [shape: f32[8,16], index: 3, kind: output, shape index: {}]
  %s4 = sld [smem:[#allocation0]]
  $region22: #{branch_0_fun.3} parent=0
    _
  %s6 = ssub.s32 1, %s4
  %s7 = scalar_select 0, %s6, %s4
  $region1: #{branch_0_fun.3} parent=0
    #allocation2 [shape = 'u8[4096]{0}', space=vmem, size = 0x1000, scoped, tag = 'output window, operand 0, single buffered']
    #allocation3 [shape = 's32[1]{0}', space=sflag, size = 0x4, scoped, tag = 'scoped memory for branch_0_fun.3']
    %8 = vsyncpa [#allocation3], 0
    // Predicated region
    $region2: #{branch_0_fun.3} parent=1 // pred_check
      _
    $region3: #{branch_0_fun.3} parent=1 // pred_check_branch
      %10 = sbr.rel (0) target = $region5
    $region4: #{branch_0_fun.3} parent=1 // pred_region
      _
    $region5: #{branch_0_fun.3} parent=1 // pred_fallthru
      _
    // Predicated region
    $region6: #{branch_0_fun.3} parent=1 // pred_check
      _
    $region7: #{branch_0_fun.3} parent=1 // pred_check_branch
      %12 = sbr.rel (0) target = $region9
    $region8: #{branch_0_fun.3} parent=1 // pred_region
      _
    $region9: #{branch_0_fun.3} parent=1 // pred_fallthru
      _
    // Predicated region
    $region10: #{branch_0_fun.3} parent=1 // pred_check
      _
    $region11: #{branch_0_fun.3} parent=1 // pred_check_branch
      %14 = sbr.rel (0) target = $region13
    $region12: #{branch_0_fun.3} parent=1 // pred_region
      _
    $region13: #{branch_0_fun.3} parent=1 // pred_fallthru
      _
    %v16 = vld [vmem:[%s0] sm:$0xff]
    %v17 = vpack.c.bf16 %v16, %v16
    %v18 = vld [vmem:[%s1] sm:$0xf]
    %v19 = vld [vmem:[%s1 + $0x4] sm:$0xf]
    %v20 = vld [vmem:[%s2] sm:$0x1]
    %v21 = vlaneseq
    %v22 = vshrl.u32 %v21, 7
    %v23 = vsub.s32 0, %v22
    %v24 = vrot.slane %v20, %v23
    %v27 = vunpack.c.l.b16 %v18
    %v28 = vunpack.c.l.b16 %v19
    %v29 = vpack.c.b16 %v28, %v27
    %vm31 = vcmask 130048
    %v33 = vsel %vm31, %v17, 0
    %35 = vmatprep.subr.bf16.mxu0 0
    %36 = vmatpush1.bf16.msra.mxu0 %v29
    %37 = vmatprep.subr.bf16.mxu0 0
    %38 = vmatpush1.bf16.msra.mxu0 0
    %39 = vmatprep.subr.bf16.mxu0 0
    %40 = vmatpush1.bf16.msra.mxu0 0
    %41 = vmatprep.subr.bf16.mxu0 0
    %42 = vmatpush1.bf16.msra.mxu0 0
    %43 = vmatprep.subr.bf16.mxu0 0
    %44 = vmatpush1.bf16.msra.mxu0 0
    %45 = vmatprep.subr.bf16.mxu0 0
    %46 = vmatpush1.bf16.msra.mxu0 0
    %47 = vmatprep.subr.bf16.mxu0 0
    %48 = vmatpush1.bf16.msra.mxu0 0
    %49 = vmatprep.subr.bf16.mxu0 0
    %50 = vmatpush1.bf16.msra.mxu0 0
    %51 = vmatprep.subr.bf16.mxu0 0
    %52 = vmatpush1.bf16.msra.mxu0 0
    %53 = vmatprep.subr.bf16.mxu0 0
    %54 = vmatpush1.bf16.msra.mxu0 0
    %55 = vmatprep.subr.bf16.mxu0 0
    %56 = vmatpush1.bf16.msra.mxu0 0
    %57 = vmatprep.subr.bf16.mxu0 0
    %58 = vmatpush1.bf16.msra.mxu0 0
    %59 = vmatprep.subr.bf16.mxu0 0
    %60 = vmatpush1.bf16.msra.mxu0 0
    %61 = vmatprep.subr.bf16.mxu0 0
    %62 = vmatpush1.bf16.msra.mxu0 0
    %63 = vmatprep.subr.bf16.mxu0 0
    %64 = vmatpush1.bf16.msra.mxu0 0
    %65 = vmatprep.subr.bf16.mxu0 0
    %66 = vmatpush1.bf16.msra.mxu0 0
    %67 = vmatprep.mubr.bf16.mxu0 0
    %68 = vmatmul.mubr.bf16.gmra.mrb[0].mxu0 %v33
    %v69 = vpop.f32.mrb[0].mxu0
    %v70 = vadd.f32 %v24, %v69
    %v71 = vpop.f32.mrb[0].mxu0
    %v72 = vpop.f32.mrb[0].mxu0
    %v73 = vpop.f32.mrb[0].mxu0
    %74 = vdwg.mxu0
    %v75 = vmax.f32 %v70, 0.0
    %v76 = vpack.c.bf16 %v75, %v75
    %v77 = vld [vmem:[%s1 + $0x8] sm:$0xf]
    %v78 = vld [vmem:[%s1 + $0xc] sm:$0xf]
    %v79 = vld [vmem:[%s1 + $0x10] sm:$0xf]
    %v80 = vld [vmem:[%s1 + $0x14] sm:$0xf]
    %v81 = vld [vmem:[%s1 + $0x18] sm:$0xf]
    %v82 = vld [vmem:[%s1 + $0x1c] sm:$0xf]
    %v83 = vld [vmem:[%s1 + $0x20] sm:$0xf]
    %v84 = vld [vmem:[%s1 + $0x24] sm:$0xf]
    %v85 = vld [vmem:[%s1 + $0x28] sm:$0xf]
    %v86 = vld [vmem:[%s1 + $0x2c] sm:$0xf]
    %v87 = vld [vmem:[%s1 + $0x30] sm:$0xf]
    %v88 = vld [vmem:[%s1 + $0x34] sm:$0xf]
    %v89 = vld [vmem:[%s1 + $0x38] sm:$0xf]
    %v90 = vld [vmem:[%s1 + $0x3c] sm:$0xf]
    %v91 = vld [vmem:[%s1 + $0x40] sm:$0xf]
    %v92 = vld [vmem:[%s1 + $0x44] sm:$0xf]
    %v93 = vld [vmem:[%s2 + $0x1] sm:$0x1]
    %v94 = vlaneseq
    %v95 = vshrl.u32 %v94, 7
    %v96 = vsub.s32 0, %v95
    %v97 = vrot.slane %v93, %v96
    %v114 = vunpack.c.l.b16 %v77
    %v115 = vunpack.c.l.b16 %v78
    %v116 = vunpack.c.l.b16 %v79
    %v117 = vunpack.c.l.b16 %v80
    %v118 = vunpack.c.l.b16 %v81
    %v119 = vunpack.c.l.b16 %v82
    %v120 = vunpack.c.l.b16 %v83
    %v121 = vunpack.c.l.b16 %v84
    %v122 = vunpack.c.l.b16 %v85
    %v123 = vunpack.c.l.b16 %v86
    %v124 = vunpack.c.l.b16 %v87
    %v125 = vunpack.c.l.b16 %v88
    %v126 = vunpack.c.l.b16 %v89
    %v127 = vunpack.c.l.b16 %v90
    %v128 = vunpack.c.l.b16 %v91
    %v129 = vunpack.c.l.b16 %v92
    %v130 = vpack.c.b16 %v115, %v114
    %v131 = vpack.c.b16 %v117, %v116
    %v132 = vpack.c.b16 %v119, %v118
    %v133 = vpack.c.b16 %v121, %v120
    %v134 = vpack.c.b16 %v123, %v122
    %v135 = vpack.c.b16 %v125, %v124
    %v136 = vpack.c.b16 %v127, %v126
    %v137 = vpack.c.b16 %v129, %v128
    %146 = vmatprep.subr.bf16.mxu0 0
    %147 = vmatpush1.bf16.msra.mxu0 %v130
    %148 = vmatprep.subr.bf16.mxu0 0
    %149 = vmatpush1.bf16.msra.mxu0 %v131
    %150 = vmatprep.subr.bf16.mxu0 0
    %151 = vmatpush1.bf16.msra.mxu0 %v132
    %152 = vmatprep.subr.bf16.mxu0 0
    %153 = vmatpush1.bf16.msra.mxu0 %v133
    %154 = vmatprep.subr.bf16.mxu0 0
    %155 = vmatpush1.bf16.msra.mxu0 %v134
    %156 = vmatprep.subr.bf16.mxu0 0
    %157 = vmatpush1.bf16.msra.mxu0 %v135
    %158 = vmatprep.subr.bf16.mxu0 0
    %159 = vmatpush1.bf16.msra.mxu0 %v136
    %160 = vmatprep.subr.bf16.mxu0 0
    %161 = vmatpush1.bf16.msra.mxu0 %v137
    %162 = vmatprep.subr.bf16.mxu0 0
    %163 = vmatpush1.bf16.msra.mxu0 0
    %164 = vmatprep.subr.bf16.mxu0 0
    %165 = vmatpush1.bf16.msra.mxu0 0
    %166 = vmatprep.subr.bf16.mxu0 0
    %167 = vmatpush1.bf16.msra.mxu0 0
    %168 = vmatprep.subr.bf16.mxu0 0
    %169 = vmatpush1.bf16.msra.mxu0 0
    %170 = vmatprep.subr.bf16.mxu0 0
    %171 = vmatpush1.bf16.msra.mxu0 0
    %172 = vmatprep.subr.bf16.mxu0 0
    %173 = vmatpush1.bf16.msra.mxu0 0
    %174 = vmatprep.subr.bf16.mxu0 0
    %175 = vmatpush1.bf16.msra.mxu0 0
    %176 = vmatprep.subr.bf16.mxu0 0
    %177 = vmatpush1.bf16.msra.mxu0 0
    %178 = vmatprep.mubr.bf16.mxu0 0
    %179 = vmatmul.mubr.bf16.gmra.mrb[0].mxu0 %v76
    %v180 = vpop.f32.mrb[0].mxu0
    %v181 = vadd.f32 %v97, %v180
    %v182 = vpop.f32.mrb[0].mxu0
    %v183 = vpop.f32.mrb[0].mxu0
    %v184 = vpop.f32.mrb[0].mxu0
    %185 = vdwg.mxu0
    %v186 = vmax.f32 %v181, 0.0
    %v187 = vpack.c.bf16 %v186, %v186
    %v188 = vld [vmem:[%s1 + $0x48] sm:$0xf]
    %v189 = vld [vmem:[%s1 + $0x4c] sm:$0xf]
    %v190 = vld [vmem:[%s1 + $0x50] sm:$0xf]
    %v191 = vld [vmem:[%s1 + $0x54] sm:$0xf]
    %v192 = vld [vmem:[%s1 + $0x58] sm:$0xf]
    %v193 = vld [vmem:[%s1 + $0x5c] sm:$0xf]
    %v194 = vld [vmem:[%s1 + $0x60] sm:$0xf]
    %v195 = vld [vmem:[%s1 + $0x64] sm:$0xf]
    %v196 = vld [vmem:[%s1 + $0x68] sm:$0xf]
    %v197 = vld [vmem:[%s1 + $0x6c] sm:$0xf]
    %v198 = vld [vmem:[%s1 + $0x70] sm:$0xf]
    %v199 = vld [vmem:[%s1 + $0x74] sm:$0xf]
    %v200 = vld [vmem:[%s1 + $0x78] sm:$0xf]
    %v201 = vld [vmem:[%s1 + $0x7c] sm:$0xf]
    %v202 = vld [vmem:[%s1 + $0x80] sm:$0xf]
    %v203 = vld [vmem:[%s1 + $0x84] sm:$0xf]
    %v204 = vld [vmem:[%s2 + $0x2] sm:$0x1]
    %v205 = vlaneseq
    %v206 = vshrl.u32 %v205, 7
    %v207 = vsub.s32 0, %v206
    %v208 = vrot.slane %v204, %v207
    %v225 = vunpack.c.l.b16 %v188
    %v226 = vunpack.c.l.b16 %v189
    %v227 = vunpack.c.l.b16 %v190
    %v228 = vunpack.c.l.b16 %v191
    %v229 = vunpack.c.l.b16 %v192
    %v230 = vunpack.c.l.b16 %v193
    %v231 = vunpack.c.l.b16 %v194
    %v232 = vunpack.c.l.b16 %v195
    %v233 = vunpack.c.l.b16 %v196
    %v234 = vunpack.c.l.b16 %v197
    %v235 = vunpack.c.l.b16 %v198
    %v236 = vunpack.c.l.b16 %v199
    %v237 = vunpack.c.l.b16 %v200
    %v238 = vunpack.c.l.b16 %v201
    %v239 = vunpack.c.l.b16 %v202
    %v240 = vunpack.c.l.b16 %v203
    %v241 = vpack.c.b16 %v226, %v225
    %v242 = vpack.c.b16 %v228, %v227
    %v243 = vpack.c.b16 %v230, %v229
    %v244 = vpack.c.b16 %v232, %v231
    %v245 = vpack.c.b16 %v234, %v233
    %v246 = vpack.c.b16 %v236, %v235
    %v247 = vpack.c.b16 %v238, %v237
    %v248 = vpack.c.b16 %v240, %v239
    %257 = vmatprep.subr.bf16.mxu0 0
    %258 = vmatpush1.bf16.msra.mxu0 %v241
    %259 = vmatprep.subr.bf16.mxu0 0
    %260 = vmatpush1.bf16.msra.mxu0 %v242
    %261 = vmatprep.subr.bf16.mxu0 0
    %262 = vmatpush1.bf16.msra.mxu0 %v243
    %263 = vmatprep.subr.bf16.mxu0 0
    %264 = vmatpush1.bf16.msra.mxu0 %v244
    %265 = vmatprep.subr.bf16.mxu0 0
    %266 = vmatpush1.bf16.msra.mxu0 %v245
    %267 = vmatprep.subr.bf16.mxu0 0
    %268 = vmatpush1.bf16.msra.mxu0 %v246
    %269 = vmatprep.subr.bf16.mxu0 0
    %270 = vmatpush1.bf16.msra.mxu0 %v247
    %271 = vmatprep.subr.bf16.mxu0 0
    %272 = vmatpush1.bf16.msra.mxu0 %v248
    %273 = vmatprep.subr.bf16.mxu0 0
    %274 = vmatpush1.bf16.msra.mxu0 0
    %275 = vmatprep.subr.bf16.mxu0 0
    %276 = vmatpush1.bf16.msra.mxu0 0
    %277 = vmatprep.subr.bf16.mxu0 0
    %278 = vmatpush1.bf16.msra.mxu0 0
    %279 = vmatprep.subr.bf16.mxu0 0
    %280 = vmatpush1.bf16.msra.mxu0 0
    %281 = vmatprep.subr.bf16.mxu0 0
    %282 = vmatpush1.bf16.msra.mxu0 0
    %283 = vmatprep.subr.bf16.mxu0 0
    %284 = vmatpush1.bf16.msra.mxu0 0
    %285 = vmatprep.subr.bf16.mxu0 0
    %286 = vmatpush1.bf16.msra.mxu0 0
    %287 = vmatprep.subr.bf16.mxu0 0
    %288 = vmatpush1.bf16.msra.mxu0 0
    %289 = vmatprep.mubr.bf16.mxu0 0
    %290 = vmatmul.mubr.bf16.gmra.mrb[0].mxu0 %v187
    %v291 = vpop.f32.mrb[0].mxu0
    %v292 = vadd.f32 %v208, %v291
    %v293 = vpop.f32.mrb[0].mxu0
    %v294 = vpop.f32.mrb[0].mxu0
    %v295 = vpop.f32.mrb[0].mxu0
    %296 = vdwg.mxu0
    %v297 = vlaneseq
    %v298 = vshrl.u32 %v297, 7
    %v299 = vcvt.s32.f32 %v298
    %v300 = vlaneseq
    %v301 = vand.u32 %v300, 127
    %v302 = vcvt.s32.f32 %v301
    %v303 = vmul.f32 %v299, 0.25
    %v304 = vfloor.f32 %v303
    %v305 = vmul.f32 %v302, 0.25
    %v306 = vfloor.f32 %v305
    %vm307 = vcmp.eq.f32.partialorder %v304, %v306
    %v308 = vsel %vm307, 1, 0
    %v309 = vcvt.s32.f32 %v308
    %v310 = vpack.c.bf16 %v292, %v292
    %vm311 = vcmask 261120
    %v313 = vsel %vm311, %v310, 0
    %315 = vmatprep.subr.bf16.mxu0 0
    %316 = vmatpush1.bf16.xpose.msra.mxu0 %v313
    %317 = vmatprep.subr.bf16.mxu0 0
    %318 = vmatpush1.bf16.xpose.msra.mxu0 0
    %319 = vmatprep.subr.bf16.mxu0 0
    %320 = vmatpush1.bf16.xpose.msra.mxu0 0
    %321 = vmatprep.subr.bf16.mxu0 0
    %322 = vmatpush1.bf16.xpose.msra.mxu0 0
    %323 = vmatprep.subr.bf16.mxu0 0
    %324 = vmatpush1.bf16.xpose.msra.mxu0 0
    %325 = vmatprep.subr.bf16.mxu0 0
    %326 = vmatpush1.bf16.xpose.msra.mxu0 0
    %327 = vmatprep.subr.bf16.mxu0 0
    %328 = vmatpush1.bf16.xpose.msra.mxu0 0
    %329 = vmatprep.subr.bf16.mxu0 0
    %330 = vmatpush1.bf16.xpose.msra.mxu0 0
    %331 = vmatprep.subr.bf16.mxu0 0
    %332 = vmatpush1.bf16.xpose.msra.mxu0 0
    %333 = vmatprep.subr.bf16.mxu0 0
    %334 = vmatpush1.bf16.xpose.msra.mxu0 0
    %335 = vmatprep.subr.bf16.mxu0 0
    %336 = vmatpush1.bf16.xpose.msra.mxu0 0
    %337 = vmatprep.subr.bf16.mxu0 0
    %338 = vmatpush1.bf16.xpose.msra.mxu0 0
    %339 = vmatprep.subr.bf16.mxu0 0
    %340 = vmatpush1.bf16.xpose.msra.mxu0 0
    %341 = vmatprep.subr.bf16.mxu0 0
    %342 = vmatpush1.bf16.xpose.msra.mxu0 0
    %343 = vmatprep.subr.bf16.mxu0 0
    %344 = vmatpush1.bf16.xpose.msra.mxu0 0
    %345 = vmatprep.subr.bf16.mxu0 0
    %346 = vmatpush1.bf16.xpose.msra.mxu0 0
    %347 = vmatprep.mubr.bf16.mxu0 0
    %348 = vmatmul.mubr.bf16.gmra.mrb[0].mxu0 %v313
    %v349 = vpop.f32.mrb[0].mxu0
    %v350 = vadd.f32 0.0, %v349
    %v351 = vpop.f32.mrb[0].mxu0
    %v352 = vpop.f32.mrb[0].mxu0
    %v353 = vpop.f32.mrb[0].mxu0
    %354 = vdwg.mxu0
    %v355 = vmax.f32 %v350, 0.0
    %v356 = vmul.f32 %v355, %v309
    %vm357 = vcmask 64512
    %v358 = vsel %vm357, %v356, -inf
    %359 = vmax.xlane.f32.xlu0 %v358
    %v360 = vpop.xlane.xlu0 %359
    %v361 = vsub.f32 %v356, %v360
    %v362 = vmul.f32 %v361, 1.442695
    %v363 = vpow.pop %v362
    %v364 = vmul.f32 %v363, %v309
    %v365 = vsel %vm357, %v364, 0.0
    %366 = vadd.xlane.f32.xlu0 %v365
    %v367 = vpop.xlane.xlu0 %366
    %v368 = vrcp.pop %v367
    %v369 = vmul.f32 %v364, %v368
    %v370 = vpack.c.bf16 %v369, %v369
    %v372 = vsel %vm357, %v370, 0
    %vm374 = vcmask 1043456
    %v375 = vsel %vm374, %v310, 0
    %377 = vmatprep.subr.bf16.mxu0 0
    %378 = vmatpush1.bf16.msra.mxu0 %v375
    %379 = vmatprep.subr.bf16.mxu0 0
    %380 = vmatpush1.bf16.msra.mxu0 0
    %381 = vmatprep.subr.bf16.mxu0 0
    %382 = vmatpush1.bf16.msra.mxu0 0
    %383 = vmatprep.subr.bf16.mxu0 0
    %384 = vmatpush1.bf16.msra.mxu0 0
    %385 = vmatprep.subr.bf16.mxu0 0
    %386 = vmatpush1.bf16.msra.mxu0 0
    %387 = vmatprep.subr.bf16.mxu0 0
    %388 = vmatpush1.bf16.msra.mxu0 0
    %389 = vmatprep.subr.bf16.mxu0 0
    %390 = vmatpush1.bf16.msra.mxu0 0
    %391 = vmatprep.subr.bf16.mxu0 0
    %392 = vmatpush1.bf16.msra.mxu0 0
    %393 = vmatprep.subr.bf16.mxu0 0
    %394 = vmatpush1.bf16.msra.mxu0 0
    %395 = vmatprep.subr.bf16.mxu0 0
    %396 = vmatpush1.bf16.msra.mxu0 0
    %397 = vmatprep.subr.bf16.mxu0 0
    %398 = vmatpush1.bf16.msra.mxu0 0
    %399 = vmatprep.subr.bf16.mxu0 0
    %400 = vmatpush1.bf16.msra.mxu0 0
    %401 = vmatprep.subr.bf16.mxu0 0
    %402 = vmatpush1.bf16.msra.mxu0 0
    %403 = vmatprep.subr.bf16.mxu0 0
    %404 = vmatpush1.bf16.msra.mxu0 0
    %405 = vmatprep.subr.bf16.mxu0 0
    %406 = vmatpush1.bf16.msra.mxu0 0
    %407 = vmatprep.subr.bf16.mxu0 0
    %408 = vmatpush1.bf16.msra.mxu0 0
    %409 = vmatprep.mubr.bf16.mxu0 0
    %410 = vmatmul.mubr.bf16.gmra.mrb[0].mxu0 %v372
    %v411 = vpop.f32.mrb[0].mxu0
    %v412 = vadd.f32 0.0, %v411
    %v413 = vpop.f32.mrb[0].mxu0
    %v414 = vpop.f32.mrb[0].mxu0
    %v415 = vpop.f32.mrb[0].mxu0
    %416 = vdwg.mxu0
    %v417 = vpack.c.bf16 %v412, %v412
    %v418 = vld [vmem:[%s1 + $0x88] sm:$0xf]
    %v419 = vld [vmem:[%s1 + $0x8c] sm:$0xf]
    %v420 = vld [vmem:[%s1 + $0x90] sm:$0xf]
    %v421 = vld [vmem:[%s1 + $0x94] sm:$0xf]
    %v422 = vld [vmem:[%s2 + $0x3] sm:$0x1]
    %v423 = vlaneseq
    %v424 = vshrl.u32 %v423, 7
    %v425 = vsub.s32 0, %v424
    %v426 = vrot.slane %v422, %v425
    %v431 = vunpack.c.l.b16 %v418
    %v432 = vunpack.c.l.b16 %v419
    %v433 = vunpack.c.l.b16 %v420
    %v434 = vunpack.c.l.b16 %v421
    %v435 = vpack.c.b16 %v432, %v431
    %v436 = vpack.c.b16 %v434, %v433
    %v440 = vsel %vm311, %v417, 0
    %442 = vmatprep.subr.bf16.mxu0 0
    %443 = vmatpush1.bf16.msra.mxu0 %v435
    %444 = vmatprep.subr.bf16.mxu0 0
    %445 = vmatpush1.bf16.msra.mxu0 %v436
    %446 = vmatprep.subr.bf16.mxu0 0
    %447 = vmatpush1.bf16.msra.mxu0 0
    %448 = vmatprep.subr.bf16.mxu0 0
    %449 = vmatpush1.bf16.msra.mxu0 0
    %450 = vmatprep.subr.bf16.mxu0 0
    %451 = vmatpush1.bf16.msra.mxu0 0
    %452 = vmatprep.subr.bf16.mxu0 0
    %453 = vmatpush1.bf16.msra.mxu0 0
    %454 = vmatprep.subr.bf16.mxu0 0
    %455 = vmatpush1.bf16.msra.mxu0 0
    %456 = vmatprep.subr.bf16.mxu0 0
    %457 = vmatpush1.bf16.msra.mxu0 0
    %458 = vmatprep.subr.bf16.mxu0 0
    %459 = vmatpush1.bf16.msra.mxu0 0
    %460 = vmatprep.subr.bf16.mxu0 0
    %461 = vmatpush1.bf16.msra.mxu0 0
    %462 = vmatprep.subr.bf16.mxu0 0
    %463 = vmatpush1.bf16.msra.mxu0 0
    %464 = vmatprep.subr.bf16.mxu0 0
    %465 = vmatpush1.bf16.msra.mxu0 0
    %466 = vmatprep.subr.bf16.mxu0 0
    %467 = vmatpush1.bf16.msra.mxu0 0
    %468 = vmatprep.subr.bf16.mxu0 0
    %469 = vmatpush1.bf16.msra.mxu0 0
    %470 = vmatprep.subr.bf16.mxu0 0
    %471 = vmatpush1.bf16.msra.mxu0 0
    %472 = vmatprep.subr.bf16.mxu0 0
    %473 = vmatpush1.bf16.msra.mxu0 0
    %474 = vmatprep.mubr.bf16.mxu0 0
    %475 = vmatmul.mubr.bf16.gmra.mrb[0].mxu0 %v440
    %v476 = vpop.f32.mrb[0].mxu0
    %v477 = vadd.f32 %v426, %v476
    %v478 = vpop.f32.mrb[0].mxu0
    %v479 = vpop.f32.mrb[0].mxu0
    %v480 = vpop.f32.mrb[0].mxu0
    %481 = vdwg.mxu0
    %v482 = vmax.f32 %v477, 0.0
    %v483 = vld [vmem:[%s1 + $0x98] sm:$0xf]
    %v484 = vld [vmem:[%s1 + $0x9c] sm:$0xf]
    %v485 = vld [vmem:[%s1 + $0xa0] sm:$0xf]
    %v486 = vld [vmem:[%s1 + $0xa4] sm:$0xf]
    %v487 = vld [vmem:[%s2 + $0x4] sm:$0x1]
    %v488 = vlaneseq
    %v489 = vshrl.u32 %v488, 7
    %v490 = vsub.s32 0, %v489
    %v491 = vrot.slane %v487, %v490
    %v496 = vunpack.c.l.b16 %v483
    %v497 = vunpack.c.l.b16 %v484
    %v498 = vunpack.c.l.b16 %v485
    %v499 = vunpack.c.l.b16 %v486
    %v500 = vpack.c.b16 %v497, %v496
    %v501 = vpack.c.b16 %v499, %v498
    %504 = vmatprep.subr.bf16.mxu0 0
    %505 = vmatpush1.bf16.msra.mxu0 %v500
    %506 = vmatprep.subr.bf16.mxu0 0
    %507 = vmatpush1.bf16.msra.mxu0 %v501
    %508 = vmatprep.subr.bf16.mxu0 0
    %509 = vmatpush1.bf16.msra.mxu0 0
    %510 = vmatprep.subr.bf16.mxu0 0
    %511 = vmatpush1.bf16.msra.mxu0 0
    %512 = vmatprep.subr.bf16.mxu0 0
    %513 = vmatpush1.bf16.msra.mxu0 0
    %514 = vmatprep.subr.bf16.mxu0 0
    %515 = vmatpush1.bf16.msra.mxu0 0
    %516 = vmatprep.subr.bf16.mxu0 0
    %517 = vmatpush1.bf16.msra.mxu0 0
    %518 = vmatprep.subr.bf16.mxu0 0
    %519 = vmatpush1.bf16.msra.mxu0 0
    %520 = vmatprep.subr.bf16.mxu0 0
    %521 = vmatpush1.bf16.msra.mxu0 0
    %522 = vmatprep.subr.bf16.mxu0 0
    %523 = vmatpush1.bf16.msra.mxu0 0
    %524 = vmatprep.subr.bf16.mxu0 0
    %525 = vmatpush1.bf16.msra.mxu0 0
    %526 = vmatprep.subr.bf16.mxu0 0
    %527 = vmatpush1.bf16.msra.mxu0 0
    %528 = vmatprep.subr.bf16.mxu0 0
    %529 = vmatpush1.bf16.msra.mxu0 0
    %530 = vmatprep.subr.bf16.mxu0 0
    %531 = vmatpush1.bf16.msra.mxu0 0
    %532 = vmatprep.subr.bf16.mxu0 0
    %533 = vmatpush1.bf16.msra.mxu0 0
    %534 = vmatprep.subr.bf16.mxu0 0
    %535 = vmatpush1.bf16.msra.mxu0 0
    %536 = vmatprep.mubr.bf16.mxu0 0
    %537 = vmatmul.mubr.bf16.gmra.mrb[0].mxu0 %v440
    %v538 = vpop.f32.mrb[0].mxu0
    %v539 = vadd.f32 %v491, %v538
    %v540 = vpop.f32.mrb[0].mxu0
    %v541 = vpop.f32.mrb[0].mxu0
    %v542 = vpop.f32.mrb[0].mxu0
    %543 = vdwg.mxu0
    %v544 = vmax.f32 %v539, 0.0
    %v545 = vmul.f32 %v304, 4.0
    %v546 = vsub.f32 %v299, %v545
    %v547 = vmul.f32 %v306, 4.0
    %v548 = vsub.f32 %v302, %v547
    %v549 = vsub.f32 %v302, %v545
    %vm550 = vcmp.eq.f32.partialorder %v546, %v548
    %vm551 = vcmp.ge.f32.partialorder %v549, 0.0
    %vm552 = vmand %vm550, %vm551
    %vm553 = vcmp.lt.f32.partialorder %v549, 4.0
    %vm554 = vmand %vm552, %vm553
    %v555 = vsel %vm554, 1.0, 0.0
    %v557 = vsel %vm357, %v555, 0
    %559 = vmatprep.subr.mxu0 0.0
    %560 = vmatpush1.msra.mxu0 %v482
    %561 = vmatprep.subr.mxu0 0.0
    %562 = vmatpush1.msra.mxu0 0.0
    %563 = vmatprep.subr.mxu0 0.0
    %564 = vmatpush1.msra.mxu0 0.0
    %565 = vmatprep.subr.mxu0 0.0
    %566 = vmatpush1.msra.mxu0 0.0
    %567 = vmatprep.subr.mxu0 0.0
    %568 = vmatpush1.msra.mxu0 0.0
    %569 = vmatprep.subr.mxu0 0.0
    %570 = vmatpush1.msra.mxu0 0.0
    %571 = vmatprep.subr.mxu0 0.0
    %572 = vmatpush1.msra.mxu0 0.0
    %573 = vmatprep.subr.mxu0 0.0
    %574 = vmatpush1.msra.mxu0 0.0
    %575 = vmatprep.subr.mxu0 0.0
    %576 = vmatpush1.msra.mxu0 0.0
    %577 = vmatprep.subr.mxu0 0.0
    %578 = vmatpush1.msra.mxu0 0.0
    %579 = vmatprep.subr.mxu0 0.0
    %580 = vmatpush1.msra.mxu0 0.0
    %581 = vmatprep.subr.mxu0 0.0
    %582 = vmatpush1.msra.mxu0 0.0
    %583 = vmatprep.subr.mxu0 0.0
    %584 = vmatpush1.msra.mxu0 0.0
    %585 = vmatprep.subr.mxu0 0.0
    %586 = vmatpush1.msra.mxu0 0.0
    %587 = vmatprep.subr.mxu0 0.0
    %588 = vmatpush1.msra.mxu0 0.0
    %589 = vmatprep.subr.mxu0 0.0
    %590 = vmatpush1.msra.mxu0 0.0
    %591 = vmatprep.subr.mxu0 0.0
    %592 = vmatpush1.msra.mxu0 0.0
    %593 = vmatprep.subr.mxu0 0.0
    %594 = vmatpush1.msra.mxu0 0.0
    %595 = vmatprep.subr.mxu0 0.0
    %596 = vmatpush1.msra.mxu0 0.0
    %597 = vmatprep.subr.mxu0 0.0
    %598 = vmatpush1.msra.mxu0 0.0
    %599 = vmatprep.subr.mxu0 0.0
    %600 = vmatpush1.msra.mxu0 0.0
    %601 = vmatprep.subr.mxu0 0.0
    %602 = vmatpush1.msra.mxu0 0.0
    %603 = vmatprep.subr.mxu0 0.0
    %604 = vmatpush1.msra.mxu0 0.0
    %605 = vmatprep.subr.mxu0 0.0
    %606 = vmatpush1.msra.mxu0 0.0
    %607 = vmatprep.subr.mxu0 0.0
    %608 = vmatpush1.msra.mxu0 0.0
    %609 = vmatprep.subr.mxu0 0.0
    %610 = vmatpush1.msra.mxu0 0.0
    %611 = vmatprep.subr.mxu0 0.0
    %612 = vmatpush1.msra.mxu0 0.0
    %613 = vmatprep.subr.mxu0 0.0
    %614 = vmatpush1.msra.mxu0 0.0
    %615 = vmatprep.subr.mxu0 0.0
    %616 = vmatpush1.msra.mxu0 0.0
    %617 = vmatprep.subr.mxu0 0.0
    %618 = vmatpush1.msra.mxu0 0.0
    %619 = vmatprep.subr.mxu0 0.0
    %620 = vmatpush1.msra.mxu0 0.0
    %621 = vmatprep.subr.mxu0 0.0
    %622 = vmatpush1.msra.mxu0 0.0
    %623 = vmatprep.mubr.f32.mxu0 0.0
    %624 = vmatmul.mubr.f32.gmra.mrb[0].mxu0 %v557
    %v625 = vpop.f32.mrb[0].mxu0
    %v626 = vadd.f32 0.0, %v625
    %v627 = vpop.f32.mrb[0].mxu0
    %628 = vdwg.mxu0
    %629 = vmatprep.subr.mxu0 0.0
    %630 = vmatpush1.msra.mxu0 %v544
    %631 = vmatprep.subr.mxu0 0.0
    %632 = vmatpush1.msra.mxu0 0.0
    %633 = vmatprep.subr.mxu0 0.0
    %634 = vmatpush1.msra.mxu0 0.0
    %635 = vmatprep.subr.mxu0 0.0
    %636 = vmatpush1.msra.mxu0 0.0
    %637 = vmatprep.subr.mxu0 0.0
    %638 = vmatpush1.msra.mxu0 0.0
    %639 = vmatprep.subr.mxu0 0.0
    %640 = vmatpush1.msra.mxu0 0.0
    %641 = vmatprep.subr.mxu0 0.0
    %642 = vmatpush1.msra.mxu0 0.0
    %643 = vmatprep.subr.mxu0 0.0
    %644 = vmatpush1.msra.mxu0 0.0
    %645 = vmatprep.subr.mxu0 0.0
    %646 = vmatpush1.msra.mxu0 0.0
    %647 = vmatprep.subr.mxu0 0.0
    %648 = vmatpush1.msra.mxu0 0.0
    %649 = vmatprep.subr.mxu0 0.0
    %650 = vmatpush1.msra.mxu0 0.0
    %651 = vmatprep.subr.mxu0 0.0
    %652 = vmatpush1.msra.mxu0 0.0
    %653 = vmatprep.subr.mxu0 0.0
    %654 = vmatpush1.msra.mxu0 0.0
    %655 = vmatprep.subr.mxu0 0.0
    %656 = vmatpush1.msra.mxu0 0.0
    %657 = vmatprep.subr.mxu0 0.0
    %658 = vmatpush1.msra.mxu0 0.0
    %659 = vmatprep.subr.mxu0 0.0
    %660 = vmatpush1.msra.mxu0 0.0
    %661 = vmatprep.subr.mxu0 0.0
    %662 = vmatpush1.msra.mxu0 0.0
    %663 = vmatprep.subr.mxu0 0.0
    %664 = vmatpush1.msra.mxu0 0.0
    %665 = vmatprep.subr.mxu0 0.0
    %666 = vmatpush1.msra.mxu0 0.0
    %667 = vmatprep.subr.mxu0 0.0
    %668 = vmatpush1.msra.mxu0 0.0
    %669 = vmatprep.subr.mxu0 0.0
    %670 = vmatpush1.msra.mxu0 0.0
    %671 = vmatprep.subr.mxu0 0.0
    %672 = vmatpush1.msra.mxu0 0.0
    %673 = vmatprep.subr.mxu0 0.0
    %674 = vmatpush1.msra.mxu0 0.0
    %675 = vmatprep.subr.mxu0 0.0
    %676 = vmatpush1.msra.mxu0 0.0
    %677 = vmatprep.subr.mxu0 0.0
    %678 = vmatpush1.msra.mxu0 0.0
    %679 = vmatprep.subr.mxu0 0.0
    %680 = vmatpush1.msra.mxu0 0.0
    %681 = vmatprep.subr.mxu0 0.0
    %682 = vmatpush1.msra.mxu0 0.0
    %683 = vmatprep.subr.mxu0 0.0
    %684 = vmatpush1.msra.mxu0 0.0
    %685 = vmatprep.subr.mxu0 0.0
    %686 = vmatpush1.msra.mxu0 0.0
    %687 = vmatprep.subr.mxu0 0.0
    %688 = vmatpush1.msra.mxu0 0.0
    %689 = vmatprep.subr.mxu0 0.0
    %690 = vmatpush1.msra.mxu0 0.0
    %691 = vmatprep.subr.mxu0 0.0
    %692 = vmatpush1.msra.mxu0 0.0
    %693 = vmatprep.mubr.f32.mxu0 0.0
    %694 = vmatmul.mubr.f32.gmra.mrb[0].mxu0 %v557
    %v695 = vpop.f32.mrb[0].mxu0
    %v696 = vadd.f32 0.0, %v695
    %v697 = vpop.f32.mrb[0].mxu0
    %698 = vdwg.mxu0
    %v699 = vpack.c.bf16 %v626, %v626
    %v700 = vld [vmem:[%s1 + $0xa8] sm:$0xf]
    %v701 = vld [vmem:[%s1 + $0xac] sm:$0xf]
    %v702 = vpack.c.bf16 %v696, %v696
    %v703 = vld [vmem:[%s1 + $0xb0] sm:$0xf]
    %v704 = vld [vmem:[%s1 + $0xb4] sm:$0xf]
    %v707 = vunpack.c.l.b16 %v703
    %v708 = vunpack.c.l.b16 %v704
    %v709 = vpack.c.b16 %v708, %v707
    %v712 = vsel %vm31, %v702, 0
    %714 = vmatprep.subr.bf16.mxu0 0
    %715 = vmatpush1.bf16.msra.mxu0 %v709
    %716 = vmatprep.subr.bf16.mxu0 0
    %717 = vmatpush1.bf16.msra.mxu0 0
    %718 = vmatprep.subr.bf16.mxu0 0
    %719 = vmatpush1.bf16.msra.mxu0 0
    %720 = vmatprep.subr.bf16.mxu0 0
    %721 = vmatpush1.bf16.msra.mxu0 0
    %722 = vmatprep.subr.bf16.mxu0 0
    %723 = vmatpush1.bf16.msra.mxu0 0
    %724 = vmatprep.subr.bf16.mxu0 0
    %725 = vmatpush1.bf16.msra.mxu0 0
    %726 = vmatprep.subr.bf16.mxu0 0
    %727 = vmatpush1.bf16.msra.mxu0 0
    %728 = vmatprep.subr.bf16.mxu0 0
    %729 = vmatpush1.bf16.msra.mxu0 0
    %730 = vmatprep.subr.bf16.mxu0 0
    %731 = vmatpush1.bf16.msra.mxu0 0
    %732 = vmatprep.subr.bf16.mxu0 0
    %733 = vmatpush1.bf16.msra.mxu0 0
    %734 = vmatprep.subr.bf16.mxu0 0
    %735 = vmatpush1.bf16.msra.mxu0 0
    %736 = vmatprep.subr.bf16.mxu0 0
    %737 = vmatpush1.bf16.msra.mxu0 0
    %738 = vmatprep.subr.bf16.mxu0 0
    %739 = vmatpush1.bf16.msra.mxu0 0
    %740 = vmatprep.subr.bf16.mxu0 0
    %741 = vmatpush1.bf16.msra.mxu0 0
    %742 = vmatprep.subr.bf16.mxu0 0
    %743 = vmatpush1.bf16.msra.mxu0 0
    %744 = vmatprep.subr.bf16.mxu0 0
    %745 = vmatpush1.bf16.msra.mxu0 0
    %746 = vmatprep.mubr.bf16.mxu0 0
    %747 = vmatmul.mubr.bf16.gmra.mrb[0].mxu0 %v712
    %v748 = vpop.f32.mrb[0].mxu0
    %v749 = vadd.f32 0.0, %v748
    %v750 = vpop.f32.mrb[0].mxu0
    %v751 = vpop.f32.mrb[0].mxu0
    %v752 = vpop.f32.mrb[0].mxu0
    %753 = vdwg.mxu0
    %v756 = vunpack.c.l.b16 %v700
    %v757 = vunpack.c.l.b16 %v701
    %v758 = vpack.c.b16 %v757, %v756
    %v761 = vsel %vm31, %v699, 0
    %763 = vmatprep.subr.bf16.mxu0 0
    %764 = vmatpush1.bf16.msra.mxu0 %v758
    %765 = vmatprep.subr.bf16.mxu0 0
    %766 = vmatpush1.bf16.msra.mxu0 0
    %767 = vmatprep.subr.bf16.mxu0 0
    %768 = vmatpush1.bf16.msra.mxu0 0
    %769 = vmatprep.subr.bf16.mxu0 0
    %770 = vmatpush1.bf16.msra.mxu0 0
    %771 = vmatprep.subr.bf16.mxu0 0
    %772 = vmatpush1.bf16.msra.mxu0 0
    %773 = vmatprep.subr.bf16.mxu0 0
    %774 = vmatpush1.bf16.msra.mxu0 0
    %775 = vmatprep.subr.bf16.mxu0 0
    %776 = vmatpush1.bf16.msra.mxu0 0
    %777 = vmatprep.subr.bf16.mxu0 0
    %778 = vmatpush1.bf16.msra.mxu0 0
    %779 = vmatprep.subr.bf16.mxu0 0
    %780 = vmatpush1.bf16.msra.mxu0 0
    %781 = vmatprep.subr.bf16.mxu0 0
    %782 = vmatpush1.bf16.msra.mxu0 0
    %783 = vmatprep.subr.bf16.mxu0 0
    %784 = vmatpush1.bf16.msra.mxu0 0
    %785 = vmatprep.subr.bf16.mxu0 0
    %786 = vmatpush1.bf16.msra.mxu0 0
    %787 = vmatprep.subr.bf16.mxu0 0
    %788 = vmatpush1.bf16.msra.mxu0 0
    %789 = vmatprep.subr.bf16.mxu0 0
    %790 = vmatpush1.bf16.msra.mxu0 0
    %791 = vmatprep.subr.bf16.mxu0 0
    %792 = vmatpush1.bf16.msra.mxu0 0
    %793 = vmatprep.subr.bf16.mxu0 0
    %794 = vmatpush1.bf16.msra.mxu0 0
    %795 = vmatprep.mubr.bf16.mxu0 0
    %796 = vmatmul.mubr.bf16.gmra.mrb[0].mxu0 %v761
    %v797 = vpop.f32.mrb[0].mxu0
    %v798 = vadd.f32 %v749, %v797
    %v799 = vpop.f32.mrb[0].mxu0
    %v800 = vpop.f32.mrb[0].mxu0
    %v801 = vpop.f32.mrb[0].mxu0
    %802 = vdwg.mxu0
    %v803 = vld [vmem:[%s2 + $0x5] sm:$0x1]
    %v804 = vlaneseq
    %v805 = vshrl.u32 %v804, 7
    %v806 = vsub.s32 0, %v805
    %v807 = vrot.slane %v803, %v806
    %v808 = vadd.f32 %v798, %v807
    %v809 = vmax.f32 %v808, 0.0
    %v810 = vpack.c.bf16 %v809, %v809
    %v811 = vld [vmem:[%s1 + $0xb8] sm:$0xf]
    %v812 = vld [vmem:[%s1 + $0xbc] sm:$0xf]
    %v813 = vld [vmem:[%s1 + $0xc0] sm:$0xf]
    %v814 = vld [vmem:[%s1 + $0xc4] sm:$0xf]
    %v815 = vld [vmem:[%s2 + $0x6] sm:$0x1]
    %v816 = vlaneseq
    %v817 = vshrl.u32 %v816, 7
    %v818 = vsub.s32 0, %v817
    %v819 = vrot.slane %v815, %v818
    %v824 = vunpack.c.l.b16 %v811
    %v825 = vunpack.c.l.b16 %v812
    %v826 = vunpack.c.l.b16 %v813
    %v827 = vunpack.c.l.b16 %v814
    %v828 = vpack.c.b16 %v825, %v824
    %v829 = vpack.c.b16 %v827, %v826
    %v833 = vsel %vm311, %v810, 0
    %835 = vmatprep.subr.bf16.mxu0 0
    %836 = vmatpush1.bf16.msra.mxu0 %v828
    %837 = vmatprep.subr.bf16.mxu0 0
    %838 = vmatpush1.bf16.msra.mxu0 %v829
    %839 = vmatprep.subr.bf16.mxu0 0
    %840 = vmatpush1.bf16.msra.mxu0 0
    %841 = vmatprep.subr.bf16.mxu0 0
    %842 = vmatpush1.bf16.msra.mxu0 0
    %843 = vmatprep.subr.bf16.mxu0 0
    %844 = vmatpush1.bf16.msra.mxu0 0
    %845 = vmatprep.subr.bf16.mxu0 0
    %846 = vmatpush1.bf16.msra.mxu0 0
    %847 = vmatprep.subr.bf16.mxu0 0
    %848 = vmatpush1.bf16.msra.mxu0 0
    %849 = vmatprep.subr.bf16.mxu0 0
    %850 = vmatpush1.bf16.msra.mxu0 0
    %851 = vmatprep.subr.bf16.mxu0 0
    %852 = vmatpush1.bf16.msra.mxu0 0
    %853 = vmatprep.subr.bf16.mxu0 0
    %854 = vmatpush1.bf16.msra.mxu0 0
    %855 = vmatprep.subr.bf16.mxu0 0
    %856 = vmatpush1.bf16.msra.mxu0 0
    %857 = vmatprep.subr.bf16.mxu0 0
    %858 = vmatpush1.bf16.msra.mxu0 0
    %859 = vmatprep.subr.bf16.mxu0 0
    %860 = vmatpush1.bf16.msra.mxu0 0
    %861 = vmatprep.subr.bf16.mxu0 0
    %862 = vmatpush1.bf16.msra.mxu0 0
    %863 = vmatprep.subr.bf16.mxu0 0
    %864 = vmatpush1.bf16.msra.mxu0 0
    %865 = vmatprep.subr.bf16.mxu0 0
    %866 = vmatpush1.bf16.msra.mxu0 0
    %867 = vmatprep.mubr.bf16.mxu0 0
    %868 = vmatmul.mubr.bf16.gmra.mrb[0].mxu0 %v833
    %v869 = vpop.f32.mrb[0].mxu0
    %v870 = vadd.f32 %v819, %v869
    %v871 = vpop.f32.mrb[0].mxu0
    %v872 = vpop.f32.mrb[0].mxu0
    %v873 = vpop.f32.mrb[0].mxu0
    %874 = vdwg.mxu0
    %v875 = vmax.f32 %v870, 0.0
    %v876 = vpack.c.bf16 %v875, %v875
    %v877 = vld [vmem:[%s1 + $0xc8] sm:$0xf]
    %v878 = vld [vmem:[%s2 + $0x7] sm:$0x1]
    %v879 = vlaneseq
    %v880 = vshrl.u32 %v879, 7
    %v881 = vsub.s32 0, %v880
    %v882 = vrot.slane %v878, %v881
    %v884 = vsel %vm357, %v876, 0
    %v887 = vsel %vm374, %v877, 0
    %889 = vmatprep.subr.bf16.mxu0 0
    %890 = vmatpush1.bf16.msra.mxu0 %v887
    %891 = vmatprep.subr.bf16.mxu0 0
    %892 = vmatpush1.bf16.msra.mxu0 0
    %893 = vmatprep.subr.bf16.mxu0 0
    %894 = vmatpush1.bf16.msra.mxu0 0
    %895 = vmatprep.subr.bf16.mxu0 0
    %896 = vmatpush1.bf16.msra.mxu0 0
    %897 = vmatprep.subr.bf16.mxu0 0
    %898 = vmatpush1.bf16.msra.mxu0 0
    %899 = vmatprep.subr.bf16.mxu0 0
    %900 = vmatpush1.bf16.msra.mxu0 0
    %901 = vmatprep.subr.bf16.mxu0 0
    %902 = vmatpush1.bf16.msra.mxu0 0
    %903 = vmatprep.subr.bf16.mxu0 0
    %904 = vmatpush1.bf16.msra.mxu0 0
    %905 = vmatprep.subr.bf16.mxu0 0
    %906 = vmatpush1.bf16.msra.mxu0 0
    %907 = vmatprep.subr.bf16.mxu0 0
    %908 = vmatpush1.bf16.msra.mxu0 0
    %909 = vmatprep.subr.bf16.mxu0 0
    %910 = vmatpush1.bf16.msra.mxu0 0
    %911 = vmatprep.subr.bf16.mxu0 0
    %912 = vmatpush1.bf16.msra.mxu0 0
    %913 = vmatprep.subr.bf16.mxu0 0
    %914 = vmatpush1.bf16.msra.mxu0 0
    %915 = vmatprep.subr.bf16.mxu0 0
    %916 = vmatpush1.bf16.msra.mxu0 0
    %917 = vmatprep.subr.bf16.mxu0 0
    %918 = vmatpush1.bf16.msra.mxu0 0
    %919 = vmatprep.subr.bf16.mxu0 0
    %920 = vmatpush1.bf16.msra.mxu0 0
    %921 = vmatprep.mubr.bf16.mxu0 0
    %922 = vmatmul.mubr.bf16.gmra.mrb[0].mxu0 %v884
    %v923 = vpop.f32.mrb[0].mxu0
    %v924 = vadd.f32 %v882, %v923
    %v925 = vpop.f32.mrb[0].mxu0
    %v926 = vpop.f32.mrb[0].mxu0
    %v927 = vpop.f32.mrb[0].mxu0
    %928 = vdwg.mxu0
    %929 = vst.msk [vmem:[#allocation2] sm:$0xff] %vm31, %v924
    // Predicated region
    $region14: #{branch_0_fun.3} parent=1 // pred_check
      _
    $region15: #{branch_0_fun.3} parent=1 // pred_check_branch
      %931 = sbr.rel (0) target = $region17
    $region16: #{branch_0_fun.3} parent=1 // pred_region
      %s933 = ssub.s32 128, 128
      %934 = vsyncadd [#allocation3], %s933
      %s936 = sshll.u32 [#allocation2], 4
      %s937 = int_to_ptr.vmem [resolvable:$true] %s936
      %939 = dma.vmem_to_hbm [thread:$0]  %s937, 128, %s3, [#allocation3]
    $region17: #{branch_0_fun.3} parent=1 // pred_fallthru
      _
    // Predicated region
    $region18: #{branch_0_fun.3} parent=1 // pred_check
      _
    $region19: #{branch_0_fun.3} parent=1 // pred_check_branch
      %941 = sbr.rel (0) target = $region21
    $region20: #{branch_0_fun.3} parent=1 // pred_region
      %942 = dma.done [#allocation3], 128
    $region21: #{branch_0_fun.3} parent=1 // pred_fallthru
      _
    %943 = vsyncpa [#allocation3], 1

</llo_original>
